<compile_context>
chip_gen: v7x
topology: tpu7x:2x2x1
jax: 0.10.0
libtpu: 0.0.40
codegen_flags: <defaults>
</compile_context>

<pallas_src>
import functools

import jax
import jax.numpy as jnp
from jax.experimental import pallas as pl
from jax.experimental.pallas import tpu as pltpu


_TARGET_PIXELS = 512  # ~pixels per grid step (keeps vreg/VMEM pressure modest)


def _cparams():
    return pltpu.CompilerParams(
        dimension_semantics=("parallel", "parallel"),
        vmem_limit_bytes=32 * 1024 * 1024,
    )


def _pick_bh(Ho, Wo, target_pixels=_TARGET_PIXELS):
    return max(1, min(Ho, target_pixels // max(Wo, 1)))


# --------------------------------------------------------------------------
# XLA glue: 6-slot phase tensor for a 3x3 stride-2 pad-1 conv.
# Slots (channel-concatenated, order a_E,a_O,b_E,b_O,c_E,c_O):
#   row phase a/b/c -> source row 2i-1 / 2i / 2i+1
#   col phase E/O   -> source col 2k-1 / 2k  (E has Wo+1 entries: k in [0, Wo])
# The 9 taps of the conv are unit-offset slices of these slots inside the kernel.
# --------------------------------------------------------------------------
def _build_taps(x, Ho_pad, Wo):
    N, H, W, C = x.shape
    Hq = 2 * Ho_pad + 2
    Wq = 2 * Wo + 2
    xp = jnp.pad(x, ((0, 0), (1, Hq - 1 - H), (1, Wq - 1 - W), (0, 0)))
    rows = (
        xp[:, 0:2 * Ho_pad:2],        # a: source row 2i-1
        xp[:, 1:2 * Ho_pad + 1:2],    # b: source row 2i
        xp[:, 2:2 * Ho_pad + 2:2],    # c: source row 2i+1
    )
    slots = []
    for r in rows:
        slots.append(r[:, :, 0:2 * Wo + 1:2])   # E: source col 2k-1
        slots.append(r[:, :, 1:2 * Wo + 2:2])   # O: source col 2k
    return jnp.concatenate(slots, axis=-1)      # (N, Ho_pad, Wo+1, 6*C)


# --------------------------------------------------------------------------
# Kernel A: conv1 = 3x3 stride-2 conv (+ folded BN + ReLU)
# --------------------------------------------------------------------------
def _conv1_kernel(t_ref, w_ref, b_ref, o_ref, *, bh, Wo, Cin, Cout):
    P = bh * Wo
    acc = jnp.zeros((P, Cout), jnp.float32)
    for di in range(3):
        E = t_ref[0, :, :, (2 * di) * Cin:(2 * di + 1) * Cin]      # (bh, Wo+1, Cin)
        O = t_ref[0, :, :, (2 * di + 1) * Cin:(2 * di + 2) * Cin]
        taps = (E[:, 0:Wo, :], O[:, 0:Wo, :], E[:, 1:Wo + 1, :])
        for dj in range(3):
            t = di * 3 + dj
            acc = acc + jnp.dot(
                taps[dj].reshape(P, Cin),
                w_ref[t * Cin:(t + 1) * Cin, :],
                preferred_element_type=jnp.float32,
            )
    y = jnp.maximum(acc + b_ref[...], 0.0)
    o_ref[0] = y.reshape(bh, Wo, Cout).astype(o_ref.dtype)


def _conv1_call(taps, wmat, bias, *, bh, Cout):
    N, Hp, W1p1, C6 = taps.shape
    Cin = C6 // 6
    W1 = W1p1 - 1
    kernel = functools.partial(_conv1_kernel, bh=bh, Wo=W1, Cin=Cin, Cout=Cout)
    return pl.pallas_call(
        kernel,
        grid=(N, Hp // bh),
        in_specs=[
            pl.BlockSpec((1, bh, W1p1, C6), lambda n, i: (n, i, 0, 0)),
            pl.BlockSpec(wmat.shape, lambda n, i: (0, 0)),
            pl.BlockSpec(bias.shape, lambda n, i: (0, 0)),
        ],
        out_specs=pl.BlockSpec((1, bh, W1, Cout), lambda n, i: (n, i, 0, 0)),
        out_shape=jax.ShapeDtypeStruct((N, Hp, W1, Cout), jnp.float32),
        compiler_params=_cparams(),
    )(taps, wmat, bias)


# --------------------------------------------------------------------------
# Kernel B: fused  [x2 -> expand 1x1 -> dw 3x3/s2 -> linear 1x1]
#               +  [x1 -> dw 3x3/s2 -> 1x1]
#               +  concat + channel_shuffle(2)   (folded into wu/wv/bias columns)
# --------------------------------------------------------------------------
def _stage2_kernel(t_ref, we_ref, be_ref, w1_ref, wm_ref, wu_ref, wv_ref, ob_ref,
                   o_ref, *, bh, Wo, S, bc, mid, H1, W1, Cout):
    P = bh * Wo
    ib = pl.program_id(1)

    # Validity masks: the expand 1x1 (bias + ReLU) makes zero-padded positions
    # non-zero, so the expanded activation is re-zeroed where the source row/col
    # lies outside the (H1, W1) feature map.  (branch1 taps need no mask: zero
    # padding in y-space is exactly the conv's zero padding.)
    grow = ib * bh + jax.lax.broadcasted_iota(jnp.int32, (bh, 1, 1), 0)
    kcol = jax.lax.broadcasted_iota(jnp.int32, (1, Wo + 1, 1), 1)
    ra = (grow >= 1).astype(jnp.float32)                          # row 2i-1 valid
    rc = ((2 * grow + 1) <= (H1 - 1)).astype(jnp.float32)         # row 2i+1 valid
    cE = ((kcol >= 1) & ((2 * kcol - 1) <= (W1 - 1))).astype(jnp.float32)
    slot_mask = [ra * cE, ra, cE, None, rc * cE, rc]              # aE aO bE bO cE cO

    u_acc = jnp.zeros((bh, Wo, bc), jnp.float32)    # branch1 depthwise accumulator
    v_acc = jnp.zeros((bh, Wo, mid), jnp.float32)   # main-branch depthwise accumulator

    for di in range(3):
        for phase in range(2):                      # 0 = E columns, 1 = O columns
            s = 2 * di + phase
            base = s * S
            x1 = t_ref[0, :, :, base:base + bc]                  # (bh, Wo+1, bc)
            x2 = t_ref[0, :, :, base + bc:base + S]              # (bh, Wo+1, S-bc)
            m = jnp.dot(x2.reshape(bh * (Wo + 1), S - bc), we_ref[...],
                        preferred_element_type=jnp.float32) + be_ref[...]
            m = jnp.maximum(m, 0.0).reshape(bh, Wo + 1, mid)
            if slot_mask[s] is not None:
                m = m * slot_mask[s]
            pairs = ((0, 0), (2, 1)) if phase == 0 else ((1, 0),)
            for dj, off in pairs:
                t = di * 3 + dj
                u_acc = u_acc + x1[:, off:off + Wo, :] * w1_ref[t]
                v_acc = v_acc + m[:, off:off + Wo, :] * wm_ref[t]

    out = (jnp.dot(u_acc.reshape(P, bc), wu_ref[...], preferred_element_type=jnp.float32)
           + jnp.dot(v_acc.reshape(P, mid), wv_ref[...], preferred_element_type=jnp.float32)
           + ob_ref[...])
    out = jnp.maximum(out, 0.0)
    o_ref[0] = out.reshape(bh, Wo, Cout).astype(o_ref.dtype)


def _stage2_call(taps, we, be, w1, wm, wu, wv, ob, *, bh, H1, W1, S, bc, mid, Cout):
    N, Hp, W2p1, C6 = taps.shape
    W2 = W2p1 - 1
    kernel = functools.partial(_stage2_kernel, bh=bh, Wo=W2, S=S, bc=bc, mid=mid,
                               H1=H1, W1=W1, Cout=Cout)
    cmap = lambda n, i: (n, i, 0, 0)
    z2 = lambda n, i: (0, 0)
    z3 = lambda n, i: (0, 0, 0)
    return pl.pallas_call(
        kernel,
        grid=(N, Hp // bh),
        in_specs=[
            pl.BlockSpec((1, bh, W2p1, C6), cmap),
            pl.BlockSpec(we.shape, z2),
            pl.BlockSpec(be.shape, z2),
            pl.BlockSpec(w1.shape, z3),
            pl.BlockSpec(wm.shape, z3),
            pl.BlockSpec(wu.shape, z2),
            pl.BlockSpec(wv.shape, z2),
            pl.BlockSpec(ob.shape, z2),
        ],
        out_specs=pl.BlockSpec((1, bh, W2, Cout), cmap),
        out_shape=jax.ShapeDtypeStruct((N, Hp, W2, Cout), jnp.float32),
        compiler_params=_cparams(),
    )(taps, we, be, w1, wm, wu, wv, ob)


# --------------------------------------------------------------------------
# Stem forward (mirrors the PyTorch module; NCHW in / NCHW out)
# --------------------------------------------------------------------------
def stem_forward(x_nchw, p, branch_channels):
    x = jnp.transpose(x_nchw, (0, 2, 3, 1)).astype(jnp.float32)   # NCHW -> NHWC
    N, H, W, Cin = x.shape
    S = p["conv1_w"].shape[-1]          # stem_channels
    bc = branch_channels
    mid = p["expand_w"].shape[1]
    inc = p["b1pw_w"].shape[1]
    lin = p["linear_w"].shape[1]
    Cout = inc + lin

    H1, W1 = -(-H // 2), -(-W // 2)     # ceil: conv1 output size
    H2, W2 = -(-H1 // 2), -(-W1 // 2)   # ceil: final output size

    # ----- conv1: 3x3 s2 + BN + ReLU -----
    bh1 = _pick_bh(H1, W1)
    H1p = -(-H1 // bh1) * bh1
    taps1 = _build_taps(x, H1p, W1)                                  # (N,H1p,W1+1,6*Cin)
    w1mat = (p["conv1_w"] * p["conv1_s"]).reshape(9 * Cin, S)        # fold BN scale
    y = _conv1_call(taps1, w1mat, p["conv1_b"].reshape(1, S), bh=bh1, Cout=S)
    y = y[:, :H1]                                                    # drop row-tile tail

    # ----- fused stage 2 -----
    bh2 = _pick_bh(H2, W2)
    H2p = -(-H2 // bh2) * bh2
    taps2 = _build_taps(y, H2p, W2)                                  # (N,H2p,W2+1,6*S)

    we = p["expand_w"] * p["expand_s"][None, :]                      # (bc, mid)
    be = p["expand_b"].reshape(1, mid)
    w1dw = p["b1dw_w"].reshape(9, 1, bc)
    wmdw = p["dw_w"].reshape(9, 1, mid)

    # branch1: dw-BN and pw-BN folded into the pointwise weight / bias
    wpw_s = p["b1pw_w"] * p["b1pw_s"][None, :]
    wu_eff = p["b1dw_s"][:, None] * wpw_s                            # (bc, inc)
    bias_u = p["b1dw_b"] @ wpw_s + p["b1pw_b"]                       # (inc,)
    # main: dw-BN and linear-BN folded into the linear weight / bias
    wlin_s = p["linear_w"] * p["linear_s"][None, :]
    wv_eff = p["dw_s"][:, None] * wlin_s                             # (mid, lin)
    bias_v = p["dw_b"] @ wlin_s + p["linear_b"]                      # (lin,)

    # concat([branch1, main]) + channel_shuffle(groups=2) as a static column permutation
    half = Cout // 2
    perm = jnp.array([(o % 2) * half + o // 2 for o in range(Cout)], dtype=jnp.int32)
    wu = jnp.concatenate([wu_eff, jnp.zeros((bc, lin), jnp.float32)], axis=1)[:, perm]
    wv = jnp.concatenate([jnp.zeros((mid, inc), jnp.float32), wv_eff], axis=1)[:, perm]
    ob = jnp.concatenate([bias_u, bias_v])[perm].reshape(1, Cout)

    out = _stage2_call(taps2, we, be, w1dw, wmdw, wu, wv, ob,
                       bh=bh2, H1=H1, W1=W1, S=S, bc=bc, mid=mid, Cout=Cout)
    out = out[:, :H2]
    return jnp.transpose(out, (0, 3, 1, 2))                          # back to NCHW


# --------------------------------------------------------------------------
# Deterministic parameter init (shapes per Stem.__init__), BN folded to (s, b)
# --------------------------------------------------------------------------
def init_params(key, in_channels, stem_channels, out_channels, expand_ratio):
    mid = int(round(stem_channels * expand_ratio))
    bc = stem_channels // 2
    if stem_channels == out_channels:
        inc, lin_out = out_channels - bc, bc
    else:
        inc, lin_out = out_channels - stem_channels, stem_channels

    keys = jax.random.split(key, 12)

    def w(k, shape):
        return 0.2 * jax.random.normal(k, shape, jnp.float32)

    def bn(k, c):
        k1, k2, k3, k4 = jax.random.split(k, 4)
        gamma = 1.0 + 0.1 * jax.random.normal(k1, (c,), jnp.float32)
        beta = 0.1 * jax.random.normal(k2, (c,), jnp.float32)
        mean = 0.1 * jax.random.normal(k3, (c,), jnp.float32)
        var = 1.0 + 0.1 * jax.random.uniform(k4, (c,), jnp.float32)
        s = gamma * jax.lax.rsqrt(var + 1e-5)
        return s, beta - mean * s

    p = {}
    p["conv1_w"] = w(keys[0], (3, 3, in_channels, stem_channels))   # HWIO
    p["conv1_s"], p["conv1_b"] = bn(keys[1], stem_channels)
    p["b1dw_w"] = w(keys[2], (3, 3, bc))                            # depthwise HWC
    p["b1dw_s"], p["b1dw_b"] = bn(keys[3], bc)
    p["b1pw_w"] = w(keys[4], (bc, inc))                             # 1x1 as (Cin, Cout)
    p["b1pw_s"], p["b1pw_b"] = bn(keys[5], inc)
    p["expand_w"] = w(keys[6], (bc, mid))
    p["expand_s"], p["expand_b"] = bn(keys[7], mid)
    p["dw_w"] = w(keys[8], (3, 3, mid))
    p["dw_s"], p["dw_b"] = bn(keys[9], mid)
    p["linear_w"] = w(keys[10], (mid, lin_out))
    p["linear_s"], p["linear_b"] = bn(keys[11], lin_out)
    return p, bc


# --------------------------------------------------------------------------
# Pure-JAX reference (lax.conv) for verification
# --------------------------------------------------------------------------
def ref_forward(x_nchw, p, bc):
    x = jnp.transpose(x_nchw, (0, 2, 3, 1))

    def conv(x, w_hwio, s, b, stride, pad, groups, relu):
        y = jax.lax.conv_general_dilated(
            x, w_hwio, (stride, stride), [(pad, pad), (pad, pad)],
            dimension_numbers=("NHWC", "HWIO", "NHWC"),
            feature_group_count=groups)
        y = y * s + b
        return jnp.maximum(y, 0.0) if relu else y

    y = conv(x, p["conv1_w"], p["conv1_s"], p["conv1_b"], 2, 1, 1, True)
    x1, x2 = y[..., :bc], y[..., bc:]
    ew = p["expand_w"]
    x2 = conv(x2, ew.reshape(1, 1, *ew.shape), p["expand_s"], p["expand_b"], 1, 0, 1, True)
    Cm = x2.shape[-1]
    x2 = conv(x2, p["dw_w"].reshape(3, 3, 1, Cm), p["dw_s"], p["dw_b"], 2, 1, Cm, False)
    lw = p["linear_w"]
    x2 = conv(x2, lw.reshape(1, 1, *lw.shape), p["linear_s"], p["linear_b"], 1, 0, 1, True)
    b1 = conv(x1, p["b1dw_w"].reshape(3, 3, 1, bc), p["b1dw_s"], p["b1dw_b"], 2, 1, bc, False)
    pw = p["b1pw_w"]
    b1 = conv(b1, pw.reshape(1, 1, *pw.shape), p["b1pw_s"], p["b1pw_b"], 1, 0, 1, True)
    out = jnp.concatenate([b1, x2], axis=-1)
    N, H, W, C = out.shape
    out = out.reshape(N, H, W, 2, C // 2).transpose(0, 1, 2, 4, 3).reshape(N, H, W, C)
    return jnp.transpose(out, (0, 3, 1, 2))


if __name__ == "__main__":
    cfg = dict(in_channels=3, stem_channels=32, out_channels=32, expand_ratio=1.0)
    key = jax.random.PRNGKey(0)
    kx, kp = jax.random.split(key)
    params, bc = init_params(kp, **cfg)

    fwd = jax.jit(functools.partial(stem_forward, branch_channels=bc))

    # even spatial size
    x = jax.random.normal(kx, (2, cfg["in_channels"], 16, 16), jnp.float32)  # NCHW
    out = fwd(x, params)
    jax.block_until_ready(out)
    assert out.shape == (2, cfg["out_channels"], 4, 4), out.shape
    ref = ref_forward(x, params, bc)
    err = float(jnp.max(jnp.abs(out - ref)))
    assert jnp.allclose(out, ref, atol=2e-4, rtol=2e-4), err

    # odd spatial size (exercises ceil() output sizing and the padding masks)
    x_odd = jax.random.normal(kx, (1, cfg["in_channels"], 14, 13), jnp.float32)
    out_odd = fwd(x_odd, params)
    jax.block_until_ready(out_odd)
    ref_odd = ref_forward(x_odd, params, bc)
    assert out_odd.shape == ref_odd.shape == (1, cfg["out_channels"], 4, 4), out_odd.shape
    err_odd = float(jnp.max(jnp.abs(out_odd - ref_odd)))
    assert jnp.allclose(out_odd, ref_odd, atol=2e-4, rtol=2e-4), err_odd

    print("KERNEL_OK")
</pallas_src>

<mosaic_0001>
module attributes {stable_mosaic.version = 11 : i64} {
  func.func @_conv1_kernel(%arg0: i32, %arg1: i32, %arg2: memref<1x8x9x18xf32, #tpu.memory_space<vmem>>, %arg3: memref<27x32xf32, #tpu.memory_space<vmem>>, %arg4: memref<1x32xf32, #tpu.memory_space<vmem>>, %arg5: memref<1x8x8x32xf32, #tpu.memory_space<vmem>>) attributes {dimension_semantics = [#tpu.dimension_semantics<parallel>, #tpu.dimension_semantics<parallel>], iteration_bounds = array<i64: 2, 1>, scalar_prefetch = 0 : i64, scratch_operands = 0 : i64, tpu.core_type = #tpu.core_type<tc>, window_params = [{transform_indices = @transform_0, window_bounds = array<i64: 1, 8, 9, 18>}, {pipeline_mode = #tpu.pipeline_mode<synchronous>, transform_indices = @transform_1, window_bounds = array<i64: 27, 32>}, {pipeline_mode = #tpu.pipeline_mode<synchronous>, transform_indices = @transform_2, window_bounds = array<i64: 1, 32>}, {transform_indices = @transform_3, window_bounds = array<i64: 1, 8, 8, 32>}]} {
    %cst = arith.constant 0.000000e+00 : f32
    %0 = vector.broadcast %cst : f32 to vector<64x32xf32>
    %c0 = arith.constant 0 : index
    %c0_0 = arith.constant 0 : index
    %c0_1 = arith.constant 0 : index
    %c0_2 = arith.constant 0 : index
    %1 = vector.load %arg2[%c0, %c0_0, %c0_1, %c0_2] : memref<1x8x9x18xf32, #tpu.memory_space<vmem>>, vector<1x8x9x3xf32>
    %2 = vector.shape_cast %1 : vector<1x8x9x3xf32> to vector<8x9x3xf32>
    %c0_3 = arith.constant 0 : index
    %c0_4 = arith.constant 0 : index
    %c0_5 = arith.constant 0 : index
    %c3 = arith.constant 3 : index
    %3 = vector.load %arg2[%c0_3, %c0_4, %c0_5, %c3] : memref<1x8x9x18xf32, #tpu.memory_space<vmem>>, vector<1x8x9x3xf32>
    %4 = vector.shape_cast %3 : vector<1x8x9x3xf32> to vector<8x9x3xf32>
    %5 = vector.extract_strided_slice %2 {offsets = [0, 0, 0], sizes = [8, 8, 3], strides = [1, 1, 1]} : vector<8x9x3xf32> to vector<8x8x3xf32>
    %6 = vector.extract_strided_slice %4 {offsets = [0, 0, 0], sizes = [8, 8, 3], strides = [1, 1, 1]} : vector<8x9x3xf32> to vector<8x8x3xf32>
    %7 = vector.extract_strided_slice %2 {offsets = [0, 1, 0], sizes = [8, 8, 3], strides = [1, 1, 1]} : vector<8x9x3xf32> to vector<8x8x3xf32>
    %8 = vector.shape_cast %5 : vector<8x8x3xf32> to vector<64x3xf32>
    %c0_6 = arith.constant 0 : index
    %c0_7 = arith.constant 0 : index
    %9 = vector.load %arg3[%c0_6, %c0_7] : memref<27x32xf32, #tpu.memory_space<vmem>>, vector<3x32xf32>
    %cst_8 = arith.constant dense<0.000000e+00> : vector<64x32xf32>
    %10 = tpu.matmul %8, %9, %cst_8 {dimension_numbers = #tpu.dot_dimension_numbers<[1], [0], [0], [1], [0, 0, 1, 1], [], []>} : vector<64x3xf32>, vector<3x32xf32>, vector<64x32xf32> -> vector<64x32xf32>
    %11 = arith.addf %0, %10 : vector<64x32xf32>
    %12 = vector.shape_cast %6 : vector<8x8x3xf32> to vector<64x3xf32>
    %c3_9 = arith.constant 3 : index
    %c0_10 = arith.constant 0 : index
    %13 = vector.load %arg3[%c3_9, %c0_10] : memref<27x32xf32, #tpu.memory_space<vmem>>, vector<3x32xf32>
    %cst_11 = arith.constant dense<0.000000e+00> : vector<64x32xf32>
    %14 = tpu.matmul %12, %13, %cst_11 {dimension_numbers = #tpu.dot_dimension_numbers<[1], [0], [0], [1], [0, 0, 1, 1], [], []>} : vector<64x3xf32>, vector<3x32xf32>, vector<64x32xf32> -> vector<64x32xf32>
    %15 = arith.addf %11, %14 : vector<64x32xf32>
    %16 = vector.shape_cast %7 : vector<8x8x3xf32> to vector<64x3xf32>
    %c6 = arith.constant 6 : index
    %c0_12 = arith.constant 0 : index
    %17 = vector.load %arg3[%c6, %c0_12] : memref<27x32xf32, #tpu.memory_space<vmem>>, vector<3x32xf32>
    %cst_13 = arith.constant dense<0.000000e+00> : vector<64x32xf32>
    %18 = tpu.matmul %16, %17, %cst_13 {dimension_numbers = #tpu.dot_dimension_numbers<[1], [0], [0], [1], [0, 0, 1, 1], [], []>} : vector<64x3xf32>, vector<3x32xf32>, vector<64x32xf32> -> vector<64x32xf32>
    %19 = arith.addf %15, %18 : vector<64x32xf32>
    %c0_14 = arith.constant 0 : index
    %c0_15 = arith.constant 0 : index
    %c0_16 = arith.constant 0 : index
    %c6_17 = arith.constant 6 : index
    %20 = vector.load %arg2[%c0_14, %c0_15, %c0_16, %c6_17] : memref<1x8x9x18xf32, #tpu.memory_space<vmem>>, vector<1x8x9x3xf32>
    %21 = vector.shape_cast %20 : vector<1x8x9x3xf32> to vector<8x9x3xf32>
    %c0_18 = arith.constant 0 : index
    %c0_19 = arith.constant 0 : index
    %c0_20 = arith.constant 0 : index
    %c9 = arith.constant 9 : index
    %22 = vector.load %arg2[%c0_18, %c0_19, %c0_20, %c9] : memref<1x8x9x18xf32, #tpu.memory_space<vmem>>, vector<1x8x9x3xf32>
    %23 = vector.shape_cast %22 : vector<1x8x9x3xf32> to vector<8x9x3xf32>
    %24 = vector.extract_strided_slice %21 {offsets = [0, 0, 0], sizes = [8, 8, 3], strides = [1, 1, 1]} : vector<8x9x3xf32> to vector<8x8x3xf32>
    %25 = vector.extract_strided_slice %23 {offsets = [0, 0, 0], sizes = [8, 8, 3], strides = [1, 1, 1]} : vector<8x9x3xf32> to vector<8x8x3xf32>
    %26 = vector.extract_strided_slice %21 {offsets = [0, 1, 0], sizes = [8, 8, 3], strides = [1, 1, 1]} : vector<8x9x3xf32> to vector<8x8x3xf32>
    %27 = vector.shape_cast %24 : vector<8x8x3xf32> to vector<64x3xf32>
    %c9_21 = arith.constant 9 : index
    %c0_22 = arith.constant 0 : index
    %28 = vector.load %arg3[%c9_21, %c0_22] : memref<27x32xf32, #tpu.memory_space<vmem>>, vector<3x32xf32>
    %cst_23 = arith.constant dense<0.000000e+00> : vector<64x32xf32>
    %29 = tpu.matmul %27, %28, %cst_23 {dimension_numbers = #tpu.dot_dimension_numbers<[1], [0], [0], [1], [0, 0, 1, 1], [], []>} : vector<64x3xf32>, vector<3x32xf32>, vector<64x32xf32> -> vector<64x32xf32>
    %30 = arith.addf %19, %29 : vector<64x32xf32>
    %31 = vector.shape_cast %25 : vector<8x8x3xf32> to vector<64x3xf32>
    %c12 = arith.constant 12 : index
    %c0_24 = arith.constant 0 : index
    %32 = vector.load %arg3[%c12, %c0_24] : memref<27x32xf32, #tpu.memory_space<vmem>>, vector<3x32xf32>
    %cst_25 = arith.constant dense<0.000000e+00> : vector<64x32xf32>
    %33 = tpu.matmul %31, %32, %cst_25 {dimension_numbers = #tpu.dot_dimension_numbers<[1], [0], [0], [1], [0, 0, 1, 1], [], []>} : vector<64x3xf32>, vector<3x32xf32>, vector<64x32xf32> -> vector<64x32xf32>
    %34 = arith.addf %30, %33 : vector<64x32xf32>
    %35 = vector.shape_cast %26 : vector<8x8x3xf32> to vector<64x3xf32>
    %c15 = arith.constant 15 : index
    %c0_26 = arith.constant 0 : index
    %36 = vector.load %arg3[%c15, %c0_26] : memref<27x32xf32, #tpu.memory_space<vmem>>, vector<3x32xf32>
    %cst_27 = arith.constant dense<0.000000e+00> : vector<64x32xf32>
    %37 = tpu.matmul %35, %36, %cst_27 {dimension_numbers = #tpu.dot_dimension_numbers<[1], [0], [0], [1], [0, 0, 1, 1], [], []>} : vector<64x3xf32>, vector<3x32xf32>, vector<64x32xf32> -> vector<64x32xf32>
    %38 = arith.addf %34, %37 : vector<64x32xf32>
    %c0_28 = arith.constant 0 : index
    %c0_29 = arith.constant 0 : index
    %c0_30 = arith.constant 0 : index
    %c12_31 = arith.constant 12 : index
    %39 = vector.load %arg2[%c0_28, %c0_29, %c0_30, %c12_31] : memref<1x8x9x18xf32, #tpu.memory_space<vmem>>, vector<1x8x9x3xf32>
    %40 = vector.shape_cast %39 : vector<1x8x9x3xf32> to vector<8x9x3xf32>
    %c0_32 = arith.constant 0 : index
    %c0_33 = arith.constant 0 : index
    %c0_34 = arith.constant 0 : index
    %c15_35 = arith.constant 15 : index
    %41 = vector.load %arg2[%c0_32, %c0_33, %c0_34, %c15_35] : memref<1x8x9x18xf32, #tpu.memory_space<vmem>>, vector<1x8x9x3xf32>
    %42 = vector.shape_cast %41 : vector<1x8x9x3xf32> to vector<8x9x3xf32>
    %43 = vector.extract_strided_slice %40 {offsets = [0, 0, 0], sizes = [8, 8, 3], strides = [1, 1, 1]} : vector<8x9x3xf32> to vector<8x8x3xf32>
    %44 = vector.extract_strided_slice %42 {offsets = [0, 0, 0], sizes = [8, 8, 3], strides = [1, 1, 1]} : vector<8x9x3xf32> to vector<8x8x3xf32>
    %45 = vector.extract_strided_slice %40 {offsets = [0, 1, 0], sizes = [8, 8, 3], strides = [1, 1, 1]} : vector<8x9x3xf32> to vector<8x8x3xf32>
    %46 = vector.shape_cast %43 : vector<8x8x3xf32> to vector<64x3xf32>
    %c18 = arith.constant 18 : index
    %c0_36 = arith.constant 0 : index
    %47 = vector.load %arg3[%c18, %c0_36] : memref<27x32xf32, #tpu.memory_space<vmem>>, vector<3x32xf32>
    %cst_37 = arith.constant dense<0.000000e+00> : vector<64x32xf32>
    %48 = tpu.matmul %46, %47, %cst_37 {dimension_numbers = #tpu.dot_dimension_numbers<[1], [0], [0], [1], [0, 0, 1, 1], [], []>} : vector<64x3xf32>, vector<3x32xf32>, vector<64x32xf32> -> vector<64x32xf32>
    %49 = arith.addf %38, %48 : vector<64x32xf32>
    %50 = vector.shape_cast %44 : vector<8x8x3xf32> to vector<64x3xf32>
    %c21 = arith.constant 21 : index
    %c0_38 = arith.constant 0 : index
    %51 = vector.load %arg3[%c21, %c0_38] : memref<27x32xf32, #tpu.memory_space<vmem>>, vector<3x32xf32>
    %cst_39 = arith.constant dense<0.000000e+00> : vector<64x32xf32>
    %52 = tpu.matmul %50, %51, %cst_39 {dimension_numbers = #tpu.dot_dimension_numbers<[1], [0], [0], [1], [0, 0, 1, 1], [], []>} : vector<64x3xf32>, vector<3x32xf32>, vector<64x32xf32> -> vector<64x32xf32>
    %53 = arith.addf %49, %52 : vector<64x32xf32>
    %54 = vector.shape_cast %45 : vector<8x8x3xf32> to vector<64x3xf32>
    %c24 = arith.constant 24 : index
    %c0_40 = arith.constant 0 : index
    %55 = vector.load %arg3[%c24, %c0_40] : memref<27x32xf32, #tpu.memory_space<vmem>>, vector<3x32xf32>
    %cst_41 = arith.constant dense<0.000000e+00> : vector<64x32xf32>
    %56 = tpu.matmul %54, %55, %cst_41 {dimension_numbers = #tpu.dot_dimension_numbers<[1], [0], [0], [1], [0, 0, 1, 1], [], []>} : vector<64x3xf32>, vector<3x32xf32>, vector<64x32xf32> -> vector<64x32xf32>
    %57 = arith.addf %53, %56 : vector<64x32xf32>
    %c0_42 = arith.constant 0 : index
    %c0_43 = arith.constant 0 : index
    %58 = vector.load %arg4[%c0_42, %c0_43] : memref<1x32xf32, #tpu.memory_space<vmem>>, vector<1x32xf32>
    %59 = vector.broadcast %58 : vector<1x32xf32> to vector<64x32xf32>
    %60 = arith.addf %57, %59 : vector<64x32xf32>
    %cst_44 = arith.constant 0.000000e+00 : f32
    %61 = vector.broadcast %cst_44 : f32 to vector<64x32xf32>
    %62 = arith.maximumf %60, %61 : vector<64x32xf32>
    %63 = vector.shape_cast %62 : vector<64x32xf32> to vector<8x8x32xf32>
    %c0_45 = arith.constant 0 : index
    %c0_46 = arith.constant 0 : index
    %c0_47 = arith.constant 0 : index
    %c0_48 = arith.constant 0 : index
    %64 = vector.load %arg5[%c0_45, %c0_46, %c0_47, %c0_48] : memref<1x8x8x32xf32, #tpu.memory_space<vmem>>, vector<1x8x8x32xf32>
    %65 = vector.shape_cast %64 : vector<1x8x8x32xf32> to vector<8x8x32xf32>
    %66 = vector.shape_cast %63 : vector<8x8x32xf32> to vector<1x8x8x32xf32>
    tpu.vector_store %arg5[%c0_45, %c0_46, %c0_47, %c0_48], %66 {strides = array<i32>} : memref<1x8x8x32xf32, #tpu.memory_space<vmem>>, vector<1x8x8x32xf32>,
    return
  }
  func.func @transform_0(%arg0: i32, %arg1: i32) -> (i32, i32, i32, i32) {
    %c0_i32 = arith.constant 0 : i32
    %c0_i32_0 = arith.constant 0 : i32
    %c0_i32_1 = arith.constant 0 : i32
    return %arg0, %arg1, %c0_i32, %c0_i32_0 : i32, i32, i32, i32
  }
  func.func @transform_1(%arg0: i32, %arg1: i32) -> (i32, i32) {
    %c0_i32 = arith.constant 0 : i32
    %c0_i32_0 = arith.constant 0 : i32
    %c0_i32_1 = arith.constant 0 : i32
    return %c0_i32, %c0_i32_0 : i32, i32
  }
  func.func @transform_2(%arg0: i32, %arg1: i32) -> (i32, i32) {
    %c0_i32 = arith.constant 0 : i32
    %c0_i32_0 = arith.constant 0 : i32
    %c0_i32_1 = arith.constant 0 : i32
    return %c0_i32, %c0_i32_0 : i32, i32
  }
  func.func @transform_3(%arg0: i32, %arg1: i32) -> (i32, i32, i32, i32) {
    %c0_i32 = arith.constant 0 : i32
    %c0_i32_0 = arith.constant 0 : i32
    %c0_i32_1 = arith.constant 0 : i32
    return %arg0, %arg1, %c0_i32, %c0_i32_0 : i32, i32, i32, i32
  }
}

module attributes {stable_mosaic.version = 11 : i64} {
  func.func @_stage2_kernel(%arg0: i32, %arg1: i32, %arg2: memref<1x4x5x192xf32, #tpu.memory_space<vmem>>, %arg3: memref<16x32xf32, #tpu.memory_space<vmem>>, %arg4: memref<1x32xf32, #tpu.memory_space<vmem>>, %arg5: memref<9x1x16xf32, #tpu.memory_space<vmem>>, %arg6: memref<9x1x32xf32, #tpu.memory_space<vmem>>, %arg7: memref<16x32xf32, #tpu.memory_space<vmem>>, %arg8: memref<32x32xf32, #tpu.memory_space<vmem>>, %arg9: memref<1x32xf32, #tpu.memory_space<vmem>>, %arg10: memref<1x4x4x32xf32, #tpu.memory_space<vmem>>) attributes {dimension_semantics = [#tpu.dimension_semantics<parallel>, #tpu.dimension_semantics<parallel>], iteration_bounds = array<i64: 2, 1>, scalar_prefetch = 0 : i64, scratch_operands = 0 : i64, tpu.core_type = #tpu.core_type<tc>, window_params = [{transform_indices = @transform_0, window_bounds = array<i64: 1, 4, 5, 192>}, {pipeline_mode = #tpu.pipeline_mode<synchronous>, transform_indices = @transform_1, window_bounds = array<i64: 16, 32>}, {pipeline_mode = #tpu.pipeline_mode<synchronous>, transform_indices = @transform_2, window_bounds = array<i64: 1, 32>}, {pipeline_mode = #tpu.pipeline_mode<synchronous>, transform_indices = @transform_3, window_bounds = array<i64: 9, 1, 16>}, {pipeline_mode = #tpu.pipeline_mode<synchronous>, transform_indices = @transform_4, window_bounds = array<i64: 9, 1, 32>}, {pipeline_mode = #tpu.pipeline_mode<synchronous>, transform_indices = @transform_5, window_bounds = array<i64: 16, 32>}, {pipeline_mode = #tpu.pipeline_mode<synchronous>, transform_indices = @transform_6, window_bounds = array<i64: 32, 32>}, {pipeline_mode = #tpu.pipeline_mode<synchronous>, transform_indices = @transform_7, window_bounds = array<i64: 1, 32>}, {transform_indices = @transform_8, window_bounds = array<i64: 1, 4, 4, 32>}]} {
    %c4_i32 = arith.constant 4 : i32
    %0 = arith.muli %arg1, %c4_i32 : i32
    %1 = tpu.iota {dimensions = array<i32: 0>} : vector<4x1x1xi32>
    %2 = vector.broadcast %0 : i32 to vector<4x1x1xi32>
    %3 = arith.addi %2, %1 : vector<4x1x1xi32>
    %4 = tpu.iota {dimensions = array<i32: 1>} : vector<1x5x1xi32>
    %c1_i32 = arith.constant 1 : i32
    %5 = vector.broadcast %c1_i32 : i32 to vector<4x1x1xi32>
    %6 = arith.cmpi sge, %3, %5 : vector<4x1x1xi32>
    %7 = arith.extui %6 : vector<4x1x1xi1> to vector<4x1x1xi32>
    %8 = arith.sitofp %7 : vector<4x1x1xi32> to vector<4x1x1xf32>
    %c2_i32 = arith.constant 2 : i32
    %9 = vector.broadcast %c2_i32 : i32 to vector<4x1x1xi32>
    %10 = arith.muli %9, %3 : vector<4x1x1xi32>
    %c1_i32_0 = arith.constant 1 : i32
    %11 = vector.broadcast %c1_i32_0 : i32 to vector<4x1x1xi32>
    %12 = arith.addi %10, %11 : vector<4x1x1xi32>
    %c7_i32 = arith.constant 7 : i32
    %13 = vector.broadcast %c7_i32 : i32 to vector<4x1x1xi32>
    %14 = arith.cmpi sle, %12, %13 : vector<4x1x1xi32>
    %15 = arith.extui %14 : vector<4x1x1xi1> to vector<4x1x1xi32>
    %16 = arith.sitofp %15 : vector<4x1x1xi32> to vector<4x1x1xf32>
    %c1_i32_1 = arith.constant 1 : i32
    %17 = vector.broadcast %c1_i32_1 : i32 to vector<1x5x1xi32>
    %18 = arith.cmpi sge, %4, %17 : vector<1x5x1xi32>
    %c2_i32_2 = arith.constant 2 : i32
    %19 = vector.broadcast %c2_i32_2 : i32 to vector<1x5x1xi32>
    %20 = arith.muli %19, %4 : vector<1x5x1xi32>
    %c1_i32_3 = arith.constant 1 : i32
    %21 = vector.broadcast %c1_i32_3 : i32 to vector<1x5x1xi32>
    %22 = arith.subi %20, %21 : vector<1x5x1xi32>
    %c7_i32_4 = arith.constant 7 : i32
    %23 = vector.broadcast %c7_i32_4 : i32 to vector<1x5x1xi32>
    %24 = arith.cmpi sle, %22, %23 : vector<1x5x1xi32>
    %25 = arith.andi %18, %24 : vector<1x5x1xi1>
    %26 = arith.extui %25 : vector<1x5x1xi1> to vector<1x5x1xi32>
    %27 = arith.sitofp %26 : vector<1x5x1xi32> to vector<1x5x1xf32>
    %28 = vector.broadcast %8 : vector<4x1x1xf32> to vector<4x5x1xf32>
    %29 = vector.broadcast %27 : vector<1x5x1xf32> to vector<4x5x1xf32>
    %30 = arith.mulf %28, %29 : vector<4x5x1xf32>
    %31 = vector.broadcast %16 : vector<4x1x1xf32> to vector<4x5x1xf32>
    %32 = vector.broadcast %27 : vector<1x5x1xf32> to vector<4x5x1xf32>
    %33 = arith.mulf %31, %32 : vector<4x5x1xf32>
    %cst = arith.constant 0.000000e+00 : f32
    %34 = vector.broadcast %cst : f32 to vector<4x4x16xf32>
    %cst_5 = arith.constant 0.000000e+00 : f32
    %35 = vector.broadcast %cst_5 : f32 to vector<4x4x32xf32>
    %c0 = arith.constant 0 : index
    %c0_6 = arith.constant 0 : index
    %c0_7 = arith.constant 0 : index
    %c0_8 = arith.constant 0 : index
    %36 = vector.load %arg2[%c0, %c0_6, %c0_7, %c0_8] : memref<1x4x5x192xf32, #tpu.memory_space<vmem>>, vector<1x4x5x16xf32>
    %37 = vector.shape_cast %36 : vector<1x4x5x16xf32> to vector<4x5x16xf32>
    %c0_9 = arith.constant 0 : index
    %c0_10 = arith.constant 0 : index
    %c0_11 = arith.constant 0 : index
    %c16 = arith.constant 16 : index
    %38 = vector.load %arg2[%c0_9, %c0_10, %c0_11, %c16] : memref<1x4x5x192xf32, #tpu.memory_space<vmem>>, vector<1x4x5x16xf32>
    %39 = vector.shape_cast %38 : vector<1x4x5x16xf32> to vector<4x5x16xf32>
    %40 = vector.shape_cast %39 : vector<4x5x16xf32> to vector<20x16xf32>
    %c0_12 = arith.constant 0 : index
    %c0_13 = arith.constant 0 : index
    %41 = vector.load %arg3[%c0_12, %c0_13] : memref<16x32xf32, #tpu.memory_space<vmem>>, vector<16x32xf32>
    %cst_14 = arith.constant dense<0.000000e+00> : vector<20x32xf32>
    %42 = tpu.matmul %40, %41, %cst_14 {dimension_numbers = #tpu.dot_dimension_numbers<[1], [0], [0], [1], [0, 0, 1, 1], [], []>} : vector<20x16xf32>, vector<16x32xf32>, vector<20x32xf32> -> vector<20x32xf32>
    %c0_15 = arith.constant 0 : index
    %c0_16 = arith.constant 0 : index
    %43 = vector.load %arg4[%c0_15, %c0_16] : memref<1x32xf32, #tpu.memory_space<vmem>>, vector<1x32xf32>
    %44 = vector.broadcast %43 : vector<1x32xf32> to vector<20x32xf32>
    %45 = arith.addf %42, %44 : vector<20x32xf32>
    %cst_17 = arith.constant 0.000000e+00 : f32
    %46 = vector.broadcast %cst_17 : f32 to vector<20x32xf32>
    %47 = arith.maximumf %45, %46 : vector<20x32xf32>
    %48 = vector.shape_cast %47 : vector<20x32xf32> to vector<4x5x32xf32>
    %49 = vector.broadcast %30 : vector<4x5x1xf32> to vector<4x5x32xf32>
    %50 = arith.mulf %48, %49 : vector<4x5x32xf32>
    %51 = vector.extract_strided_slice %37 {offsets = [0, 0, 0], sizes = [4, 4, 16], strides = [1, 1, 1]} : vector<4x5x16xf32> to vector<4x4x16xf32>
    %c0_18 = arith.constant 0 : index
    %c0_19 = arith.constant 0 : index
    %c0_20 = arith.constant 0 : index
    %52 = vector.load %arg5[%c0_18, %c0_19, %c0_20] : memref<9x1x16xf32, #tpu.memory_space<vmem>>, vector<1x1x16xf32>
    %53 = vector.shape_cast %52 : vector<1x1x16xf32> to vector<1x16xf32>
    %54 = vector.shape_cast %53 : vector<1x16xf32> to vector<1x1x16xf32>
    %55 = vector.broadcast %54 : vector<1x1x16xf32> to vector<4x4x16xf32>
    %56 = arith.mulf %51, %55 : vector<4x4x16xf32>
    %57 = arith.addf %34, %56 : vector<4x4x16xf32>
    %58 = vector.extract_strided_slice %50 {offsets = [0, 0, 0], sizes = [4, 4, 32], strides = [1, 1, 1]} : vector<4x5x32xf32> to vector<4x4x32xf32>
    %c0_21 = arith.constant 0 : index
    %c0_22 = arith.constant 0 : index
    %c0_23 = arith.constant 0 : index
    %59 = vector.load %arg6[%c0_21, %c0_22, %c0_23] : memref<9x1x32xf32, #tpu.memory_space<vmem>>, vector<1x1x32xf32>
    %60 = vector.shape_cast %59 : vector<1x1x32xf32> to vector<1x32xf32>
    %61 = vector.shape_cast %60 : vector<1x32xf32> to vector<1x1x32xf32>
    %62 = vector.broadcast %61 : vector<1x1x32xf32> to vector<4x4x32xf32>
    %63 = arith.mulf %58, %62 : vector<4x4x32xf32>
    %64 = arith.addf %35, %63 : vector<4x4x32xf32>
    %65 = vector.extract_strided_slice %37 {offsets = [0, 1, 0], sizes = [4, 4, 16], strides = [1, 1, 1]} : vector<4x5x16xf32> to vector<4x4x16xf32>
    %c2 = arith.constant 2 : index
    %c0_24 = arith.constant 0 : index
    %c0_25 = arith.constant 0 : index
    %66 = vector.load %arg5[%c2, %c0_24, %c0_25] : memref<9x1x16xf32, #tpu.memory_space<vmem>>, vector<1x1x16xf32>
    %67 = vector.shape_cast %66 : vector<1x1x16xf32> to vector<1x16xf32>
    %68 = vector.shape_cast %67 : vector<1x16xf32> to vector<1x1x16xf32>
    %69 = vector.broadcast %68 : vector<1x1x16xf32> to vector<4x4x16xf32>
    %70 = arith.mulf %65, %69 : vector<4x4x16xf32>
    %71 = arith.addf %57, %70 : vector<4x4x16xf32>
    %72 = vector.extract_strided_slice %50 {offsets = [0, 1, 0], sizes = [4, 4, 32], strides = [1, 1, 1]} : vector<4x5x32xf32> to vector<4x4x32xf32>
    %c2_26 = arith.constant 2 : index
    %c0_27 = arith.constant 0 : index
    %c0_28 = arith.constant 0 : index
    %73 = vector.load %arg6[%c2_26, %c0_27, %c0_28] : memref<9x1x32xf32, #tpu.memory_space<vmem>>, vector<1x1x32xf32>
    %74 = vector.shape_cast %73 : vector<1x1x32xf32> to vector<1x32xf32>
    %75 = vector.shape_cast %74 : vector<1x32xf32> to vector<1x1x32xf32>
    %76 = vector.broadcast %75 : vector<1x1x32xf32> to vector<4x4x32xf32>
    %77 = arith.mulf %72, %76 : vector<4x4x32xf32>
    %78 = arith.addf %64, %77 : vector<4x4x32xf32>
    %c0_29 = arith.constant 0 : index
    %c0_30 = arith.constant 0 : index
    %c0_31 = arith.constant 0 : index
    %c32 = arith.constant 32 : index
    %79 = vector.load %arg2[%c0_29, %c0_30, %c0_31, %c32] : memref<1x4x5x192xf32, #tpu.memory_space<vmem>>, vector<1x4x5x16xf32>
    %80 = vector.shape_cast %79 : vector<1x4x5x16xf32> to vector<4x5x16xf32>
    %c0_32 = arith.constant 0 : index
    %c0_33 = arith.constant 0 : index
    %c0_34 = arith.constant 0 : index
    %c48 = arith.constant 48 : index
    %81 = vector.load %arg2[%c0_32, %c0_33, %c0_34, %c48] : memref<1x4x5x192xf32, #tpu.memory_space<vmem>>, vector<1x4x5x16xf32>
    %82 = vector.shape_cast %81 : vector<1x4x5x16xf32> to vector<4x5x16xf32>
    %83 = vector.shape_cast %82 : vector<4x5x16xf32> to vector<20x16xf32>
    %c0_35 = arith.constant 0 : index
    %c0_36 = arith.constant 0 : index
    %84 = vector.load %arg3[%c0_35, %c0_36] : memref<16x32xf32, #tpu.memory_space<vmem>>, vector<16x32xf32>
    %cst_37 = arith.constant dense<0.000000e+00> : vector<20x32xf32>
    %85 = tpu.matmul %83, %84, %cst_37 {dimension_numbers = #tpu.dot_dimension_numbers<[1], [0], [0], [1], [0, 0, 1, 1], [], []>} : vector<20x16xf32>, vector<16x32xf32>, vector<20x32xf32> -> vector<20x32xf32>
    %c0_38 = arith.constant 0 : index
    %c0_39 = arith.constant 0 : index
    %86 = vector.load %arg4[%c0_38, %c0_39] : memref<1x32xf32, #tpu.memory_space<vmem>>, vector<1x32xf32>
    %87 = vector.broadcast %86 : vector<1x32xf32> to vector<20x32xf32>
    %88 = arith.addf %85, %87 : vector<20x32xf32>
    %cst_40 = arith.constant 0.000000e+00 : f32
    %89 = vector.broadcast %cst_40 : f32 to vector<20x32xf32>
    %90 = arith.maximumf %88, %89 : vector<20x32xf32>
    %91 = vector.shape_cast %90 : vector<20x32xf32> to vector<4x5x32xf32>
    %92 = vector.broadcast %8 : vector<4x1x1xf32> to vector<4x5x32xf32>
    %93 = arith.mulf %91, %92 : vector<4x5x32xf32>
    %94 = vector.extract_strided_slice %80 {offsets = [0, 0, 0], sizes = [4, 4, 16], strides = [1, 1, 1]} : vector<4x5x16xf32> to vector<4x4x16xf32>
    %c1 = arith.constant 1 : index
    %c0_41 = arith.constant 0 : index
    %c0_42 = arith.constant 0 : index
    %95 = vector.load %arg5[%c1, %c0_41, %c0_42] : memref<9x1x16xf32, #tpu.memory_space<vmem>>, vector<1x1x16xf32>
    %96 = vector.shape_cast %95 : vector<1x1x16xf32> to vector<1x16xf32>
    %97 = vector.shape_cast %96 : vector<1x16xf32> to vector<1x1x16xf32>
    %98 = vector.broadcast %97 : vector<1x1x16xf32> to vector<4x4x16xf32>
    %99 = arith.mulf %94, %98 : vector<4x4x16xf32>
    %100 = arith.addf %71, %99 : vector<4x4x16xf32>
    %101 = vector.extract_strided_slice %93 {offsets = [0, 0, 0], sizes = [4, 4, 32], strides = [1, 1, 1]} : vector<4x5x32xf32> to vector<4x4x32xf32>
    %c1_43 = arith.constant 1 : index
    %c0_44 = arith.constant 0 : index
    %c0_45 = arith.constant 0 : index
    %102 = vector.load %arg6[%c1_43, %c0_44, %c0_45] : memref<9x1x32xf32, #tpu.memory_space<vmem>>, vector<1x1x32xf32>
    %103 = vector.shape_cast %102 : vector<1x1x32xf32> to vector<1x32xf32>
    %104 = vector.shape_cast %103 : vector<1x32xf32> to vector<1x1x32xf32>
    %105 = vector.broadcast %104 : vector<1x1x32xf32> to vector<4x4x32xf32>
    %106 = arith.mulf %101, %105 : vector<4x4x32xf32>
    %107 = arith.addf %78, %106 : vector<4x4x32xf32>
    %c0_46 = arith.constant 0 : index
    %c0_47 = arith.constant 0 : index
    %c0_48 = arith.constant 0 : index
    %c64 = arith.constant 64 : index
    %108 = vector.load %arg2[%c0_46, %c0_47, %c0_48, %c64] : memref<1x4x5x192xf32, #tpu.memory_space<vmem>>, vector<1x4x5x16xf32>
    %109 = vector.shape_cast %108 : vector<1x4x5x16xf32> to vector<4x5x16xf32>
    %c0_49 = arith.constant 0 : index
    %c0_50 = arith.constant 0 : index
    %c0_51 = arith.constant 0 : index
    %c80 = arith.constant 80 : index
    %110 = vector.load %arg2[%c0_49, %c0_50, %c0_51, %c80] : memref<1x4x5x192xf32, #tpu.memory_space<vmem>>, vector<1x4x5x16xf32>
    %111 = vector.shape_cast %110 : vector<1x4x5x16xf32> to vector<4x5x16xf32>
    %112 = vector.shape_cast %111 : vector<4x5x16xf32> to vector<20x16xf32>
    %c0_52 = arith.constant 0 : index
    %c0_53 = arith.constant 0 : index
    %113 = vector.load %arg3[%c0_52, %c0_53] : memref<16x32xf32, #tpu.memory_space<vmem>>, vector<16x32xf32>
    %cst_54 = arith.constant dense<0.000000e+00> : vector<20x32xf32>
    %114 = tpu.matmul %112, %113, %cst_54 {dimension_numbers = #tpu.dot_dimension_numbers<[1], [0], [0], [1], [0, 0, 1, 1], [], []>} : vector<20x16xf32>, vector<16x32xf32>, vector<20x32xf32> -> vector<20x32xf32>
    %c0_55 = arith.constant 0 : index
    %c0_56 = arith.constant 0 : index
    %115 = vector.load %arg4[%c0_55, %c0_56] : memref<1x32xf32, #tpu.memory_space<vmem>>, vector<1x32xf32>
    %116 = vector.broadcast %115 : vector<1x32xf32> to vector<20x32xf32>
    %117 = arith.addf %114, %116 : vector<20x32xf32>
    %cst_57 = arith.constant 0.000000e+00 : f32
    %118 = vector.broadcast %cst_57 : f32 to vector<20x32xf32>
    %119 = arith.maximumf %117, %118 : vector<20x32xf32>
    %120 = vector.shape_cast %119 : vector<20x32xf32> to vector<4x5x32xf32>
    %121 = vector.broadcast %27 : vector<1x5x1xf32> to vector<4x5x32xf32>
    %122 = arith.mulf %120, %121 : vector<4x5x32xf32>
    %123 = vector.extract_strided_slice %109 {offsets = [0, 0, 0], sizes = [4, 4, 16], strides = [1, 1, 1]} : vector<4x5x16xf32> to vector<4x4x16xf32>
    %c3 = arith.constant 3 : index
    %c0_58 = arith.constant 0 : index
    %c0_59 = arith.constant 0 : index
    %124 = vector.load %arg5[%c3, %c0_58, %c0_59] : memref<9x1x16xf32, #tpu.memory_space<vmem>>, vector<1x1x16xf32>
    %125 = vector.shape_cast %124 : vector<1x1x16xf32> to vector<1x16xf32>
    %126 = vector.shape_cast %125 : vector<1x16xf32> to vector<1x1x16xf32>
    %127 = vector.broadcast %126 : vector<1x1x16xf32> to vector<4x4x16xf32>
    %128 = arith.mulf %123, %127 : vector<4x4x16xf32>
    %129 = arith.addf %100, %128 : vector<4x4x16xf32>
    %130 = vector.extract_strided_slice %122 {offsets = [0, 0, 0], sizes = [4, 4, 32], strides = [1, 1, 1]} : vector<4x5x32xf32> to vector<4x4x32xf32>
    %c3_60 = arith.constant 3 : index
    %c0_61 = arith.constant 0 : index
    %c0_62 = arith.constant 0 : index
    %131 = vector.load %arg6[%c3_60, %c0_61, %c0_62] : memref<9x1x32xf32, #tpu.memory_space<vmem>>, vector<1x1x32xf32>
    %132 = vector.shape_cast %131 : vector<1x1x32xf32> to vector<1x32xf32>
    %133 = vector.shape_cast %132 : vector<1x32xf32> to vector<1x1x32xf32>
    %134 = vector.broadcast %133 : vector<1x1x32xf32> to vector<4x4x32xf32>
    %135 = arith.mulf %130, %134 : vector<4x4x32xf32>
    %136 = arith.addf %107, %135 : vector<4x4x32xf32>
    %137 = vector.extract_strided_slice %109 {offsets = [0, 1, 0], sizes = [4, 4, 16], strides = [1, 1, 1]} : vector<4x5x16xf32> to vector<4x4x16xf32>
    %c5 = arith.constant 5 : index
    %c0_63 = arith.constant 0 : index
    %c0_64 = arith.constant 0 : index
    %138 = vector.load %arg5[%c5, %c0_63, %c0_64] : memref<9x1x16xf32, #tpu.memory_space<vmem>>, vector<1x1x16xf32>
    %139 = vector.shape_cast %138 : vector<1x1x16xf32> to vector<1x16xf32>
    %140 = vector.shape_cast %139 : vector<1x16xf32> to vector<1x1x16xf32>
    %141 = vector.broadcast %140 : vector<1x1x16xf32> to vector<4x4x16xf32>
    %142 = arith.mulf %137, %141 : vector<4x4x16xf32>
    %143 = arith.addf %129, %142 : vector<4x4x16xf32>
    %144 = vector.extract_strided_slice %122 {offsets = [0, 1, 0], sizes = [4, 4, 32], strides = [1, 1, 1]} : vector<4x5x32xf32> to vector<4x4x32xf32>
    %c5_65 = arith.constant 5 : index
    %c0_66 = arith.constant 0 : index
    %c0_67 = arith.constant 0 : index
    %145 = vector.load %arg6[%c5_65, %c0_66, %c0_67] : memref<9x1x32xf32, #tpu.memory_space<vmem>>, vector<1x1x32xf32>
    %146 = vector.shape_cast %145 : vector<1x1x32xf32> to vector<1x32xf32>
    %147 = vector.shape_cast %146 : vector<1x32xf32> to vector<1x1x32xf32>
    %148 = vector.broadcast %147 : vector<1x1x32xf32> to vector<4x4x32xf32>
    %149 = arith.mulf %144, %148 : vector<4x4x32xf32>
    %150 = arith.addf %136, %149 : vector<4x4x32xf32>
    %c0_68 = arith.constant 0 : index
    %c0_69 = arith.constant 0 : index
    %c0_70 = arith.constant 0 : index
    %c96 = arith.constant 96 : index
    %151 = vector.load %arg2[%c0_68, %c0_69, %c0_70, %c96] : memref<1x4x5x192xf32, #tpu.memory_space<vmem>>, vector<1x4x5x16xf32>
    %152 = vector.shape_cast %151 : vector<1x4x5x16xf32> to vector<4x5x16xf32>
    %c0_71 = arith.constant 0 : index
    %c0_72 = arith.constant 0 : index
    %c0_73 = arith.constant 0 : index
    %c112 = arith.constant 112 : index
    %153 = vector.load %arg2[%c0_71, %c0_72, %c0_73, %c112] : memref<1x4x5x192xf32, #tpu.memory_space<vmem>>, vector<1x4x5x16xf32>
    %154 = vector.shape_cast %153 : vector<1x4x5x16xf32> to vector<4x5x16xf32>
    %155 = vector.shape_cast %154 : vector<4x5x16xf32> to vector<20x16xf32>
    %c0_74 = arith.constant 0 : index
    %c0_75 = arith.constant 0 : index
    %156 = vector.load %arg3[%c0_74, %c0_75] : memref<16x32xf32, #tpu.memory_space<vmem>>, vector<16x32xf32>
    %cst_76 = arith.constant dense<0.000000e+00> : vector<20x32xf32>
    %157 = tpu.matmul %155, %156, %cst_76 {dimension_numbers = #tpu.dot_dimension_numbers<[1], [0], [0], [1], [0, 0, 1, 1], [], []>} : vector<20x16xf32>, vector<16x32xf32>, vector<20x32xf32> -> vector<20x32xf32>
    %c0_77 = arith.constant 0 : index
    %c0_78 = arith.constant 0 : index
    %158 = vector.load %arg4[%c0_77, %c0_78] : memref<1x32xf32, #tpu.memory_space<vmem>>, vector<1x32xf32>
    %159 = vector.broadcast %158 : vector<1x32xf32> to vector<20x32xf32>
    %160 = arith.addf %157, %159 : vector<20x32xf32>
    %cst_79 = arith.constant 0.000000e+00 : f32
    %161 = vector.broadcast %cst_79 : f32 to vector<20x32xf32>
    %162 = arith.maximumf %160, %161 : vector<20x32xf32>
    %163 = vector.shape_cast %162 : vector<20x32xf32> to vector<4x5x32xf32>
    %164 = vector.extract_strided_slice %152 {offsets = [0, 0, 0], sizes = [4, 4, 16], strides = [1, 1, 1]} : vector<4x5x16xf32> to vector<4x4x16xf32>
    %c4 = arith.constant 4 : index
    %c0_80 = arith.constant 0 : index
    %c0_81 = arith.constant 0 : index
    %165 = vector.load %arg5[%c4, %c0_80, %c0_81] : memref<9x1x16xf32, #tpu.memory_space<vmem>>, vector<1x1x16xf32>
    %166 = vector.shape_cast %165 : vector<1x1x16xf32> to vector<1x16xf32>
    %167 = vector.shape_cast %166 : vector<1x16xf32> to vector<1x1x16xf32>
    %168 = vector.broadcast %167 : vector<1x1x16xf32> to vector<4x4x16xf32>
    %169 = arith.mulf %164, %168 : vector<4x4x16xf32>
    %170 = arith.addf %143, %169 : vector<4x4x16xf32>
    %171 = vector.extract_strided_slice %163 {offsets = [0, 0, 0], sizes = [4, 4, 32], strides = [1, 1, 1]} : vector<4x5x32xf32> to vector<4x4x32xf32>
    %c4_82 = arith.constant 4 : index
    %c0_83 = arith.constant 0 : index
    %c0_84 = arith.constant 0 : index
    %172 = vector.load %arg6[%c4_82, %c0_83, %c0_84] : memref<9x1x32xf32, #tpu.memory_space<vmem>>, vector<1x1x32xf32>
    %173 = vector.shape_cast %172 : vector<1x1x32xf32> to vector<1x32xf32>
    %174 = vector.shape_cast %173 : vector<1x32xf32> to vector<1x1x32xf32>
    %175 = vector.broadcast %174 : vector<1x1x32xf32> to vector<4x4x32xf32>
    %176 = arith.mulf %171, %175 : vector<4x4x32xf32>
    %177 = arith.addf %150, %176 : vector<4x4x32xf32>
    %c0_85 = arith.constant 0 : index
    %c0_86 = arith.constant 0 : index
    %c0_87 = arith.constant 0 : index
    %c128 = arith.constant 128 : index
    %178 = vector.load %arg2[%c0_85, %c0_86, %c0_87, %c128] : memref<1x4x5x192xf32, #tpu.memory_space<vmem>>, vector<1x4x5x16xf32>
    %179 = vector.shape_cast %178 : vector<1x4x5x16xf32> to vector<4x5x16xf32>
    %c0_88 = arith.constant 0 : index
    %c0_89 = arith.constant 0 : index
    %c0_90 = arith.constant 0 : index
    %c144 = arith.constant 144 : index
    %180 = vector.load %arg2[%c0_88, %c0_89, %c0_90, %c144] : memref<1x4x5x192xf32, #tpu.memory_space<vmem>>, vector<1x4x5x16xf32>
    %181 = vector.shape_cast %180 : vector<1x4x5x16xf32> to vector<4x5x16xf32>
    %182 = vector.shape_cast %181 : vector<4x5x16xf32> to vector<20x16xf32>
    %c0_91 = arith.constant 0 : index
    %c0_92 = arith.constant 0 : index
    %183 = vector.load %arg3[%c0_91, %c0_92] : memref<16x32xf32, #tpu.memory_space<vmem>>, vector<16x32xf32>
    %cst_93 = arith.constant dense<0.000000e+00> : vector<20x32xf32>
    %184 = tpu.matmul %182, %183, %cst_93 {dimension_numbers = #tpu.dot_dimension_numbers<[1], [0], [0], [1], [0, 0, 1, 1], [], []>} : vector<20x16xf32>, vector<16x32xf32>, vector<20x32xf32> -> vector<20x32xf32>
    %c0_94 = arith.constant 0 : index
    %c0_95 = arith.constant 0 : index
    %185 = vector.load %arg4[%c0_94, %c0_95] : memref<1x32xf32, #tpu.memory_space<vmem>>, vector<1x32xf32>
    %186 = vector.broadcast %185 : vector<1x32xf32> to vector<20x32xf32>
    %187 = arith.addf %184, %186 : vector<20x32xf32>
    %cst_96 = arith.constant 0.000000e+00 : f32
    %188 = vector.broadcast %cst_96 : f32 to vector<20x32xf32>
    %189 = arith.maximumf %187, %188 : vector<20x32xf32>
    %190 = vector.shape_cast %189 : vector<20x32xf32> to vector<4x5x32xf32>
    %191 = vector.broadcast %33 : vector<4x5x1xf32> to vector<4x5x32xf32>
    %192 = arith.mulf %190, %191 : vector<4x5x32xf32>
    %193 = vector.extract_strided_slice %179 {offsets = [0, 0, 0], sizes = [4, 4, 16], strides = [1, 1, 1]} : vector<4x5x16xf32> to vector<4x4x16xf32>
    %c6 = arith.constant 6 : index
    %c0_97 = arith.constant 0 : index
    %c0_98 = arith.constant 0 : index
    %194 = vector.load %arg5[%c6, %c0_97, %c0_98] : memref<9x1x16xf32, #tpu.memory_space<vmem>>, vector<1x1x16xf32>
    %195 = vector.shape_cast %194 : vector<1x1x16xf32> to vector<1x16xf32>
    %196 = vector.shape_cast %195 : vector<1x16xf32> to vector<1x1x16xf32>
    %197 = vector.broadcast %196 : vector<1x1x16xf32> to vector<4x4x16xf32>
    %198 = arith.mulf %193, %197 : vector<4x4x16xf32>
    %199 = arith.addf %170, %198 : vector<4x4x16xf32>
    %200 = vector.extract_strided_slice %192 {offsets = [0, 0, 0], sizes = [4, 4, 32], strides = [1, 1, 1]} : vector<4x5x32xf32> to vector<4x4x32xf32>
    %c6_99 = arith.constant 6 : index
    %c0_100 = arith.constant 0 : index
    %c0_101 = arith.constant 0 : index
    %201 = vector.load %arg6[%c6_99, %c0_100, %c0_101] : memref<9x1x32xf32, #tpu.memory_space<vmem>>, vector<1x1x32xf32>
    %202 = vector.shape_cast %201 : vector<1x1x32xf32> to vector<1x32xf32>
    %203 = vector.shape_cast %202 : vector<1x32xf32> to vector<1x1x32xf32>
    %204 = vector.broadcast %203 : vector<1x1x32xf32> to vector<4x4x32xf32>
    %205 = arith.mulf %200, %204 : vector<4x4x32xf32>
    %206 = arith.addf %177, %205 : vector<4x4x32xf32>
    %207 = vector.extract_strided_slice %179 {offsets = [0, 1, 0], sizes = [4, 4, 16], strides = [1, 1, 1]} : vector<4x5x16xf32> to vector<4x4x16xf32>
    %c8 = arith.constant 8 : index
    %c0_102 = arith.constant 0 : index
    %c0_103 = arith.constant 0 : index
    %208 = vector.load %arg5[%c8, %c0_102, %c0_103] : memref<9x1x16xf32, #tpu.memory_space<vmem>>, vector<1x1x16xf32>
    %209 = vector.shape_cast %208 : vector<1x1x16xf32> to vector<1x16xf32>
    %210 = vector.shape_cast %209 : vector<1x16xf32> to vector<1x1x16xf32>
    %211 = vector.broadcast %210 : vector<1x1x16xf32> to vector<4x4x16xf32>
    %212 = arith.mulf %207, %211 : vector<4x4x16xf32>
    %213 = arith.addf %199, %212 : vector<4x4x16xf32>
    %214 = vector.extract_strided_slice %192 {offsets = [0, 1, 0], sizes = [4, 4, 32], strides = [1, 1, 1]} : vector<4x5x32xf32> to vector<4x4x32xf32>
    %c8_104 = arith.constant 8 : index
    %c0_105 = arith.constant 0 : index
    %c0_106 = arith.constant 0 : index
    %215 = vector.load %arg6[%c8_104, %c0_105, %c0_106] : memref<9x1x32xf32, #tpu.memory_space<vmem>>, vector<1x1x32xf32>
    %216 = vector.shape_cast %215 : vector<1x1x32xf32> to vector<1x32xf32>
    %217 = vector.shape_cast %216 : vector<1x32xf32> to vector<1x1x32xf32>
    %218 = vector.broadcast %217 : vector<1x1x32xf32> to vector<4x4x32xf32>
    %219 = arith.mulf %214, %218 : vector<4x4x32xf32>
    %220 = arith.addf %206, %219 : vector<4x4x32xf32>
    %c0_107 = arith.constant 0 : index
    %c0_108 = arith.constant 0 : index
    %c0_109 = arith.constant 0 : index
    %c160 = arith.constant 160 : index
    %221 = vector.load %arg2[%c0_107, %c0_108, %c0_109, %c160] : memref<1x4x5x192xf32, #tpu.memory_space<vmem>>, vector<1x4x5x16xf32>
    %222 = vector.shape_cast %221 : vector<1x4x5x16xf32> to vector<4x5x16xf32>
    %c0_110 = arith.constant 0 : index
    %c0_111 = arith.constant 0 : index
    %c0_112 = arith.constant 0 : index
    %c176 = arith.constant 176 : index
    %223 = vector.load %arg2[%c0_110, %c0_111, %c0_112, %c176] : memref<1x4x5x192xf32, #tpu.memory_space<vmem>>, vector<1x4x5x16xf32>
    %224 = vector.shape_cast %223 : vector<1x4x5x16xf32> to vector<4x5x16xf32>
    %225 = vector.shape_cast %224 : vector<4x5x16xf32> to vector<20x16xf32>
    %c0_113 = arith.constant 0 : index
    %c0_114 = arith.constant 0 : index
    %226 = vector.load %arg3[%c0_113, %c0_114] : memref<16x32xf32, #tpu.memory_space<vmem>>, vector<16x32xf32>
    %cst_115 = arith.constant dense<0.000000e+00> : vector<20x32xf32>
    %227 = tpu.matmul %225, %226, %cst_115 {dimension_numbers = #tpu.dot_dimension_numbers<[1], [0], [0], [1], [0, 0, 1, 1], [], []>} : vector<20x16xf32>, vector<16x32xf32>, vector<20x32xf32> -> vector<20x32xf32>
    %c0_116 = arith.constant 0 : index
    %c0_117 = arith.constant 0 : index
    %228 = vector.load %arg4[%c0_116, %c0_117] : memref<1x32xf32, #tpu.memory_space<vmem>>, vector<1x32xf32>
    %229 = vector.broadcast %228 : vector<1x32xf32> to vector<20x32xf32>
    %230 = arith.addf %227, %229 : vector<20x32xf32>
    %cst_118 = arith.constant 0.000000e+00 : f32
    %231 = vector.broadcast %cst_118 : f32 to vector<20x32xf32>
    %232 = arith.maximumf %230, %231 : vector<20x32xf32>
    %233 = vector.shape_cast %232 : vector<20x32xf32> to vector<4x5x32xf32>
    %234 = vector.broadcast %16 : vector<4x1x1xf32> to vector<4x5x32xf32>
    %235 = arith.mulf %233, %234 : vector<4x5x32xf32>
    %236 = vector.extract_strided_slice %222 {offsets = [0, 0, 0], sizes = [4, 4, 16], strides = [1, 1, 1]} : vector<4x5x16xf32> to vector<4x4x16xf32>
    %c7 = arith.constant 7 : index
    %c0_119 = arith.constant 0 : index
    %c0_120 = arith.constant 0 : index
    %237 = vector.load %arg5[%c7, %c0_119, %c0_120] : memref<9x1x16xf32, #tpu.memory_space<vmem>>, vector<1x1x16xf32>
    %238 = vector.shape_cast %237 : vector<1x1x16xf32> to vector<1x16xf32>
    %239 = vector.shape_cast %238 : vector<1x16xf32> to vector<1x1x16xf32>
    %240 = vector.broadcast %239 : vector<1x1x16xf32> to vector<4x4x16xf32>
    %241 = arith.mulf %236, %240 : vector<4x4x16xf32>
    %242 = arith.addf %213, %241 : vector<4x4x16xf32>
    %243 = vector.extract_strided_slice %235 {offsets = [0, 0, 0], sizes = [4, 4, 32], strides = [1, 1, 1]} : vector<4x5x32xf32> to vector<4x4x32xf32>
    %c7_121 = arith.constant 7 : index
    %c0_122 = arith.constant 0 : index
    %c0_123 = arith.constant 0 : index
    %244 = vector.load %arg6[%c7_121, %c0_122, %c0_123] : memref<9x1x32xf32, #tpu.memory_space<vmem>>, vector<1x1x32xf32>
    %245 = vector.shape_cast %244 : vector<1x1x32xf32> to vector<1x32xf32>
    %246 = vector.shape_cast %245 : vector<1x32xf32> to vector<1x1x32xf32>
    %247 = vector.broadcast %246 : vector<1x1x32xf32> to vector<4x4x32xf32>
    %248 = arith.mulf %243, %247 : vector<4x4x32xf32>
    %249 = arith.addf %220, %248 : vector<4x4x32xf32>
    %250 = vector.shape_cast %242 : vector<4x4x16xf32> to vector<16x16xf32>
    %c0_124 = arith.constant 0 : index
    %c0_125 = arith.constant 0 : index
    %251 = vector.load %arg7[%c0_124, %c0_125] : memref<16x32xf32, #tpu.memory_space<vmem>>, vector<16x32xf32>
    %cst_126 = arith.constant dense<0.000000e+00> : vector<16x32xf32>
    %252 = tpu.matmul %250, %251, %cst_126 {dimension_numbers = #tpu.dot_dimension_numbers<[1], [0], [0], [1], [0, 0, 1, 1], [], []>} : vector<16x16xf32>, vector<16x32xf32>, vector<16x32xf32> -> vector<16x32xf32>
    %253 = vector.shape_cast %249 : vector<4x4x32xf32> to vector<16x32xf32>
    %c0_127 = arith.constant 0 : index
    %c0_128 = arith.constant 0 : index
    %254 = vector.load %arg8[%c0_127, %c0_128] : memref<32x32xf32, #tpu.memory_space<vmem>>, vector<32x32xf32>
    %cst_129 = arith.constant dense<0.000000e+00> : vector<16x32xf32>
    %255 = tpu.matmul %253, %254, %cst_129 {dimension_numbers = #tpu.dot_dimension_numbers<[1], [0], [0], [1], [0, 0, 1, 1], [], []>} : vector<16x32xf32>, vector<32x32xf32>, vector<16x32xf32> -> vector<16x32xf32>
    %256 = arith.addf %252, %255 : vector<16x32xf32>
    %c0_130 = arith.constant 0 : index
    %c0_131 = arith.constant 0 : index
    %257 = vector.load %arg9[%c0_130, %c0_131] : memref<1x32xf32, #tpu.memory_space<vmem>>, vector<1x32xf32>
    %258 = vector.broadcast %257 : vector<1x32xf32> to vector<16x32xf32>
    %259 = arith.addf %256, %258 : vector<16x32xf32>
    %cst_132 = arith.constant 0.000000e+00 : f32
    %260 = vector.broadcast %cst_132 : f32 to vector<16x32xf32>
    %261 = arith.maximumf %259, %260 : vector<16x32xf32>
    %262 = vector.shape_cast %261 : vector<16x32xf32> to vector<4x4x32xf32>
    %c0_133 = arith.constant 0 : index
    %c0_134 = arith.constant 0 : index
    %c0_135 = arith.constant 0 : index
    %c0_136 = arith.constant 0 : index
    %263 = vector.load %arg10[%c0_133, %c0_134, %c0_135, %c0_136] : memref<1x4x4x32xf32, #tpu.memory_space<vmem>>, vector<1x4x4x32xf32>
    %264 = vector.shape_cast %263 : vector<1x4x4x32xf32> to vector<4x4x32xf32>
    %265 = vector.shape_cast %262 : vector<4x4x32xf32> to vector<1x4x4x32xf32>
    tpu.vector_store %arg10[%c0_133, %c0_134, %c0_135, %c0_136], %265 {strides = array<i32>} : memref<1x4x4x32xf32, #tpu.memory_space<vmem>>, vector<1x4x4x32xf32>,
    return
  }
  func.func @transform_0(%arg0: i32, %arg1: i32) -> (i32, i32, i32, i32) {
    %c0_i32 = arith.constant 0 : i32
    %c0_i32_0 = arith.constant 0 : i32
    %c0_i32_1 = arith.constant 0 : i32
    return %arg0, %arg1, %c0_i32, %c0_i32_0 : i32, i32, i32, i32
  }
  func.func @transform_1(%arg0: i32, %arg1: i32) -> (i32, i32) {
    %c0_i32 = arith.constant 0 : i32
    %c0_i32_0 = arith.constant 0 : i32
    %c0_i32_1 = arith.constant 0 : i32
    return %c0_i32, %c0_i32_0 : i32, i32
  }
  func.func @transform_2(%arg0: i32, %arg1: i32) -> (i32, i32) {
    %c0_i32 = arith.constant 0 : i32
    %c0_i32_0 = arith.constant 0 : i32
    %c0_i32_1 = arith.constant 0 : i32
    return %c0_i32, %c0_i32_0 : i32, i32
  }
  func.func @transform_3(%arg0: i32, %arg1: i32) -> (i32, i32, i32) {
    %c0_i32 = arith.constant 0 : i32
    %c0_i32_0 = arith.constant 0 : i32
    %c0_i32_1 = arith.constant 0 : i32
    %c0_i32_2 = arith.constant 0 : i32
    return %c0_i32, %c0_i32_0, %c0_i32_1 : i32, i32, i32
  }
  func.func @transform_4(%arg0: i32, %arg1: i32) -> (i32, i32, i32) {
    %c0_i32 = arith.constant 0 : i32
    %c0_i32_0 = arith.constant 0 : i32
    %c0_i32_1 = arith.constant 0 : i32
    %c0_i32_2 = arith.constant 0 : i32
    return %c0_i32, %c0_i32_0, %c0_i32_1 : i32, i32, i32
  }
  func.func @transform_5(%arg0: i32, %arg1: i32) -> (i32, i32) {
    %c0_i32 = arith.constant 0 : i32
    %c0_i32_0 = arith.constant 0 : i32
    %c0_i32_1 = arith.constant 0 : i32
    return %c0_i32, %c0_i32_0 : i32, i32
  }
  func.func @transform_6(%arg0: i32, %arg1: i32) -> (i32, i32) {
    %c0_i32 = arith.constant 0 : i32
    %c0_i32_0 = arith.constant 0 : i32
    %c0_i32_1 = arith.constant 0 : i32
    return %c0_i32, %c0_i32_0 : i32, i32
  }
  func.func @transform_7(%arg0: i32, %arg1: i32) -> (i32, i32) {
    %c0_i32 = arith.constant 0 : i32
    %c0_i32_0 = arith.constant 0 : i32
    %c0_i32_1 = arith.constant 0 : i32
    return %c0_i32, %c0_i32_0 : i32, i32
  }
  func.func @transform_8(%arg0: i32, %arg1: i32) -> (i32, i32, i32, i32) {
    %c0_i32 = arith.constant 0 : i32
    %c0_i32_0 = arith.constant 0 : i32
    %c0_i32_1 = arith.constant 0 : i32
    return %arg0, %arg1, %c0_i32, %c0_i32_0 : i32, i32, i32, i32
  }
}

</mosaic_0001>

<llo_original>
// kernel: stem_forward.2
$region0: #{stem_forward.2}
  #allocation0 [shape = 'u32[]', space=smem, size = 0x4, offset = 0x4, fixed_abs, tag = 'smem constant byte address 0x4 - core index']
  #allocation1 [shape = 'u32[144,128]{1,0:T(1,128)}', space=vmem, size = 0x12000, scoped, tag = 'internal scratch']
  %s0 = inlined_call_operand.vmem [shape: f32[2,8,9,18], index: 0, kind: input, shape index: {}]
  %s1 = inlined_call_operand.vmem [shape: f32[27,32], index: 1, kind: input, shape index: {}]
  %s2 = inlined_call_operand.vmem [shape: f32[1,32], index: 2, kind: input, shape index: {}]
  %s3 = inlined_call_operand.vmem [shape: f32[2,8,8,32], index: 3, kind: output, shape index: {}]
  %s4 = sld [smem:[#allocation0]]
  $region45: #{stem_forward.2} parent=0
    _
  %s6 = ssub.s32 1, %s4
  %s7 = scalar_select 0, %s6, %s4
  loop: start=0, step=1, limit=4
  $region2: #{stem_forward.2} parent=0 // loop_pre_header
    _
  $region3: #{stem_forward.2} parent=0 // loop_header
    %s9 = sphi 0, %s13
    %p10 = scmp.ge.s32.totalorder %s9, 4
    %s16 = sphi 0, %s28
    %s17 = sphi 0, %s24
    %s18 = sphi 0, %s16
    %s19 = sphi 0, %s17
    %s20 = sphi 0, %s18
    %s21 = sphi 0, %s19
    %s33 = sphi 0, %s35
    %s36 = sphi 0, %s33
    %s37 = sphi 0, %s36
    %s53 = sphi 0, %s37
    %s57 = sphi 0, %s57
    %s59 = sphi 0, %s57
    %s60 = sphi 0, %s59
    %s74 = sphi 0, %s60
    %s78 = sphi 0, %s78
    %s80 = sphi 0, %s78
    %s81 = sphi 0, %s80
    %s95 = sphi 0, %s81
    %s103 = sphi 0, %s105
    %s106 = sphi 0, %s103
    %s107 = sphi 0, %s106
    %s123 = sphi 0, %s107
  $region4: #{stem_forward.2} parent=0 // loop_header_branch
    %12 = sbr.rel (%p10) target = $region8
  $region5: #{stem_forward.2} parent=0 // loop_body
    %s14 = ssub.s32 %s9, 1
    %s15 = ssub.s32 %s9, 2
    %s22 = sadd.s32 1, %s17
    %p23 = scmp.ge.s32.totalorder %s22, 1
    %s24 = scalar_select %p23, 0, %s22
    %s25 = sadd.s32 1, %s16
    %s26 = scalar_select %p23, %s25, %s16
    %p27 = scmp.ge.s32.totalorder %s26, 2
    %s28 = scalar_select %p27, 0, %s26
    %s29 = ssub.s32 %s16, %s28
    %s30 = ssub.s32 %s17, %s24
    %s31 = sor.u32 %s29, %s30
    %p32 = scmp.eq.s32.totalorder %s31, 0
    %s34 = sadd.s32 %s33, 1
    %s35 = scalar_select %p32, %s33, %s34
    %p38 = pneg %p32
    %p39 = scmp.eq.s32.totalorder %s9, 1
    %p40 = por %p38, %p39
    %p41 = scmp.ne.s32.totalorder %s33, %s36
    %p42 = scmp.eq.s32.totalorder %s9, 0
    %p43 = por %p41, %p42
    %p44 = scmp.ne.s32.totalorder %s33, %s36
    %p45 = scmp.eq.s32.totalorder %s14, 1
    %p46 = por %p44, %p45
    %p47 = scmp.ne.s32.totalorder %s36, %s37
    %p48 = scmp.eq.s32.totalorder %s14, 0
    %p49 = por %p47, %p48
    %p50 = scmp.ne.s32.totalorder %s36, %s37
    %p51 = scmp.eq.s32.totalorder %s15, 1
    %p52 = por %p50, %p51
    %p54 = scmp.ne.s32.totalorder %s37, %s53
    %p55 = scmp.eq.s32.totalorder %s15, 0
    %p56 = por %p54, %p55
    %s58 = sadd.s32 %s57, 1
    %p61 = scmp.eq.s32.totalorder %s9, 1
    %p62 = scmp.ne.s32.totalorder %s57, %s59
    %p63 = scmp.eq.s32.totalorder %s9, 0
    %p64 = por %p62, %p63
    %p65 = scmp.ne.s32.totalorder %s57, %s59
    %p66 = scmp.eq.s32.totalorder %s14, 1
    %p67 = por %p65, %p66
    %p68 = scmp.ne.s32.totalorder %s59, %s60
    %p69 = scmp.eq.s32.totalorder %s14, 0
    %p70 = por %p68, %p69
    %p71 = scmp.ne.s32.totalorder %s59, %s60
    %p72 = scmp.eq.s32.totalorder %s15, 1
    %p73 = por %p71, %p72
    %p75 = scmp.ne.s32.totalorder %s60, %s74
    %p76 = scmp.eq.s32.totalorder %s15, 0
    %p77 = por %p75, %p76
    %s79 = sadd.s32 %s78, 1
    %p82 = scmp.eq.s32.totalorder %s9, 1
    %p83 = scmp.ne.s32.totalorder %s78, %s80
    %p84 = scmp.eq.s32.totalorder %s9, 0
    %p85 = por %p83, %p84
    %p86 = scmp.ne.s32.totalorder %s78, %s80
    %p87 = scmp.eq.s32.totalorder %s14, 1
    %p88 = por %p86, %p87
    %p89 = scmp.ne.s32.totalorder %s80, %s81
    %p90 = scmp.eq.s32.totalorder %s14, 0
    %p91 = por %p89, %p90
    %p92 = scmp.ne.s32.totalorder %s80, %s81
    %p93 = scmp.eq.s32.totalorder %s15, 1
    %p94 = por %p92, %p93
    %p96 = scmp.ne.s32.totalorder %s81, %s95
    %p97 = scmp.eq.s32.totalorder %s15, 0
    %p98 = por %p96, %p97
    %s99 = ssub.s32 %s16, %s28
    %s100 = ssub.s32 %s17, %s24
    %s101 = sor.u32 %s99, %s100
    %p102 = scmp.eq.s32.totalorder %s101, 0
    %s104 = sadd.s32 %s103, 1
    %s105 = scalar_select %p102, %s103, %s104
    %p108 = pneg %p102
    %p109 = scmp.eq.s32.totalorder %s9, 1
    %p110 = por %p108, %p109
    %p111 = scmp.ne.s32.totalorder %s103, %s106
    %p112 = scmp.eq.s32.totalorder %s9, 0
    %p113 = por %p111, %p112
    %p114 = scmp.ne.s32.totalorder %s103, %s106
    %p115 = scmp.eq.s32.totalorder %s14, 1
    %p116 = por %p114, %p115
    %p117 = scmp.ne.s32.totalorder %s106, %s107
    %p118 = scmp.eq.s32.totalorder %s14, 0
    %p119 = por %p117, %p118
    %p120 = scmp.ne.s32.totalorder %s106, %s107
    %p121 = scmp.eq.s32.totalorder %s15, 1
    %p122 = por %p120, %p121
    %p124 = scmp.ne.s32.totalorder %s107, %s123
    %p125 = scmp.eq.s32.totalorder %s15, 0
    %p126 = por %p124, %p125
    %p127 = scmp.le.s32.totalorder 1, %s9
    %p128 = scmp.lt.s32.totalorder %s9, 3
    %p129 = pnand %p127, %p128
    %p130 = pneg %p129
    // Predicated region
    $region9: #{stem_forward.2} parent=5 // pred_check
      _
    $region10: #{stem_forward.2} parent=5 // pred_check_branch
      %132 = sbr.rel (%p129) target = $region12
    $region11: #{stem_forward.2} parent=5 // pred_region
      %s133 = ssub.s32 %s9, 1
      // Predicated region
      $region13: #{stem_forward.2} parent=11 // pred_check
        %p134 = pneg %p70
      $region14: #{stem_forward.2} parent=11 // pred_check_branch
        %136 = sbr.rel (%p134) target = $region16
      $region15: #{stem_forward.2} parent=11 // pred_region
        _
      $region16: #{stem_forward.2} parent=11 // pred_fallthru
        _
      // Predicated region
      $region17: #{stem_forward.2} parent=11 // pred_check
        %p137 = pneg %p91
      $region18: #{stem_forward.2} parent=11 // pred_check_branch
        %139 = sbr.rel (%p137) target = $region20
      $region19: #{stem_forward.2} parent=11 // pred_region
        _
      $region20: #{stem_forward.2} parent=11 // pred_fallthru
        _
    $region12: #{stem_forward.2} parent=5 // pred_fallthru
      _
    %p140 = scmp.lt.s32.totalorder %s9, 2
    // Predicated region
    $region21: #{stem_forward.2} parent=5 // pred_check
      %p141 = pneg %p140
    $region22: #{stem_forward.2} parent=5 // pred_check_branch
      %143 = sbr.rel (%p141) target = $region24
    $region23: #{stem_forward.2} parent=5 // pred_region
      // Predicated region
      $region25: #{stem_forward.2} parent=23 // pred_check
        %p144 = pneg %p43
      $region26: #{stem_forward.2} parent=23 // pred_check_branch
        %146 = sbr.rel (%p144) target = $region28
      $region27: #{stem_forward.2} parent=23 // pred_region
        %s147 = smul.u32 8, %s17
        %p148 = scmp.lt.s32.totalorder %s16, 1
        %s149 = scalar_select %p148, %s16, 1
        %p150 = scmp.lt.s32.totalorder %s147, 7
        %s151 = scalar_select %p150, %s147, 7
        %s152 = smul.addr %s151, 2
        %s153 = smul.addr %s149, 16
        %s154 = sadd.s32 %s152, %s153
        %s155 = smul.addr %s154, 8
        %s156 = scalar_lea.vmem %s0, %s155
        %s157 = smul.u32 8, %s17
      $region28: #{stem_forward.2} parent=23 // pred_fallthru
        _
    $region24: #{stem_forward.2} parent=5 // pred_fallthru
      _
    %p158 = scmp.le.s32.totalorder 1, %s9
    %p159 = scmp.lt.s32.totalorder %s9, 3
    %p160 = pnand %p158, %p159
    %p161 = pneg %p160
    // Predicated region
    $region29: #{stem_forward.2} parent=5 // pred_check
      _
    $region30: #{stem_forward.2} parent=5 // pred_check_branch
      %163 = sbr.rel (%p160) target = $region32
    $region31: #{stem_forward.2} parent=5 // pred_region
      %s164 = ssub.s32 %s9, 1
      %s165 = smul.u32 8, %s19
      %p166 = scmp.lt.s32.totalorder %s18, 1
      %s167 = scalar_select %p166, %s18, 1
      %p168 = scmp.lt.s32.totalorder %s165, 7
      %s169 = scalar_select %p168, %s165, 7
      %s170 = smul.addr %s169, 2
      %s171 = smul.addr %s167, 16
      %s172 = sadd.s32 %s170, %s171
      %s173 = smul.addr %s172, 8
      %s174 = scalar_lea.vmem %s0, %s173
      %p175 = pneg %p49
      %p176 = pneg %p46
      %p177 = pneg %p70
      %p178 = pneg %p67
      %p179 = pneg %p91
      %p180 = pneg %p88
      %p181 = pneg %p119
      %p182 = pneg %p116
      %s183 = smul.u32 8, %s19
      %p184 = scmp.lt.s32.totalorder %s18, 1
      %s185 = scalar_select %p184, %s18, 1
      %p186 = scmp.lt.s32.totalorder %s183, 7
      %s187 = scalar_select %p186, %s183, 7
      %s188 = smul.addr %s185, 8
      %s189 = sadd.s32 %s187, %s188
      %s190 = smul.addr %s189, 8
      %s191 = scalar_lea.vmem %s3, %s190
      %s192 = smul.u32 8, %s19
      %p193 = scmp.lt.s32.totalorder %s18, 1
      %s194 = scalar_select %p193, %s18, 1
      %p195 = scmp.lt.s32.totalorder %s192, 7
      %s196 = scalar_select %p195, %s192, 7
      %s197 = smul.addr %s196, 2
      %s198 = smul.addr %s194, 16
      %s199 = sadd.s32 %s197, %s198
      %s200 = smul.addr %s199, 8
      %s201 = scalar_lea.vmem %s0, %s200
      %s202 = smul.u32 8, %s19
      %s203 = smul.u32 8, %s19
      %p204 = scmp.lt.s32.totalorder %s18, 1
      %s205 = scalar_select %p204, %s18, 1
      %p206 = scmp.lt.s32.totalorder %s203, 7
      %s207 = scalar_select %p206, %s203, 7
      %s208 = smul.addr %s205, 8
      %s209 = sadd.s32 %s207, %s208
      %s210 = smul.addr %s209, 8
      %s211 = scalar_lea.vmem %s3, %s210
      %s212 = smul.u32 8, %s19
      %v213 = vld [vmem:[%s201] sm:$0xff]
      %v214 = vld [vmem:[%s201 + $0x8] sm:$0x1]
      %v215 = vld [vmem:[%s201 + $0x10] sm:$0xff]
      %v216 = vld [vmem:[%s201 + $0x18] sm:$0x1]
      %v217 = vld [vmem:[%s201 + $0x20] sm:$0xff]
      %v218 = vld [vmem:[%s201 + $0x28] sm:$0x1]
      %v219 = vld [vmem:[%s201 + $0x30] sm:$0xff]
      %v220 = vld [vmem:[%s201 + $0x38] sm:$0x1]
      %v221 = vld [vmem:[%s201 + $0x40] sm:$0xff]
      %v222 = vld [vmem:[%s201 + $0x48] sm:$0x1]
      %v223 = vld [vmem:[%s201 + $0x50] sm:$0xff]
      %v224 = vld [vmem:[%s201 + $0x58] sm:$0x1]
      %v225 = vld [vmem:[%s201 + $0x60] sm:$0xff]
      %v226 = vld [vmem:[%s201 + $0x68] sm:$0x1]
      %v227 = vld [vmem:[%s201 + $0x70] sm:$0xff]
      %v228 = vld [vmem:[%s201 + $0x78] sm:$0x1]
      %v229 = vld [vmem:[%s1] sm:$0x7]
      %v230 = vld [vmem:[%s1 + $0x3] sm:$0x7]
      %239 = vrot.lane.b32.xlu0 %v213, 125
      %v240 = vpop.permute.xlu0 %239
      %241 = vrot.lane.b32.xlu0 %v215, 125
      %v242 = vpop.permute.xlu0 %241
      %243 = vrot.lane.b32.xlu0 %v217, 125
      %v244 = vpop.permute.xlu0 %243
      %245 = vrot.lane.b32.xlu0 %v219, 125
      %v246 = vpop.permute.xlu0 %245
      %247 = vrot.lane.b32.xlu0 %v221, 125
      %v248 = vpop.permute.xlu0 %247
      %249 = vrot.lane.b32.xlu0 %v223, 125
      %v250 = vpop.permute.xlu0 %249
      %251 = vrot.lane.b32.xlu0 %v225, 125
      %v252 = vpop.permute.xlu0 %251
      %253 = vrot.lane.b32.xlu0 %v227, 125
      %v254 = vpop.permute.xlu0 %253
      %vm255 = vcmask 23552
      %v256 = vsel %vm255, %v240, 0
      %v258 = vsel %vm255, %v242, 0
      %v260 = vsel %vm255, %v244, 0
      %v262 = vsel %vm255, %v246, 0
      %v264 = vsel %vm255, %v248, 0
      %v266 = vsel %vm255, %v250, 0
      %v268 = vsel %vm255, %v252, 0
      %v270 = vsel %vm255, %v254, 0
      %vm272 = vcmask 1042432
      %v274 = vsel %vm272, %v230, 0
      %276 = vmatprep.subr.mxu0 0.0
      %277 = vmatpush1.msra.mxu0 %v274
      %278 = vmatprep.subr.mxu0 0.0
      %279 = vmatpush1.msra.mxu0 0.0
      %280 = vmatprep.subr.mxu0 0.0
      %281 = vmatpush1.msra.mxu0 0.0
      %282 = vmatprep.subr.mxu0 0.0
      %283 = vmatpush1.msra.mxu0 0.0
      %284 = vmatprep.subr.mxu0 0.0
      %285 = vmatpush1.msra.mxu0 0.0
      %286 = vmatprep.subr.mxu0 0.0
      %287 = vmatpush1.msra.mxu0 0.0
      %288 = vmatprep.subr.mxu0 0.0
      %289 = vmatpush1.msra.mxu0 0.0
      %290 = vmatprep.subr.mxu0 0.0
      %291 = vmatpush1.msra.mxu0 0.0
      %292 = vmatprep.subr.mxu0 0.0
      %293 = vmatpush1.msra.mxu0 0.0
      %294 = vmatprep.subr.mxu0 0.0
      %295 = vmatpush1.msra.mxu0 0.0
      %296 = vmatprep.subr.mxu0 0.0
      %297 = vmatpush1.msra.mxu0 0.0
      %298 = vmatprep.subr.mxu0 0.0
      %299 = vmatpush1.msra.mxu0 0.0
      %300 = vmatprep.subr.mxu0 0.0
      %301 = vmatpush1.msra.mxu0 0.0
      %302 = vmatprep.subr.mxu0 0.0
      %303 = vmatpush1.msra.mxu0 0.0
      %304 = vmatprep.subr.mxu0 0.0
      %305 = vmatpush1.msra.mxu0 0.0
      %306 = vmatprep.subr.mxu0 0.0
      %307 = vmatpush1.msra.mxu0 0.0
      %308 = vmatprep.subr.mxu0 0.0
      %309 = vmatpush1.msra.mxu0 0.0
      %310 = vmatprep.subr.mxu0 0.0
      %311 = vmatpush1.msra.mxu0 0.0
      %312 = vmatprep.subr.mxu0 0.0
      %313 = vmatpush1.msra.mxu0 0.0
      %314 = vmatprep.subr.mxu0 0.0
      %315 = vmatpush1.msra.mxu0 0.0
      %316 = vmatprep.subr.mxu0 0.0
      %317 = vmatpush1.msra.mxu0 0.0
      %318 = vmatprep.subr.mxu0 0.0
      %319 = vmatpush1.msra.mxu0 0.0
      %320 = vmatprep.subr.mxu0 0.0
      %321 = vmatpush1.msra.mxu0 0.0
      %322 = vmatprep.subr.mxu0 0.0
      %323 = vmatpush1.msra.mxu0 0.0
      %324 = vmatprep.subr.mxu0 0.0
      %325 = vmatpush1.msra.mxu0 0.0
      %326 = vmatprep.subr.mxu0 0.0
      %327 = vmatpush1.msra.mxu0 0.0
      %328 = vmatprep.subr.mxu0 0.0
      %329 = vmatpush1.msra.mxu0 0.0
      %330 = vmatprep.subr.mxu0 0.0
      %331 = vmatpush1.msra.mxu0 0.0
      %332 = vmatprep.subr.mxu0 0.0
      %333 = vmatpush1.msra.mxu0 0.0
      %334 = vmatprep.subr.mxu0 0.0
      %335 = vmatpush1.msra.mxu0 0.0
      %336 = vmatprep.subr.mxu0 0.0
      %337 = vmatpush1.msra.mxu0 0.0
      %338 = vmatprep.subr.mxu0 0.0
      %339 = vmatpush1.msra.mxu0 0.0
      %340 = vmatprep.mubr.f32.mxu0 0.0
      %341 = vmatmul.mubr.f32.gmra.mrb[0].mxu0 %v256
      %v342 = vpop.f32.mrb[0].mxu0
      %v343 = vadd.f32 0.0, %v342
      %v344 = vpop.f32.mrb[0].mxu0
      %345 = vmatprep.mubr.f32.mxu0 0.0
      %346 = vmatmul.mubr.f32.gmra.mrb[0].mxu0 %v258
      %v347 = vpop.f32.mrb[0].mxu0
      %v348 = vadd.f32 0.0, %v347
      %v349 = vpop.f32.mrb[0].mxu0
      %350 = vmatprep.mubr.f32.mxu0 0.0
      %351 = vmatmul.mubr.f32.gmra.mrb[0].mxu0 %v260
      %v352 = vpop.f32.mrb[0].mxu0
      %v353 = vadd.f32 0.0, %v352
      %v354 = vpop.f32.mrb[0].mxu0
      %355 = vmatprep.mubr.f32.mxu0 0.0
      %356 = vmatmul.mubr.f32.gmra.mrb[0].mxu0 %v262
      %v357 = vpop.f32.mrb[0].mxu0
      %v358 = vadd.f32 0.0, %v357
      %v359 = vpop.f32.mrb[0].mxu0
      %360 = vmatprep.mubr.f32.mxu0 0.0
      %361 = vmatmul.mubr.f32.gmra.mrb[0].mxu0 %v264
      %v362 = vpop.f32.mrb[0].mxu0
      %v363 = vadd.f32 0.0, %v362
      %v364 = vpop.f32.mrb[0].mxu0
      %365 = vmatprep.mubr.f32.mxu0 0.0
      %366 = vmatmul.mubr.f32.gmra.mrb[0].mxu0 %v266
      %v367 = vpop.f32.mrb[0].mxu0
      %v368 = vadd.f32 0.0, %v367
      %v369 = vpop.f32.mrb[0].mxu0
      %370 = vmatprep.mubr.f32.mxu0 0.0
      %371 = vmatmul.mubr.f32.gmra.mrb[0].mxu0 %v268
      %v372 = vpop.f32.mrb[0].mxu0
      %v373 = vadd.f32 0.0, %v372
      %v374 = vpop.f32.mrb[0].mxu0
      %375 = vmatprep.mubr.f32.mxu0 0.0
      %376 = vmatmul.mubr.f32.gmra.mrb[0].mxu0 %v270
      %v377 = vpop.f32.mrb[0].mxu0
      %v378 = vadd.f32 0.0, %v377
      %v379 = vpop.f32.mrb[0].mxu0
      %380 = vdwg.mxu0
      %v381 = vsel %vm255, %v213, 0
      %v383 = vsel %vm255, %v215, 0
      %v385 = vsel %vm255, %v217, 0
      %v387 = vsel %vm255, %v219, 0
      %v389 = vsel %vm255, %v221, 0
      %v391 = vsel %vm255, %v223, 0
      %v393 = vsel %vm255, %v225, 0
      %v395 = vsel %vm255, %v227, 0
      %v398 = vsel %vm272, %v229, 0
      %400 = vmatprep.subr.mxu0 0.0
      %401 = vmatpush1.msra.mxu0 %v398
      %402 = vmatprep.subr.mxu0 0.0
      %403 = vmatpush1.msra.mxu0 0.0
      %404 = vmatprep.subr.mxu0 0.0
      %405 = vmatpush1.msra.mxu0 0.0
      %406 = vmatprep.subr.mxu0 0.0
      %407 = vmatpush1.msra.mxu0 0.0
      %408 = vmatprep.subr.mxu0 0.0
      %409 = vmatpush1.msra.mxu0 0.0
      %410 = vmatprep.subr.mxu0 0.0
      %411 = vmatpush1.msra.mxu0 0.0
      %412 = vmatprep.subr.mxu0 0.0
      %413 = vmatpush1.msra.mxu0 0.0
      %414 = vmatprep.subr.mxu0 0.0
      %415 = vmatpush1.msra.mxu0 0.0
      %416 = vmatprep.subr.mxu0 0.0
      %417 = vmatpush1.msra.mxu0 0.0
      %418 = vmatprep.subr.mxu0 0.0
      %419 = vmatpush1.msra.mxu0 0.0
      %420 = vmatprep.subr.mxu0 0.0
      %421 = vmatpush1.msra.mxu0 0.0
      %422 = vmatprep.subr.mxu0 0.0
      %423 = vmatpush1.msra.mxu0 0.0
      %424 = vmatprep.subr.mxu0 0.0
      %425 = vmatpush1.msra.mxu0 0.0
      %426 = vmatprep.subr.mxu0 0.0
      %427 = vmatpush1.msra.mxu0 0.0
      %428 = vmatprep.subr.mxu0 0.0
      %429 = vmatpush1.msra.mxu0 0.0
      %430 = vmatprep.subr.mxu0 0.0
      %431 = vmatpush1.msra.mxu0 0.0
      %432 = vmatprep.subr.mxu0 0.0
      %433 = vmatpush1.msra.mxu0 0.0
      %434 = vmatprep.subr.mxu0 0.0
      %435 = vmatpush1.msra.mxu0 0.0
      %436 = vmatprep.subr.mxu0 0.0
      %437 = vmatpush1.msra.mxu0 0.0
      %438 = vmatprep.subr.mxu0 0.0
      %439 = vmatpush1.msra.mxu0 0.0
      %440 = vmatprep.subr.mxu0 0.0
      %441 = vmatpush1.msra.mxu0 0.0
      %442 = vmatprep.subr.mxu0 0.0
      %443 = vmatpush1.msra.mxu0 0.0
      %444 = vmatprep.subr.mxu0 0.0
      %445 = vmatpush1.msra.mxu0 0.0
      %446 = vmatprep.subr.mxu0 0.0
      %447 = vmatpush1.msra.mxu0 0.0
      %448 = vmatprep.subr.mxu0 0.0
      %449 = vmatpush1.msra.mxu0 0.0
      %450 = vmatprep.subr.mxu0 0.0
      %451 = vmatpush1.msra.mxu0 0.0
      %452 = vmatprep.subr.mxu0 0.0
      %453 = vmatpush1.msra.mxu0 0.0
      %454 = vmatprep.subr.mxu0 0.0
      %455 = vmatpush1.msra.mxu0 0.0
      %456 = vmatprep.subr.mxu0 0.0
      %457 = vmatpush1.msra.mxu0 0.0
      %458 = vmatprep.subr.mxu0 0.0
      %459 = vmatpush1.msra.mxu0 0.0
      %460 = vmatprep.subr.mxu0 0.0
      %461 = vmatpush1.msra.mxu0 0.0
      %462 = vmatprep.subr.mxu0 0.0
      %463 = vmatpush1.msra.mxu0 0.0
      %464 = vmatprep.mubr.f32.mxu0 0.0
      %465 = vmatmul.mubr.f32.gmra.mrb[0].mxu0 %v381
      %v466 = vpop.f32.mrb[0].mxu0
      %v467 = vadd.f32 %v343, %v466
      %v468 = vpop.f32.mrb[0].mxu0
      %469 = vmatprep.mubr.f32.mxu0 0.0
      %470 = vmatmul.mubr.f32.gmra.mrb[0].mxu0 %v383
      %v471 = vpop.f32.mrb[0].mxu0
      %v472 = vadd.f32 %v348, %v471
      %v473 = vpop.f32.mrb[0].mxu0
      %474 = vmatprep.mubr.f32.mxu0 0.0
      %475 = vmatmul.mubr.f32.gmra.mrb[0].mxu0 %v385
      %v476 = vpop.f32.mrb[0].mxu0
      %v477 = vadd.f32 %v353, %v476
      %v478 = vpop.f32.mrb[0].mxu0
      %479 = vmatprep.mubr.f32.mxu0 0.0
      %480 = vmatmul.mubr.f32.gmra.mrb[0].mxu0 %v387
      %v481 = vpop.f32.mrb[0].mxu0
      %v482 = vadd.f32 %v358, %v481
      %v483 = vpop.f32.mrb[0].mxu0
      %484 = vmatprep.mubr.f32.mxu0 0.0
      %485 = vmatmul.mubr.f32.gmra.mrb[0].mxu0 %v389
      %v486 = vpop.f32.mrb[0].mxu0
      %v487 = vadd.f32 %v363, %v486
      %v488 = vpop.f32.mrb[0].mxu0
      %489 = vmatprep.mubr.f32.mxu0 0.0
      %490 = vmatmul.mubr.f32.gmra.mrb[0].mxu0 %v391
      %v491 = vpop.f32.mrb[0].mxu0
      %v492 = vadd.f32 %v368, %v491
      %v493 = vpop.f32.mrb[0].mxu0
      %494 = vmatprep.mubr.f32.mxu0 0.0
      %495 = vmatmul.mubr.f32.gmra.mrb[0].mxu0 %v393
      %v496 = vpop.f32.mrb[0].mxu0
      %v497 = vadd.f32 %v373, %v496
      %v498 = vpop.f32.mrb[0].mxu0
      %499 = vmatprep.mubr.f32.mxu0 0.0
      %500 = vmatmul.mubr.f32.gmra.mrb[0].mxu0 %v395
      %v501 = vpop.f32.mrb[0].mxu0
      %v502 = vadd.f32 %v378, %v501
      %v503 = vpop.f32.mrb[0].mxu0
      %504 = vdwg.mxu0
      %vm513 = vcmask 1046528
      %v514 = vrot.slane %v213, 1
      %v515 = vrot.slane %v214, 1
      %v516 = vsel %vm513, %v514, %v515
      %v517 = vrot.slane %v215, 1
      %v518 = vrot.slane %v216, 1
      %v519 = vsel %vm513, %v517, %v518
      %v520 = vrot.slane %v217, 1
      %v521 = vrot.slane %v218, 1
      %v522 = vsel %vm513, %v520, %v521
      %v523 = vrot.slane %v219, 1
      %v524 = vrot.slane %v220, 1
      %v525 = vsel %vm513, %v523, %v524
      %v526 = vrot.slane %v221, 1
      %v527 = vrot.slane %v222, 1
      %v528 = vsel %vm513, %v526, %v527
      %v529 = vrot.slane %v223, 1
      %v530 = vrot.slane %v224, 1
      %v531 = vsel %vm513, %v529, %v530
      %v532 = vrot.slane %v225, 1
      %v533 = vrot.slane %v226, 1
      %v534 = vsel %vm513, %v532, %v533
      %v535 = vrot.slane %v227, 1
      %v536 = vrot.slane %v228, 1
      %v537 = vsel %vm513, %v535, %v536
      %v538 = vld [vmem:[%s1 + $0x6] sm:$0x7]
      %v539 = vsel %vm255, %v516, 0
      %v541 = vsel %vm255, %v519, 0
      %v543 = vsel %vm255, %v522, 0
      %v545 = vsel %vm255, %v525, 0
      %v547 = vsel %vm255, %v528, 0
      %v549 = vsel %vm255, %v531, 0
      %v551 = vsel %vm255, %v534, 0
      %v553 = vsel %vm255, %v537, 0
      %v556 = vsel %vm272, %v538, 0
      %558 = vmatprep.subr.mxu0 0.0
      %559 = vmatpush1.msra.mxu0 %v556
      %560 = vmatprep.subr.mxu0 0.0
      %561 = vmatpush1.msra.mxu0 0.0
      %562 = vmatprep.subr.mxu0 0.0
      %563 = vmatpush1.msra.mxu0 0.0
      %564 = vmatprep.subr.mxu0 0.0
      %565 = vmatpush1.msra.mxu0 0.0
      %566 = vmatprep.subr.mxu0 0.0
      %567 = vmatpush1.msra.mxu0 0.0
      %568 = vmatprep.subr.mxu0 0.0
      %569 = vmatpush1.msra.mxu0 0.0
      %570 = vmatprep.subr.mxu0 0.0
      %571 = vmatpush1.msra.mxu0 0.0
      %572 = vmatprep.subr.mxu0 0.0
      %573 = vmatpush1.msra.mxu0 0.0
      %574 = vmatprep.subr.mxu0 0.0
      %575 = vmatpush1.msra.mxu0 0.0
      %576 = vmatprep.subr.mxu0 0.0
      %577 = vmatpush1.msra.mxu0 0.0
      %578 = vmatprep.subr.mxu0 0.0
      %579 = vmatpush1.msra.mxu0 0.0
      %580 = vmatprep.subr.mxu0 0.0
      %581 = vmatpush1.msra.mxu0 0.0
      %582 = vmatprep.subr.mxu0 0.0
      %583 = vmatpush1.msra.mxu0 0.0
      %584 = vmatprep.subr.mxu0 0.0
      %585 = vmatpush1.msra.mxu0 0.0
      %586 = vmatprep.subr.mxu0 0.0
      %587 = vmatpush1.msra.mxu0 0.0
      %588 = vmatprep.subr.mxu0 0.0
      %589 = vmatpush1.msra.mxu0 0.0
      %590 = vmatprep.subr.mxu0 0.0
      %591 = vmatpush1.msra.mxu0 0.0
      %592 = vmatprep.subr.mxu0 0.0
      %593 = vmatpush1.msra.mxu0 0.0
      %594 = vmatprep.subr.mxu0 0.0
      %595 = vmatpush1.msra.mxu0 0.0
      %596 = vmatprep.subr.mxu0 0.0
      %597 = vmatpush1.msra.mxu0 0.0
      %598 = vmatprep.subr.mxu0 0.0
      %599 = vmatpush1.msra.mxu0 0.0
      %600 = vmatprep.subr.mxu0 0.0
      %601 = vmatpush1.msra.mxu0 0.0
      %602 = vmatprep.subr.mxu0 0.0
      %603 = vmatpush1.msra.mxu0 0.0
      %604 = vmatprep.subr.mxu0 0.0
      %605 = vmatpush1.msra.mxu0 0.0
      %606 = vmatprep.subr.mxu0 0.0
      %607 = vmatpush1.msra.mxu0 0.0
      %608 = vmatprep.subr.mxu0 0.0
      %609 = vmatpush1.msra.mxu0 0.0
      %610 = vmatprep.subr.mxu0 0.0
      %611 = vmatpush1.msra.mxu0 0.0
      %612 = vmatprep.subr.mxu0 0.0
      %613 = vmatpush1.msra.mxu0 0.0
      %614 = vmatprep.subr.mxu0 0.0
      %615 = vmatpush1.msra.mxu0 0.0
      %616 = vmatprep.subr.mxu0 0.0
      %617 = vmatpush1.msra.mxu0 0.0
      %618 = vmatprep.subr.mxu0 0.0
      %619 = vmatpush1.msra.mxu0 0.0
      %620 = vmatprep.subr.mxu0 0.0
      %621 = vmatpush1.msra.mxu0 0.0
      %622 = vmatprep.mubr.f32.mxu0 0.0
      %623 = vmatmul.mubr.f32.gmra.mrb[0].mxu0 %v539
      %v624 = vpop.f32.mrb[0].mxu0
      %v625 = vadd.f32 0.0, %v624
      %v626 = vpop.f32.mrb[0].mxu0
      %627 = vmatprep.mubr.f32.mxu0 0.0
      %628 = vmatmul.mubr.f32.gmra.mrb[0].mxu0 %v541
      %v629 = vpop.f32.mrb[0].mxu0
      %v630 = vadd.f32 0.0, %v629
      %v631 = vpop.f32.mrb[0].mxu0
      %632 = vmatprep.mubr.f32.mxu0 0.0
      %633 = vmatmul.mubr.f32.gmra.mrb[0].mxu0 %v543
      %v634 = vpop.f32.mrb[0].mxu0
      %v635 = vadd.f32 0.0, %v634
      %v636 = vpop.f32.mrb[0].mxu0
      %637 = vmatprep.mubr.f32.mxu0 0.0
      %638 = vmatmul.mubr.f32.gmra.mrb[0].mxu0 %v545
      %v639 = vpop.f32.mrb[0].mxu0
      %v640 = vadd.f32 0.0, %v639
      %v641 = vpop.f32.mrb[0].mxu0
      %642 = vmatprep.mubr.f32.mxu0 0.0
      %643 = vmatmul.mubr.f32.gmra.mrb[0].mxu0 %v547
      %v644 = vpop.f32.mrb[0].mxu0
      %v645 = vadd.f32 0.0, %v644
      %v646 = vpop.f32.mrb[0].mxu0
      %647 = vmatprep.mubr.f32.mxu0 0.0
      %648 = vmatmul.mubr.f32.gmra.mrb[0].mxu0 %v549
      %v649 = vpop.f32.mrb[0].mxu0
      %v650 = vadd.f32 0.0, %v649
      %v651 = vpop.f32.mrb[0].mxu0
      %652 = vmatprep.mubr.f32.mxu0 0.0
      %653 = vmatmul.mubr.f32.gmra.mrb[0].mxu0 %v551
      %v654 = vpop.f32.mrb[0].mxu0
      %v655 = vadd.f32 0.0, %v654
      %v656 = vpop.f32.mrb[0].mxu0
      %657 = vmatprep.mubr.f32.mxu0 0.0
      %658 = vmatmul.mubr.f32.gmra.mrb[0].mxu0 %v553
      %v659 = vpop.f32.mrb[0].mxu0
      %v660 = vadd.f32 0.0, %v659
      %v661 = vpop.f32.mrb[0].mxu0
      %662 = vdwg.mxu0
      %v663 = vadd.f32 %v467, %v625
      %v664 = vadd.f32 %v472, %v630
      %v665 = vadd.f32 %v477, %v635
      %v666 = vadd.f32 %v482, %v640
      %v667 = vadd.f32 %v487, %v645
      %v668 = vadd.f32 %v492, %v650
      %v669 = vadd.f32 %v497, %v655
      %v670 = vadd.f32 %v502, %v660
      %v671 = vld [vmem:[%s1 + $0x9] sm:$0x7]
      %672 = vrot.lane.b32.xlu0 %v213, 122
      %v673 = vpop.permute.xlu0 %672
      %674 = vrot.lane.b32.xlu0 %v215, 122
      %v675 = vpop.permute.xlu0 %674
      %676 = vrot.lane.b32.xlu0 %v217, 122
      %v677 = vpop.permute.xlu0 %676
      %678 = vrot.lane.b32.xlu0 %v219, 122
      %v679 = vpop.permute.xlu0 %678
      %680 = vrot.lane.b32.xlu0 %v221, 122
      %v681 = vpop.permute.xlu0 %680
      %682 = vrot.lane.b32.xlu0 %v223, 122
      %v683 = vpop.permute.xlu0 %682
      %684 = vrot.lane.b32.xlu0 %v225, 122
      %v685 = vpop.permute.xlu0 %684
      %686 = vrot.lane.b32.xlu0 %v227, 122
      %v687 = vpop.permute.xlu0 %686
      %v688 = vsel %vm255, %v673, 0
      %v690 = vsel %vm255, %v675, 0
      %v692 = vsel %vm255, %v677, 0
      %v694 = vsel %vm255, %v679, 0
      %v696 = vsel %vm255, %v681, 0
      %v698 = vsel %vm255, %v683, 0
      %v700 = vsel %vm255, %v685, 0
      %v702 = vsel %vm255, %v687, 0
      %v705 = vsel %vm272, %v671, 0
      %707 = vmatprep.subr.mxu0 0.0
      %708 = vmatpush1.msra.mxu0 %v705
      %709 = vmatprep.subr.mxu0 0.0
      %710 = vmatpush1.msra.mxu0 0.0
      %711 = vmatprep.subr.mxu0 0.0
      %712 = vmatpush1.msra.mxu0 0.0
      %713 = vmatprep.subr.mxu0 0.0
      %714 = vmatpush1.msra.mxu0 0.0
      %715 = vmatprep.subr.mxu0 0.0
      %716 = vmatpush1.msra.mxu0 0.0
      %717 = vmatprep.subr.mxu0 0.0
      %718 = vmatpush1.msra.mxu0 0.0
      %719 = vmatprep.subr.mxu0 0.0
      %720 = vmatpush1.msra.mxu0 0.0
      %721 = vmatprep.subr.mxu0 0.0
      %722 = vmatpush1.msra.mxu0 0.0
      %723 = vmatprep.subr.mxu0 0.0
      %724 = vmatpush1.msra.mxu0 0.0
      %725 = vmatprep.subr.mxu0 0.0
      %726 = vmatpush1.msra.mxu0 0.0
      %727 = vmatprep.subr.mxu0 0.0
      %728 = vmatpush1.msra.mxu0 0.0
      %729 = vmatprep.subr.mxu0 0.0
      %730 = vmatpush1.msra.mxu0 0.0
      %731 = vmatprep.subr.mxu0 0.0
      %732 = vmatpush1.msra.mxu0 0.0
      %733 = vmatprep.subr.mxu0 0.0
      %734 = vmatpush1.msra.mxu0 0.0
      %735 = vmatprep.subr.mxu0 0.0
      %736 = vmatpush1.msra.mxu0 0.0
      %737 = vmatprep.subr.mxu0 0.0
      %738 = vmatpush1.msra.mxu0 0.0
      %739 = vmatprep.subr.mxu0 0.0
      %740 = vmatpush1.msra.mxu0 0.0
      %741 = vmatprep.subr.mxu0 0.0
      %742 = vmatpush1.msra.mxu0 0.0
      %743 = vmatprep.subr.mxu0 0.0
      %744 = vmatpush1.msra.mxu0 0.0
      %745 = vmatprep.subr.mxu0 0.0
      %746 = vmatpush1.msra.mxu0 0.0
      %747 = vmatprep.subr.mxu0 0.0
      %748 = vmatpush1.msra.mxu0 0.0
      %749 = vmatprep.subr.mxu0 0.0
      %750 = vmatpush1.msra.mxu0 0.0
      %751 = vmatprep.subr.mxu0 0.0
      %752 = vmatpush1.msra.mxu0 0.0
      %753 = vmatprep.subr.mxu0 0.0
      %754 = vmatpush1.msra.mxu0 0.0
      %755 = vmatprep.subr.mxu0 0.0
      %756 = vmatpush1.msra.mxu0 0.0
      %757 = vmatprep.subr.mxu0 0.0
      %758 = vmatpush1.msra.mxu0 0.0
      %759 = vmatprep.subr.mxu0 0.0
      %760 = vmatpush1.msra.mxu0 0.0
      %761 = vmatprep.subr.mxu0 0.0
      %762 = vmatpush1.msra.mxu0 0.0
      %763 = vmatprep.subr.mxu0 0.0
      %764 = vmatpush1.msra.mxu0 0.0
      %765 = vmatprep.subr.mxu0 0.0
      %766 = vmatpush1.msra.mxu0 0.0
      %767 = vmatprep.subr.mxu0 0.0
      %768 = vmatpush1.msra.mxu0 0.0
      %769 = vmatprep.subr.mxu0 0.0
      %770 = vmatpush1.msra.mxu0 0.0
      %771 = vmatprep.mubr.f32.mxu0 0.0
      %772 = vmatmul.mubr.f32.gmra.mrb[0].mxu0 %v688
      %v773 = vpop.f32.mrb[0].mxu0
      %v774 = vadd.f32 0.0, %v773
      %v775 = vpop.f32.mrb[0].mxu0
      %776 = vmatprep.mubr.f32.mxu0 0.0
      %777 = vmatmul.mubr.f32.gmra.mrb[0].mxu0 %v690
      %v778 = vpop.f32.mrb[0].mxu0
      %v779 = vadd.f32 0.0, %v778
      %v780 = vpop.f32.mrb[0].mxu0
      %781 = vmatprep.mubr.f32.mxu0 0.0
      %782 = vmatmul.mubr.f32.gmra.mrb[0].mxu0 %v692
      %v783 = vpop.f32.mrb[0].mxu0
      %v784 = vadd.f32 0.0, %v783
      %v785 = vpop.f32.mrb[0].mxu0
      %786 = vmatprep.mubr.f32.mxu0 0.0
      %787 = vmatmul.mubr.f32.gmra.mrb[0].mxu0 %v694
      %v788 = vpop.f32.mrb[0].mxu0
      %v789 = vadd.f32 0.0, %v788
      %v790 = vpop.f32.mrb[0].mxu0
      %791 = vmatprep.mubr.f32.mxu0 0.0
      %792 = vmatmul.mubr.f32.gmra.mrb[0].mxu0 %v696
      %v793 = vpop.f32.mrb[0].mxu0
      %v794 = vadd.f32 0.0, %v793
      %v795 = vpop.f32.mrb[0].mxu0
      %796 = vmatprep.mubr.f32.mxu0 0.0
      %797 = vmatmul.mubr.f32.gmra.mrb[0].mxu0 %v698
      %v798 = vpop.f32.mrb[0].mxu0
      %v799 = vadd.f32 0.0, %v798
      %v800 = vpop.f32.mrb[0].mxu0
      %801 = vmatprep.mubr.f32.mxu0 0.0
      %802 = vmatmul.mubr.f32.gmra.mrb[0].mxu0 %v700
      %v803 = vpop.f32.mrb[0].mxu0
      %v804 = vadd.f32 0.0, %v803
      %v805 = vpop.f32.mrb[0].mxu0
      %806 = vmatprep.mubr.f32.mxu0 0.0
      %807 = vmatmul.mubr.f32.gmra.mrb[0].mxu0 %v702
      %v808 = vpop.f32.mrb[0].mxu0
      %v809 = vadd.f32 0.0, %v808
      %v810 = vpop.f32.mrb[0].mxu0
      %811 = vdwg.mxu0
      %v812 = vadd.f32 %v663, %v774
      %v813 = vadd.f32 %v664, %v779
      %v814 = vadd.f32 %v665, %v784
      %v815 = vadd.f32 %v666, %v789
      %v816 = vadd.f32 %v667, %v794
      %v817 = vadd.f32 %v668, %v799
      %v818 = vadd.f32 %v669, %v804
      %v819 = vadd.f32 %v670, %v809
      %v820 = vld [vmem:[%s1 + $0xc] sm:$0x7]
      %821 = vrot.lane.b32.xlu0 %v213, 119
      %v822 = vpop.permute.xlu0 %821
      %823 = vrot.lane.b32.xlu0 %v215, 119
      %v824 = vpop.permute.xlu0 %823
      %825 = vrot.lane.b32.xlu0 %v217, 119
      %v826 = vpop.permute.xlu0 %825
      %827 = vrot.lane.b32.xlu0 %v219, 119
      %v828 = vpop.permute.xlu0 %827
      %829 = vrot.lane.b32.xlu0 %v221, 119
      %v830 = vpop.permute.xlu0 %829
      %831 = vrot.lane.b32.xlu0 %v223, 119
      %v832 = vpop.permute.xlu0 %831
      %833 = vrot.lane.b32.xlu0 %v225, 119
      %v834 = vpop.permute.xlu0 %833
      %835 = vrot.lane.b32.xlu0 %v227, 119
      %v836 = vpop.permute.xlu0 %835
      %v837 = vsel %vm255, %v822, 0
      %v839 = vsel %vm255, %v824, 0
      %v841 = vsel %vm255, %v826, 0
      %v843 = vsel %vm255, %v828, 0
      %v845 = vsel %vm255, %v830, 0
      %v847 = vsel %vm255, %v832, 0
      %v849 = vsel %vm255, %v834, 0
      %v851 = vsel %vm255, %v836, 0
      %v854 = vsel %vm272, %v820, 0
      %856 = vmatprep.subr.mxu0 0.0
      %857 = vmatpush1.msra.mxu0 %v854
      %858 = vmatprep.subr.mxu0 0.0
      %859 = vmatpush1.msra.mxu0 0.0
      %860 = vmatprep.subr.mxu0 0.0
      %861 = vmatpush1.msra.mxu0 0.0
      %862 = vmatprep.subr.mxu0 0.0
      %863 = vmatpush1.msra.mxu0 0.0
      %864 = vmatprep.subr.mxu0 0.0
      %865 = vmatpush1.msra.mxu0 0.0
      %866 = vmatprep.subr.mxu0 0.0
      %867 = vmatpush1.msra.mxu0 0.0
      %868 = vmatprep.subr.mxu0 0.0
      %869 = vmatpush1.msra.mxu0 0.0
      %870 = vmatprep.subr.mxu0 0.0
      %871 = vmatpush1.msra.mxu0 0.0
      %872 = vmatprep.subr.mxu0 0.0
      %873 = vmatpush1.msra.mxu0 0.0
      %874 = vmatprep.subr.mxu0 0.0
      %875 = vmatpush1.msra.mxu0 0.0
      %876 = vmatprep.subr.mxu0 0.0
      %877 = vmatpush1.msra.mxu0 0.0
      %878 = vmatprep.subr.mxu0 0.0
      %879 = vmatpush1.msra.mxu0 0.0
      %880 = vmatprep.subr.mxu0 0.0
      %881 = vmatpush1.msra.mxu0 0.0
      %882 = vmatprep.subr.mxu0 0.0
      %883 = vmatpush1.msra.mxu0 0.0
      %884 = vmatprep.subr.mxu0 0.0
      %885 = vmatpush1.msra.mxu0 0.0
      %886 = vmatprep.subr.mxu0 0.0
      %887 = vmatpush1.msra.mxu0 0.0
      %888 = vmatprep.subr.mxu0 0.0
      %889 = vmatpush1.msra.mxu0 0.0
      %890 = vmatprep.subr.mxu0 0.0
      %891 = vmatpush1.msra.mxu0 0.0
      %892 = vmatprep.subr.mxu0 0.0
      %893 = vmatpush1.msra.mxu0 0.0
      %894 = vmatprep.subr.mxu0 0.0
      %895 = vmatpush1.msra.mxu0 0.0
      %896 = vmatprep.subr.mxu0 0.0
      %897 = vmatpush1.msra.mxu0 0.0
      %898 = vmatprep.subr.mxu0 0.0
      %899 = vmatpush1.msra.mxu0 0.0
      %900 = vmatprep.subr.mxu0 0.0
      %901 = vmatpush1.msra.mxu0 0.0
      %902 = vmatprep.subr.mxu0 0.0
      %903 = vmatpush1.msra.mxu0 0.0
      %904 = vmatprep.subr.mxu0 0.0
      %905 = vmatpush1.msra.mxu0 0.0
      %906 = vmatprep.subr.mxu0 0.0
      %907 = vmatpush1.msra.mxu0 0.0
      %908 = vmatprep.subr.mxu0 0.0
      %909 = vmatpush1.msra.mxu0 0.0
      %910 = vmatprep.subr.mxu0 0.0
      %911 = vmatpush1.msra.mxu0 0.0
      %912 = vmatprep.subr.mxu0 0.0
      %913 = vmatpush1.msra.mxu0 0.0
      %914 = vmatprep.subr.mxu0 0.0
      %915 = vmatpush1.msra.mxu0 0.0
      %916 = vmatprep.subr.mxu0 0.0
      %917 = vmatpush1.msra.mxu0 0.0
      %918 = vmatprep.subr.mxu0 0.0
      %919 = vmatpush1.msra.mxu0 0.0
      %920 = vmatprep.mubr.f32.mxu0 0.0
      %921 = vmatmul.mubr.f32.gmra.mrb[0].mxu0 %v837
      %v922 = vpop.f32.mrb[0].mxu0
      %v923 = vadd.f32 0.0, %v922
      %v924 = vpop.f32.mrb[0].mxu0
      %925 = vmatprep.mubr.f32.mxu0 0.0
      %926 = vmatmul.mubr.f32.gmra.mrb[0].mxu0 %v839
      %v927 = vpop.f32.mrb[0].mxu0
      %v928 = vadd.f32 0.0, %v927
      %v929 = vpop.f32.mrb[0].mxu0
      %930 = vmatprep.mubr.f32.mxu0 0.0
      %931 = vmatmul.mubr.f32.gmra.mrb[0].mxu0 %v841
      %v932 = vpop.f32.mrb[0].mxu0
      %v933 = vadd.f32 0.0, %v932
      %v934 = vpop.f32.mrb[0].mxu0
      %935 = vmatprep.mubr.f32.mxu0 0.0
      %936 = vmatmul.mubr.f32.gmra.mrb[0].mxu0 %v843
      %v937 = vpop.f32.mrb[0].mxu0
      %v938 = vadd.f32 0.0, %v937
      %v939 = vpop.f32.mrb[0].mxu0
      %940 = vmatprep.mubr.f32.mxu0 0.0
      %941 = vmatmul.mubr.f32.gmra.mrb[0].mxu0 %v845
      %v942 = vpop.f32.mrb[0].mxu0
      %v943 = vadd.f32 0.0, %v942
      %v944 = vpop.f32.mrb[0].mxu0
      %945 = vmatprep.mubr.f32.mxu0 0.0
      %946 = vmatmul.mubr.f32.gmra.mrb[0].mxu0 %v847
      %v947 = vpop.f32.mrb[0].mxu0
      %v948 = vadd.f32 0.0, %v947
      %v949 = vpop.f32.mrb[0].mxu0
      %950 = vmatprep.mubr.f32.mxu0 0.0
      %951 = vmatmul.mubr.f32.gmra.mrb[0].mxu0 %v849
      %v952 = vpop.f32.mrb[0].mxu0
      %v953 = vadd.f32 0.0, %v952
      %v954 = vpop.f32.mrb[0].mxu0
      %955 = vmatprep.mubr.f32.mxu0 0.0
      %956 = vmatmul.mubr.f32.gmra.mrb[0].mxu0 %v851
      %v957 = vpop.f32.mrb[0].mxu0
      %v958 = vadd.f32 0.0, %v957
      %v959 = vpop.f32.mrb[0].mxu0
      %960 = vdwg.mxu0
      %v961 = vadd.f32 %v812, %v923
      %v962 = vadd.f32 %v813, %v928
      %v963 = vadd.f32 %v814, %v933
      %v964 = vadd.f32 %v815, %v938
      %v965 = vadd.f32 %v816, %v943
      %v966 = vadd.f32 %v817, %v948
      %v967 = vadd.f32 %v818, %v953
      %v968 = vadd.f32 %v819, %v958
      %v969 = vld [vmem:[%s1 + $0xf] sm:$0x7]
      %970 = vrot.lane.b32.xlu0 %v516, 122
      %v971 = vpop.permute.xlu0 %970
      %972 = vrot.lane.b32.xlu0 %v519, 122
      %v973 = vpop.permute.xlu0 %972
      %974 = vrot.lane.b32.xlu0 %v522, 122
      %v975 = vpop.permute.xlu0 %974
      %976 = vrot.lane.b32.xlu0 %v525, 122
      %v977 = vpop.permute.xlu0 %976
      %978 = vrot.lane.b32.xlu0 %v528, 122
      %v979 = vpop.permute.xlu0 %978
      %980 = vrot.lane.b32.xlu0 %v531, 122
      %v981 = vpop.permute.xlu0 %980
      %982 = vrot.lane.b32.xlu0 %v534, 122
      %v983 = vpop.permute.xlu0 %982
      %984 = vrot.lane.b32.xlu0 %v537, 122
      %v985 = vpop.permute.xlu0 %984
      %v986 = vsel %vm255, %v971, 0
      %v988 = vsel %vm255, %v973, 0
      %v990 = vsel %vm255, %v975, 0
      %v992 = vsel %vm255, %v977, 0
      %v994 = vsel %vm255, %v979, 0
      %v996 = vsel %vm255, %v981, 0
      %v998 = vsel %vm255, %v983, 0
      %v1000 = vsel %vm255, %v985, 0
      %v1003 = vsel %vm272, %v969, 0
      %1005 = vmatprep.subr.mxu0 0.0
      %1006 = vmatpush1.msra.mxu0 %v1003
      %1007 = vmatprep.subr.mxu0 0.0
      %1008 = vmatpush1.msra.mxu0 0.0
      %1009 = vmatprep.subr.mxu0 0.0
      %1010 = vmatpush1.msra.mxu0 0.0
      %1011 = vmatprep.subr.mxu0 0.0
      %1012 = vmatpush1.msra.mxu0 0.0
      %1013 = vmatprep.subr.mxu0 0.0
      %1014 = vmatpush1.msra.mxu0 0.0
      %1015 = vmatprep.subr.mxu0 0.0
      %1016 = vmatpush1.msra.mxu0 0.0
      %1017 = vmatprep.subr.mxu0 0.0
      %1018 = vmatpush1.msra.mxu0 0.0
      %1019 = vmatprep.subr.mxu0 0.0
      %1020 = vmatpush1.msra.mxu0 0.0
      %1021 = vmatprep.subr.mxu0 0.0
      %1022 = vmatpush1.msra.mxu0 0.0
      %1023 = vmatprep.subr.mxu0 0.0
      %1024 = vmatpush1.msra.mxu0 0.0
      %1025 = vmatprep.subr.mxu0 0.0
      %1026 = vmatpush1.msra.mxu0 0.0
      %1027 = vmatprep.subr.mxu0 0.0
      %1028 = vmatpush1.msra.mxu0 0.0
      %1029 = vmatprep.subr.mxu0 0.0
      %1030 = vmatpush1.msra.mxu0 0.0
      %1031 = vmatprep.subr.mxu0 0.0
      %1032 = vmatpush1.msra.mxu0 0.0
      %1033 = vmatprep.subr.mxu0 0.0
      %1034 = vmatpush1.msra.mxu0 0.0
      %1035 = vmatprep.subr.mxu0 0.0
      %1036 = vmatpush1.msra.mxu0 0.0
      %1037 = vmatprep.subr.mxu0 0.0
      %1038 = vmatpush1.msra.mxu0 0.0
      %1039 = vmatprep.subr.mxu0 0.0
      %1040 = vmatpush1.msra.mxu0 0.0
      %1041 = vmatprep.subr.mxu0 0.0
      %1042 = vmatpush1.msra.mxu0 0.0
      %1043 = vmatprep.subr.mxu0 0.0
      %1044 = vmatpush1.msra.mxu0 0.0
      %1045 = vmatprep.subr.mxu0 0.0
      %1046 = vmatpush1.msra.mxu0 0.0
      %1047 = vmatprep.subr.mxu0 0.0
      %1048 = vmatpush1.msra.mxu0 0.0
      %1049 = vmatprep.subr.mxu0 0.0
      %1050 = vmatpush1.msra.mxu0 0.0
      %1051 = vmatprep.subr.mxu0 0.0
      %1052 = vmatpush1.msra.mxu0 0.0
      %1053 = vmatprep.subr.mxu0 0.0
      %1054 = vmatpush1.msra.mxu0 0.0
      %1055 = vmatprep.subr.mxu0 0.0
      %1056 = vmatpush1.msra.mxu0 0.0
      %1057 = vmatprep.subr.mxu0 0.0
      %1058 = vmatpush1.msra.mxu0 0.0
      %1059 = vmatprep.subr.mxu0 0.0
      %1060 = vmatpush1.msra.mxu0 0.0
      %1061 = vmatprep.subr.mxu0 0.0
      %1062 = vmatpush1.msra.mxu0 0.0
      %1063 = vmatprep.subr.mxu0 0.0
      %1064 = vmatpush1.msra.mxu0 0.0
      %1065 = vmatprep.subr.mxu0 0.0
      %1066 = vmatpush1.msra.mxu0 0.0
      %1067 = vmatprep.subr.mxu0 0.0
      %1068 = vmatpush1.msra.mxu0 0.0
      %1069 = vmatprep.mubr.f32.mxu0 0.0
      %1070 = vmatmul.mubr.f32.gmra.mrb[0].mxu0 %v986
      %v1071 = vpop.f32.mrb[0].mxu0
      %v1072 = vadd.f32 0.0, %v1071
      %v1073 = vpop.f32.mrb[0].mxu0
      %1074 = vmatprep.mubr.f32.mxu0 0.0
      %1075 = vmatmul.mubr.f32.gmra.mrb[0].mxu0 %v988
      %v1076 = vpop.f32.mrb[0].mxu0
      %v1077 = vadd.f32 0.0, %v1076
      %v1078 = vpop.f32.mrb[0].mxu0
      %1079 = vmatprep.mubr.f32.mxu0 0.0
      %1080 = vmatmul.mubr.f32.gmra.mrb[0].mxu0 %v990
      %v1081 = vpop.f32.mrb[0].mxu0
      %v1082 = vadd.f32 0.0, %v1081
      %v1083 = vpop.f32.mrb[0].mxu0
      %1084 = vmatprep.mubr.f32.mxu0 0.0
      %1085 = vmatmul.mubr.f32.gmra.mrb[0].mxu0 %v992
      %v1086 = vpop.f32.mrb[0].mxu0
      %v1087 = vadd.f32 0.0, %v1086
      %v1088 = vpop.f32.mrb[0].mxu0
      %1089 = vmatprep.mubr.f32.mxu0 0.0
      %1090 = vmatmul.mubr.f32.gmra.mrb[0].mxu0 %v994
      %v1091 = vpop.f32.mrb[0].mxu0
      %v1092 = vadd.f32 0.0, %v1091
      %v1093 = vpop.f32.mrb[0].mxu0
      %1094 = vmatprep.mubr.f32.mxu0 0.0
      %1095 = vmatmul.mubr.f32.gmra.mrb[0].mxu0 %v996
      %v1096 = vpop.f32.mrb[0].mxu0
      %v1097 = vadd.f32 0.0, %v1096
      %v1098 = vpop.f32.mrb[0].mxu0
      %1099 = vmatprep.mubr.f32.mxu0 0.0
      %1100 = vmatmul.mubr.f32.gmra.mrb[0].mxu0 %v998
      %v1101 = vpop.f32.mrb[0].mxu0
      %v1102 = vadd.f32 0.0, %v1101
      %v1103 = vpop.f32.mrb[0].mxu0
      %1104 = vmatprep.mubr.f32.mxu0 0.0
      %1105 = vmatmul.mubr.f32.gmra.mrb[0].mxu0 %v1000
      %v1106 = vpop.f32.mrb[0].mxu0
      %v1107 = vadd.f32 0.0, %v1106
      %v1108 = vpop.f32.mrb[0].mxu0
      %1109 = vdwg.mxu0
      %v1110 = vadd.f32 %v961, %v1072
      %v1111 = vadd.f32 %v962, %v1077
      %v1112 = vadd.f32 %v963, %v1082
      %v1113 = vadd.f32 %v964, %v1087
      %v1114 = vadd.f32 %v965, %v1092
      %v1115 = vadd.f32 %v966, %v1097
      %v1116 = vadd.f32 %v967, %v1102
      %v1117 = vadd.f32 %v968, %v1107
      %v1118 = vld [vmem:[%s1 + $0x12] sm:$0x7]
      %1119 = vrot.lane.b32.xlu0 %v213, 116
      %v1120 = vpop.permute.xlu0 %1119
      %1121 = vrot.lane.b32.xlu0 %v215, 116
      %v1122 = vpop.permute.xlu0 %1121
      %1123 = vrot.lane.b32.xlu0 %v217, 116
      %v1124 = vpop.permute.xlu0 %1123
      %1125 = vrot.lane.b32.xlu0 %v219, 116
      %v1126 = vpop.permute.xlu0 %1125
      %1127 = vrot.lane.b32.xlu0 %v221, 116
      %v1128 = vpop.permute.xlu0 %1127
      %1129 = vrot.lane.b32.xlu0 %v223, 116
      %v1130 = vpop.permute.xlu0 %1129
      %1131 = vrot.lane.b32.xlu0 %v225, 116
      %v1132 = vpop.permute.xlu0 %1131
      %1133 = vrot.lane.b32.xlu0 %v227, 116
      %v1134 = vpop.permute.xlu0 %1133
      %v1135 = vsel %vm255, %v1120, 0
      %v1137 = vsel %vm255, %v1122, 0
      %v1139 = vsel %vm255, %v1124, 0
      %v1141 = vsel %vm255, %v1126, 0
      %v1143 = vsel %vm255, %v1128, 0
      %v1145 = vsel %vm255, %v1130, 0
      %v1147 = vsel %vm255, %v1132, 0
      %v1149 = vsel %vm255, %v1134, 0
      %v1152 = vsel %vm272, %v1118, 0
      %1154 = vmatprep.subr.mxu0 0.0
      %1155 = vmatpush1.msra.mxu0 %v1152
      %1156 = vmatprep.subr.mxu0 0.0
      %1157 = vmatpush1.msra.mxu0 0.0
      %1158 = vmatprep.subr.mxu0 0.0
      %1159 = vmatpush1.msra.mxu0 0.0
      %1160 = vmatprep.subr.mxu0 0.0
      %1161 = vmatpush1.msra.mxu0 0.0
      %1162 = vmatprep.subr.mxu0 0.0
      %1163 = vmatpush1.msra.mxu0 0.0
      %1164 = vmatprep.subr.mxu0 0.0
      %1165 = vmatpush1.msra.mxu0 0.0
      %1166 = vmatprep.subr.mxu0 0.0
      %1167 = vmatpush1.msra.mxu0 0.0
      %1168 = vmatprep.subr.mxu0 0.0
      %1169 = vmatpush1.msra.mxu0 0.0
      %1170 = vmatprep.subr.mxu0 0.0
      %1171 = vmatpush1.msra.mxu0 0.0
      %1172 = vmatprep.subr.mxu0 0.0
      %1173 = vmatpush1.msra.mxu0 0.0
      %1174 = vmatprep.subr.mxu0 0.0
      %1175 = vmatpush1.msra.mxu0 0.0
      %1176 = vmatprep.subr.mxu0 0.0
      %1177 = vmatpush1.msra.mxu0 0.0
      %1178 = vmatprep.subr.mxu0 0.0
      %1179 = vmatpush1.msra.mxu0 0.0
      %1180 = vmatprep.subr.mxu0 0.0
      %1181 = vmatpush1.msra.mxu0 0.0
      %1182 = vmatprep.subr.mxu0 0.0
      %1183 = vmatpush1.msra.mxu0 0.0
      %1184 = vmatprep.subr.mxu0 0.0
      %1185 = vmatpush1.msra.mxu0 0.0
      %1186 = vmatprep.subr.mxu0 0.0
      %1187 = vmatpush1.msra.mxu0 0.0
      %1188 = vmatprep.subr.mxu0 0.0
      %1189 = vmatpush1.msra.mxu0 0.0
      %1190 = vmatprep.subr.mxu0 0.0
      %1191 = vmatpush1.msra.mxu0 0.0
      %1192 = vmatprep.subr.mxu0 0.0
      %1193 = vmatpush1.msra.mxu0 0.0
      %1194 = vmatprep.subr.mxu0 0.0
      %1195 = vmatpush1.msra.mxu0 0.0
      %1196 = vmatprep.subr.mxu0 0.0
      %1197 = vmatpush1.msra.mxu0 0.0
      %1198 = vmatprep.subr.mxu0 0.0
      %1199 = vmatpush1.msra.mxu0 0.0
      %1200 = vmatprep.subr.mxu0 0.0
      %1201 = vmatpush1.msra.mxu0 0.0
      %1202 = vmatprep.subr.mxu0 0.0
      %1203 = vmatpush1.msra.mxu0 0.0
      %1204 = vmatprep.subr.mxu0 0.0
      %1205 = vmatpush1.msra.mxu0 0.0
      %1206 = vmatprep.subr.mxu0 0.0
      %1207 = vmatpush1.msra.mxu0 0.0
      %1208 = vmatprep.subr.mxu0 0.0
      %1209 = vmatpush1.msra.mxu0 0.0
      %1210 = vmatprep.subr.mxu0 0.0
      %1211 = vmatpush1.msra.mxu0 0.0
      %1212 = vmatprep.subr.mxu0 0.0
      %1213 = vmatpush1.msra.mxu0 0.0
      %1214 = vmatprep.subr.mxu0 0.0
      %1215 = vmatpush1.msra.mxu0 0.0
      %1216 = vmatprep.subr.mxu0 0.0
      %1217 = vmatpush1.msra.mxu0 0.0
      %1218 = vmatprep.mubr.f32.mxu0 0.0
      %1219 = vmatmul.mubr.f32.gmra.mrb[0].mxu0 %v1135
      %v1220 = vpop.f32.mrb[0].mxu0
      %v1221 = vadd.f32 0.0, %v1220
      %v1222 = vpop.f32.mrb[0].mxu0
      %1223 = vmatprep.mubr.f32.mxu0 0.0
      %1224 = vmatmul.mubr.f32.gmra.mrb[0].mxu0 %v1137
      %v1225 = vpop.f32.mrb[0].mxu0
      %v1226 = vadd.f32 0.0, %v1225
      %v1227 = vpop.f32.mrb[0].mxu0
      %1228 = vmatprep.mubr.f32.mxu0 0.0
      %1229 = vmatmul.mubr.f32.gmra.mrb[0].mxu0 %v1139
      %v1230 = vpop.f32.mrb[0].mxu0
      %v1231 = vadd.f32 0.0, %v1230
      %v1232 = vpop.f32.mrb[0].mxu0
      %1233 = vmatprep.mubr.f32.mxu0 0.0
      %1234 = vmatmul.mubr.f32.gmra.mrb[0].mxu0 %v1141
      %v1235 = vpop.f32.mrb[0].mxu0
      %v1236 = vadd.f32 0.0, %v1235
      %v1237 = vpop.f32.mrb[0].mxu0
      %1238 = vmatprep.mubr.f32.mxu0 0.0
      %1239 = vmatmul.mubr.f32.gmra.mrb[0].mxu0 %v1143
      %v1240 = vpop.f32.mrb[0].mxu0
      %v1241 = vadd.f32 0.0, %v1240
      %v1242 = vpop.f32.mrb[0].mxu0
      %1243 = vmatprep.mubr.f32.mxu0 0.0
      %1244 = vmatmul.mubr.f32.gmra.mrb[0].mxu0 %v1145
      %v1245 = vpop.f32.mrb[0].mxu0
      %v1246 = vadd.f32 0.0, %v1245
      %v1247 = vpop.f32.mrb[0].mxu0
      %1248 = vmatprep.mubr.f32.mxu0 0.0
      %1249 = vmatmul.mubr.f32.gmra.mrb[0].mxu0 %v1147
      %v1250 = vpop.f32.mrb[0].mxu0
      %v1251 = vadd.f32 0.0, %v1250
      %v1252 = vpop.f32.mrb[0].mxu0
      %1253 = vmatprep.mubr.f32.mxu0 0.0
      %1254 = vmatmul.mubr.f32.gmra.mrb[0].mxu0 %v1149
      %v1255 = vpop.f32.mrb[0].mxu0
      %v1256 = vadd.f32 0.0, %v1255
      %v1257 = vpop.f32.mrb[0].mxu0
      %1258 = vdwg.mxu0
      %v1259 = vadd.f32 %v1110, %v1221
      %v1260 = vadd.f32 %v1111, %v1226
      %v1261 = vadd.f32 %v1112, %v1231
      %v1262 = vadd.f32 %v1113, %v1236
      %v1263 = vadd.f32 %v1114, %v1241
      %v1264 = vadd.f32 %v1115, %v1246
      %v1265 = vadd.f32 %v1116, %v1251
      %v1266 = vadd.f32 %v1117, %v1256
      %v1267 = vld [vmem:[%s1 + $0x15] sm:$0x7]
      %1268 = vrot.lane.b32.xlu0 %v213, 113
      %v1269 = vpop.permute.xlu0 %1268
      %1270 = vrot.lane.b32.xlu0 %v215, 113
      %v1271 = vpop.permute.xlu0 %1270
      %1272 = vrot.lane.b32.xlu0 %v217, 113
      %v1273 = vpop.permute.xlu0 %1272
      %1274 = vrot.lane.b32.xlu0 %v219, 113
      %v1275 = vpop.permute.xlu0 %1274
      %1276 = vrot.lane.b32.xlu0 %v221, 113
      %v1277 = vpop.permute.xlu0 %1276
      %1278 = vrot.lane.b32.xlu0 %v223, 113
      %v1279 = vpop.permute.xlu0 %1278
      %1280 = vrot.lane.b32.xlu0 %v225, 113
      %v1281 = vpop.permute.xlu0 %1280
      %1282 = vrot.lane.b32.xlu0 %v227, 113
      %v1283 = vpop.permute.xlu0 %1282
      %v1284 = vsel %vm255, %v1269, 0
      %v1286 = vsel %vm255, %v1271, 0
      %v1288 = vsel %vm255, %v1273, 0
      %v1290 = vsel %vm255, %v1275, 0
      %v1292 = vsel %vm255, %v1277, 0
      %v1294 = vsel %vm255, %v1279, 0
      %v1296 = vsel %vm255, %v1281, 0
      %v1298 = vsel %vm255, %v1283, 0
      %v1301 = vsel %vm272, %v1267, 0
      %1303 = vmatprep.subr.mxu0 0.0
      %1304 = vmatpush1.msra.mxu0 %v1301
      %1305 = vmatprep.subr.mxu0 0.0
      %1306 = vmatpush1.msra.mxu0 0.0
      %1307 = vmatprep.subr.mxu0 0.0
      %1308 = vmatpush1.msra.mxu0 0.0
      %1309 = vmatprep.subr.mxu0 0.0
      %1310 = vmatpush1.msra.mxu0 0.0
      %1311 = vmatprep.subr.mxu0 0.0
      %1312 = vmatpush1.msra.mxu0 0.0
      %1313 = vmatprep.subr.mxu0 0.0
      %1314 = vmatpush1.msra.mxu0 0.0
      %1315 = vmatprep.subr.mxu0 0.0
      %1316 = vmatpush1.msra.mxu0 0.0
      %1317 = vmatprep.subr.mxu0 0.0
      %1318 = vmatpush1.msra.mxu0 0.0
      %1319 = vmatprep.subr.mxu0 0.0
      %1320 = vmatpush1.msra.mxu0 0.0
      %1321 = vmatprep.subr.mxu0 0.0
      %1322 = vmatpush1.msra.mxu0 0.0
      %1323 = vmatprep.subr.mxu0 0.0
      %1324 = vmatpush1.msra.mxu0 0.0
      %1325 = vmatprep.subr.mxu0 0.0
      %1326 = vmatpush1.msra.mxu0 0.0
      %1327 = vmatprep.subr.mxu0 0.0
      %1328 = vmatpush1.msra.mxu0 0.0
      %1329 = vmatprep.subr.mxu0 0.0
      %1330 = vmatpush1.msra.mxu0 0.0
      %1331 = vmatprep.subr.mxu0 0.0
      %1332 = vmatpush1.msra.mxu0 0.0
      %1333 = vmatprep.subr.mxu0 0.0
      %1334 = vmatpush1.msra.mxu0 0.0
      %1335 = vmatprep.subr.mxu0 0.0
      %1336 = vmatpush1.msra.mxu0 0.0
      %1337 = vmatprep.subr.mxu0 0.0
      %1338 = vmatpush1.msra.mxu0 0.0
      %1339 = vmatprep.subr.mxu0 0.0
      %1340 = vmatpush1.msra.mxu0 0.0
      %1341 = vmatprep.subr.mxu0 0.0
      %1342 = vmatpush1.msra.mxu0 0.0
      %1343 = vmatprep.subr.mxu0 0.0
      %1344 = vmatpush1.msra.mxu0 0.0
      %1345 = vmatprep.subr.mxu0 0.0
      %1346 = vmatpush1.msra.mxu0 0.0
      %1347 = vmatprep.subr.mxu0 0.0
      %1348 = vmatpush1.msra.mxu0 0.0
      %1349 = vmatprep.subr.mxu0 0.0
      %1350 = vmatpush1.msra.mxu0 0.0
      %1351 = vmatprep.subr.mxu0 0.0
      %1352 = vmatpush1.msra.mxu0 0.0
      %1353 = vmatprep.subr.mxu0 0.0
      %1354 = vmatpush1.msra.mxu0 0.0
      %1355 = vmatprep.subr.mxu0 0.0
      %1356 = vmatpush1.msra.mxu0 0.0
      %1357 = vmatprep.subr.mxu0 0.0
      %1358 = vmatpush1.msra.mxu0 0.0
      %1359 = vmatprep.subr.mxu0 0.0
      %1360 = vmatpush1.msra.mxu0 0.0
      %1361 = vmatprep.subr.mxu0 0.0
      %1362 = vmatpush1.msra.mxu0 0.0
      %1363 = vmatprep.subr.mxu0 0.0
      %1364 = vmatpush1.msra.mxu0 0.0
      %1365 = vmatprep.subr.mxu0 0.0
      %1366 = vmatpush1.msra.mxu0 0.0
      %1367 = vmatprep.mubr.f32.mxu0 0.0
      %1368 = vmatmul.mubr.f32.gmra.mrb[0].mxu0 %v1284
      %v1369 = vpop.f32.mrb[0].mxu0
      %v1370 = vadd.f32 0.0, %v1369
      %v1371 = vpop.f32.mrb[0].mxu0
      %1372 = vmatprep.mubr.f32.mxu0 0.0
      %1373 = vmatmul.mubr.f32.gmra.mrb[0].mxu0 %v1286
      %v1374 = vpop.f32.mrb[0].mxu0
      %v1375 = vadd.f32 0.0, %v1374
      %v1376 = vpop.f32.mrb[0].mxu0
      %1377 = vmatprep.mubr.f32.mxu0 0.0
      %1378 = vmatmul.mubr.f32.gmra.mrb[0].mxu0 %v1288
      %v1379 = vpop.f32.mrb[0].mxu0
      %v1380 = vadd.f32 0.0, %v1379
      %v1381 = vpop.f32.mrb[0].mxu0
      %1382 = vmatprep.mubr.f32.mxu0 0.0
      %1383 = vmatmul.mubr.f32.gmra.mrb[0].mxu0 %v1290
      %v1384 = vpop.f32.mrb[0].mxu0
      %v1385 = vadd.f32 0.0, %v1384
      %v1386 = vpop.f32.mrb[0].mxu0
      %1387 = vmatprep.mubr.f32.mxu0 0.0
      %1388 = vmatmul.mubr.f32.gmra.mrb[0].mxu0 %v1292
      %v1389 = vpop.f32.mrb[0].mxu0
      %v1390 = vadd.f32 0.0, %v1389
      %v1391 = vpop.f32.mrb[0].mxu0
      %1392 = vmatprep.mubr.f32.mxu0 0.0
      %1393 = vmatmul.mubr.f32.gmra.mrb[0].mxu0 %v1294
      %v1394 = vpop.f32.mrb[0].mxu0
      %v1395 = vadd.f32 0.0, %v1394
      %v1396 = vpop.f32.mrb[0].mxu0
      %1397 = vmatprep.mubr.f32.mxu0 0.0
      %1398 = vmatmul.mubr.f32.gmra.mrb[0].mxu0 %v1296
      %v1399 = vpop.f32.mrb[0].mxu0
      %v1400 = vadd.f32 0.0, %v1399
      %v1401 = vpop.f32.mrb[0].mxu0
      %1402 = vmatprep.mubr.f32.mxu0 0.0
      %1403 = vmatmul.mubr.f32.gmra.mrb[0].mxu0 %v1298
      %v1404 = vpop.f32.mrb[0].mxu0
      %v1405 = vadd.f32 0.0, %v1404
      %v1406 = vpop.f32.mrb[0].mxu0
      %1407 = vdwg.mxu0
      %v1408 = vadd.f32 %v1259, %v1370
      %v1409 = vadd.f32 %v1260, %v1375
      %v1410 = vadd.f32 %v1261, %v1380
      %v1411 = vadd.f32 %v1262, %v1385
      %v1412 = vadd.f32 %v1263, %v1390
      %v1413 = vadd.f32 %v1264, %v1395
      %v1414 = vadd.f32 %v1265, %v1400
      %v1415 = vadd.f32 %v1266, %v1405
      %v1416 = vld [vmem:[%s1 + $0x18] sm:$0x7]
      %1417 = vrot.lane.b32.xlu0 %v516, 116
      %v1418 = vpop.permute.xlu0 %1417
      %1419 = vrot.lane.b32.xlu0 %v519, 116
      %v1420 = vpop.permute.xlu0 %1419
      %1421 = vrot.lane.b32.xlu0 %v522, 116
      %v1422 = vpop.permute.xlu0 %1421
      %1423 = vrot.lane.b32.xlu0 %v525, 116
      %v1424 = vpop.permute.xlu0 %1423
      %1425 = vrot.lane.b32.xlu0 %v528, 116
      %v1426 = vpop.permute.xlu0 %1425
      %1427 = vrot.lane.b32.xlu0 %v531, 116
      %v1428 = vpop.permute.xlu0 %1427
      %1429 = vrot.lane.b32.xlu0 %v534, 116
      %v1430 = vpop.permute.xlu0 %1429
      %1431 = vrot.lane.b32.xlu0 %v537, 116
      %v1432 = vpop.permute.xlu0 %1431
      %v1433 = vsel %vm255, %v1418, 0
      %v1435 = vsel %vm255, %v1420, 0
      %v1437 = vsel %vm255, %v1422, 0
      %v1439 = vsel %vm255, %v1424, 0
      %v1441 = vsel %vm255, %v1426, 0
      %v1443 = vsel %vm255, %v1428, 0
      %v1445 = vsel %vm255, %v1430, 0
      %v1447 = vsel %vm255, %v1432, 0
      %v1450 = vsel %vm272, %v1416, 0
      %1452 = vmatprep.subr.mxu0 0.0
      %1453 = vmatpush1.msra.mxu0 %v1450
      %1454 = vmatprep.subr.mxu0 0.0
      %1455 = vmatpush1.msra.mxu0 0.0
      %1456 = vmatprep.subr.mxu0 0.0
      %1457 = vmatpush1.msra.mxu0 0.0
      %1458 = vmatprep.subr.mxu0 0.0
      %1459 = vmatpush1.msra.mxu0 0.0
      %1460 = vmatprep.subr.mxu0 0.0
      %1461 = vmatpush1.msra.mxu0 0.0
      %1462 = vmatprep.subr.mxu0 0.0
      %1463 = vmatpush1.msra.mxu0 0.0
      %1464 = vmatprep.subr.mxu0 0.0
      %1465 = vmatpush1.msra.mxu0 0.0
      %1466 = vmatprep.subr.mxu0 0.0
      %1467 = vmatpush1.msra.mxu0 0.0
      %1468 = vmatprep.subr.mxu0 0.0
      %1469 = vmatpush1.msra.mxu0 0.0
      %1470 = vmatprep.subr.mxu0 0.0
      %1471 = vmatpush1.msra.mxu0 0.0
      %1472 = vmatprep.subr.mxu0 0.0
      %1473 = vmatpush1.msra.mxu0 0.0
      %1474 = vmatprep.subr.mxu0 0.0
      %1475 = vmatpush1.msra.mxu0 0.0
      %1476 = vmatprep.subr.mxu0 0.0
      %1477 = vmatpush1.msra.mxu0 0.0
      %1478 = vmatprep.subr.mxu0 0.0
      %1479 = vmatpush1.msra.mxu0 0.0
      %1480 = vmatprep.subr.mxu0 0.0
      %1481 = vmatpush1.msra.mxu0 0.0
      %1482 = vmatprep.subr.mxu0 0.0
      %1483 = vmatpush1.msra.mxu0 0.0
      %1484 = vmatprep.subr.mxu0 0.0
      %1485 = vmatpush1.msra.mxu0 0.0
      %1486 = vmatprep.subr.mxu0 0.0
      %1487 = vmatpush1.msra.mxu0 0.0
      %1488 = vmatprep.subr.mxu0 0.0
      %1489 = vmatpush1.msra.mxu0 0.0
      %1490 = vmatprep.subr.mxu0 0.0
      %1491 = vmatpush1.msra.mxu0 0.0
      %1492 = vmatprep.subr.mxu0 0.0
      %1493 = vmatpush1.msra.mxu0 0.0
      %1494 = vmatprep.subr.mxu0 0.0
      %1495 = vmatpush1.msra.mxu0 0.0
      %1496 = vmatprep.subr.mxu0 0.0
      %1497 = vmatpush1.msra.mxu0 0.0
      %1498 = vmatprep.subr.mxu0 0.0
      %1499 = vmatpush1.msra.mxu0 0.0
      %1500 = vmatprep.subr.mxu0 0.0
      %1501 = vmatpush1.msra.mxu0 0.0
      %1502 = vmatprep.subr.mxu0 0.0
      %1503 = vmatpush1.msra.mxu0 0.0
      %1504 = vmatprep.subr.mxu0 0.0
      %1505 = vmatpush1.msra.mxu0 0.0
      %1506 = vmatprep.subr.mxu0 0.0
      %1507 = vmatpush1.msra.mxu0 0.0
      %1508 = vmatprep.subr.mxu0 0.0
      %1509 = vmatpush1.msra.mxu0 0.0
      %1510 = vmatprep.subr.mxu0 0.0
      %1511 = vmatpush1.msra.mxu0 0.0
      %1512 = vmatprep.subr.mxu0 0.0
      %1513 = vmatpush1.msra.mxu0 0.0
      %1514 = vmatprep.subr.mxu0 0.0
      %1515 = vmatpush1.msra.mxu0 0.0
      %1516 = vmatprep.mubr.f32.mxu0 0.0
      %1517 = vmatmul.mubr.f32.gmra.mrb[0].mxu0 %v1433
      %v1518 = vpop.f32.mrb[0].mxu0
      %v1519 = vadd.f32 0.0, %v1518
      %v1520 = vpop.f32.mrb[0].mxu0
      %1521 = vmatprep.mubr.f32.mxu0 0.0
      %1522 = vmatmul.mubr.f32.gmra.mrb[0].mxu0 %v1435
      %v1523 = vpop.f32.mrb[0].mxu0
      %v1524 = vadd.f32 0.0, %v1523
      %v1525 = vpop.f32.mrb[0].mxu0
      %1526 = vmatprep.mubr.f32.mxu0 0.0
      %1527 = vmatmul.mubr.f32.gmra.mrb[0].mxu0 %v1437
      %v1528 = vpop.f32.mrb[0].mxu0
      %v1529 = vadd.f32 0.0, %v1528
      %v1530 = vpop.f32.mrb[0].mxu0
      %1531 = vmatprep.mubr.f32.mxu0 0.0
      %1532 = vmatmul.mubr.f32.gmra.mrb[0].mxu0 %v1439
      %v1533 = vpop.f32.mrb[0].mxu0
      %v1534 = vadd.f32 0.0, %v1533
      %v1535 = vpop.f32.mrb[0].mxu0
      %1536 = vmatprep.mubr.f32.mxu0 0.0
      %1537 = vmatmul.mubr.f32.gmra.mrb[0].mxu0 %v1441
      %v1538 = vpop.f32.mrb[0].mxu0
      %v1539 = vadd.f32 0.0, %v1538
      %v1540 = vpop.f32.mrb[0].mxu0
      %1541 = vmatprep.mubr.f32.mxu0 0.0
      %1542 = vmatmul.mubr.f32.gmra.mrb[0].mxu0 %v1443
      %v1543 = vpop.f32.mrb[0].mxu0
      %v1544 = vadd.f32 0.0, %v1543
      %v1545 = vpop.f32.mrb[0].mxu0
      %1546 = vmatprep.mubr.f32.mxu0 0.0
      %1547 = vmatmul.mubr.f32.gmra.mrb[0].mxu0 %v1445
      %v1548 = vpop.f32.mrb[0].mxu0
      %v1549 = vadd.f32 0.0, %v1548
      %v1550 = vpop.f32.mrb[0].mxu0
      %1551 = vmatprep.mubr.f32.mxu0 0.0
      %1552 = vmatmul.mubr.f32.gmra.mrb[0].mxu0 %v1447
      %v1553 = vpop.f32.mrb[0].mxu0
      %v1554 = vadd.f32 0.0, %v1553
      %v1555 = vpop.f32.mrb[0].mxu0
      %1556 = vdwg.mxu0
      %v1557 = vadd.f32 %v1408, %v1519
      %v1558 = vadd.f32 %v1409, %v1524
      %v1559 = vadd.f32 %v1410, %v1529
      %v1560 = vadd.f32 %v1411, %v1534
      %v1561 = vadd.f32 %v1412, %v1539
      %v1562 = vadd.f32 %v1413, %v1544
      %v1563 = vadd.f32 %v1414, %v1549
      %v1564 = vadd.f32 %v1415, %v1554
      %v1565 = vld [vmem:[%s2] sm:$0x1]
      %v1567 = vlaneseq
      %v1568 = vshrl.u32 %v1567, 7
      %v1569 = vsub.s32 0, %v1568
      %v1570 = vrot.slane %v1565, %v1569
      %v1572 = vadd.f32 %v1557, %v1570
      %v1573 = vadd.f32 %v1558, %v1570
      %v1574 = vadd.f32 %v1559, %v1570
      %v1575 = vadd.f32 %v1560, %v1570
      %v1576 = vadd.f32 %v1561, %v1570
      %v1577 = vadd.f32 %v1562, %v1570
      %v1578 = vadd.f32 %v1563, %v1570
      %v1579 = vadd.f32 %v1564, %v1570
      %v1580 = vmax.f32 %v1572, 0.0
      %v1581 = vmax.f32 %v1573, 0.0
      %v1582 = vmax.f32 %v1574, 0.0
      %v1583 = vmax.f32 %v1575, 0.0
      %v1584 = vmax.f32 %v1576, 0.0
      %v1585 = vmax.f32 %v1577, 0.0
      %v1586 = vmax.f32 %v1578, 0.0
      %v1587 = vmax.f32 %v1579, 0.0
      %vm1588 = vcmask 261120
      %1589 = vst.msk [vmem:[%s211] sm:$0xff] %vm1588, %v1580
      %1590 = vst.msk [vmem:[%s211 + $0x8] sm:$0xff] %vm1588, %v1581
      %1591 = vst.msk [vmem:[%s211 + $0x10] sm:$0xff] %vm1588, %v1582
      %1592 = vst.msk [vmem:[%s211 + $0x18] sm:$0xff] %vm1588, %v1583
      %1593 = vst.msk [vmem:[%s211 + $0x20] sm:$0xff] %vm1588, %v1584
      %1594 = vst.msk [vmem:[%s211 + $0x28] sm:$0xff] %vm1588, %v1585
      %1595 = vst.msk [vmem:[%s211 + $0x30] sm:$0xff] %vm1588, %v1586
      %1596 = vst.msk [vmem:[%s211 + $0x38] sm:$0xff] %vm1588, %v1587
      %s1597 = smul.u32 8, %s19
      %p1598 = scmp.lt.s32.totalorder %s18, 1
      %s1599 = scalar_select %p1598, %s18, 1
      %p1600 = scmp.lt.s32.totalorder %s1597, 7
      %s1601 = scalar_select %p1600, %s1597, 7
      %s1602 = smul.addr %s1599, 8
      %s1603 = sadd.s32 %s1601, %s1602
      %s1604 = smul.addr %s1603, 8
      %s1605 = scalar_lea.vmem %s3, %s1604
      // Predicated region
      $region33: #{stem_forward.2} parent=31 // pred_check
        %p1606 = pneg %p116
      $region34: #{stem_forward.2} parent=31 // pred_check_branch
        %1608 = sbr.rel (%p1606) target = $region36
      $region35: #{stem_forward.2} parent=31 // pred_region
        %s1609 = smul.u32 8, %s19
      $region36: #{stem_forward.2} parent=31 // pred_fallthru
        _
    $region32: #{stem_forward.2} parent=5 // pred_fallthru
      _
    %p1610 = scmp.le.s32.totalorder 2, %s9
    // Predicated region
    $region37: #{stem_forward.2} parent=5 // pred_check
      %p1611 = pneg %p1610
    $region38: #{stem_forward.2} parent=5 // pred_check_branch
      %1613 = sbr.rel (%p1611) target = $region40
    $region39: #{stem_forward.2} parent=5 // pred_region
      %s1614 = ssub.s32 %s9, 2
      // Predicated region
      $region41: #{stem_forward.2} parent=39 // pred_check
        %p1615 = pneg %p122
      $region42: #{stem_forward.2} parent=39 // pred_check_branch
        %1617 = sbr.rel (%p1615) target = $region44
      $region43: #{stem_forward.2} parent=39 // pred_region
        %s1618 = smul.u32 8, %s21
        %p1619 = scmp.lt.s32.totalorder %s20, 1
        %s1620 = scalar_select %p1619, %s20, 1
        %p1621 = scmp.lt.s32.totalorder %s1618, 7
        %s1622 = scalar_select %p1621, %s1618, 7
        %s1623 = smul.addr %s1620, 8
        %s1624 = sadd.s32 %s1622, %s1623
        %s1625 = smul.addr %s1624, 8
        %s1626 = scalar_lea.vmem %s3, %s1625
      $region44: #{stem_forward.2} parent=39 // pred_fallthru
        _
    $region40: #{stem_forward.2} parent=5 // pred_fallthru
      _
  $region6: #{stem_forward.2} parent=0 // loop_footer
    %s13 = sadd.s32 1, %s9
  $region7: #{stem_forward.2} parent=0 // loop_footer_branch
    %8 = sbr.rel target = $region3
  $region8: #{stem_forward.2} parent=0 // loop_exit
    _

// kernel: stem_forward.3
$region0: #{stem_forward.3}
  #allocation0 [shape = 'u32[]', space=smem, size = 0x4, offset = 0x4, fixed_abs, tag = 'smem constant byte address 0x4 - core index']
  #allocation1 [shape = 'u32[144,128]{1,0:T(1,128)}', space=vmem, size = 0x12000, scoped, tag = 'internal scratch']
  %s0 = inlined_call_operand.vmem [shape: f32[2,4,5,192], index: 0, kind: input, shape index: {}]
  %s1 = inlined_call_operand.vmem [shape: f32[16,32], index: 1, kind: input, shape index: {}]
  %s2 = inlined_call_operand.vmem [shape: f32[1,32], index: 2, kind: input, shape index: {}]
  %s3 = inlined_call_operand.vmem [shape: f32[9,1,16], index: 3, kind: input, shape index: {}]
  %s4 = inlined_call_operand.vmem [shape: f32[9,1,32], index: 4, kind: input, shape index: {}]
  %s5 = inlined_call_operand.vmem [shape: f32[16,32], index: 5, kind: input, shape index: {}]
  %s6 = inlined_call_operand.vmem [shape: f32[32,32], index: 6, kind: input, shape index: {}]
  %s7 = inlined_call_operand.vmem [shape: f32[1,32], index: 7, kind: input, shape index: {}]
  %s8 = inlined_call_operand.hbm [shape: f32[2,4,4,32], index: 8, kind: output, shape index: {}]
  %s9 = sld [smem:[#allocation0]]
  $region65: #{stem_forward.3} parent=0
    _
  %s11 = ssub.s32 1, %s9
  %s12 = scalar_select 0, %s11, %s9
  $region1: #{stem_forward.3} parent=0
    #allocation2 [shape = 'u8[16384]{0}', space=vmem, size = 0x4000, scoped, tag = 'output window, operand 0']
    #allocation3 [shape = 's32[2]{0}', space=sflag, size = 0x8, scoped, tag = 'scoped memory for stem_forward.3']
    %13 = vsyncpa [#allocation3], 0
    %s14 = scalar_lea.sflag [#allocation3], 1
    %15 = vsyncpa %s14, 0
    loop: start=0, step=1, limit=4
    $region2: #{stem_forward.3} parent=1 // loop_pre_header
      _
    $region3: #{stem_forward.3} parent=1 // loop_header
      %s17 = sphi 0, %s21
      %p18 = scmp.ge.s32.totalorder %s17, 4
      %s24 = sphi 0, %s36
      %s25 = sphi 0, %s32
      %s26 = sphi 0, %s24
      %s27 = sphi 0, %s25
      %s28 = sphi 0, %s26
      %s29 = sphi 0, %s27
      %s41 = sphi 0, %s43
      %s44 = sphi 0, %s41
      %s45 = sphi 0, %s44
      %s61 = sphi 0, %s45
      %s65 = sphi 0, %s65
      %s67 = sphi 0, %s65
      %s68 = sphi 0, %s67
      %s82 = sphi 0, %s68
      %s86 = sphi 0, %s86
      %s88 = sphi 0, %s86
      %s89 = sphi 0, %s88
      %s103 = sphi 0, %s89
      %s107 = sphi 0, %s107
      %s109 = sphi 0, %s107
      %s110 = sphi 0, %s109
      %s124 = sphi 0, %s110
      %s128 = sphi 0, %s128
      %s130 = sphi 0, %s128
      %s131 = sphi 0, %s130
      %s145 = sphi 0, %s131
      %s149 = sphi 0, %s149
      %s151 = sphi 0, %s149
      %s152 = sphi 0, %s151
      %s166 = sphi 0, %s152
      %s170 = sphi 0, %s170
      %s172 = sphi 0, %s170
      %s173 = sphi 0, %s172
      %s187 = sphi 0, %s173
      %s191 = sphi 0, %s191
      %s193 = sphi 0, %s191
      %s194 = sphi 0, %s193
      %s208 = sphi 0, %s194
      %s216 = sphi 0, %s218
      %s219 = sphi 0, %s216
      %s220 = sphi 0, %s219
      %s236 = sphi 0, %s220
    $region4: #{stem_forward.3} parent=1 // loop_header_branch
      %20 = sbr.rel (%p18) target = $region8
    $region5: #{stem_forward.3} parent=1 // loop_body
      %s22 = ssub.s32 %s17, 1
      %s23 = ssub.s32 %s17, 2
      %s30 = sadd.s32 1, %s25
      %p31 = scmp.ge.s32.totalorder %s30, 1
      %s32 = scalar_select %p31, 0, %s30
      %s33 = sadd.s32 1, %s24
      %s34 = scalar_select %p31, %s33, %s24
      %p35 = scmp.ge.s32.totalorder %s34, 2
      %s36 = scalar_select %p35, 0, %s34
      %s37 = ssub.s32 %s24, %s36
      %s38 = ssub.s32 %s25, %s32
      %s39 = sor.u32 %s37, %s38
      %p40 = scmp.eq.s32.totalorder %s39, 0
      %s42 = sadd.s32 %s41, 1
      %s43 = scalar_select %p40, %s41, %s42
      %p46 = pneg %p40
      %p47 = scmp.eq.s32.totalorder %s17, 1
      %p48 = por %p46, %p47
      %p49 = scmp.ne.s32.totalorder %s41, %s44
      %p50 = scmp.eq.s32.totalorder %s17, 0
      %p51 = por %p49, %p50
      %p52 = scmp.ne.s32.totalorder %s41, %s44
      %p53 = scmp.eq.s32.totalorder %s22, 1
      %p54 = por %p52, %p53
      %p55 = scmp.ne.s32.totalorder %s44, %s45
      %p56 = scmp.eq.s32.totalorder %s22, 0
      %p57 = por %p55, %p56
      %p58 = scmp.ne.s32.totalorder %s44, %s45
      %p59 = scmp.eq.s32.totalorder %s23, 1
      %p60 = por %p58, %p59
      %p62 = scmp.ne.s32.totalorder %s45, %s61
      %p63 = scmp.eq.s32.totalorder %s23, 0
      %p64 = por %p62, %p63
      %s66 = sadd.s32 %s65, 1
      %p69 = scmp.eq.s32.totalorder %s17, 1
      %p70 = scmp.ne.s32.totalorder %s65, %s67
      %p71 = scmp.eq.s32.totalorder %s17, 0
      %p72 = por %p70, %p71
      %p73 = scmp.ne.s32.totalorder %s65, %s67
      %p74 = scmp.eq.s32.totalorder %s22, 1
      %p75 = por %p73, %p74
      %p76 = scmp.ne.s32.totalorder %s67, %s68
      %p77 = scmp.eq.s32.totalorder %s22, 0
      %p78 = por %p76, %p77
      %p79 = scmp.ne.s32.totalorder %s67, %s68
      %p80 = scmp.eq.s32.totalorder %s23, 1
      %p81 = por %p79, %p80
      %p83 = scmp.ne.s32.totalorder %s68, %s82
      %p84 = scmp.eq.s32.totalorder %s23, 0
      %p85 = por %p83, %p84
      %s87 = sadd.s32 %s86, 1
      %p90 = scmp.eq.s32.totalorder %s17, 1
      %p91 = scmp.ne.s32.totalorder %s86, %s88
      %p92 = scmp.eq.s32.totalorder %s17, 0
      %p93 = por %p91, %p92
      %p94 = scmp.ne.s32.totalorder %s86, %s88
      %p95 = scmp.eq.s32.totalorder %s22, 1
      %p96 = por %p94, %p95
      %p97 = scmp.ne.s32.totalorder %s88, %s89
      %p98 = scmp.eq.s32.totalorder %s22, 0
      %p99 = por %p97, %p98
      %p100 = scmp.ne.s32.totalorder %s88, %s89
      %p101 = scmp.eq.s32.totalorder %s23, 1
      %p102 = por %p100, %p101
      %p104 = scmp.ne.s32.totalorder %s89, %s103
      %p105 = scmp.eq.s32.totalorder %s23, 0
      %p106 = por %p104, %p105
      %s108 = sadd.s32 %s107, 1
      %p111 = scmp.eq.s32.totalorder %s17, 1
      %p112 = scmp.ne.s32.totalorder %s107, %s109
      %p113 = scmp.eq.s32.totalorder %s17, 0
      %p114 = por %p112, %p113
      %p115 = scmp.ne.s32.totalorder %s107, %s109
      %p116 = scmp.eq.s32.totalorder %s22, 1
      %p117 = por %p115, %p116
      %p118 = scmp.ne.s32.totalorder %s109, %s110
      %p119 = scmp.eq.s32.totalorder %s22, 0
      %p120 = por %p118, %p119
      %p121 = scmp.ne.s32.totalorder %s109, %s110
      %p122 = scmp.eq.s32.totalorder %s23, 1
      %p123 = por %p121, %p122
      %p125 = scmp.ne.s32.totalorder %s110, %s124
      %p126 = scmp.eq.s32.totalorder %s23, 0
      %p127 = por %p125, %p126
      %s129 = sadd.s32 %s128, 1
      %p132 = scmp.eq.s32.totalorder %s17, 1
      %p133 = scmp.ne.s32.totalorder %s128, %s130
      %p134 = scmp.eq.s32.totalorder %s17, 0
      %p135 = por %p133, %p134
      %p136 = scmp.ne.s32.totalorder %s128, %s130
      %p137 = scmp.eq.s32.totalorder %s22, 1
      %p138 = por %p136, %p137
      %p139 = scmp.ne.s32.totalorder %s130, %s131
      %p140 = scmp.eq.s32.totalorder %s22, 0
      %p141 = por %p139, %p140
      %p142 = scmp.ne.s32.totalorder %s130, %s131
      %p143 = scmp.eq.s32.totalorder %s23, 1
      %p144 = por %p142, %p143
      %p146 = scmp.ne.s32.totalorder %s131, %s145
      %p147 = scmp.eq.s32.totalorder %s23, 0
      %p148 = por %p146, %p147
      %s150 = sadd.s32 %s149, 1
      %p153 = scmp.eq.s32.totalorder %s17, 1
      %p154 = scmp.ne.s32.totalorder %s149, %s151
      %p155 = scmp.eq.s32.totalorder %s17, 0
      %p156 = por %p154, %p155
      %p157 = scmp.ne.s32.totalorder %s149, %s151
      %p158 = scmp.eq.s32.totalorder %s22, 1
      %p159 = por %p157, %p158
      %p160 = scmp.ne.s32.totalorder %s151, %s152
      %p161 = scmp.eq.s32.totalorder %s22, 0
      %p162 = por %p160, %p161
      %p163 = scmp.ne.s32.totalorder %s151, %s152
      %p164 = scmp.eq.s32.totalorder %s23, 1
      %p165 = por %p163, %p164
      %p167 = scmp.ne.s32.totalorder %s152, %s166
      %p168 = scmp.eq.s32.totalorder %s23, 0
      %p169 = por %p167, %p168
      %s171 = sadd.s32 %s170, 1
      %p174 = scmp.eq.s32.totalorder %s17, 1
      %p175 = scmp.ne.s32.totalorder %s170, %s172
      %p176 = scmp.eq.s32.totalorder %s17, 0
      %p177 = por %p175, %p176
      %p178 = scmp.ne.s32.totalorder %s170, %s172
      %p179 = scmp.eq.s32.totalorder %s22, 1
      %p180 = por %p178, %p179
      %p181 = scmp.ne.s32.totalorder %s172, %s173
      %p182 = scmp.eq.s32.totalorder %s22, 0
      %p183 = por %p181, %p182
      %p184 = scmp.ne.s32.totalorder %s172, %s173
      %p185 = scmp.eq.s32.totalorder %s23, 1
      %p186 = por %p184, %p185
      %p188 = scmp.ne.s32.totalorder %s173, %s187
      %p189 = scmp.eq.s32.totalorder %s23, 0
      %p190 = por %p188, %p189
      %s192 = sadd.s32 %s191, 1
      %p195 = scmp.eq.s32.totalorder %s17, 1
      %p196 = scmp.ne.s32.totalorder %s191, %s193
      %p197 = scmp.eq.s32.totalorder %s17, 0
      %p198 = por %p196, %p197
      %p199 = scmp.ne.s32.totalorder %s191, %s193
      %p200 = scmp.eq.s32.totalorder %s22, 1
      %p201 = por %p199, %p200
      %p202 = scmp.ne.s32.totalorder %s193, %s194
      %p203 = scmp.eq.s32.totalorder %s22, 0
      %p204 = por %p202, %p203
      %p205 = scmp.ne.s32.totalorder %s193, %s194
      %p206 = scmp.eq.s32.totalorder %s23, 1
      %p207 = por %p205, %p206
      %p209 = scmp.ne.s32.totalorder %s194, %s208
      %p210 = scmp.eq.s32.totalorder %s23, 0
      %p211 = por %p209, %p210
      %s212 = ssub.s32 %s24, %s36
      %s213 = ssub.s32 %s25, %s32
      %s214 = sor.u32 %s212, %s213
      %p215 = scmp.eq.s32.totalorder %s214, 0
      %s217 = sadd.s32 %s216, 1
      %s218 = scalar_select %p215, %s216, %s217
      %p221 = pneg %p215
      %p222 = scmp.eq.s32.totalorder %s17, 1
      %p223 = por %p221, %p222
      %p224 = scmp.ne.s32.totalorder %s216, %s219
      %p225 = scmp.eq.s32.totalorder %s17, 0
      %p226 = por %p224, %p225
      %p227 = scmp.ne.s32.totalorder %s216, %s219
      %p228 = scmp.eq.s32.totalorder %s22, 1
      %p229 = por %p227, %p228
      %p230 = scmp.ne.s32.totalorder %s219, %s220
      %p231 = scmp.eq.s32.totalorder %s22, 0
      %p232 = por %p230, %p231
      %p233 = scmp.ne.s32.totalorder %s219, %s220
      %p234 = scmp.eq.s32.totalorder %s23, 1
      %p235 = por %p233, %p234
      %p237 = scmp.ne.s32.totalorder %s220, %s236
      %p238 = scmp.eq.s32.totalorder %s23, 0
      %p239 = por %p237, %p238
      %p240 = scmp.le.s32.totalorder 1, %s17
      %p241 = scmp.lt.s32.totalorder %s17, 3
      %p242 = pnand %p240, %p241
      %p243 = pneg %p242
      // Predicated region
      $region9: #{stem_forward.3} parent=5 // pred_check
        _
      $region10: #{stem_forward.3} parent=5 // pred_check_branch
        %245 = sbr.rel (%p242) target = $region12
      $region11: #{stem_forward.3} parent=5 // pred_region
        %s246 = ssub.s32 %s17, 1
        // Predicated region
        $region13: #{stem_forward.3} parent=11 // pred_check
          %p247 = pneg %p78
        $region14: #{stem_forward.3} parent=11 // pred_check_branch
          %249 = sbr.rel (%p247) target = $region16
        $region15: #{stem_forward.3} parent=11 // pred_region
          _
        $region16: #{stem_forward.3} parent=11 // pred_fallthru
          _
        // Predicated region
        $region17: #{stem_forward.3} parent=11 // pred_check
          %p250 = pneg %p99
        $region18: #{stem_forward.3} parent=11 // pred_check_branch
          %252 = sbr.rel (%p250) target = $region20
        $region19: #{stem_forward.3} parent=11 // pred_region
          _
        $region20: #{stem_forward.3} parent=11 // pred_fallthru
          _
        // Predicated region
        $region21: #{stem_forward.3} parent=11 // pred_check
          %p253 = pneg %p120
        $region22: #{stem_forward.3} parent=11 // pred_check_branch
          %255 = sbr.rel (%p253) target = $region24
        $region23: #{stem_forward.3} parent=11 // pred_region
          _
        $region24: #{stem_forward.3} parent=11 // pred_fallthru
          _
        // Predicated region
        $region25: #{stem_forward.3} parent=11 // pred_check
          %p256 = pneg %p141
        $region26: #{stem_forward.3} parent=11 // pred_check_branch
          %258 = sbr.rel (%p256) target = $region28
        $region27: #{stem_forward.3} parent=11 // pred_region
          _
        $region28: #{stem_forward.3} parent=11 // pred_fallthru
          _
        // Predicated region
        $region29: #{stem_forward.3} parent=11 // pred_check
          %p259 = pneg %p162
        $region30: #{stem_forward.3} parent=11 // pred_check_branch
          %261 = sbr.rel (%p259) target = $region32
        $region31: #{stem_forward.3} parent=11 // pred_region
          _
        $region32: #{stem_forward.3} parent=11 // pred_fallthru
          _
        // Predicated region
        $region33: #{stem_forward.3} parent=11 // pred_check
          %p262 = pneg %p183
        $region34: #{stem_forward.3} parent=11 // pred_check_branch
          %264 = sbr.rel (%p262) target = $region36
        $region35: #{stem_forward.3} parent=11 // pred_region
          _
        $region36: #{stem_forward.3} parent=11 // pred_fallthru
          _
        // Predicated region
        $region37: #{stem_forward.3} parent=11 // pred_check
          %p265 = pneg %p204
        $region38: #{stem_forward.3} parent=11 // pred_check_branch
          %267 = sbr.rel (%p265) target = $region40
        $region39: #{stem_forward.3} parent=11 // pred_region
          _
        $region40: #{stem_forward.3} parent=11 // pred_fallthru
          _
      $region12: #{stem_forward.3} parent=5 // pred_fallthru
        _
      %p268 = scmp.lt.s32.totalorder %s17, 2
      // Predicated region
      $region41: #{stem_forward.3} parent=5 // pred_check
        %p269 = pneg %p268
      $region42: #{stem_forward.3} parent=5 // pred_check_branch
        %271 = sbr.rel (%p269) target = $region44
      $region43: #{stem_forward.3} parent=5 // pred_region
        // Predicated region
        $region45: #{stem_forward.3} parent=43 // pred_check
          %p272 = pneg %p51
        $region46: #{stem_forward.3} parent=43 // pred_check_branch
          %274 = sbr.rel (%p272) target = $region48
        $region47: #{stem_forward.3} parent=43 // pred_region
          %s275 = smul.u32 4, %s25
          %p276 = scmp.lt.s32.totalorder %s24, 1
          %s277 = scalar_select %p276, %s24, 1
          %p278 = scmp.lt.s32.totalorder %s275, 3
          %s279 = scalar_select %p278, %s275, 3
          %s280 = smul.addr %s279, 2
          %s281 = smul.addr %s277, 8
          %s282 = sadd.s32 %s280, %s281
          %s283 = smul.addr %s282, 8
          %s284 = scalar_lea.vmem %s0, %s283
          %s285 = smul.u32 4, %s25
        $region48: #{stem_forward.3} parent=43 // pred_fallthru
          _
      $region44: #{stem_forward.3} parent=5 // pred_fallthru
        _
      %p286 = scmp.le.s32.totalorder 1, %s17
      %p287 = scmp.lt.s32.totalorder %s17, 3
      %p288 = pnand %p286, %p287
      %p289 = pneg %p288
      // Predicated region
      $region49: #{stem_forward.3} parent=5 // pred_check
        _
      $region50: #{stem_forward.3} parent=5 // pred_check_branch
        %291 = sbr.rel (%p288) target = $region52
      $region51: #{stem_forward.3} parent=5 // pred_region
        %s292 = ssub.s32 %s17, 1
        %s293 = smul.u32 4, %s27
        %p294 = scmp.lt.s32.totalorder %s26, 1
        %s295 = scalar_select %p294, %s26, 1
        %p296 = scmp.lt.s32.totalorder %s293, 3
        %s297 = scalar_select %p296, %s293, 3
        %s298 = smul.addr %s297, 2
        %s299 = smul.addr %s295, 8
        %s300 = sadd.s32 %s298, %s299
        %s301 = smul.addr %s300, 8
        %s302 = scalar_lea.vmem %s0, %s301
        %p303 = pneg %p57
        %p304 = pneg %p54
        %p305 = pneg %p78
        %p306 = pneg %p75
        %p307 = pneg %p99
        %p308 = pneg %p96
        %p309 = pneg %p120
        %p310 = pneg %p117
        %p311 = pneg %p141
        %p312 = pneg %p138
        %p313 = pneg %p162
        %p314 = pneg %p159
        %p315 = pneg %p183
        %p316 = pneg %p180
        %p317 = pneg %p204
        %p318 = pneg %p201
        %p319 = pneg %p232
        %p320 = pneg %p229
        %s321 = sand.u32 %s219, 1
        %s322 = scalar_lea.sflag [#allocation3], %s321
        %s323 = sand.u32 %s219, 1
        %s324 = smul.addr %s323, 16
        %s325 = scalar_lea.vmem [#allocation2], %s324
        %s326 = smul.u32 4, %s27
        %p327 = scmp.lt.s32.totalorder %s26, 1
        %s328 = scalar_select %p327, %s26, 1
        %p329 = scmp.lt.s32.totalorder %s326, 3
        %s330 = scalar_select %p329, %s326, 3
        %s331 = smul.addr %s330, 2
        %s332 = smul.addr %s328, 8
        %s333 = sadd.s32 %s331, %s332
        %s334 = smul.addr %s333, 8
        %s335 = scalar_lea.vmem %s0, %s334
        %s336 = smul.u32 4, %s27
        %s337 = smul.u32 4, %s27
        %s338 = smul.u32 %s27, 4
        %v339 = vstv %s338
        %v340 = vadd.s32 %v339, 1
        %v341 = vadd.s32 %v339, 2
        %v342 = vadd.s32 %v339, 3
        %v343 = vlaneseq
        %v344 = vshrl.u32 %v343, 7
        %vm345 = vcmp.ge.s32.totalorder %v339, 1
        %vm346 = vcmp.ge.s32.totalorder %v340, 1
        %vm347 = vcmp.ge.s32.totalorder %v341, 1
        %vm348 = vcmp.ge.s32.totalorder %v342, 1
        %v349 = vsel %vm345, 1, 0
        %v350 = vsel %vm346, 1, 0
        %v351 = vsel %vm347, 1, 0
        %v352 = vsel %vm348, 1, 0
        %v353 = vcvt.s32.f32 %v349
        %v354 = vcvt.s32.f32 %v350
        %v355 = vcvt.s32.f32 %v351
        %v356 = vcvt.s32.f32 %v352
        %v357 = vmul.u32 %v339, 2
        %v358 = vmul.u32 %v340, 2
        %v359 = vmul.u32 %v341, 2
        %v360 = vmul.u32 %v342, 2
        %v361 = vadd.s32 %v357, 1
        %v362 = vadd.s32 %v358, 1
        %v363 = vadd.s32 %v359, 1
        %v364 = vadd.s32 %v360, 1
        %vm365 = vcmp.le.s32.totalorder %v361, 7
        %vm366 = vcmp.le.s32.totalorder %v362, 7
        %vm367 = vcmp.le.s32.totalorder %v363, 7
        %vm368 = vcmp.le.s32.totalorder %v364, 7
        %v369 = vsel %vm365, 1, 0
        %v370 = vsel %vm366, 1, 0
        %v371 = vsel %vm367, 1, 0
        %v372 = vsel %vm368, 1, 0
        %v373 = vcvt.s32.f32 %v369
        %v374 = vcvt.s32.f32 %v370
        %v375 = vcvt.s32.f32 %v371
        %v376 = vcvt.s32.f32 %v372
        %vm377 = vcmp.ge.s32.totalorder %v344, 1
        %v378 = vmul.u32 %v344, 2
        %v379 = vsub.s32 %v378, 1
        %vm380 = vcmp.le.s32.totalorder %v379, 7
        %vm381 = vmand %vm377, %vm380
        %v382 = vsel %vm381, 1, 0
        %v383 = vcvt.s32.f32 %v382
        %v384 = vmul.f32 %v353, %v383
        %v385 = vmul.f32 %v354, %v383
        %v386 = vmul.f32 %v355, %v383
        %v387 = vmul.f32 %v356, %v383
        %v388 = vmul.f32 %v373, %v383
        %v389 = vmul.f32 %v374, %v383
        %v390 = vmul.f32 %v375, %v383
        %v391 = vmul.f32 %v376, %v383
        %v392 = vld [vmem:[%s335] sm:$0x1f]
        %v393 = vld [vmem:[%s335 + $0x10] sm:$0x1f]
        %v394 = vld [vmem:[%s335 + $0x20] sm:$0x1f]
        %v395 = vld [vmem:[%s335 + $0x30] sm:$0x1f]
        %v400 = vcombine.high %v392, %v392
        %v402 = vunpack.c.l.s4 1966171168
        %v403 = vunpack.c.0.s8 %v402
        %v404 = vlaneseq
        %v405 = vshrl.u32 %v404, 7
        %v406 = vsub.s32 %v403, %v405
        %v407 = vrot.slane %v392, %v406
        %v409 = vunpack.c.l.s4 1966171168
        %v410 = vunpack.c.0.s8 %v409
        %v411 = vlaneseq
        %v412 = vshrl.u32 %v411, 7
        %v413 = vsub.s32 %v410, %v412
        %v414 = vrot.slane %v400, %v413
        %v415 = vcombine.high %v407, %v407
        %v417 = vunpack.c.l.s4 1966171168
        %v418 = vunpack.c.0.s8 %v417
        %v419 = vlaneseq
        %v420 = vshrl.u32 %v419, 7
        %v421 = vsub.s32 %v418, %v420
        %v422 = vrot.slane %v407, %v421
        %v424 = vunpack.c.l.s4 1966171168
        %v425 = vunpack.c.0.s8 %v424
        %v426 = vlaneseq
        %v427 = vshrl.u32 %v426, 7
        %v428 = vsub.s32 %v425, %v427
        %v429 = vrot.slane %v414, %v428
        %v431 = vunpack.c.l.s4 1966171168
        %v432 = vunpack.c.0.s8 %v431
        %v433 = vlaneseq
        %v434 = vshrl.u32 %v433, 7
        %v435 = vsub.s32 %v432, %v434
        %v436 = vrot.slane %v415, %v435
        %v437 = vcombine.high %v422, %v422
        %v438 = vcombine.high %v436, %v436
        %v439 = vcombine.high %v393, %v393
        %v441 = vunpack.c.l.s4 1966171168
        %v442 = vunpack.c.0.s8 %v441
        %v443 = vlaneseq
        %v444 = vshrl.u32 %v443, 7
        %v445 = vsub.s32 %v442, %v444
        %v446 = vrot.slane %v393, %v445
        %v448 = vunpack.c.l.s4 1966171168
        %v449 = vunpack.c.0.s8 %v448
        %v450 = vlaneseq
        %v451 = vshrl.u32 %v450, 7
        %v452 = vsub.s32 %v449, %v451
        %v453 = vrot.slane %v439, %v452
        %v454 = vcombine.high %v446, %v446
        %v456 = vunpack.c.l.s4 1966171168
        %v457 = vunpack.c.0.s8 %v456
        %v458 = vlaneseq
        %v459 = vshrl.u32 %v458, 7
        %v460 = vsub.s32 %v457, %v459
        %v461 = vrot.slane %v446, %v460
        %v463 = vunpack.c.l.s4 1966171168
        %v464 = vunpack.c.0.s8 %v463
        %v465 = vlaneseq
        %v466 = vshrl.u32 %v465, 7
        %v467 = vsub.s32 %v464, %v466
        %v468 = vrot.slane %v453, %v467
        %v470 = vunpack.c.l.s4 1966171168
        %v471 = vunpack.c.0.s8 %v470
        %v472 = vlaneseq
        %v473 = vshrl.u32 %v472, 7
        %v474 = vsub.s32 %v471, %v473
        %v475 = vrot.slane %v454, %v474
        %v476 = vcombine.high %v461, %v461
        %v477 = vcombine.high %v475, %v475
        %v478 = vcombine.high %v394, %v394
        %v480 = vunpack.c.l.s4 1966171168
        %v481 = vunpack.c.0.s8 %v480
        %v482 = vlaneseq
        %v483 = vshrl.u32 %v482, 7
        %v484 = vsub.s32 %v481, %v483
        %v485 = vrot.slane %v394, %v484
        %v487 = vunpack.c.l.s4 1966171168
        %v488 = vunpack.c.0.s8 %v487
        %v489 = vlaneseq
        %v490 = vshrl.u32 %v489, 7
        %v491 = vsub.s32 %v488, %v490
        %v492 = vrot.slane %v478, %v491
        %v493 = vcombine.high %v485, %v485
        %v495 = vunpack.c.l.s4 1966171168
        %v496 = vunpack.c.0.s8 %v495
        %v497 = vlaneseq
        %v498 = vshrl.u32 %v497, 7
        %v499 = vsub.s32 %v496, %v498
        %v500 = vrot.slane %v485, %v499
        %v502 = vunpack.c.l.s4 1966171168
        %v503 = vunpack.c.0.s8 %v502
        %v504 = vlaneseq
        %v505 = vshrl.u32 %v504, 7
        %v506 = vsub.s32 %v503, %v505
        %v507 = vrot.slane %v492, %v506
        %v509 = vunpack.c.l.s4 1966171168
        %v510 = vunpack.c.0.s8 %v509
        %v511 = vlaneseq
        %v512 = vshrl.u32 %v511, 7
        %v513 = vsub.s32 %v510, %v512
        %v514 = vrot.slane %v493, %v513
        %v515 = vcombine.high %v500, %v500
        %v516 = vcombine.high %v514, %v514
        %v517 = vcombine.high %v395, %v395
        %v519 = vunpack.c.l.s4 1966171168
        %v520 = vunpack.c.0.s8 %v519
        %v521 = vlaneseq
        %v522 = vshrl.u32 %v521, 7
        %v523 = vsub.s32 %v520, %v522
        %v524 = vrot.slane %v395, %v523
        %v526 = vunpack.c.l.s4 1966171168
        %v527 = vunpack.c.0.s8 %v526
        %v528 = vlaneseq
        %v529 = vshrl.u32 %v528, 7
        %v530 = vsub.s32 %v527, %v529
        %v531 = vrot.slane %v517, %v530
        %v532 = vcombine.high %v524, %v524
        %v534 = vunpack.c.l.s4 1966171168
        %v535 = vunpack.c.0.s8 %v534
        %v536 = vlaneseq
        %v537 = vshrl.u32 %v536, 7
        %v538 = vsub.s32 %v535, %v537
        %v539 = vrot.slane %v524, %v538
        %v541 = vunpack.c.l.s4 1966171168
        %v542 = vunpack.c.0.s8 %v541
        %v543 = vlaneseq
        %v544 = vshrl.u32 %v543, 7
        %v545 = vsub.s32 %v542, %v544
        %v546 = vrot.slane %v531, %v545
        %v548 = vunpack.c.l.s4 1966171168
        %v549 = vunpack.c.0.s8 %v548
        %v550 = vlaneseq
        %v551 = vshrl.u32 %v550, 7
        %v552 = vsub.s32 %v549, %v551
        %v553 = vrot.slane %v532, %v552
        %v554 = vcombine.high %v539, %v539
        %v555 = vcombine.high %v553, %v553
        %v556 = vld [vmem:[%s1] sm:$0xff]
        %v557 = vld [vmem:[%s1 + $0x8] sm:$0xff]
        %v558 = vld [vmem:[%s2] sm:$0x1]
        %v560 = vlaneseq
        %v561 = vshrl.u32 %v560, 7
        %v562 = vsub.s32 0, %v561
        %v563 = vrot.slane %v558, %v562
        %v565 = vcombine.low %v422, %v436
        %v566 = vcombine.low %v437, %v438
        %v567 = vcombine.low %v429, %v461
        %v568 = vcombine.low %v475, %v476
        %v570 = vunpack.c.l.s4 1966171168
        %v571 = vunpack.c.0.s8 %v570
        %v572 = vlaneseq
        %v573 = vshrl.u32 %v572, 7
        %v574 = vsub.s32 %v571, %v573
        %v575 = vrot.slane %v565, %v574
        %v577 = vunpack.c.l.s4 1966171168
        %v578 = vunpack.c.0.s8 %v577
        %v579 = vlaneseq
        %v580 = vshrl.u32 %v579, 7
        %v581 = vsub.s32 %v578, %v580
        %v582 = vrot.slane %v566, %v581
        %v584 = vunpack.c.l.s4 1966171168
        %v585 = vunpack.c.0.s8 %v584
        %v586 = vlaneseq
        %v587 = vshrl.u32 %v586, 7
        %v588 = vsub.s32 %v585, %v587
        %v589 = vrot.slane %v567, %v588
        %v591 = vunpack.c.l.s4 1966171168
        %v592 = vunpack.c.0.s8 %v591
        %v593 = vlaneseq
        %v594 = vshrl.u32 %v593, 7
        %v595 = vsub.s32 %v592, %v594
        %v596 = vrot.slane %v568, %v595
        %v597 = vcombine.low %v575, %v582
        %v598 = vcombine.low %v589, %v596
        %v600 = vunpack.c.l.s4 1966171168
        %v601 = vunpack.c.0.s8 %v600
        %v602 = vlaneseq
        %v603 = vshrl.u32 %v602, 7
        %v604 = vsub.s32 %v601, %v603
        %v605 = vrot.slane %v597, %v604
        %v607 = vunpack.c.l.s4 1966171168
        %v608 = vunpack.c.0.s8 %v607
        %v609 = vlaneseq
        %v610 = vshrl.u32 %v609, 7
        %v611 = vsub.s32 %v608, %v610
        %v612 = vrot.slane %v598, %v611
        %v613 = vcombine.low %v605, %v612
        %v614 = vcombine.low %v477, %v468
        %v615 = vcombine.low %v500, %v514
        %v616 = vcombine.low %v515, %v516
        %v617 = vcombine.low %v507, %v539
        %v619 = vunpack.c.l.s4 1966171168
        %v620 = vunpack.c.0.s8 %v619
        %v621 = vlaneseq
        %v622 = vshrl.u32 %v621, 7
        %v623 = vsub.s32 %v620, %v622
        %v624 = vrot.slane %v614, %v623
        %v626 = vunpack.c.l.s4 1966171168
        %v627 = vunpack.c.0.s8 %v626
        %v628 = vlaneseq
        %v629 = vshrl.u32 %v628, 7
        %v630 = vsub.s32 %v627, %v629
        %v631 = vrot.slane %v615, %v630
        %v633 = vunpack.c.l.s4 1966171168
        %v634 = vunpack.c.0.s8 %v633
        %v635 = vlaneseq
        %v636 = vshrl.u32 %v635, 7
        %v637 = vsub.s32 %v634, %v636
        %v638 = vrot.slane %v616, %v637
        %v640 = vunpack.c.l.s4 1966171168
        %v641 = vunpack.c.0.s8 %v640
        %v642 = vlaneseq
        %v643 = vshrl.u32 %v642, 7
        %v644 = vsub.s32 %v641, %v643
        %v645 = vrot.slane %v617, %v644
        %v646 = vcombine.low %v624, %v631
        %v647 = vcombine.low %v638, %v645
        %v649 = vunpack.c.l.s4 1966171168
        %v650 = vunpack.c.0.s8 %v649
        %v651 = vlaneseq
        %v652 = vshrl.u32 %v651, 7
        %v653 = vsub.s32 %v650, %v652
        %v654 = vrot.slane %v646, %v653
        %v656 = vunpack.c.l.s4 1966171168
        %v657 = vunpack.c.0.s8 %v656
        %v658 = vlaneseq
        %v659 = vshrl.u32 %v658, 7
        %v660 = vsub.s32 %v657, %v659
        %v661 = vrot.slane %v647, %v660
        %v662 = vcombine.low %v654, %v661
        %v663 = vcombine.low %v553, %v554
        %v664 = vcombine.low %v555, %v546
        %v666 = vunpack.c.l.s4 1966171168
        %v667 = vunpack.c.0.s8 %v666
        %v668 = vlaneseq
        %v669 = vshrl.u32 %v668, 7
        %v670 = vsub.s32 %v667, %v669
        %v671 = vrot.slane %v663, %v670
        %v673 = vunpack.c.l.s4 1966171168
        %v674 = vunpack.c.0.s8 %v673
        %v675 = vlaneseq
        %v676 = vshrl.u32 %v675, 7
        %v677 = vsub.s32 %v674, %v676
        %v678 = vrot.slane %v664, %v677
        %v679 = vcombine.low %v671, %v678
        %v681 = vunpack.c.l.s4 1966171168
        %v682 = vunpack.c.0.s8 %v681
        %v683 = vlaneseq
        %v684 = vshrl.u32 %v683, 7
        %v685 = vsub.s32 %v682, %v684
        %v686 = vrot.slane %v679, %v685
        %687 = vrot.lane.b32.xlu0 %v613, 112
        %v688 = vpop.permute.xlu0 %687
        %689 = vrot.lane.b32.xlu0 %v662, 112
        %v690 = vpop.permute.xlu0 %689
        %691 = vrot.lane.b32.xlu0 %v686, 112
        %v692 = vpop.permute.xlu0 %691
        %vm693 = vcmask 130048
        %v694 = vsel %vm693, %v688, 0
        %v696 = vsel %vm693, %v690, 0
        %v698 = vsel %vm693, %v692, 0
        %700 = vmatprep.subr.mxu0 0.0
        %701 = vmatpush1.msra.mxu0 %v556
        %702 = vmatprep.subr.mxu0 0.0
        %703 = vmatpush1.msra.mxu0 %v557
        %704 = vmatprep.subr.mxu0 0.0
        %705 = vmatpush1.msra.mxu0 0.0
        %706 = vmatprep.subr.mxu0 0.0
        %707 = vmatpush1.msra.mxu0 0.0
        %708 = vmatprep.subr.mxu0 0.0
        %709 = vmatpush1.msra.mxu0 0.0
        %710 = vmatprep.subr.mxu0 0.0
        %711 = vmatpush1.msra.mxu0 0.0
        %712 = vmatprep.subr.mxu0 0.0
        %713 = vmatpush1.msra.mxu0 0.0
        %714 = vmatprep.subr.mxu0 0.0
        %715 = vmatpush1.msra.mxu0 0.0
        %716 = vmatprep.subr.mxu0 0.0
        %717 = vmatpush1.msra.mxu0 0.0
        %718 = vmatprep.subr.mxu0 0.0
        %719 = vmatpush1.msra.mxu0 0.0
        %720 = vmatprep.subr.mxu0 0.0
        %721 = vmatpush1.msra.mxu0 0.0
        %722 = vmatprep.subr.mxu0 0.0
        %723 = vmatpush1.msra.mxu0 0.0
        %724 = vmatprep.subr.mxu0 0.0
        %725 = vmatpush1.msra.mxu0 0.0
        %726 = vmatprep.subr.mxu0 0.0
        %727 = vmatpush1.msra.mxu0 0.0
        %728 = vmatprep.subr.mxu0 0.0
        %729 = vmatpush1.msra.mxu0 0.0
        %730 = vmatprep.subr.mxu0 0.0
        %731 = vmatpush1.msra.mxu0 0.0
        %732 = vmatprep.subr.mxu0 0.0
        %733 = vmatpush1.msra.mxu0 0.0
        %734 = vmatprep.subr.mxu0 0.0
        %735 = vmatpush1.msra.mxu0 0.0
        %736 = vmatprep.subr.mxu0 0.0
        %737 = vmatpush1.msra.mxu0 0.0
        %738 = vmatprep.subr.mxu0 0.0
        %739 = vmatpush1.msra.mxu0 0.0
        %740 = vmatprep.subr.mxu0 0.0
        %741 = vmatpush1.msra.mxu0 0.0
        %742 = vmatprep.subr.mxu0 0.0
        %743 = vmatpush1.msra.mxu0 0.0
        %744 = vmatprep.subr.mxu0 0.0
        %745 = vmatpush1.msra.mxu0 0.0
        %746 = vmatprep.subr.mxu0 0.0
        %747 = vmatpush1.msra.mxu0 0.0
        %748 = vmatprep.subr.mxu0 0.0
        %749 = vmatpush1.msra.mxu0 0.0
        %750 = vmatprep.subr.mxu0 0.0
        %751 = vmatpush1.msra.mxu0 0.0
        %752 = vmatprep.subr.mxu0 0.0
        %753 = vmatpush1.msra.mxu0 0.0
        %754 = vmatprep.subr.mxu0 0.0
        %755 = vmatpush1.msra.mxu0 0.0
        %756 = vmatprep.subr.mxu0 0.0
        %757 = vmatpush1.msra.mxu0 0.0
        %758 = vmatprep.subr.mxu0 0.0
        %759 = vmatpush1.msra.mxu0 0.0
        %760 = vmatprep.subr.mxu0 0.0
        %761 = vmatpush1.msra.mxu0 0.0
        %762 = vmatprep.subr.mxu0 0.0
        %763 = vmatpush1.msra.mxu0 0.0
        %764 = vmatprep.mubr.f32.mxu0 0.0
        %765 = vmatmul.mubr.f32.gmra.mrb[0].mxu0 %v694
        %v766 = vpop.f32.mrb[0].mxu0
        %v767 = vadd.f32 %v563, %v766
        %v768 = vpop.f32.mrb[0].mxu0
        %769 = vmatprep.mubr.f32.mxu0 0.0
        %770 = vmatmul.mubr.f32.gmra.mrb[0].mxu0 %v696
        %v771 = vpop.f32.mrb[0].mxu0
        %v772 = vadd.f32 %v563, %v771
        %v773 = vpop.f32.mrb[0].mxu0
        %774 = vmatprep.mubr.f32.mxu0 0.0
        %775 = vmatmul.mubr.f32.gmra.mrb[0].mxu0 %v698
        %v776 = vpop.f32.mrb[0].mxu0
        %v777 = vadd.f32 %v563, %v776
        %v778 = vpop.f32.mrb[0].mxu0
        %779 = vdwg.mxu0
        %v780 = vmax.f32 %v767, 0.0
        %v781 = vmax.f32 %v772, 0.0
        %v782 = vmax.f32 %v777, 0.0
        %v786 = vcombine.high %v780, %v780
        %v788 = vunpack.c.l.s4 1966171168
        %v789 = vunpack.c.0.s8 %v788
        %v790 = vlaneseq
        %v791 = vshrl.u32 %v790, 7
        %v792 = vsub.s32 %v789, %v791
        %v793 = vrot.slane %v780, %v792
        %v795 = vunpack.c.l.s4 1966171168
        %v796 = vunpack.c.0.s8 %v795
        %v797 = vlaneseq
        %v798 = vshrl.u32 %v797, 7
        %v799 = vsub.s32 %v796, %v798
        %v800 = vrot.slane %v786, %v799
        %v801 = vcombine.high %v793, %v793
        %v802 = vcombine.high %v800, %v800
        %v804 = vunpack.c.l.s4 1966171168
        %v805 = vunpack.c.0.s8 %v804
        %v806 = vlaneseq
        %v807 = vshrl.u32 %v806, 7
        %v808 = vsub.s32 %v805, %v807
        %v809 = vrot.slane %v793, %v808
        %v811 = vunpack.c.l.s4 1966171168
        %v812 = vunpack.c.0.s8 %v811
        %v813 = vlaneseq
        %v814 = vshrl.u32 %v813, 7
        %v815 = vsub.s32 %v812, %v814
        %v816 = vrot.slane %v800, %v815
        %v818 = vunpack.c.l.s4 1966171168
        %v819 = vunpack.c.0.s8 %v818
        %v820 = vlaneseq
        %v821 = vshrl.u32 %v820, 7
        %v822 = vsub.s32 %v819, %v821
        %v823 = vrot.slane %v801, %v822
        %v825 = vunpack.c.l.s4 1966171168
        %v826 = vunpack.c.0.s8 %v825
        %v827 = vlaneseq
        %v828 = vshrl.u32 %v827, 7
        %v829 = vsub.s32 %v826, %v828
        %v830 = vrot.slane %v802, %v829
        %v831 = vcombine.high %v809, %v809
        %v832 = vcombine.high %v816, %v816
        %v833 = vcombine.high %v823, %v823
        %v834 = vcombine.high %v830, %v830
        %v835 = vcombine.high %v781, %v781
        %v837 = vunpack.c.l.s4 1966171168
        %v838 = vunpack.c.0.s8 %v837
        %v839 = vlaneseq
        %v840 = vshrl.u32 %v839, 7
        %v841 = vsub.s32 %v838, %v840
        %v842 = vrot.slane %v781, %v841
        %v844 = vunpack.c.l.s4 1966171168
        %v845 = vunpack.c.0.s8 %v844
        %v846 = vlaneseq
        %v847 = vshrl.u32 %v846, 7
        %v848 = vsub.s32 %v845, %v847
        %v849 = vrot.slane %v835, %v848
        %v850 = vcombine.high %v842, %v842
        %v851 = vcombine.high %v849, %v849
        %v853 = vunpack.c.l.s4 1966171168
        %v854 = vunpack.c.0.s8 %v853
        %v855 = vlaneseq
        %v856 = vshrl.u32 %v855, 7
        %v857 = vsub.s32 %v854, %v856
        %v858 = vrot.slane %v842, %v857
        %v860 = vunpack.c.l.s4 1966171168
        %v861 = vunpack.c.0.s8 %v860
        %v862 = vlaneseq
        %v863 = vshrl.u32 %v862, 7
        %v864 = vsub.s32 %v861, %v863
        %v865 = vrot.slane %v849, %v864
        %v867 = vunpack.c.l.s4 1966171168
        %v868 = vunpack.c.0.s8 %v867
        %v869 = vlaneseq
        %v870 = vshrl.u32 %v869, 7
        %v871 = vsub.s32 %v868, %v870
        %v872 = vrot.slane %v850, %v871
        %v874 = vunpack.c.l.s4 1966171168
        %v875 = vunpack.c.0.s8 %v874
        %v876 = vlaneseq
        %v877 = vshrl.u32 %v876, 7
        %v878 = vsub.s32 %v875, %v877
        %v879 = vrot.slane %v851, %v878
        %v880 = vcombine.high %v858, %v858
        %v881 = vcombine.high %v865, %v865
        %v882 = vcombine.high %v872, %v872
        %v883 = vcombine.high %v879, %v879
        %v885 = vunpack.c.l.s4 1966171168
        %v886 = vunpack.c.0.s8 %v885
        %v887 = vlaneseq
        %v888 = vshrl.u32 %v887, 7
        %v889 = vsub.s32 %v886, %v888
        %v890 = vrot.slane %v782, %v889
        %v891 = vcombine.high %v890, %v890
        %v893 = vunpack.c.l.s4 1966171168
        %v894 = vunpack.c.0.s8 %v893
        %v895 = vlaneseq
        %v896 = vshrl.u32 %v895, 7
        %v897 = vsub.s32 %v894, %v896
        %v898 = vrot.slane %v890, %v897
        %v900 = vunpack.c.l.s4 1966171168
        %v901 = vunpack.c.0.s8 %v900
        %v902 = vlaneseq
        %v903 = vshrl.u32 %v902, 7
        %v904 = vsub.s32 %v901, %v903
        %v905 = vrot.slane %v891, %v904
        %v906 = vcombine.high %v898, %v898
        %v907 = vcombine.high %v905, %v905
        %v932 = vlaneseq
        %v933 = vshrl.u32 %v932, 7
        %v934 = vsub.s32 0, %v933
        %v935 = vrot.slane %v384, %v934
        %v936 = vlaneseq
        %v937 = vshrl.u32 %v936, 7
        %v938 = vsub.s32 1, %v937
        %v939 = vrot.slane %v384, %v938
        %v940 = vlaneseq
        %v941 = vshrl.u32 %v940, 7
        %v942 = vsub.s32 2, %v941
        %v943 = vrot.slane %v384, %v942
        %v944 = vlaneseq
        %v945 = vshrl.u32 %v944, 7
        %v946 = vsub.s32 3, %v945
        %v947 = vrot.slane %v384, %v946
        %v948 = vlaneseq
        %v949 = vshrl.u32 %v948, 7
        %v950 = vsub.s32 4, %v949
        %v951 = vrot.slane %v384, %v950
        %v952 = vlaneseq
        %v953 = vshrl.u32 %v952, 7
        %v954 = vsub.s32 0, %v953
        %v955 = vrot.slane %v385, %v954
        %v956 = vlaneseq
        %v957 = vshrl.u32 %v956, 7
        %v958 = vsub.s32 1, %v957
        %v959 = vrot.slane %v385, %v958
        %v960 = vlaneseq
        %v961 = vshrl.u32 %v960, 7
        %v962 = vsub.s32 2, %v961
        %v963 = vrot.slane %v385, %v962
        %v964 = vlaneseq
        %v965 = vshrl.u32 %v964, 7
        %v966 = vsub.s32 3, %v965
        %v967 = vrot.slane %v385, %v966
        %v968 = vlaneseq
        %v969 = vshrl.u32 %v968, 7
        %v970 = vsub.s32 4, %v969
        %v971 = vrot.slane %v385, %v970
        %v972 = vlaneseq
        %v973 = vshrl.u32 %v972, 7
        %v974 = vsub.s32 0, %v973
        %v975 = vrot.slane %v386, %v974
        %v976 = vlaneseq
        %v977 = vshrl.u32 %v976, 7
        %v978 = vsub.s32 1, %v977
        %v979 = vrot.slane %v386, %v978
        %v980 = vlaneseq
        %v981 = vshrl.u32 %v980, 7
        %v982 = vsub.s32 2, %v981
        %v983 = vrot.slane %v386, %v982
        %v984 = vlaneseq
        %v985 = vshrl.u32 %v984, 7
        %v986 = vsub.s32 3, %v985
        %v987 = vrot.slane %v386, %v986
        %v988 = vlaneseq
        %v989 = vshrl.u32 %v988, 7
        %v990 = vsub.s32 4, %v989
        %v991 = vrot.slane %v386, %v990
        %v992 = vlaneseq
        %v993 = vshrl.u32 %v992, 7
        %v994 = vsub.s32 0, %v993
        %v995 = vrot.slane %v387, %v994
        %v996 = vlaneseq
        %v997 = vshrl.u32 %v996, 7
        %v998 = vsub.s32 1, %v997
        %v999 = vrot.slane %v387, %v998
        %v1000 = vlaneseq
        %v1001 = vshrl.u32 %v1000, 7
        %v1002 = vsub.s32 2, %v1001
        %v1003 = vrot.slane %v387, %v1002
        %v1004 = vlaneseq
        %v1005 = vshrl.u32 %v1004, 7
        %v1006 = vsub.s32 3, %v1005
        %v1007 = vrot.slane %v387, %v1006
        %v1008 = vlaneseq
        %v1009 = vshrl.u32 %v1008, 7
        %v1010 = vsub.s32 4, %v1009
        %v1011 = vrot.slane %v387, %v1010
        %v1032 = vmul.f32 %v809, %v935
        %v1033 = vmul.f32 %v823, %v939
        %v1034 = vmul.f32 %v831, %v943
        %v1035 = vmul.f32 %v833, %v947
        %v1036 = vmul.f32 %v816, %v951
        %v1037 = vmul.f32 %v830, %v955
        %v1038 = vmul.f32 %v832, %v959
        %v1039 = vmul.f32 %v834, %v963
        %v1040 = vmul.f32 %v858, %v967
        %v1041 = vmul.f32 %v872, %v971
        %v1042 = vmul.f32 %v880, %v975
        %v1043 = vmul.f32 %v882, %v979
        %v1044 = vmul.f32 %v865, %v983
        %v1045 = vmul.f32 %v879, %v987
        %v1046 = vmul.f32 %v881, %v991
        %v1047 = vmul.f32 %v883, %v995
        %v1048 = vmul.f32 %v898, %v999
        %v1049 = vmul.f32 %v905, %v1003
        %v1050 = vmul.f32 %v906, %v1007
        %v1051 = vmul.f32 %v907, %v1011
        %v1052 = vld [vmem:[%s3] sm:$0x1]
        %v1054 = vlaneseq
        %v1055 = vshrl.u32 %v1054, 7
        %v1056 = vsub.s32 0, %v1055
        %v1057 = vrot.slane %v1052, %v1056
        %v1059 = vmul.f32 %v392, %v1057
        %v1060 = vmul.f32 %v393, %v1057
        %v1061 = vmul.f32 %v394, %v1057
        %v1062 = vmul.f32 %v395, %v1057
        %v1063 = vadd.f32 %v1059, 0.0
        %v1064 = vadd.f32 %v1060, 0.0
        %v1065 = vadd.f32 %v1061, 0.0
        %v1066 = vadd.f32 %v1062, 0.0
        %v1067 = vld [vmem:[%s4] sm:$0x1]
        %v1069 = vlaneseq
        %v1070 = vshrl.u32 %v1069, 7
        %v1071 = vsub.s32 0, %v1070
        %v1072 = vrot.slane %v1067, %v1071
        %v1074 = vunpack.c.l.s4 1966171168
        %v1075 = vunpack.c.0.s8 %v1074
        %v1076 = vlaneseq
        %v1077 = vshrl.u32 %v1076, 7
        %v1078 = vsub.s32 %v1075, %v1077
        %v1079 = vrot.slane %v1072, %v1078
        %v1080 = vcombine.high %v1079, %v1079
        %v1082 = vunpack.c.l.s4 1966171168
        %v1083 = vunpack.c.0.s8 %v1082
        %v1084 = vlaneseq
        %v1085 = vshrl.u32 %v1084, 7
        %v1086 = vsub.s32 %v1083, %v1085
        %v1087 = vrot.slane %v1079, %v1086
        %v1089 = vunpack.c.l.s4 1966171168
        %v1090 = vunpack.c.0.s8 %v1089
        %v1091 = vlaneseq
        %v1092 = vshrl.u32 %v1091, 7
        %v1093 = vsub.s32 %v1090, %v1092
        %v1094 = vrot.slane %v1080, %v1093
        %v1095 = vcombine.high %v1087, %v1087
        %v1096 = vcombine.high %v1094, %v1094
        %v1101 = vmul.f32 %v1032, %v1087
        %v1102 = vmul.f32 %v1033, %v1094
        %v1103 = vmul.f32 %v1034, %v1095
        %v1104 = vmul.f32 %v1035, %v1096
        %v1105 = vmul.f32 %v1037, %v1087
        %v1106 = vmul.f32 %v1038, %v1094
        %v1107 = vmul.f32 %v1039, %v1095
        %v1108 = vmul.f32 %v1040, %v1096
        %v1109 = vmul.f32 %v1042, %v1087
        %v1110 = vmul.f32 %v1043, %v1094
        %v1111 = vmul.f32 %v1044, %v1095
        %v1112 = vmul.f32 %v1045, %v1096
        %v1113 = vmul.f32 %v1047, %v1087
        %v1114 = vmul.f32 %v1048, %v1094
        %v1115 = vmul.f32 %v1049, %v1095
        %v1116 = vmul.f32 %v1050, %v1096
        %v1117 = vadd.f32 %v1101, 0.0
        %v1118 = vadd.f32 %v1102, 0.0
        %v1119 = vadd.f32 %v1103, 0.0
        %v1120 = vadd.f32 %v1104, 0.0
        %v1121 = vadd.f32 %v1105, 0.0
        %v1122 = vadd.f32 %v1106, 0.0
        %v1123 = vadd.f32 %v1107, 0.0
        %v1124 = vadd.f32 %v1108, 0.0
        %v1125 = vadd.f32 %v1109, 0.0
        %v1126 = vadd.f32 %v1110, 0.0
        %v1127 = vadd.f32 %v1111, 0.0
        %v1128 = vadd.f32 %v1112, 0.0
        %v1129 = vadd.f32 %v1113, 0.0
        %v1130 = vadd.f32 %v1114, 0.0
        %v1131 = vadd.f32 %v1115, 0.0
        %v1132 = vadd.f32 %v1116, 0.0
        %s1133 = scalar_lea.vmem %s3, 2
        %v1134 = vld [vmem:[%s1133] sm:$0x1]
        %v1136 = vlaneseq
        %v1137 = vshrl.u32 %v1136, 7
        %v1138 = vsub.s32 0, %v1137
        %v1139 = vrot.slane %v1134, %v1138
        %v1141 = vmul.f32 %v392, %v1139
        %v1142 = vmul.f32 %v393, %v1139
        %v1143 = vmul.f32 %v394, %v1139
        %v1144 = vmul.f32 %v395, %v1139
        %v1149 = vrot.slane %v1141, 1
        %v1150 = vrot.slane %v1142, 1
        %v1151 = vrot.slane %v1143, 1
        %v1152 = vrot.slane %v1144, 1
        %v1157 = vadd.f32 %v1063, %v1149
        %v1158 = vadd.f32 %v1064, %v1150
        %v1159 = vadd.f32 %v1065, %v1151
        %v1160 = vadd.f32 %v1066, %v1152
        %s1161 = scalar_lea.vmem %s4, 2
        %v1162 = vld [vmem:[%s1161] sm:$0x1]
        %v1164 = vlaneseq
        %v1165 = vshrl.u32 %v1164, 7
        %v1166 = vsub.s32 0, %v1165
        %v1167 = vrot.slane %v1162, %v1166
        %v1169 = vunpack.c.l.s4 1966171168
        %v1170 = vunpack.c.0.s8 %v1169
        %v1171 = vlaneseq
        %v1172 = vshrl.u32 %v1171, 7
        %v1173 = vsub.s32 %v1170, %v1172
        %v1174 = vrot.slane %v1167, %v1173
        %v1175 = vcombine.high %v1174, %v1174
        %v1177 = vunpack.c.l.s4 1966171168
        %v1178 = vunpack.c.0.s8 %v1177
        %v1179 = vlaneseq
        %v1180 = vshrl.u32 %v1179, 7
        %v1181 = vsub.s32 %v1178, %v1180
        %v1182 = vrot.slane %v1174, %v1181
        %v1184 = vunpack.c.l.s4 1966171168
        %v1185 = vunpack.c.0.s8 %v1184
        %v1186 = vlaneseq
        %v1187 = vshrl.u32 %v1186, 7
        %v1188 = vsub.s32 %v1185, %v1187
        %v1189 = vrot.slane %v1175, %v1188
        %v1190 = vcombine.high %v1182, %v1182
        %v1191 = vcombine.high %v1189, %v1189
        %v1196 = vmul.f32 %v1033, %v1182
        %v1197 = vmul.f32 %v1034, %v1189
        %v1198 = vmul.f32 %v1035, %v1190
        %v1199 = vmul.f32 %v1036, %v1191
        %v1200 = vmul.f32 %v1038, %v1182
        %v1201 = vmul.f32 %v1039, %v1189
        %v1202 = vmul.f32 %v1040, %v1190
        %v1203 = vmul.f32 %v1041, %v1191
        %v1204 = vmul.f32 %v1043, %v1182
        %v1205 = vmul.f32 %v1044, %v1189
        %v1206 = vmul.f32 %v1045, %v1190
        %v1207 = vmul.f32 %v1046, %v1191
        %v1208 = vmul.f32 %v1048, %v1182
        %v1209 = vmul.f32 %v1049, %v1189
        %v1210 = vmul.f32 %v1050, %v1190
        %v1211 = vmul.f32 %v1051, %v1191
        %v1212 = vadd.f32 %v1117, %v1196
        %v1213 = vadd.f32 %v1118, %v1197
        %v1214 = vadd.f32 %v1119, %v1198
        %v1215 = vadd.f32 %v1120, %v1199
        %v1216 = vadd.f32 %v1121, %v1200
        %v1217 = vadd.f32 %v1122, %v1201
        %v1218 = vadd.f32 %v1123, %v1202
        %v1219 = vadd.f32 %v1124, %v1203
        %v1220 = vadd.f32 %v1125, %v1204
        %v1221 = vadd.f32 %v1126, %v1205
        %v1222 = vadd.f32 %v1127, %v1206
        %v1223 = vadd.f32 %v1128, %v1207
        %v1224 = vadd.f32 %v1129, %v1208
        %v1225 = vadd.f32 %v1130, %v1209
        %v1226 = vadd.f32 %v1131, %v1210
        %v1227 = vadd.f32 %v1132, %v1211
        %v1228 = vld [vmem:[%s335] sm:$0x1f]
        %v1229 = vld [vmem:[%s335 + $0x10] sm:$0x1f]
        %v1230 = vld [vmem:[%s335 + $0x20] sm:$0x1f]
        %v1231 = vld [vmem:[%s335 + $0x30] sm:$0x1f]
        %v1236 = vcombine.high %v1228, %v1228
        %v1238 = vunpack.c.l.s4 1966171168
        %v1239 = vunpack.c.0.s8 %v1238
        %v1240 = vlaneseq
        %v1241 = vshrl.u32 %v1240, 7
        %v1242 = vsub.s32 %v1239, %v1241
        %v1243 = vrot.slane %v1228, %v1242
        %v1245 = vunpack.c.l.s4 1966171168
        %v1246 = vunpack.c.0.s8 %v1245
        %v1247 = vlaneseq
        %v1248 = vshrl.u32 %v1247, 7
        %v1249 = vsub.s32 %v1246, %v1248
        %v1250 = vrot.slane %v1236, %v1249
        %v1251 = vcombine.high %v1243, %v1243
        %v1253 = vunpack.c.l.s4 1966171168
        %v1254 = vunpack.c.0.s8 %v1253
        %v1255 = vlaneseq
        %v1256 = vshrl.u32 %v1255, 7
        %v1257 = vsub.s32 %v1254, %v1256
        %v1258 = vrot.slane %v1243, %v1257
        %v1260 = vunpack.c.l.s4 1966171168
        %v1261 = vunpack.c.0.s8 %v1260
        %v1262 = vlaneseq
        %v1263 = vshrl.u32 %v1262, 7
        %v1264 = vsub.s32 %v1261, %v1263
        %v1265 = vrot.slane %v1250, %v1264
        %v1267 = vunpack.c.l.s4 1966171168
        %v1268 = vunpack.c.0.s8 %v1267
        %v1269 = vlaneseq
        %v1270 = vshrl.u32 %v1269, 7
        %v1271 = vsub.s32 %v1268, %v1270
        %v1272 = vrot.slane %v1251, %v1271
        %v1273 = vcombine.high %v1258, %v1258
        %v1274 = vcombine.high %v1272, %v1272
        %v1275 = vcombine.high %v1229, %v1229
        %v1277 = vunpack.c.l.s4 1966171168
        %v1278 = vunpack.c.0.s8 %v1277
        %v1279 = vlaneseq
        %v1280 = vshrl.u32 %v1279, 7
        %v1281 = vsub.s32 %v1278, %v1280
        %v1282 = vrot.slane %v1229, %v1281
        %v1284 = vunpack.c.l.s4 1966171168
        %v1285 = vunpack.c.0.s8 %v1284
        %v1286 = vlaneseq
        %v1287 = vshrl.u32 %v1286, 7
        %v1288 = vsub.s32 %v1285, %v1287
        %v1289 = vrot.slane %v1275, %v1288
        %v1290 = vcombine.high %v1282, %v1282
        %v1292 = vunpack.c.l.s4 1966171168
        %v1293 = vunpack.c.0.s8 %v1292
        %v1294 = vlaneseq
        %v1295 = vshrl.u32 %v1294, 7
        %v1296 = vsub.s32 %v1293, %v1295
        %v1297 = vrot.slane %v1282, %v1296
        %v1299 = vunpack.c.l.s4 1966171168
        %v1300 = vunpack.c.0.s8 %v1299
        %v1301 = vlaneseq
        %v1302 = vshrl.u32 %v1301, 7
        %v1303 = vsub.s32 %v1300, %v1302
        %v1304 = vrot.slane %v1289, %v1303
        %v1306 = vunpack.c.l.s4 1966171168
        %v1307 = vunpack.c.0.s8 %v1306
        %v1308 = vlaneseq
        %v1309 = vshrl.u32 %v1308, 7
        %v1310 = vsub.s32 %v1307, %v1309
        %v1311 = vrot.slane %v1290, %v1310
        %v1312 = vcombine.high %v1297, %v1297
        %v1313 = vcombine.high %v1311, %v1311
        %v1314 = vcombine.high %v1230, %v1230
        %v1316 = vunpack.c.l.s4 1966171168
        %v1317 = vunpack.c.0.s8 %v1316
        %v1318 = vlaneseq
        %v1319 = vshrl.u32 %v1318, 7
        %v1320 = vsub.s32 %v1317, %v1319
        %v1321 = vrot.slane %v1230, %v1320
        %v1323 = vunpack.c.l.s4 1966171168
        %v1324 = vunpack.c.0.s8 %v1323
        %v1325 = vlaneseq
        %v1326 = vshrl.u32 %v1325, 7
        %v1327 = vsub.s32 %v1324, %v1326
        %v1328 = vrot.slane %v1314, %v1327
        %v1329 = vcombine.high %v1321, %v1321
        %v1331 = vunpack.c.l.s4 1966171168
        %v1332 = vunpack.c.0.s8 %v1331
        %v1333 = vlaneseq
        %v1334 = vshrl.u32 %v1333, 7
        %v1335 = vsub.s32 %v1332, %v1334
        %v1336 = vrot.slane %v1321, %v1335
        %v1338 = vunpack.c.l.s4 1966171168
        %v1339 = vunpack.c.0.s8 %v1338
        %v1340 = vlaneseq
        %v1341 = vshrl.u32 %v1340, 7
        %v1342 = vsub.s32 %v1339, %v1341
        %v1343 = vrot.slane %v1328, %v1342
        %v1345 = vunpack.c.l.s4 1966171168
        %v1346 = vunpack.c.0.s8 %v1345
        %v1347 = vlaneseq
        %v1348 = vshrl.u32 %v1347, 7
        %v1349 = vsub.s32 %v1346, %v1348
        %v1350 = vrot.slane %v1329, %v1349
        %v1351 = vcombine.high %v1336, %v1336
        %v1352 = vcombine.high %v1350, %v1350
        %v1353 = vcombine.high %v1231, %v1231
        %v1355 = vunpack.c.l.s4 1966171168
        %v1356 = vunpack.c.0.s8 %v1355
        %v1357 = vlaneseq
        %v1358 = vshrl.u32 %v1357, 7
        %v1359 = vsub.s32 %v1356, %v1358
        %v1360 = vrot.slane %v1231, %v1359
        %v1362 = vunpack.c.l.s4 1966171168
        %v1363 = vunpack.c.0.s8 %v1362
        %v1364 = vlaneseq
        %v1365 = vshrl.u32 %v1364, 7
        %v1366 = vsub.s32 %v1363, %v1365
        %v1367 = vrot.slane %v1353, %v1366
        %v1368 = vcombine.high %v1360, %v1360
        %v1370 = vunpack.c.l.s4 1966171168
        %v1371 = vunpack.c.0.s8 %v1370
        %v1372 = vlaneseq
        %v1373 = vshrl.u32 %v1372, 7
        %v1374 = vsub.s32 %v1371, %v1373
        %v1375 = vrot.slane %v1360, %v1374
        %v1377 = vunpack.c.l.s4 1966171168
        %v1378 = vunpack.c.0.s8 %v1377
        %v1379 = vlaneseq
        %v1380 = vshrl.u32 %v1379, 7
        %v1381 = vsub.s32 %v1378, %v1380
        %v1382 = vrot.slane %v1367, %v1381
        %v1384 = vunpack.c.l.s4 1966171168
        %v1385 = vunpack.c.0.s8 %v1384
        %v1386 = vlaneseq
        %v1387 = vshrl.u32 %v1386, 7
        %v1388 = vsub.s32 %v1385, %v1387
        %v1389 = vrot.slane %v1368, %v1388
        %v1390 = vcombine.high %v1375, %v1375
        %v1391 = vcombine.high %v1389, %v1389
        %v1392 = vcombine.low %v1258, %v1272
        %v1393 = vcombine.low %v1273, %v1274
        %v1394 = vcombine.low %v1265, %v1297
        %v1395 = vcombine.low %v1311, %v1312
        %v1397 = vunpack.c.l.s4 1966171168
        %v1398 = vunpack.c.0.s8 %v1397
        %v1399 = vlaneseq
        %v1400 = vshrl.u32 %v1399, 7
        %v1401 = vsub.s32 %v1398, %v1400
        %v1402 = vrot.slane %v1392, %v1401
        %v1404 = vunpack.c.l.s4 1966171168
        %v1405 = vunpack.c.0.s8 %v1404
        %v1406 = vlaneseq
        %v1407 = vshrl.u32 %v1406, 7
        %v1408 = vsub.s32 %v1405, %v1407
        %v1409 = vrot.slane %v1393, %v1408
        %v1411 = vunpack.c.l.s4 1966171168
        %v1412 = vunpack.c.0.s8 %v1411
        %v1413 = vlaneseq
        %v1414 = vshrl.u32 %v1413, 7
        %v1415 = vsub.s32 %v1412, %v1414
        %v1416 = vrot.slane %v1394, %v1415
        %v1418 = vunpack.c.l.s4 1966171168
        %v1419 = vunpack.c.0.s8 %v1418
        %v1420 = vlaneseq
        %v1421 = vshrl.u32 %v1420, 7
        %v1422 = vsub.s32 %v1419, %v1421
        %v1423 = vrot.slane %v1395, %v1422
        %v1424 = vcombine.low %v1402, %v1409
        %v1425 = vcombine.low %v1416, %v1423
        %v1427 = vunpack.c.l.s4 1966171168
        %v1428 = vunpack.c.0.s8 %v1427
        %v1429 = vlaneseq
        %v1430 = vshrl.u32 %v1429, 7
        %v1431 = vsub.s32 %v1428, %v1430
        %v1432 = vrot.slane %v1424, %v1431
        %v1434 = vunpack.c.l.s4 1966171168
        %v1435 = vunpack.c.0.s8 %v1434
        %v1436 = vlaneseq
        %v1437 = vshrl.u32 %v1436, 7
        %v1438 = vsub.s32 %v1435, %v1437
        %v1439 = vrot.slane %v1425, %v1438
        %v1440 = vcombine.low %v1432, %v1439
        %v1441 = vcombine.low %v1313, %v1304
        %v1442 = vcombine.low %v1336, %v1350
        %v1443 = vcombine.low %v1351, %v1352
        %v1444 = vcombine.low %v1343, %v1375
        %v1446 = vunpack.c.l.s4 1966171168
        %v1447 = vunpack.c.0.s8 %v1446
        %v1448 = vlaneseq
        %v1449 = vshrl.u32 %v1448, 7
        %v1450 = vsub.s32 %v1447, %v1449
        %v1451 = vrot.slane %v1441, %v1450
        %v1453 = vunpack.c.l.s4 1966171168
        %v1454 = vunpack.c.0.s8 %v1453
        %v1455 = vlaneseq
        %v1456 = vshrl.u32 %v1455, 7
        %v1457 = vsub.s32 %v1454, %v1456
        %v1458 = vrot.slane %v1442, %v1457
        %v1460 = vunpack.c.l.s4 1966171168
        %v1461 = vunpack.c.0.s8 %v1460
        %v1462 = vlaneseq
        %v1463 = vshrl.u32 %v1462, 7
        %v1464 = vsub.s32 %v1461, %v1463
        %v1465 = vrot.slane %v1443, %v1464
        %v1467 = vunpack.c.l.s4 1966171168
        %v1468 = vunpack.c.0.s8 %v1467
        %v1469 = vlaneseq
        %v1470 = vshrl.u32 %v1469, 7
        %v1471 = vsub.s32 %v1468, %v1470
        %v1472 = vrot.slane %v1444, %v1471
        %v1473 = vcombine.low %v1451, %v1458
        %v1474 = vcombine.low %v1465, %v1472
        %v1476 = vunpack.c.l.s4 1966171168
        %v1477 = vunpack.c.0.s8 %v1476
        %v1478 = vlaneseq
        %v1479 = vshrl.u32 %v1478, 7
        %v1480 = vsub.s32 %v1477, %v1479
        %v1481 = vrot.slane %v1473, %v1480
        %v1483 = vunpack.c.l.s4 1966171168
        %v1484 = vunpack.c.0.s8 %v1483
        %v1485 = vlaneseq
        %v1486 = vshrl.u32 %v1485, 7
        %v1487 = vsub.s32 %v1484, %v1486
        %v1488 = vrot.slane %v1474, %v1487
        %v1489 = vcombine.low %v1481, %v1488
        %v1490 = vcombine.low %v1389, %v1390
        %v1491 = vcombine.low %v1391, %v1382
        %v1493 = vunpack.c.l.s4 1966171168
        %v1494 = vunpack.c.0.s8 %v1493
        %v1495 = vlaneseq
        %v1496 = vshrl.u32 %v1495, 7
        %v1497 = vsub.s32 %v1494, %v1496
        %v1498 = vrot.slane %v1490, %v1497
        %v1500 = vunpack.c.l.s4 1966171168
        %v1501 = vunpack.c.0.s8 %v1500
        %v1502 = vlaneseq
        %v1503 = vshrl.u32 %v1502, 7
        %v1504 = vsub.s32 %v1501, %v1503
        %v1505 = vrot.slane %v1491, %v1504
        %v1506 = vcombine.low %v1498, %v1505
        %v1508 = vunpack.c.l.s4 1966171168
        %v1509 = vunpack.c.0.s8 %v1508
        %v1510 = vlaneseq
        %v1511 = vshrl.u32 %v1510, 7
        %v1512 = vsub.s32 %v1509, %v1511
        %v1513 = vrot.slane %v1506, %v1512
        %1514 = vrot.lane.b32.xlu0 %v1440, 80
        %v1515 = vpop.permute.xlu0 %1514
        %1516 = vrot.lane.b32.xlu0 %v1489, 80
        %v1517 = vpop.permute.xlu0 %1516
        %1518 = vrot.lane.b32.xlu0 %v1513, 80
        %v1519 = vpop.permute.xlu0 %1518
        %v1520 = vsel %vm693, %v1515, 0
        %v1522 = vsel %vm693, %v1517, 0
        %v1524 = vsel %vm693, %v1519, 0
        %1526 = vmatprep.subr.mxu0 0.0
        %1527 = vmatpush1.msra.mxu0 %v556
        %1528 = vmatprep.subr.mxu0 0.0
        %1529 = vmatpush1.msra.mxu0 %v557
        %1530 = vmatprep.subr.mxu0 0.0
        %1531 = vmatpush1.msra.mxu0 0.0
        %1532 = vmatprep.subr.mxu0 0.0
        %1533 = vmatpush1.msra.mxu0 0.0
        %1534 = vmatprep.subr.mxu0 0.0
        %1535 = vmatpush1.msra.mxu0 0.0
        %1536 = vmatprep.subr.mxu0 0.0
        %1537 = vmatpush1.msra.mxu0 0.0
        %1538 = vmatprep.subr.mxu0 0.0
        %1539 = vmatpush1.msra.mxu0 0.0
        %1540 = vmatprep.subr.mxu0 0.0
        %1541 = vmatpush1.msra.mxu0 0.0
        %1542 = vmatprep.subr.mxu0 0.0
        %1543 = vmatpush1.msra.mxu0 0.0
        %1544 = vmatprep.subr.mxu0 0.0
        %1545 = vmatpush1.msra.mxu0 0.0
        %1546 = vmatprep.subr.mxu0 0.0
        %1547 = vmatpush1.msra.mxu0 0.0
        %1548 = vmatprep.subr.mxu0 0.0
        %1549 = vmatpush1.msra.mxu0 0.0
        %1550 = vmatprep.subr.mxu0 0.0
        %1551 = vmatpush1.msra.mxu0 0.0
        %1552 = vmatprep.subr.mxu0 0.0
        %1553 = vmatpush1.msra.mxu0 0.0
        %1554 = vmatprep.subr.mxu0 0.0
        %1555 = vmatpush1.msra.mxu0 0.0
        %1556 = vmatprep.subr.mxu0 0.0
        %1557 = vmatpush1.msra.mxu0 0.0
        %1558 = vmatprep.subr.mxu0 0.0
        %1559 = vmatpush1.msra.mxu0 0.0
        %1560 = vmatprep.subr.mxu0 0.0
        %1561 = vmatpush1.msra.mxu0 0.0
        %1562 = vmatprep.subr.mxu0 0.0
        %1563 = vmatpush1.msra.mxu0 0.0
        %1564 = vmatprep.subr.mxu0 0.0
        %1565 = vmatpush1.msra.mxu0 0.0
        %1566 = vmatprep.subr.mxu0 0.0
        %1567 = vmatpush1.msra.mxu0 0.0
        %1568 = vmatprep.subr.mxu0 0.0
        %1569 = vmatpush1.msra.mxu0 0.0
        %1570 = vmatprep.subr.mxu0 0.0
        %1571 = vmatpush1.msra.mxu0 0.0
        %1572 = vmatprep.subr.mxu0 0.0
        %1573 = vmatpush1.msra.mxu0 0.0
        %1574 = vmatprep.subr.mxu0 0.0
        %1575 = vmatpush1.msra.mxu0 0.0
        %1576 = vmatprep.subr.mxu0 0.0
        %1577 = vmatpush1.msra.mxu0 0.0
        %1578 = vmatprep.subr.mxu0 0.0
        %1579 = vmatpush1.msra.mxu0 0.0
        %1580 = vmatprep.subr.mxu0 0.0
        %1581 = vmatpush1.msra.mxu0 0.0
        %1582 = vmatprep.subr.mxu0 0.0
        %1583 = vmatpush1.msra.mxu0 0.0
        %1584 = vmatprep.subr.mxu0 0.0
        %1585 = vmatpush1.msra.mxu0 0.0
        %1586 = vmatprep.subr.mxu0 0.0
        %1587 = vmatpush1.msra.mxu0 0.0
        %1588 = vmatprep.subr.mxu0 0.0
        %1589 = vmatpush1.msra.mxu0 0.0
        %1590 = vmatprep.mubr.f32.mxu0 0.0
        %1591 = vmatmul.mubr.f32.gmra.mrb[0].mxu0 %v1520
        %v1592 = vpop.f32.mrb[0].mxu0
        %v1593 = vadd.f32 %v563, %v1592
        %v1594 = vpop.f32.mrb[0].mxu0
        %1595 = vmatprep.mubr.f32.mxu0 0.0
        %1596 = vmatmul.mubr.f32.gmra.mrb[0].mxu0 %v1522
        %v1597 = vpop.f32.mrb[0].mxu0
        %v1598 = vadd.f32 %v563, %v1597
        %v1599 = vpop.f32.mrb[0].mxu0
        %1600 = vmatprep.mubr.f32.mxu0 0.0
        %1601 = vmatmul.mubr.f32.gmra.mrb[0].mxu0 %v1524
        %v1602 = vpop.f32.mrb[0].mxu0
        %v1603 = vadd.f32 %v563, %v1602
        %v1604 = vpop.f32.mrb[0].mxu0
        %1605 = vdwg.mxu0
        %v1606 = vmax.f32 %v1593, 0.0
        %v1607 = vmax.f32 %v1598, 0.0
        %v1608 = vmax.f32 %v1603, 0.0
        %v1612 = vcombine.high %v1606, %v1606
        %v1614 = vunpack.c.l.s4 1966171168
        %v1615 = vunpack.c.0.s8 %v1614
        %v1616 = vlaneseq
        %v1617 = vshrl.u32 %v1616, 7
        %v1618 = vsub.s32 %v1615, %v1617
        %v1619 = vrot.slane %v1606, %v1618
        %v1621 = vunpack.c.l.s4 1966171168
        %v1622 = vunpack.c.0.s8 %v1621
        %v1623 = vlaneseq
        %v1624 = vshrl.u32 %v1623, 7
        %v1625 = vsub.s32 %v1622, %v1624
        %v1626 = vrot.slane %v1612, %v1625
        %v1627 = vcombine.high %v1619, %v1619
        %v1628 = vcombine.high %v1626, %v1626
        %v1630 = vunpack.c.l.s4 1966171168
        %v1631 = vunpack.c.0.s8 %v1630
        %v1632 = vlaneseq
        %v1633 = vshrl.u32 %v1632, 7
        %v1634 = vsub.s32 %v1631, %v1633
        %v1635 = vrot.slane %v1619, %v1634
        %v1637 = vunpack.c.l.s4 1966171168
        %v1638 = vunpack.c.0.s8 %v1637
        %v1639 = vlaneseq
        %v1640 = vshrl.u32 %v1639, 7
        %v1641 = vsub.s32 %v1638, %v1640
        %v1642 = vrot.slane %v1626, %v1641
        %v1644 = vunpack.c.l.s4 1966171168
        %v1645 = vunpack.c.0.s8 %v1644
        %v1646 = vlaneseq
        %v1647 = vshrl.u32 %v1646, 7
        %v1648 = vsub.s32 %v1645, %v1647
        %v1649 = vrot.slane %v1627, %v1648
        %v1651 = vunpack.c.l.s4 1966171168
        %v1652 = vunpack.c.0.s8 %v1651
        %v1653 = vlaneseq
        %v1654 = vshrl.u32 %v1653, 7
        %v1655 = vsub.s32 %v1652, %v1654
        %v1656 = vrot.slane %v1628, %v1655
        %v1657 = vcombine.high %v1635, %v1635
        %v1658 = vcombine.high %v1642, %v1642
        %v1659 = vcombine.high %v1649, %v1649
        %v1660 = vcombine.high %v1656, %v1656
        %v1661 = vcombine.high %v1607, %v1607
        %v1663 = vunpack.c.l.s4 1966171168
        %v1664 = vunpack.c.0.s8 %v1663
        %v1665 = vlaneseq
        %v1666 = vshrl.u32 %v1665, 7
        %v1667 = vsub.s32 %v1664, %v1666
        %v1668 = vrot.slane %v1607, %v1667
        %v1670 = vunpack.c.l.s4 1966171168
        %v1671 = vunpack.c.0.s8 %v1670
        %v1672 = vlaneseq
        %v1673 = vshrl.u32 %v1672, 7
        %v1674 = vsub.s32 %v1671, %v1673
        %v1675 = vrot.slane %v1661, %v1674
        %v1676 = vcombine.high %v1668, %v1668
        %v1677 = vcombine.high %v1675, %v1675
        %v1679 = vunpack.c.l.s4 1966171168
        %v1680 = vunpack.c.0.s8 %v1679
        %v1681 = vlaneseq
        %v1682 = vshrl.u32 %v1681, 7
        %v1683 = vsub.s32 %v1680, %v1682
        %v1684 = vrot.slane %v1668, %v1683
        %v1686 = vunpack.c.l.s4 1966171168
        %v1687 = vunpack.c.0.s8 %v1686
        %v1688 = vlaneseq
        %v1689 = vshrl.u32 %v1688, 7
        %v1690 = vsub.s32 %v1687, %v1689
        %v1691 = vrot.slane %v1675, %v1690
        %v1693 = vunpack.c.l.s4 1966171168
        %v1694 = vunpack.c.0.s8 %v1693
        %v1695 = vlaneseq
        %v1696 = vshrl.u32 %v1695, 7
        %v1697 = vsub.s32 %v1694, %v1696
        %v1698 = vrot.slane %v1676, %v1697
        %v1700 = vunpack.c.l.s4 1966171168
        %v1701 = vunpack.c.0.s8 %v1700
        %v1702 = vlaneseq
        %v1703 = vshrl.u32 %v1702, 7
        %v1704 = vsub.s32 %v1701, %v1703
        %v1705 = vrot.slane %v1677, %v1704
        %v1706 = vcombine.high %v1684, %v1684
        %v1707 = vcombine.high %v1698, %v1698
        %v1708 = vcombine.high %v1705, %v1705
        %v1710 = vunpack.c.l.s4 1966171168
        %v1711 = vunpack.c.0.s8 %v1710
        %v1712 = vlaneseq
        %v1713 = vshrl.u32 %v1712, 7
        %v1714 = vsub.s32 %v1711, %v1713
        %v1715 = vrot.slane %v1608, %v1714
        %v1716 = vcombine.high %v1715, %v1715
        %v1718 = vunpack.c.l.s4 1966171168
        %v1719 = vunpack.c.0.s8 %v1718
        %v1720 = vlaneseq
        %v1721 = vshrl.u32 %v1720, 7
        %v1722 = vsub.s32 %v1719, %v1721
        %v1723 = vrot.slane %v1715, %v1722
        %v1725 = vunpack.c.l.s4 1966171168
        %v1726 = vunpack.c.0.s8 %v1725
        %v1727 = vlaneseq
        %v1728 = vshrl.u32 %v1727, 7
        %v1729 = vsub.s32 %v1726, %v1728
        %v1730 = vrot.slane %v1716, %v1729
        %v1731 = vcombine.high %v1723, %v1723
        %v1748 = vmul.f32 %v1635, %v353
        %v1749 = vmul.f32 %v1649, %v353
        %v1750 = vmul.f32 %v1657, %v353
        %v1751 = vmul.f32 %v1659, %v353
        %v1752 = vmul.f32 %v1656, %v354
        %v1753 = vmul.f32 %v1658, %v354
        %v1754 = vmul.f32 %v1660, %v354
        %v1755 = vmul.f32 %v1684, %v354
        %v1756 = vmul.f32 %v1706, %v355
        %v1757 = vmul.f32 %v1707, %v355
        %v1758 = vmul.f32 %v1691, %v355
        %v1759 = vmul.f32 %v1705, %v355
        %v1760 = vmul.f32 %v1708, %v356
        %v1761 = vmul.f32 %v1723, %v356
        %v1762 = vmul.f32 %v1730, %v356
        %v1763 = vmul.f32 %v1731, %v356
        %s1764 = scalar_lea.vmem %s3, 1
        %v1765 = vld [vmem:[%s1764] sm:$0x1]
        %v1767 = vlaneseq
        %v1768 = vshrl.u32 %v1767, 7
        %v1769 = vsub.s32 0, %v1768
        %v1770 = vrot.slane %v1765, %v1769
        %1771 = vrot.lane.b32.xlu0 %v1770, 32
        %v1772 = vpop.permute.xlu0 %1771
        %v1774 = vmul.f32 %v1228, %v1772
        %v1775 = vmul.f32 %v1229, %v1772
        %v1776 = vmul.f32 %v1230, %v1772
        %v1777 = vmul.f32 %v1231, %v1772
        %1782 = vrot.lane.b32.xlu0 %v1774, 96
        %v1783 = vpop.permute.xlu0 %1782
        %1784 = vrot.lane.b32.xlu0 %v1775, 96
        %v1785 = vpop.permute.xlu0 %1784
        %1786 = vrot.lane.b32.xlu0 %v1776, 96
        %v1787 = vpop.permute.xlu0 %1786
        %1788 = vrot.lane.b32.xlu0 %v1777, 96
        %v1789 = vpop.permute.xlu0 %1788
        %v1794 = vadd.f32 %v1157, %v1783
        %v1795 = vadd.f32 %v1158, %v1785
        %v1796 = vadd.f32 %v1159, %v1787
        %v1797 = vadd.f32 %v1160, %v1789
        %s1798 = scalar_lea.vmem %s4, 1
        %v1799 = vld [vmem:[%s1798] sm:$0x1]
        %v1801 = vlaneseq
        %v1802 = vshrl.u32 %v1801, 7
        %v1803 = vsub.s32 0, %v1802
        %v1804 = vrot.slane %v1799, %v1803
        %v1806 = vunpack.c.l.s4 1966171168
        %v1807 = vunpack.c.0.s8 %v1806
        %v1808 = vlaneseq
        %v1809 = vshrl.u32 %v1808, 7
        %v1810 = vsub.s32 %v1807, %v1809
        %v1811 = vrot.slane %v1804, %v1810
        %v1812 = vcombine.high %v1811, %v1811
        %v1814 = vunpack.c.l.s4 1966171168
        %v1815 = vunpack.c.0.s8 %v1814
        %v1816 = vlaneseq
        %v1817 = vshrl.u32 %v1816, 7
        %v1818 = vsub.s32 %v1815, %v1817
        %v1819 = vrot.slane %v1811, %v1818
        %v1821 = vunpack.c.l.s4 1966171168
        %v1822 = vunpack.c.0.s8 %v1821
        %v1823 = vlaneseq
        %v1824 = vshrl.u32 %v1823, 7
        %v1825 = vsub.s32 %v1822, %v1824
        %v1826 = vrot.slane %v1812, %v1825
        %v1827 = vcombine.high %v1819, %v1819
        %v1828 = vcombine.high %v1826, %v1826
        %v1833 = vmul.f32 %v1748, %v1819
        %v1834 = vmul.f32 %v1749, %v1826
        %v1835 = vmul.f32 %v1750, %v1827
        %v1836 = vmul.f32 %v1751, %v1828
        %v1837 = vmul.f32 %v1752, %v1819
        %v1838 = vmul.f32 %v1753, %v1826
        %v1839 = vmul.f32 %v1754, %v1827
        %v1840 = vmul.f32 %v1755, %v1828
        %v1841 = vmul.f32 %v1756, %v1819
        %v1842 = vmul.f32 %v1757, %v1826
        %v1843 = vmul.f32 %v1758, %v1827
        %v1844 = vmul.f32 %v1759, %v1828
        %v1845 = vmul.f32 %v1760, %v1819
        %v1846 = vmul.f32 %v1761, %v1826
        %v1847 = vmul.f32 %v1762, %v1827
        %v1848 = vmul.f32 %v1763, %v1828
        %v1849 = vadd.f32 %v1212, %v1833
        %v1850 = vadd.f32 %v1213, %v1834
        %v1851 = vadd.f32 %v1214, %v1835
        %v1852 = vadd.f32 %v1215, %v1836
        %v1853 = vadd.f32 %v1216, %v1837
        %v1854 = vadd.f32 %v1217, %v1838
        %v1855 = vadd.f32 %v1218, %v1839
        %v1856 = vadd.f32 %v1219, %v1840
        %v1857 = vadd.f32 %v1220, %v1841
        %v1858 = vadd.f32 %v1221, %v1842
        %v1859 = vadd.f32 %v1222, %v1843
        %v1860 = vadd.f32 %v1223, %v1844
        %v1861 = vadd.f32 %v1224, %v1845
        %v1862 = vadd.f32 %v1225, %v1846
        %v1863 = vadd.f32 %v1226, %v1847
        %v1864 = vadd.f32 %v1227, %v1848
        %v1865 = vld [vmem:[%s335] sm:$0x1f]
        %v1866 = vld [vmem:[%s335 + $0x10] sm:$0x1f]
        %v1867 = vld [vmem:[%s335 + $0x20] sm:$0x1f]
        %v1868 = vld [vmem:[%s335 + $0x30] sm:$0x1f]
        %v1873 = vcombine.high %v1865, %v1865
        %v1875 = vunpack.c.l.s4 1966171168
        %v1876 = vunpack.c.0.s8 %v1875
        %v1877 = vlaneseq
        %v1878 = vshrl.u32 %v1877, 7
        %v1879 = vsub.s32 %v1876, %v1878
        %v1880 = vrot.slane %v1865, %v1879
        %v1882 = vunpack.c.l.s4 1966171168
        %v1883 = vunpack.c.0.s8 %v1882
        %v1884 = vlaneseq
        %v1885 = vshrl.u32 %v1884, 7
        %v1886 = vsub.s32 %v1883, %v1885
        %v1887 = vrot.slane %v1873, %v1886
        %v1888 = vcombine.high %v1880, %v1880
        %v1890 = vunpack.c.l.s4 1966171168
        %v1891 = vunpack.c.0.s8 %v1890
        %v1892 = vlaneseq
        %v1893 = vshrl.u32 %v1892, 7
        %v1894 = vsub.s32 %v1891, %v1893
        %v1895 = vrot.slane %v1880, %v1894
        %v1897 = vunpack.c.l.s4 1966171168
        %v1898 = vunpack.c.0.s8 %v1897
        %v1899 = vlaneseq
        %v1900 = vshrl.u32 %v1899, 7
        %v1901 = vsub.s32 %v1898, %v1900
        %v1902 = vrot.slane %v1887, %v1901
        %v1904 = vunpack.c.l.s4 1966171168
        %v1905 = vunpack.c.0.s8 %v1904
        %v1906 = vlaneseq
        %v1907 = vshrl.u32 %v1906, 7
        %v1908 = vsub.s32 %v1905, %v1907
        %v1909 = vrot.slane %v1888, %v1908
        %v1910 = vcombine.high %v1895, %v1895
        %v1911 = vcombine.high %v1909, %v1909
        %v1912 = vcombine.high %v1866, %v1866
        %v1914 = vunpack.c.l.s4 1966171168
        %v1915 = vunpack.c.0.s8 %v1914
        %v1916 = vlaneseq
        %v1917 = vshrl.u32 %v1916, 7
        %v1918 = vsub.s32 %v1915, %v1917
        %v1919 = vrot.slane %v1866, %v1918
        %v1921 = vunpack.c.l.s4 1966171168
        %v1922 = vunpack.c.0.s8 %v1921
        %v1923 = vlaneseq
        %v1924 = vshrl.u32 %v1923, 7
        %v1925 = vsub.s32 %v1922, %v1924
        %v1926 = vrot.slane %v1912, %v1925
        %v1927 = vcombine.high %v1919, %v1919
        %v1929 = vunpack.c.l.s4 1966171168
        %v1930 = vunpack.c.0.s8 %v1929
        %v1931 = vlaneseq
        %v1932 = vshrl.u32 %v1931, 7
        %v1933 = vsub.s32 %v1930, %v1932
        %v1934 = vrot.slane %v1919, %v1933
        %v1936 = vunpack.c.l.s4 1966171168
        %v1937 = vunpack.c.0.s8 %v1936
        %v1938 = vlaneseq
        %v1939 = vshrl.u32 %v1938, 7
        %v1940 = vsub.s32 %v1937, %v1939
        %v1941 = vrot.slane %v1926, %v1940
        %v1943 = vunpack.c.l.s4 1966171168
        %v1944 = vunpack.c.0.s8 %v1943
        %v1945 = vlaneseq
        %v1946 = vshrl.u32 %v1945, 7
        %v1947 = vsub.s32 %v1944, %v1946
        %v1948 = vrot.slane %v1927, %v1947
        %v1949 = vcombine.high %v1934, %v1934
        %v1950 = vcombine.high %v1948, %v1948
        %v1951 = vcombine.high %v1867, %v1867
        %v1953 = vunpack.c.l.s4 1966171168
        %v1954 = vunpack.c.0.s8 %v1953
        %v1955 = vlaneseq
        %v1956 = vshrl.u32 %v1955, 7
        %v1957 = vsub.s32 %v1954, %v1956
        %v1958 = vrot.slane %v1867, %v1957
        %v1960 = vunpack.c.l.s4 1966171168
        %v1961 = vunpack.c.0.s8 %v1960
        %v1962 = vlaneseq
        %v1963 = vshrl.u32 %v1962, 7
        %v1964 = vsub.s32 %v1961, %v1963
        %v1965 = vrot.slane %v1951, %v1964
        %v1966 = vcombine.high %v1958, %v1958
        %v1968 = vunpack.c.l.s4 1966171168
        %v1969 = vunpack.c.0.s8 %v1968
        %v1970 = vlaneseq
        %v1971 = vshrl.u32 %v1970, 7
        %v1972 = vsub.s32 %v1969, %v1971
        %v1973 = vrot.slane %v1958, %v1972
        %v1975 = vunpack.c.l.s4 1966171168
        %v1976 = vunpack.c.0.s8 %v1975
        %v1977 = vlaneseq
        %v1978 = vshrl.u32 %v1977, 7
        %v1979 = vsub.s32 %v1976, %v1978
        %v1980 = vrot.slane %v1965, %v1979
        %v1982 = vunpack.c.l.s4 1966171168
        %v1983 = vunpack.c.0.s8 %v1982
        %v1984 = vlaneseq
        %v1985 = vshrl.u32 %v1984, 7
        %v1986 = vsub.s32 %v1983, %v1985
        %v1987 = vrot.slane %v1966, %v1986
        %v1988 = vcombine.high %v1973, %v1973
        %v1989 = vcombine.high %v1987, %v1987
        %v1990 = vcombine.high %v1868, %v1868
        %v1992 = vunpack.c.l.s4 1966171168
        %v1993 = vunpack.c.0.s8 %v1992
        %v1994 = vlaneseq
        %v1995 = vshrl.u32 %v1994, 7
        %v1996 = vsub.s32 %v1993, %v1995
        %v1997 = vrot.slane %v1868, %v1996
        %v1999 = vunpack.c.l.s4 1966171168
        %v2000 = vunpack.c.0.s8 %v1999
        %v2001 = vlaneseq
        %v2002 = vshrl.u32 %v2001, 7
        %v2003 = vsub.s32 %v2000, %v2002
        %v2004 = vrot.slane %v1990, %v2003
        %v2005 = vcombine.high %v1997, %v1997
        %v2007 = vunpack.c.l.s4 1966171168
        %v2008 = vunpack.c.0.s8 %v2007
        %v2009 = vlaneseq
        %v2010 = vshrl.u32 %v2009, 7
        %v2011 = vsub.s32 %v2008, %v2010
        %v2012 = vrot.slane %v1997, %v2011
        %v2014 = vunpack.c.l.s4 1966171168
        %v2015 = vunpack.c.0.s8 %v2014
        %v2016 = vlaneseq
        %v2017 = vshrl.u32 %v2016, 7
        %v2018 = vsub.s32 %v2015, %v2017
        %v2019 = vrot.slane %v2004, %v2018
        %v2021 = vunpack.c.l.s4 1966171168
        %v2022 = vunpack.c.0.s8 %v2021
        %v2023 = vlaneseq
        %v2024 = vshrl.u32 %v2023, 7
        %v2025 = vsub.s32 %v2022, %v2024
        %v2026 = vrot.slane %v2005, %v2025
        %v2027 = vcombine.high %v2012, %v2012
        %v2028 = vcombine.high %v2026, %v2026
        %v2029 = vcombine.low %v1895, %v1909
        %v2030 = vcombine.low %v1910, %v1911
        %v2031 = vcombine.low %v1902, %v1934
        %v2032 = vcombine.low %v1948, %v1949
        %v2034 = vunpack.c.l.s4 1966171168
        %v2035 = vunpack.c.0.s8 %v2034
        %v2036 = vlaneseq
        %v2037 = vshrl.u32 %v2036, 7
        %v2038 = vsub.s32 %v2035, %v2037
        %v2039 = vrot.slane %v2029, %v2038
        %v2041 = vunpack.c.l.s4 1966171168
        %v2042 = vunpack.c.0.s8 %v2041
        %v2043 = vlaneseq
        %v2044 = vshrl.u32 %v2043, 7
        %v2045 = vsub.s32 %v2042, %v2044
        %v2046 = vrot.slane %v2030, %v2045
        %v2048 = vunpack.c.l.s4 1966171168
        %v2049 = vunpack.c.0.s8 %v2048
        %v2050 = vlaneseq
        %v2051 = vshrl.u32 %v2050, 7
        %v2052 = vsub.s32 %v2049, %v2051
        %v2053 = vrot.slane %v2031, %v2052
        %v2055 = vunpack.c.l.s4 1966171168
        %v2056 = vunpack.c.0.s8 %v2055
        %v2057 = vlaneseq
        %v2058 = vshrl.u32 %v2057, 7
        %v2059 = vsub.s32 %v2056, %v2058
        %v2060 = vrot.slane %v2032, %v2059
        %v2061 = vcombine.low %v2039, %v2046
        %v2062 = vcombine.low %v2053, %v2060
        %v2064 = vunpack.c.l.s4 1966171168
        %v2065 = vunpack.c.0.s8 %v2064
        %v2066 = vlaneseq
        %v2067 = vshrl.u32 %v2066, 7
        %v2068 = vsub.s32 %v2065, %v2067
        %v2069 = vrot.slane %v2061, %v2068
        %v2071 = vunpack.c.l.s4 1966171168
        %v2072 = vunpack.c.0.s8 %v2071
        %v2073 = vlaneseq
        %v2074 = vshrl.u32 %v2073, 7
        %v2075 = vsub.s32 %v2072, %v2074
        %v2076 = vrot.slane %v2062, %v2075
        %v2077 = vcombine.low %v2069, %v2076
        %v2078 = vcombine.low %v1950, %v1941
        %v2079 = vcombine.low %v1973, %v1987
        %v2080 = vcombine.low %v1988, %v1989
        %v2081 = vcombine.low %v1980, %v2012
        %v2083 = vunpack.c.l.s4 1966171168
        %v2084 = vunpack.c.0.s8 %v2083
        %v2085 = vlaneseq
        %v2086 = vshrl.u32 %v2085, 7
        %v2087 = vsub.s32 %v2084, %v2086
        %v2088 = vrot.slane %v2078, %v2087
        %v2090 = vunpack.c.l.s4 1966171168
        %v2091 = vunpack.c.0.s8 %v2090
        %v2092 = vlaneseq
        %v2093 = vshrl.u32 %v2092, 7
        %v2094 = vsub.s32 %v2091, %v2093
        %v2095 = vrot.slane %v2079, %v2094
        %v2097 = vunpack.c.l.s4 1966171168
        %v2098 = vunpack.c.0.s8 %v2097
        %v2099 = vlaneseq
        %v2100 = vshrl.u32 %v2099, 7
        %v2101 = vsub.s32 %v2098, %v2100
        %v2102 = vrot.slane %v2080, %v2101
        %v2104 = vunpack.c.l.s4 1966171168
        %v2105 = vunpack.c.0.s8 %v2104
        %v2106 = vlaneseq
        %v2107 = vshrl.u32 %v2106, 7
        %v2108 = vsub.s32 %v2105, %v2107
        %v2109 = vrot.slane %v2081, %v2108
        %v2110 = vcombine.low %v2088, %v2095
        %v2111 = vcombine.low %v2102, %v2109
        %v2113 = vunpack.c.l.s4 1966171168
        %v2114 = vunpack.c.0.s8 %v2113
        %v2115 = vlaneseq
        %v2116 = vshrl.u32 %v2115, 7
        %v2117 = vsub.s32 %v2114, %v2116
        %v2118 = vrot.slane %v2110, %v2117
        %v2120 = vunpack.c.l.s4 1966171168
        %v2121 = vunpack.c.0.s8 %v2120
        %v2122 = vlaneseq
        %v2123 = vshrl.u32 %v2122, 7
        %v2124 = vsub.s32 %v2121, %v2123
        %v2125 = vrot.slane %v2111, %v2124
        %v2126 = vcombine.low %v2118, %v2125
        %v2127 = vcombine.low %v2026, %v2027
        %v2128 = vcombine.low %v2028, %v2019
        %v2130 = vunpack.c.l.s4 1966171168
        %v2131 = vunpack.c.0.s8 %v2130
        %v2132 = vlaneseq
        %v2133 = vshrl.u32 %v2132, 7
        %v2134 = vsub.s32 %v2131, %v2133
        %v2135 = vrot.slane %v2127, %v2134
        %v2137 = vunpack.c.l.s4 1966171168
        %v2138 = vunpack.c.0.s8 %v2137
        %v2139 = vlaneseq
        %v2140 = vshrl.u32 %v2139, 7
        %v2141 = vsub.s32 %v2138, %v2140
        %v2142 = vrot.slane %v2128, %v2141
        %v2143 = vcombine.low %v2135, %v2142
        %v2145 = vunpack.c.l.s4 1966171168
        %v2146 = vunpack.c.0.s8 %v2145
        %v2147 = vlaneseq
        %v2148 = vshrl.u32 %v2147, 7
        %v2149 = vsub.s32 %v2146, %v2148
        %v2150 = vrot.slane %v2143, %v2149
        %2151 = vrot.lane.b32.xlu0 %v2077, 48
        %v2152 = vpop.permute.xlu0 %2151
        %2153 = vrot.lane.b32.xlu0 %v2126, 48
        %v2154 = vpop.permute.xlu0 %2153
        %2155 = vrot.lane.b32.xlu0 %v2150, 48
        %v2156 = vpop.permute.xlu0 %2155
        %v2157 = vsel %vm693, %v2152, 0
        %v2159 = vsel %vm693, %v2154, 0
        %v2161 = vsel %vm693, %v2156, 0
        %2163 = vmatprep.subr.mxu0 0.0
        %2164 = vmatpush1.msra.mxu0 %v556
        %2165 = vmatprep.subr.mxu0 0.0
        %2166 = vmatpush1.msra.mxu0 %v557
        %2167 = vmatprep.subr.mxu0 0.0
        %2168 = vmatpush1.msra.mxu0 0.0
        %2169 = vmatprep.subr.mxu0 0.0
        %2170 = vmatpush1.msra.mxu0 0.0
        %2171 = vmatprep.subr.mxu0 0.0
        %2172 = vmatpush1.msra.mxu0 0.0
        %2173 = vmatprep.subr.mxu0 0.0
        %2174 = vmatpush1.msra.mxu0 0.0
        %2175 = vmatprep.subr.mxu0 0.0
        %2176 = vmatpush1.msra.mxu0 0.0
        %2177 = vmatprep.subr.mxu0 0.0
        %2178 = vmatpush1.msra.mxu0 0.0
        %2179 = vmatprep.subr.mxu0 0.0
        %2180 = vmatpush1.msra.mxu0 0.0
        %2181 = vmatprep.subr.mxu0 0.0
        %2182 = vmatpush1.msra.mxu0 0.0
        %2183 = vmatprep.subr.mxu0 0.0
        %2184 = vmatpush1.msra.mxu0 0.0
        %2185 = vmatprep.subr.mxu0 0.0
        %2186 = vmatpush1.msra.mxu0 0.0
        %2187 = vmatprep.subr.mxu0 0.0
        %2188 = vmatpush1.msra.mxu0 0.0
        %2189 = vmatprep.subr.mxu0 0.0
        %2190 = vmatpush1.msra.mxu0 0.0
        %2191 = vmatprep.subr.mxu0 0.0
        %2192 = vmatpush1.msra.mxu0 0.0
        %2193 = vmatprep.subr.mxu0 0.0
        %2194 = vmatpush1.msra.mxu0 0.0
        %2195 = vmatprep.subr.mxu0 0.0
        %2196 = vmatpush1.msra.mxu0 0.0
        %2197 = vmatprep.subr.mxu0 0.0
        %2198 = vmatpush1.msra.mxu0 0.0
        %2199 = vmatprep.subr.mxu0 0.0
        %2200 = vmatpush1.msra.mxu0 0.0
        %2201 = vmatprep.subr.mxu0 0.0
        %2202 = vmatpush1.msra.mxu0 0.0
        %2203 = vmatprep.subr.mxu0 0.0
        %2204 = vmatpush1.msra.mxu0 0.0
        %2205 = vmatprep.subr.mxu0 0.0
        %2206 = vmatpush1.msra.mxu0 0.0
        %2207 = vmatprep.subr.mxu0 0.0
        %2208 = vmatpush1.msra.mxu0 0.0
        %2209 = vmatprep.subr.mxu0 0.0
        %2210 = vmatpush1.msra.mxu0 0.0
        %2211 = vmatprep.subr.mxu0 0.0
        %2212 = vmatpush1.msra.mxu0 0.0
        %2213 = vmatprep.subr.mxu0 0.0
        %2214 = vmatpush1.msra.mxu0 0.0
        %2215 = vmatprep.subr.mxu0 0.0
        %2216 = vmatpush1.msra.mxu0 0.0
        %2217 = vmatprep.subr.mxu0 0.0
        %2218 = vmatpush1.msra.mxu0 0.0
        %2219 = vmatprep.subr.mxu0 0.0
        %2220 = vmatpush1.msra.mxu0 0.0
        %2221 = vmatprep.subr.mxu0 0.0
        %2222 = vmatpush1.msra.mxu0 0.0
        %2223 = vmatprep.subr.mxu0 0.0
        %2224 = vmatpush1.msra.mxu0 0.0
        %2225 = vmatprep.subr.mxu0 0.0
        %2226 = vmatpush1.msra.mxu0 0.0
        %2227 = vmatprep.mubr.f32.mxu0 0.0
        %2228 = vmatmul.mubr.f32.gmra.mrb[0].mxu0 %v2157
        %v2229 = vpop.f32.mrb[0].mxu0
        %v2230 = vadd.f32 %v563, %v2229
        %v2231 = vpop.f32.mrb[0].mxu0
        %2232 = vmatprep.mubr.f32.mxu0 0.0
        %2233 = vmatmul.mubr.f32.gmra.mrb[0].mxu0 %v2159
        %v2234 = vpop.f32.mrb[0].mxu0
        %v2235 = vadd.f32 %v563, %v2234
        %v2236 = vpop.f32.mrb[0].mxu0
        %2237 = vmatprep.mubr.f32.mxu0 0.0
        %2238 = vmatmul.mubr.f32.gmra.mrb[0].mxu0 %v2161
        %v2239 = vpop.f32.mrb[0].mxu0
        %v2240 = vadd.f32 %v563, %v2239
        %v2241 = vpop.f32.mrb[0].mxu0
        %2242 = vdwg.mxu0
        %v2243 = vmax.f32 %v2230, 0.0
        %v2244 = vmax.f32 %v2235, 0.0
        %v2245 = vmax.f32 %v2240, 0.0
        %v2249 = vcombine.high %v2243, %v2243
        %v2251 = vunpack.c.l.s4 1966171168
        %v2252 = vunpack.c.0.s8 %v2251
        %v2253 = vlaneseq
        %v2254 = vshrl.u32 %v2253, 7
        %v2255 = vsub.s32 %v2252, %v2254
        %v2256 = vrot.slane %v2243, %v2255
        %v2258 = vunpack.c.l.s4 1966171168
        %v2259 = vunpack.c.0.s8 %v2258
        %v2260 = vlaneseq
        %v2261 = vshrl.u32 %v2260, 7
        %v2262 = vsub.s32 %v2259, %v2261
        %v2263 = vrot.slane %v2249, %v2262
        %v2264 = vcombine.high %v2256, %v2256
        %v2265 = vcombine.high %v2263, %v2263
        %v2267 = vunpack.c.l.s4 1966171168
        %v2268 = vunpack.c.0.s8 %v2267
        %v2269 = vlaneseq
        %v2270 = vshrl.u32 %v2269, 7
        %v2271 = vsub.s32 %v2268, %v2270
        %v2272 = vrot.slane %v2256, %v2271
        %v2274 = vunpack.c.l.s4 1966171168
        %v2275 = vunpack.c.0.s8 %v2274
        %v2276 = vlaneseq
        %v2277 = vshrl.u32 %v2276, 7
        %v2278 = vsub.s32 %v2275, %v2277
        %v2279 = vrot.slane %v2263, %v2278
        %v2281 = vunpack.c.l.s4 1966171168
        %v2282 = vunpack.c.0.s8 %v2281
        %v2283 = vlaneseq
        %v2284 = vshrl.u32 %v2283, 7
        %v2285 = vsub.s32 %v2282, %v2284
        %v2286 = vrot.slane %v2264, %v2285
        %v2288 = vunpack.c.l.s4 1966171168
        %v2289 = vunpack.c.0.s8 %v2288
        %v2290 = vlaneseq
        %v2291 = vshrl.u32 %v2290, 7
        %v2292 = vsub.s32 %v2289, %v2291
        %v2293 = vrot.slane %v2265, %v2292
        %v2294 = vcombine.high %v2272, %v2272
        %v2295 = vcombine.high %v2279, %v2279
        %v2296 = vcombine.high %v2286, %v2286
        %v2297 = vcombine.high %v2293, %v2293
        %v2298 = vcombine.high %v2244, %v2244
        %v2300 = vunpack.c.l.s4 1966171168
        %v2301 = vunpack.c.0.s8 %v2300
        %v2302 = vlaneseq
        %v2303 = vshrl.u32 %v2302, 7
        %v2304 = vsub.s32 %v2301, %v2303
        %v2305 = vrot.slane %v2244, %v2304
        %v2307 = vunpack.c.l.s4 1966171168
        %v2308 = vunpack.c.0.s8 %v2307
        %v2309 = vlaneseq
        %v2310 = vshrl.u32 %v2309, 7
        %v2311 = vsub.s32 %v2308, %v2310
        %v2312 = vrot.slane %v2298, %v2311
        %v2313 = vcombine.high %v2305, %v2305
        %v2314 = vcombine.high %v2312, %v2312
        %v2316 = vunpack.c.l.s4 1966171168
        %v2317 = vunpack.c.0.s8 %v2316
        %v2318 = vlaneseq
        %v2319 = vshrl.u32 %v2318, 7
        %v2320 = vsub.s32 %v2317, %v2319
        %v2321 = vrot.slane %v2305, %v2320
        %v2323 = vunpack.c.l.s4 1966171168
        %v2324 = vunpack.c.0.s8 %v2323
        %v2325 = vlaneseq
        %v2326 = vshrl.u32 %v2325, 7
        %v2327 = vsub.s32 %v2324, %v2326
        %v2328 = vrot.slane %v2312, %v2327
        %v2330 = vunpack.c.l.s4 1966171168
        %v2331 = vunpack.c.0.s8 %v2330
        %v2332 = vlaneseq
        %v2333 = vshrl.u32 %v2332, 7
        %v2334 = vsub.s32 %v2331, %v2333
        %v2335 = vrot.slane %v2313, %v2334
        %v2337 = vunpack.c.l.s4 1966171168
        %v2338 = vunpack.c.0.s8 %v2337
        %v2339 = vlaneseq
        %v2340 = vshrl.u32 %v2339, 7
        %v2341 = vsub.s32 %v2338, %v2340
        %v2342 = vrot.slane %v2314, %v2341
        %v2343 = vcombine.high %v2321, %v2321
        %v2344 = vcombine.high %v2328, %v2328
        %v2345 = vcombine.high %v2335, %v2335
        %v2346 = vcombine.high %v2342, %v2342
        %v2348 = vunpack.c.l.s4 1966171168
        %v2349 = vunpack.c.0.s8 %v2348
        %v2350 = vlaneseq
        %v2351 = vshrl.u32 %v2350, 7
        %v2352 = vsub.s32 %v2349, %v2351
        %v2353 = vrot.slane %v2245, %v2352
        %v2354 = vcombine.high %v2353, %v2353
        %v2356 = vunpack.c.l.s4 1966171168
        %v2357 = vunpack.c.0.s8 %v2356
        %v2358 = vlaneseq
        %v2359 = vshrl.u32 %v2358, 7
        %v2360 = vsub.s32 %v2357, %v2359
        %v2361 = vrot.slane %v2353, %v2360
        %v2363 = vunpack.c.l.s4 1966171168
        %v2364 = vunpack.c.0.s8 %v2363
        %v2365 = vlaneseq
        %v2366 = vshrl.u32 %v2365, 7
        %v2367 = vsub.s32 %v2364, %v2366
        %v2368 = vrot.slane %v2354, %v2367
        %v2369 = vcombine.high %v2361, %v2361
        %v2370 = vcombine.high %v2368, %v2368
        %v2392 = vlaneseq
        %v2393 = vshrl.u32 %v2392, 7
        %v2394 = vsub.s32 0, %v2393
        %v2395 = vrot.slane %v383, %v2394
        %v2396 = vlaneseq
        %v2397 = vshrl.u32 %v2396, 7
        %v2398 = vsub.s32 1, %v2397
        %v2399 = vrot.slane %v383, %v2398
        %v2400 = vlaneseq
        %v2401 = vshrl.u32 %v2400, 7
        %v2402 = vsub.s32 2, %v2401
        %v2403 = vrot.slane %v383, %v2402
        %v2404 = vlaneseq
        %v2405 = vshrl.u32 %v2404, 7
        %v2406 = vsub.s32 3, %v2405
        %v2407 = vrot.slane %v383, %v2406
        %v2408 = vlaneseq
        %v2409 = vshrl.u32 %v2408, 7
        %v2410 = vsub.s32 4, %v2409
        %v2411 = vrot.slane %v383, %v2410
        %v2417 = vmul.f32 %v2272, %v2395
        %v2418 = vmul.f32 %v2286, %v2399
        %v2419 = vmul.f32 %v2294, %v2403
        %v2420 = vmul.f32 %v2296, %v2407
        %v2421 = vmul.f32 %v2279, %v2411
        %v2422 = vmul.f32 %v2293, %v2395
        %v2423 = vmul.f32 %v2295, %v2399
        %v2424 = vmul.f32 %v2297, %v2403
        %v2425 = vmul.f32 %v2321, %v2407
        %v2426 = vmul.f32 %v2335, %v2411
        %v2427 = vmul.f32 %v2343, %v2395
        %v2428 = vmul.f32 %v2345, %v2399
        %v2429 = vmul.f32 %v2328, %v2403
        %v2430 = vmul.f32 %v2342, %v2407
        %v2431 = vmul.f32 %v2344, %v2411
        %v2432 = vmul.f32 %v2346, %v2395
        %v2433 = vmul.f32 %v2361, %v2399
        %v2434 = vmul.f32 %v2368, %v2403
        %v2435 = vmul.f32 %v2369, %v2407
        %v2436 = vmul.f32 %v2370, %v2411
        %s2437 = scalar_lea.vmem %s3, 3
        %v2438 = vld [vmem:[%s2437] sm:$0x1]
        %v2440 = vlaneseq
        %v2441 = vshrl.u32 %v2440, 7
        %v2442 = vsub.s32 0, %v2441
        %v2443 = vrot.slane %v2438, %v2442
        %2444 = vrot.lane.b32.xlu0 %v2443, 64
        %v2445 = vpop.permute.xlu0 %2444
        %v2447 = vmul.f32 %v1865, %v2445
        %v2448 = vmul.f32 %v1866, %v2445
        %v2449 = vmul.f32 %v1867, %v2445
        %v2450 = vmul.f32 %v1868, %v2445
        %2455 = vrot.lane.b32.xlu0 %v2447, 64
        %v2456 = vpop.permute.xlu0 %2455
        %2457 = vrot.lane.b32.xlu0 %v2448, 64
        %v2458 = vpop.permute.xlu0 %2457
        %2459 = vrot.lane.b32.xlu0 %v2449, 64
        %v2460 = vpop.permute.xlu0 %2459
        %2461 = vrot.lane.b32.xlu0 %v2450, 64
        %v2462 = vpop.permute.xlu0 %2461
        %v2467 = vadd.f32 %v1794, %v2456
        %v2468 = vadd.f32 %v1795, %v2458
        %v2469 = vadd.f32 %v1796, %v2460
        %v2470 = vadd.f32 %v1797, %v2462
        %s2471 = scalar_lea.vmem %s4, 3
        %v2472 = vld [vmem:[%s2471] sm:$0x1]
        %v2474 = vlaneseq
        %v2475 = vshrl.u32 %v2474, 7
        %v2476 = vsub.s32 0, %v2475
        %v2477 = vrot.slane %v2472, %v2476
        %v2479 = vunpack.c.l.s4 1966171168
        %v2480 = vunpack.c.0.s8 %v2479
        %v2481 = vlaneseq
        %v2482 = vshrl.u32 %v2481, 7
        %v2483 = vsub.s32 %v2480, %v2482
        %v2484 = vrot.slane %v2477, %v2483
        %v2485 = vcombine.high %v2484, %v2484
        %v2487 = vunpack.c.l.s4 1966171168
        %v2488 = vunpack.c.0.s8 %v2487
        %v2489 = vlaneseq
        %v2490 = vshrl.u32 %v2489, 7
        %v2491 = vsub.s32 %v2488, %v2490
        %v2492 = vrot.slane %v2484, %v2491
        %v2494 = vunpack.c.l.s4 1966171168
        %v2495 = vunpack.c.0.s8 %v2494
        %v2496 = vlaneseq
        %v2497 = vshrl.u32 %v2496, 7
        %v2498 = vsub.s32 %v2495, %v2497
        %v2499 = vrot.slane %v2485, %v2498
        %v2500 = vcombine.high %v2492, %v2492
        %v2501 = vcombine.high %v2499, %v2499
        %v2506 = vmul.f32 %v2417, %v2492
        %v2507 = vmul.f32 %v2418, %v2499
        %v2508 = vmul.f32 %v2419, %v2500
        %v2509 = vmul.f32 %v2420, %v2501
        %v2510 = vmul.f32 %v2422, %v2492
        %v2511 = vmul.f32 %v2423, %v2499
        %v2512 = vmul.f32 %v2424, %v2500
        %v2513 = vmul.f32 %v2425, %v2501
        %v2514 = vmul.f32 %v2427, %v2492
        %v2515 = vmul.f32 %v2428, %v2499
        %v2516 = vmul.f32 %v2429, %v2500
        %v2517 = vmul.f32 %v2430, %v2501
        %v2518 = vmul.f32 %v2432, %v2492
        %v2519 = vmul.f32 %v2433, %v2499
        %v2520 = vmul.f32 %v2434, %v2500
        %v2521 = vmul.f32 %v2435, %v2501
        %v2522 = vadd.f32 %v1849, %v2506
        %v2523 = vadd.f32 %v1850, %v2507
        %v2524 = vadd.f32 %v1851, %v2508
        %v2525 = vadd.f32 %v1852, %v2509
        %v2526 = vadd.f32 %v1853, %v2510
        %v2527 = vadd.f32 %v1854, %v2511
        %v2528 = vadd.f32 %v1855, %v2512
        %v2529 = vadd.f32 %v1856, %v2513
        %v2530 = vadd.f32 %v1857, %v2514
        %v2531 = vadd.f32 %v1858, %v2515
        %v2532 = vadd.f32 %v1859, %v2516
        %v2533 = vadd.f32 %v1860, %v2517
        %v2534 = vadd.f32 %v1861, %v2518
        %v2535 = vadd.f32 %v1862, %v2519
        %v2536 = vadd.f32 %v1863, %v2520
        %v2537 = vadd.f32 %v1864, %v2521
        %s2538 = scalar_lea.vmem %s3, 5
        %v2539 = vld [vmem:[%s2538] sm:$0x1]
        %v2541 = vlaneseq
        %v2542 = vshrl.u32 %v2541, 7
        %v2543 = vsub.s32 0, %v2542
        %v2544 = vrot.slane %v2539, %v2543
        %2545 = vrot.lane.b32.xlu0 %v2544, 64
        %v2546 = vpop.permute.xlu0 %2545
        %v2548 = vmul.f32 %v1865, %v2546
        %v2549 = vmul.f32 %v1866, %v2546
        %v2550 = vmul.f32 %v1867, %v2546
        %v2551 = vmul.f32 %v1868, %v2546
        %v2556 = vrot.slane %v2548, 1
        %v2557 = vrot.slane %v2549, 1
        %v2558 = vrot.slane %v2550, 1
        %v2559 = vrot.slane %v2551, 1
        %2560 = vrot.lane.b32.xlu0 %v2556, 64
        %v2561 = vpop.permute.xlu0 %2560
        %2562 = vrot.lane.b32.xlu0 %v2557, 64
        %v2563 = vpop.permute.xlu0 %2562
        %2564 = vrot.lane.b32.xlu0 %v2558, 64
        %v2565 = vpop.permute.xlu0 %2564
        %2566 = vrot.lane.b32.xlu0 %v2559, 64
        %v2567 = vpop.permute.xlu0 %2566
        %v2572 = vadd.f32 %v2467, %v2561
        %v2573 = vadd.f32 %v2468, %v2563
        %v2574 = vadd.f32 %v2469, %v2565
        %v2575 = vadd.f32 %v2470, %v2567
        %s2576 = scalar_lea.vmem %s4, 5
        %v2577 = vld [vmem:[%s2576] sm:$0x1]
        %v2579 = vlaneseq
        %v2580 = vshrl.u32 %v2579, 7
        %v2581 = vsub.s32 0, %v2580
        %v2582 = vrot.slane %v2577, %v2581
        %v2584 = vunpack.c.l.s4 1966171168
        %v2585 = vunpack.c.0.s8 %v2584
        %v2586 = vlaneseq
        %v2587 = vshrl.u32 %v2586, 7
        %v2588 = vsub.s32 %v2585, %v2587
        %v2589 = vrot.slane %v2582, %v2588
        %v2590 = vcombine.high %v2589, %v2589
        %v2592 = vunpack.c.l.s4 1966171168
        %v2593 = vunpack.c.0.s8 %v2592
        %v2594 = vlaneseq
        %v2595 = vshrl.u32 %v2594, 7
        %v2596 = vsub.s32 %v2593, %v2595
        %v2597 = vrot.slane %v2589, %v2596
        %v2599 = vunpack.c.l.s4 1966171168
        %v2600 = vunpack.c.0.s8 %v2599
        %v2601 = vlaneseq
        %v2602 = vshrl.u32 %v2601, 7
        %v2603 = vsub.s32 %v2600, %v2602
        %v2604 = vrot.slane %v2590, %v2603
        %v2605 = vcombine.high %v2597, %v2597
        %v2606 = vcombine.high %v2604, %v2604
        %v2611 = vmul.f32 %v2418, %v2597
        %v2612 = vmul.f32 %v2419, %v2604
        %v2613 = vmul.f32 %v2420, %v2605
        %v2614 = vmul.f32 %v2421, %v2606
        %v2615 = vmul.f32 %v2423, %v2597
        %v2616 = vmul.f32 %v2424, %v2604
        %v2617 = vmul.f32 %v2425, %v2605
        %v2618 = vmul.f32 %v2426, %v2606
        %v2619 = vmul.f32 %v2428, %v2597
        %v2620 = vmul.f32 %v2429, %v2604
        %v2621 = vmul.f32 %v2430, %v2605
        %v2622 = vmul.f32 %v2431, %v2606
        %v2623 = vmul.f32 %v2433, %v2597
        %v2624 = vmul.f32 %v2434, %v2604
        %v2625 = vmul.f32 %v2435, %v2605
        %v2626 = vmul.f32 %v2436, %v2606
        %v2627 = vadd.f32 %v2522, %v2611
        %v2628 = vadd.f32 %v2523, %v2612
        %v2629 = vadd.f32 %v2524, %v2613
        %v2630 = vadd.f32 %v2525, %v2614
        %v2631 = vadd.f32 %v2526, %v2615
        %v2632 = vadd.f32 %v2527, %v2616
        %v2633 = vadd.f32 %v2528, %v2617
        %v2634 = vadd.f32 %v2529, %v2618
        %v2635 = vadd.f32 %v2530, %v2619
        %v2636 = vadd.f32 %v2531, %v2620
        %v2637 = vadd.f32 %v2532, %v2621
        %v2638 = vadd.f32 %v2533, %v2622
        %v2639 = vadd.f32 %v2534, %v2623
        %v2640 = vadd.f32 %v2535, %v2624
        %v2641 = vadd.f32 %v2536, %v2625
        %v2642 = vadd.f32 %v2537, %v2626
        %v2643 = vld [vmem:[%s335] sm:$0x1f]
        %v2644 = vld [vmem:[%s335 + $0x10] sm:$0x1f]
        %v2645 = vld [vmem:[%s335 + $0x20] sm:$0x1f]
        %v2646 = vld [vmem:[%s335 + $0x30] sm:$0x1f]
        %v2651 = vcombine.high %v2643, %v2643
        %v2653 = vunpack.c.l.s4 1966171168
        %v2654 = vunpack.c.0.s8 %v2653
        %v2655 = vlaneseq
        %v2656 = vshrl.u32 %v2655, 7
        %v2657 = vsub.s32 %v2654, %v2656
        %v2658 = vrot.slane %v2643, %v2657
        %v2660 = vunpack.c.l.s4 1966171168
        %v2661 = vunpack.c.0.s8 %v2660
        %v2662 = vlaneseq
        %v2663 = vshrl.u32 %v2662, 7
        %v2664 = vsub.s32 %v2661, %v2663
        %v2665 = vrot.slane %v2651, %v2664
        %v2666 = vcombine.high %v2658, %v2658
        %v2668 = vunpack.c.l.s4 1966171168
        %v2669 = vunpack.c.0.s8 %v2668
        %v2670 = vlaneseq
        %v2671 = vshrl.u32 %v2670, 7
        %v2672 = vsub.s32 %v2669, %v2671
        %v2673 = vrot.slane %v2658, %v2672
        %v2675 = vunpack.c.l.s4 1966171168
        %v2676 = vunpack.c.0.s8 %v2675
        %v2677 = vlaneseq
        %v2678 = vshrl.u32 %v2677, 7
        %v2679 = vsub.s32 %v2676, %v2678
        %v2680 = vrot.slane %v2665, %v2679
        %v2682 = vunpack.c.l.s4 1966171168
        %v2683 = vunpack.c.0.s8 %v2682
        %v2684 = vlaneseq
        %v2685 = vshrl.u32 %v2684, 7
        %v2686 = vsub.s32 %v2683, %v2685
        %v2687 = vrot.slane %v2666, %v2686
        %v2688 = vcombine.high %v2673, %v2673
        %v2689 = vcombine.high %v2687, %v2687
        %v2690 = vcombine.high %v2644, %v2644
        %v2692 = vunpack.c.l.s4 1966171168
        %v2693 = vunpack.c.0.s8 %v2692
        %v2694 = vlaneseq
        %v2695 = vshrl.u32 %v2694, 7
        %v2696 = vsub.s32 %v2693, %v2695
        %v2697 = vrot.slane %v2644, %v2696
        %v2699 = vunpack.c.l.s4 1966171168
        %v2700 = vunpack.c.0.s8 %v2699
        %v2701 = vlaneseq
        %v2702 = vshrl.u32 %v2701, 7
        %v2703 = vsub.s32 %v2700, %v2702
        %v2704 = vrot.slane %v2690, %v2703
        %v2705 = vcombine.high %v2697, %v2697
        %v2707 = vunpack.c.l.s4 1966171168
        %v2708 = vunpack.c.0.s8 %v2707
        %v2709 = vlaneseq
        %v2710 = vshrl.u32 %v2709, 7
        %v2711 = vsub.s32 %v2708, %v2710
        %v2712 = vrot.slane %v2697, %v2711
        %v2714 = vunpack.c.l.s4 1966171168
        %v2715 = vunpack.c.0.s8 %v2714
        %v2716 = vlaneseq
        %v2717 = vshrl.u32 %v2716, 7
        %v2718 = vsub.s32 %v2715, %v2717
        %v2719 = vrot.slane %v2704, %v2718
        %v2721 = vunpack.c.l.s4 1966171168
        %v2722 = vunpack.c.0.s8 %v2721
        %v2723 = vlaneseq
        %v2724 = vshrl.u32 %v2723, 7
        %v2725 = vsub.s32 %v2722, %v2724
        %v2726 = vrot.slane %v2705, %v2725
        %v2727 = vcombine.high %v2712, %v2712
        %v2728 = vcombine.high %v2726, %v2726
        %v2729 = vcombine.high %v2645, %v2645
        %v2731 = vunpack.c.l.s4 1966171168
        %v2732 = vunpack.c.0.s8 %v2731
        %v2733 = vlaneseq
        %v2734 = vshrl.u32 %v2733, 7
        %v2735 = vsub.s32 %v2732, %v2734
        %v2736 = vrot.slane %v2645, %v2735
        %v2738 = vunpack.c.l.s4 1966171168
        %v2739 = vunpack.c.0.s8 %v2738
        %v2740 = vlaneseq
        %v2741 = vshrl.u32 %v2740, 7
        %v2742 = vsub.s32 %v2739, %v2741
        %v2743 = vrot.slane %v2729, %v2742
        %v2744 = vcombine.high %v2736, %v2736
        %v2746 = vunpack.c.l.s4 1966171168
        %v2747 = vunpack.c.0.s8 %v2746
        %v2748 = vlaneseq
        %v2749 = vshrl.u32 %v2748, 7
        %v2750 = vsub.s32 %v2747, %v2749
        %v2751 = vrot.slane %v2736, %v2750
        %v2753 = vunpack.c.l.s4 1966171168
        %v2754 = vunpack.c.0.s8 %v2753
        %v2755 = vlaneseq
        %v2756 = vshrl.u32 %v2755, 7
        %v2757 = vsub.s32 %v2754, %v2756
        %v2758 = vrot.slane %v2743, %v2757
        %v2760 = vunpack.c.l.s4 1966171168
        %v2761 = vunpack.c.0.s8 %v2760
        %v2762 = vlaneseq
        %v2763 = vshrl.u32 %v2762, 7
        %v2764 = vsub.s32 %v2761, %v2763
        %v2765 = vrot.slane %v2744, %v2764
        %v2766 = vcombine.high %v2751, %v2751
        %v2767 = vcombine.high %v2765, %v2765
        %v2768 = vcombine.high %v2646, %v2646
        %v2770 = vunpack.c.l.s4 1966171168
        %v2771 = vunpack.c.0.s8 %v2770
        %v2772 = vlaneseq
        %v2773 = vshrl.u32 %v2772, 7
        %v2774 = vsub.s32 %v2771, %v2773
        %v2775 = vrot.slane %v2646, %v2774
        %v2777 = vunpack.c.l.s4 1966171168
        %v2778 = vunpack.c.0.s8 %v2777
        %v2779 = vlaneseq
        %v2780 = vshrl.u32 %v2779, 7
        %v2781 = vsub.s32 %v2778, %v2780
        %v2782 = vrot.slane %v2768, %v2781
        %v2783 = vcombine.high %v2775, %v2775
        %v2785 = vunpack.c.l.s4 1966171168
        %v2786 = vunpack.c.0.s8 %v2785
        %v2787 = vlaneseq
        %v2788 = vshrl.u32 %v2787, 7
        %v2789 = vsub.s32 %v2786, %v2788
        %v2790 = vrot.slane %v2775, %v2789
        %v2792 = vunpack.c.l.s4 1966171168
        %v2793 = vunpack.c.0.s8 %v2792
        %v2794 = vlaneseq
        %v2795 = vshrl.u32 %v2794, 7
        %v2796 = vsub.s32 %v2793, %v2795
        %v2797 = vrot.slane %v2782, %v2796
        %v2799 = vunpack.c.l.s4 1966171168
        %v2800 = vunpack.c.0.s8 %v2799
        %v2801 = vlaneseq
        %v2802 = vshrl.u32 %v2801, 7
        %v2803 = vsub.s32 %v2800, %v2802
        %v2804 = vrot.slane %v2783, %v2803
        %v2805 = vcombine.high %v2790, %v2790
        %v2806 = vcombine.high %v2804, %v2804
        %v2807 = vcombine.low %v2673, %v2687
        %v2808 = vcombine.low %v2688, %v2689
        %v2809 = vcombine.low %v2680, %v2712
        %v2810 = vcombine.low %v2726, %v2727
        %v2812 = vunpack.c.l.s4 1966171168
        %v2813 = vunpack.c.0.s8 %v2812
        %v2814 = vlaneseq
        %v2815 = vshrl.u32 %v2814, 7
        %v2816 = vsub.s32 %v2813, %v2815
        %v2817 = vrot.slane %v2807, %v2816
        %v2819 = vunpack.c.l.s4 1966171168
        %v2820 = vunpack.c.0.s8 %v2819
        %v2821 = vlaneseq
        %v2822 = vshrl.u32 %v2821, 7
        %v2823 = vsub.s32 %v2820, %v2822
        %v2824 = vrot.slane %v2808, %v2823
        %v2826 = vunpack.c.l.s4 1966171168
        %v2827 = vunpack.c.0.s8 %v2826
        %v2828 = vlaneseq
        %v2829 = vshrl.u32 %v2828, 7
        %v2830 = vsub.s32 %v2827, %v2829
        %v2831 = vrot.slane %v2809, %v2830
        %v2833 = vunpack.c.l.s4 1966171168
        %v2834 = vunpack.c.0.s8 %v2833
        %v2835 = vlaneseq
        %v2836 = vshrl.u32 %v2835, 7
        %v2837 = vsub.s32 %v2834, %v2836
        %v2838 = vrot.slane %v2810, %v2837
        %v2839 = vcombine.low %v2817, %v2824
        %v2840 = vcombine.low %v2831, %v2838
        %v2842 = vunpack.c.l.s4 1966171168
        %v2843 = vunpack.c.0.s8 %v2842
        %v2844 = vlaneseq
        %v2845 = vshrl.u32 %v2844, 7
        %v2846 = vsub.s32 %v2843, %v2845
        %v2847 = vrot.slane %v2839, %v2846
        %v2849 = vunpack.c.l.s4 1966171168
        %v2850 = vunpack.c.0.s8 %v2849
        %v2851 = vlaneseq
        %v2852 = vshrl.u32 %v2851, 7
        %v2853 = vsub.s32 %v2850, %v2852
        %v2854 = vrot.slane %v2840, %v2853
        %v2855 = vcombine.low %v2847, %v2854
        %v2856 = vcombine.low %v2728, %v2719
        %v2857 = vcombine.low %v2751, %v2765
        %v2858 = vcombine.low %v2766, %v2767
        %v2859 = vcombine.low %v2758, %v2790
        %v2861 = vunpack.c.l.s4 1966171168
        %v2862 = vunpack.c.0.s8 %v2861
        %v2863 = vlaneseq
        %v2864 = vshrl.u32 %v2863, 7
        %v2865 = vsub.s32 %v2862, %v2864
        %v2866 = vrot.slane %v2856, %v2865
        %v2868 = vunpack.c.l.s4 1966171168
        %v2869 = vunpack.c.0.s8 %v2868
        %v2870 = vlaneseq
        %v2871 = vshrl.u32 %v2870, 7
        %v2872 = vsub.s32 %v2869, %v2871
        %v2873 = vrot.slane %v2857, %v2872
        %v2875 = vunpack.c.l.s4 1966171168
        %v2876 = vunpack.c.0.s8 %v2875
        %v2877 = vlaneseq
        %v2878 = vshrl.u32 %v2877, 7
        %v2879 = vsub.s32 %v2876, %v2878
        %v2880 = vrot.slane %v2858, %v2879
        %v2882 = vunpack.c.l.s4 1966171168
        %v2883 = vunpack.c.0.s8 %v2882
        %v2884 = vlaneseq
        %v2885 = vshrl.u32 %v2884, 7
        %v2886 = vsub.s32 %v2883, %v2885
        %v2887 = vrot.slane %v2859, %v2886
        %v2888 = vcombine.low %v2866, %v2873
        %v2889 = vcombine.low %v2880, %v2887
        %v2891 = vunpack.c.l.s4 1966171168
        %v2892 = vunpack.c.0.s8 %v2891
        %v2893 = vlaneseq
        %v2894 = vshrl.u32 %v2893, 7
        %v2895 = vsub.s32 %v2892, %v2894
        %v2896 = vrot.slane %v2888, %v2895
        %v2898 = vunpack.c.l.s4 1966171168
        %v2899 = vunpack.c.0.s8 %v2898
        %v2900 = vlaneseq
        %v2901 = vshrl.u32 %v2900, 7
        %v2902 = vsub.s32 %v2899, %v2901
        %v2903 = vrot.slane %v2889, %v2902
        %v2904 = vcombine.low %v2896, %v2903
        %v2905 = vcombine.low %v2804, %v2805
        %v2906 = vcombine.low %v2806, %v2797
        %v2908 = vunpack.c.l.s4 1966171168
        %v2909 = vunpack.c.0.s8 %v2908
        %v2910 = vlaneseq
        %v2911 = vshrl.u32 %v2910, 7
        %v2912 = vsub.s32 %v2909, %v2911
        %v2913 = vrot.slane %v2905, %v2912
        %v2915 = vunpack.c.l.s4 1966171168
        %v2916 = vunpack.c.0.s8 %v2915
        %v2917 = vlaneseq
        %v2918 = vshrl.u32 %v2917, 7
        %v2919 = vsub.s32 %v2916, %v2918
        %v2920 = vrot.slane %v2906, %v2919
        %v2921 = vcombine.low %v2913, %v2920
        %v2923 = vunpack.c.l.s4 1966171168
        %v2924 = vunpack.c.0.s8 %v2923
        %v2925 = vlaneseq
        %v2926 = vshrl.u32 %v2925, 7
        %v2927 = vsub.s32 %v2924, %v2926
        %v2928 = vrot.slane %v2921, %v2927
        %2929 = vrot.lane.b32.xlu0 %v2855, 16
        %v2930 = vpop.permute.xlu0 %2929
        %2931 = vrot.lane.b32.xlu0 %v2904, 16
        %v2932 = vpop.permute.xlu0 %2931
        %2933 = vrot.lane.b32.xlu0 %v2928, 16
        %v2934 = vpop.permute.xlu0 %2933
        %v2935 = vsel %vm693, %v2930, 0
        %v2937 = vsel %vm693, %v2932, 0
        %v2939 = vsel %vm693, %v2934, 0
        %2941 = vmatprep.subr.mxu0 0.0
        %2942 = vmatpush1.msra.mxu0 %v556
        %2943 = vmatprep.subr.mxu0 0.0
        %2944 = vmatpush1.msra.mxu0 %v557
        %2945 = vmatprep.subr.mxu0 0.0
        %2946 = vmatpush1.msra.mxu0 0.0
        %2947 = vmatprep.subr.mxu0 0.0
        %2948 = vmatpush1.msra.mxu0 0.0
        %2949 = vmatprep.subr.mxu0 0.0
        %2950 = vmatpush1.msra.mxu0 0.0
        %2951 = vmatprep.subr.mxu0 0.0
        %2952 = vmatpush1.msra.mxu0 0.0
        %2953 = vmatprep.subr.mxu0 0.0
        %2954 = vmatpush1.msra.mxu0 0.0
        %2955 = vmatprep.subr.mxu0 0.0
        %2956 = vmatpush1.msra.mxu0 0.0
        %2957 = vmatprep.subr.mxu0 0.0
        %2958 = vmatpush1.msra.mxu0 0.0
        %2959 = vmatprep.subr.mxu0 0.0
        %2960 = vmatpush1.msra.mxu0 0.0
        %2961 = vmatprep.subr.mxu0 0.0
        %2962 = vmatpush1.msra.mxu0 0.0
        %2963 = vmatprep.subr.mxu0 0.0
        %2964 = vmatpush1.msra.mxu0 0.0
        %2965 = vmatprep.subr.mxu0 0.0
        %2966 = vmatpush1.msra.mxu0 0.0
        %2967 = vmatprep.subr.mxu0 0.0
        %2968 = vmatpush1.msra.mxu0 0.0
        %2969 = vmatprep.subr.mxu0 0.0
        %2970 = vmatpush1.msra.mxu0 0.0
        %2971 = vmatprep.subr.mxu0 0.0
        %2972 = vmatpush1.msra.mxu0 0.0
        %2973 = vmatprep.subr.mxu0 0.0
        %2974 = vmatpush1.msra.mxu0 0.0
        %2975 = vmatprep.subr.mxu0 0.0
        %2976 = vmatpush1.msra.mxu0 0.0
        %2977 = vmatprep.subr.mxu0 0.0
        %2978 = vmatpush1.msra.mxu0 0.0
        %2979 = vmatprep.subr.mxu0 0.0
        %2980 = vmatpush1.msra.mxu0 0.0
        %2981 = vmatprep.subr.mxu0 0.0
        %2982 = vmatpush1.msra.mxu0 0.0
        %2983 = vmatprep.subr.mxu0 0.0
        %2984 = vmatpush1.msra.mxu0 0.0
        %2985 = vmatprep.subr.mxu0 0.0
        %2986 = vmatpush1.msra.mxu0 0.0
        %2987 = vmatprep.subr.mxu0 0.0
        %2988 = vmatpush1.msra.mxu0 0.0
        %2989 = vmatprep.subr.mxu0 0.0
        %2990 = vmatpush1.msra.mxu0 0.0
        %2991 = vmatprep.subr.mxu0 0.0
        %2992 = vmatpush1.msra.mxu0 0.0
        %2993 = vmatprep.subr.mxu0 0.0
        %2994 = vmatpush1.msra.mxu0 0.0
        %2995 = vmatprep.subr.mxu0 0.0
        %2996 = vmatpush1.msra.mxu0 0.0
        %2997 = vmatprep.subr.mxu0 0.0
        %2998 = vmatpush1.msra.mxu0 0.0
        %2999 = vmatprep.subr.mxu0 0.0
        %3000 = vmatpush1.msra.mxu0 0.0
        %3001 = vmatprep.subr.mxu0 0.0
        %3002 = vmatpush1.msra.mxu0 0.0
        %3003 = vmatprep.subr.mxu0 0.0
        %3004 = vmatpush1.msra.mxu0 0.0
        %3005 = vmatprep.mubr.f32.mxu0 0.0
        %3006 = vmatmul.mubr.f32.gmra.mrb[0].mxu0 %v2935
        %v3007 = vpop.f32.mrb[0].mxu0
        %v3008 = vadd.f32 %v563, %v3007
        %v3009 = vpop.f32.mrb[0].mxu0
        %3010 = vmatprep.mubr.f32.mxu0 0.0
        %3011 = vmatmul.mubr.f32.gmra.mrb[0].mxu0 %v2937
        %v3012 = vpop.f32.mrb[0].mxu0
        %v3013 = vadd.f32 %v563, %v3012
        %v3014 = vpop.f32.mrb[0].mxu0
        %3015 = vmatprep.mubr.f32.mxu0 0.0
        %3016 = vmatmul.mubr.f32.gmra.mrb[0].mxu0 %v2939
        %v3017 = vpop.f32.mrb[0].mxu0
        %v3018 = vadd.f32 %v563, %v3017
        %v3019 = vpop.f32.mrb[0].mxu0
        %3020 = vdwg.mxu0
        %v3021 = vmax.f32 %v3008, 0.0
        %v3022 = vmax.f32 %v3013, 0.0
        %v3023 = vmax.f32 %v3018, 0.0
        %v3027 = vcombine.high %v3021, %v3021
        %v3029 = vunpack.c.l.s4 1966171168
        %v3030 = vunpack.c.0.s8 %v3029
        %v3031 = vlaneseq
        %v3032 = vshrl.u32 %v3031, 7
        %v3033 = vsub.s32 %v3030, %v3032
        %v3034 = vrot.slane %v3021, %v3033
        %v3036 = vunpack.c.l.s4 1966171168
        %v3037 = vunpack.c.0.s8 %v3036
        %v3038 = vlaneseq
        %v3039 = vshrl.u32 %v3038, 7
        %v3040 = vsub.s32 %v3037, %v3039
        %v3041 = vrot.slane %v3027, %v3040
        %v3042 = vcombine.high %v3034, %v3034
        %v3043 = vcombine.high %v3041, %v3041
        %v3045 = vunpack.c.l.s4 1966171168
        %v3046 = vunpack.c.0.s8 %v3045
        %v3047 = vlaneseq
        %v3048 = vshrl.u32 %v3047, 7
        %v3049 = vsub.s32 %v3046, %v3048
        %v3050 = vrot.slane %v3034, %v3049
        %v3052 = vunpack.c.l.s4 1966171168
        %v3053 = vunpack.c.0.s8 %v3052
        %v3054 = vlaneseq
        %v3055 = vshrl.u32 %v3054, 7
        %v3056 = vsub.s32 %v3053, %v3055
        %v3057 = vrot.slane %v3041, %v3056
        %v3059 = vunpack.c.l.s4 1966171168
        %v3060 = vunpack.c.0.s8 %v3059
        %v3061 = vlaneseq
        %v3062 = vshrl.u32 %v3061, 7
        %v3063 = vsub.s32 %v3060, %v3062
        %v3064 = vrot.slane %v3042, %v3063
        %v3066 = vunpack.c.l.s4 1966171168
        %v3067 = vunpack.c.0.s8 %v3066
        %v3068 = vlaneseq
        %v3069 = vshrl.u32 %v3068, 7
        %v3070 = vsub.s32 %v3067, %v3069
        %v3071 = vrot.slane %v3043, %v3070
        %v3072 = vcombine.high %v3050, %v3050
        %v3073 = vcombine.high %v3057, %v3057
        %v3074 = vcombine.high %v3064, %v3064
        %v3075 = vcombine.high %v3071, %v3071
        %v3076 = vcombine.high %v3022, %v3022
        %v3078 = vunpack.c.l.s4 1966171168
        %v3079 = vunpack.c.0.s8 %v3078
        %v3080 = vlaneseq
        %v3081 = vshrl.u32 %v3080, 7
        %v3082 = vsub.s32 %v3079, %v3081
        %v3083 = vrot.slane %v3022, %v3082
        %v3085 = vunpack.c.l.s4 1966171168
        %v3086 = vunpack.c.0.s8 %v3085
        %v3087 = vlaneseq
        %v3088 = vshrl.u32 %v3087, 7
        %v3089 = vsub.s32 %v3086, %v3088
        %v3090 = vrot.slane %v3076, %v3089
        %v3091 = vcombine.high %v3083, %v3083
        %v3092 = vcombine.high %v3090, %v3090
        %v3094 = vunpack.c.l.s4 1966171168
        %v3095 = vunpack.c.0.s8 %v3094
        %v3096 = vlaneseq
        %v3097 = vshrl.u32 %v3096, 7
        %v3098 = vsub.s32 %v3095, %v3097
        %v3099 = vrot.slane %v3083, %v3098
        %v3101 = vunpack.c.l.s4 1966171168
        %v3102 = vunpack.c.0.s8 %v3101
        %v3103 = vlaneseq
        %v3104 = vshrl.u32 %v3103, 7
        %v3105 = vsub.s32 %v3102, %v3104
        %v3106 = vrot.slane %v3090, %v3105
        %v3108 = vunpack.c.l.s4 1966171168
        %v3109 = vunpack.c.0.s8 %v3108
        %v3110 = vlaneseq
        %v3111 = vshrl.u32 %v3110, 7
        %v3112 = vsub.s32 %v3109, %v3111
        %v3113 = vrot.slane %v3091, %v3112
        %v3115 = vunpack.c.l.s4 1966171168
        %v3116 = vunpack.c.0.s8 %v3115
        %v3117 = vlaneseq
        %v3118 = vshrl.u32 %v3117, 7
        %v3119 = vsub.s32 %v3116, %v3118
        %v3120 = vrot.slane %v3092, %v3119
        %v3121 = vcombine.high %v3099, %v3099
        %v3122 = vcombine.high %v3113, %v3113
        %v3123 = vcombine.high %v3120, %v3120
        %v3125 = vunpack.c.l.s4 1966171168
        %v3126 = vunpack.c.0.s8 %v3125
        %v3127 = vlaneseq
        %v3128 = vshrl.u32 %v3127, 7
        %v3129 = vsub.s32 %v3126, %v3128
        %v3130 = vrot.slane %v3023, %v3129
        %v3131 = vcombine.high %v3130, %v3130
        %v3133 = vunpack.c.l.s4 1966171168
        %v3134 = vunpack.c.0.s8 %v3133
        %v3135 = vlaneseq
        %v3136 = vshrl.u32 %v3135, 7
        %v3137 = vsub.s32 %v3134, %v3136
        %v3138 = vrot.slane %v3130, %v3137
        %v3140 = vunpack.c.l.s4 1966171168
        %v3141 = vunpack.c.0.s8 %v3140
        %v3142 = vlaneseq
        %v3143 = vshrl.u32 %v3142, 7
        %v3144 = vsub.s32 %v3141, %v3143
        %v3145 = vrot.slane %v3131, %v3144
        %v3146 = vcombine.high %v3138, %v3138
        %s3163 = scalar_lea.vmem %s3, 4
        %v3164 = vld [vmem:[%s3163] sm:$0x1]
        %v3166 = vlaneseq
        %v3167 = vshrl.u32 %v3166, 7
        %v3168 = vsub.s32 0, %v3167
        %v3169 = vrot.slane %v3164, %v3168
        %3170 = vrot.lane.b32.xlu0 %v3169, 96
        %v3171 = vpop.permute.xlu0 %3170
        %v3173 = vmul.f32 %v2643, %v3171
        %v3174 = vmul.f32 %v2644, %v3171
        %v3175 = vmul.f32 %v2645, %v3171
        %v3176 = vmul.f32 %v2646, %v3171
        %3181 = vrot.lane.b32.xlu0 %v3173, 32
        %v3182 = vpop.permute.xlu0 %3181
        %3183 = vrot.lane.b32.xlu0 %v3174, 32
        %v3184 = vpop.permute.xlu0 %3183
        %3185 = vrot.lane.b32.xlu0 %v3175, 32
        %v3186 = vpop.permute.xlu0 %3185
        %3187 = vrot.lane.b32.xlu0 %v3176, 32
        %v3188 = vpop.permute.xlu0 %3187
        %v3193 = vadd.f32 %v2572, %v3182
        %v3194 = vadd.f32 %v2573, %v3184
        %v3195 = vadd.f32 %v2574, %v3186
        %v3196 = vadd.f32 %v2575, %v3188
        %s3197 = scalar_lea.vmem %s4, 4
        %v3198 = vld [vmem:[%s3197] sm:$0x1]
        %v3200 = vlaneseq
        %v3201 = vshrl.u32 %v3200, 7
        %v3202 = vsub.s32 0, %v3201
        %v3203 = vrot.slane %v3198, %v3202
        %v3205 = vunpack.c.l.s4 1966171168
        %v3206 = vunpack.c.0.s8 %v3205
        %v3207 = vlaneseq
        %v3208 = vshrl.u32 %v3207, 7
        %v3209 = vsub.s32 %v3206, %v3208
        %v3210 = vrot.slane %v3203, %v3209
        %v3211 = vcombine.high %v3210, %v3210
        %v3213 = vunpack.c.l.s4 1966171168
        %v3214 = vunpack.c.0.s8 %v3213
        %v3215 = vlaneseq
        %v3216 = vshrl.u32 %v3215, 7
        %v3217 = vsub.s32 %v3214, %v3216
        %v3218 = vrot.slane %v3210, %v3217
        %v3220 = vunpack.c.l.s4 1966171168
        %v3221 = vunpack.c.0.s8 %v3220
        %v3222 = vlaneseq
        %v3223 = vshrl.u32 %v3222, 7
        %v3224 = vsub.s32 %v3221, %v3223
        %v3225 = vrot.slane %v3211, %v3224
        %v3226 = vcombine.high %v3218, %v3218
        %v3227 = vcombine.high %v3225, %v3225
        %v3232 = vmul.f32 %v3050, %v3218
        %v3233 = vmul.f32 %v3064, %v3225
        %v3234 = vmul.f32 %v3072, %v3226
        %v3235 = vmul.f32 %v3074, %v3227
        %v3236 = vmul.f32 %v3071, %v3218
        %v3237 = vmul.f32 %v3073, %v3225
        %v3238 = vmul.f32 %v3075, %v3226
        %v3239 = vmul.f32 %v3099, %v3227
        %v3240 = vmul.f32 %v3121, %v3218
        %v3241 = vmul.f32 %v3122, %v3225
        %v3242 = vmul.f32 %v3106, %v3226
        %v3243 = vmul.f32 %v3120, %v3227
        %v3244 = vmul.f32 %v3123, %v3218
        %v3245 = vmul.f32 %v3138, %v3225
        %v3246 = vmul.f32 %v3145, %v3226
        %v3247 = vmul.f32 %v3146, %v3227
        %v3248 = vadd.f32 %v2627, %v3232
        %v3249 = vadd.f32 %v2628, %v3233
        %v3250 = vadd.f32 %v2629, %v3234
        %v3251 = vadd.f32 %v2630, %v3235
        %v3252 = vadd.f32 %v2631, %v3236
        %v3253 = vadd.f32 %v2632, %v3237
        %v3254 = vadd.f32 %v2633, %v3238
        %v3255 = vadd.f32 %v2634, %v3239
        %v3256 = vadd.f32 %v2635, %v3240
        %v3257 = vadd.f32 %v2636, %v3241
        %v3258 = vadd.f32 %v2637, %v3242
        %v3259 = vadd.f32 %v2638, %v3243
        %v3260 = vadd.f32 %v2639, %v3244
        %v3261 = vadd.f32 %v2640, %v3245
        %v3262 = vadd.f32 %v2641, %v3246
        %v3263 = vadd.f32 %v2642, %v3247
        %v3264 = vld [vmem:[%s335 + $0x8] sm:$0x1f]
        %v3265 = vld [vmem:[%s335 + $0x18] sm:$0x1f]
        %v3266 = vld [vmem:[%s335 + $0x28] sm:$0x1f]
        %v3267 = vld [vmem:[%s335 + $0x38] sm:$0x1f]
        %v3272 = vcombine.high %v3264, %v3264
        %v3274 = vunpack.c.l.s4 1966171168
        %v3275 = vunpack.c.0.s8 %v3274
        %v3276 = vlaneseq
        %v3277 = vshrl.u32 %v3276, 7
        %v3278 = vsub.s32 %v3275, %v3277
        %v3279 = vrot.slane %v3264, %v3278
        %v3281 = vunpack.c.l.s4 1966171168
        %v3282 = vunpack.c.0.s8 %v3281
        %v3283 = vlaneseq
        %v3284 = vshrl.u32 %v3283, 7
        %v3285 = vsub.s32 %v3282, %v3284
        %v3286 = vrot.slane %v3272, %v3285
        %v3287 = vcombine.high %v3279, %v3279
        %v3289 = vunpack.c.l.s4 1966171168
        %v3290 = vunpack.c.0.s8 %v3289
        %v3291 = vlaneseq
        %v3292 = vshrl.u32 %v3291, 7
        %v3293 = vsub.s32 %v3290, %v3292
        %v3294 = vrot.slane %v3279, %v3293
        %v3296 = vunpack.c.l.s4 1966171168
        %v3297 = vunpack.c.0.s8 %v3296
        %v3298 = vlaneseq
        %v3299 = vshrl.u32 %v3298, 7
        %v3300 = vsub.s32 %v3297, %v3299
        %v3301 = vrot.slane %v3286, %v3300
        %v3303 = vunpack.c.l.s4 1966171168
        %v3304 = vunpack.c.0.s8 %v3303
        %v3305 = vlaneseq
        %v3306 = vshrl.u32 %v3305, 7
        %v3307 = vsub.s32 %v3304, %v3306
        %v3308 = vrot.slane %v3287, %v3307
        %v3309 = vcombine.high %v3294, %v3294
        %v3310 = vcombine.high %v3308, %v3308
        %v3311 = vcombine.high %v3265, %v3265
        %v3313 = vunpack.c.l.s4 1966171168
        %v3314 = vunpack.c.0.s8 %v3313
        %v3315 = vlaneseq
        %v3316 = vshrl.u32 %v3315, 7
        %v3317 = vsub.s32 %v3314, %v3316
        %v3318 = vrot.slane %v3265, %v3317
        %v3320 = vunpack.c.l.s4 1966171168
        %v3321 = vunpack.c.0.s8 %v3320
        %v3322 = vlaneseq
        %v3323 = vshrl.u32 %v3322, 7
        %v3324 = vsub.s32 %v3321, %v3323
        %v3325 = vrot.slane %v3311, %v3324
        %v3326 = vcombine.high %v3318, %v3318
        %v3328 = vunpack.c.l.s4 1966171168
        %v3329 = vunpack.c.0.s8 %v3328
        %v3330 = vlaneseq
        %v3331 = vshrl.u32 %v3330, 7
        %v3332 = vsub.s32 %v3329, %v3331
        %v3333 = vrot.slane %v3318, %v3332
        %v3335 = vunpack.c.l.s4 1966171168
        %v3336 = vunpack.c.0.s8 %v3335
        %v3337 = vlaneseq
        %v3338 = vshrl.u32 %v3337, 7
        %v3339 = vsub.s32 %v3336, %v3338
        %v3340 = vrot.slane %v3325, %v3339
        %v3342 = vunpack.c.l.s4 1966171168
        %v3343 = vunpack.c.0.s8 %v3342
        %v3344 = vlaneseq
        %v3345 = vshrl.u32 %v3344, 7
        %v3346 = vsub.s32 %v3343, %v3345
        %v3347 = vrot.slane %v3326, %v3346
        %v3348 = vcombine.high %v3333, %v3333
        %v3349 = vcombine.high %v3347, %v3347
        %v3350 = vcombine.high %v3266, %v3266
        %v3352 = vunpack.c.l.s4 1966171168
        %v3353 = vunpack.c.0.s8 %v3352
        %v3354 = vlaneseq
        %v3355 = vshrl.u32 %v3354, 7
        %v3356 = vsub.s32 %v3353, %v3355
        %v3357 = vrot.slane %v3266, %v3356
        %v3359 = vunpack.c.l.s4 1966171168
        %v3360 = vunpack.c.0.s8 %v3359
        %v3361 = vlaneseq
        %v3362 = vshrl.u32 %v3361, 7
        %v3363 = vsub.s32 %v3360, %v3362
        %v3364 = vrot.slane %v3350, %v3363
        %v3365 = vcombine.high %v3357, %v3357
        %v3367 = vunpack.c.l.s4 1966171168
        %v3368 = vunpack.c.0.s8 %v3367
        %v3369 = vlaneseq
        %v3370 = vshrl.u32 %v3369, 7
        %v3371 = vsub.s32 %v3368, %v3370
        %v3372 = vrot.slane %v3357, %v3371
        %v3374 = vunpack.c.l.s4 1966171168
        %v3375 = vunpack.c.0.s8 %v3374
        %v3376 = vlaneseq
        %v3377 = vshrl.u32 %v3376, 7
        %v3378 = vsub.s32 %v3375, %v3377
        %v3379 = vrot.slane %v3364, %v3378
        %v3381 = vunpack.c.l.s4 1966171168
        %v3382 = vunpack.c.0.s8 %v3381
        %v3383 = vlaneseq
        %v3384 = vshrl.u32 %v3383, 7
        %v3385 = vsub.s32 %v3382, %v3384
        %v3386 = vrot.slane %v3365, %v3385
        %v3387 = vcombine.high %v3372, %v3372
        %v3388 = vcombine.high %v3386, %v3386
        %v3389 = vcombine.high %v3267, %v3267
        %v3391 = vunpack.c.l.s4 1966171168
        %v3392 = vunpack.c.0.s8 %v3391
        %v3393 = vlaneseq
        %v3394 = vshrl.u32 %v3393, 7
        %v3395 = vsub.s32 %v3392, %v3394
        %v3396 = vrot.slane %v3267, %v3395
        %v3398 = vunpack.c.l.s4 1966171168
        %v3399 = vunpack.c.0.s8 %v3398
        %v3400 = vlaneseq
        %v3401 = vshrl.u32 %v3400, 7
        %v3402 = vsub.s32 %v3399, %v3401
        %v3403 = vrot.slane %v3389, %v3402
        %v3404 = vcombine.high %v3396, %v3396
        %v3406 = vunpack.c.l.s4 1966171168
        %v3407 = vunpack.c.0.s8 %v3406
        %v3408 = vlaneseq
        %v3409 = vshrl.u32 %v3408, 7
        %v3410 = vsub.s32 %v3407, %v3409
        %v3411 = vrot.slane %v3396, %v3410
        %v3413 = vunpack.c.l.s4 1966171168
        %v3414 = vunpack.c.0.s8 %v3413
        %v3415 = vlaneseq
        %v3416 = vshrl.u32 %v3415, 7
        %v3417 = vsub.s32 %v3414, %v3416
        %v3418 = vrot.slane %v3403, %v3417
        %v3420 = vunpack.c.l.s4 1966171168
        %v3421 = vunpack.c.0.s8 %v3420
        %v3422 = vlaneseq
        %v3423 = vshrl.u32 %v3422, 7
        %v3424 = vsub.s32 %v3421, %v3423
        %v3425 = vrot.slane %v3404, %v3424
        %v3426 = vcombine.high %v3411, %v3411
        %v3427 = vcombine.high %v3425, %v3425
        %v3428 = vcombine.low %v3294, %v3308
        %v3429 = vcombine.low %v3309, %v3310
        %v3430 = vcombine.low %v3301, %v3333
        %v3431 = vcombine.low %v3347, %v3348
        %v3433 = vunpack.c.l.s4 1966171168
        %v3434 = vunpack.c.0.s8 %v3433
        %v3435 = vlaneseq
        %v3436 = vshrl.u32 %v3435, 7
        %v3437 = vsub.s32 %v3434, %v3436
        %v3438 = vrot.slane %v3428, %v3437
        %v3440 = vunpack.c.l.s4 1966171168
        %v3441 = vunpack.c.0.s8 %v3440
        %v3442 = vlaneseq
        %v3443 = vshrl.u32 %v3442, 7
        %v3444 = vsub.s32 %v3441, %v3443
        %v3445 = vrot.slane %v3429, %v3444
        %v3447 = vunpack.c.l.s4 1966171168
        %v3448 = vunpack.c.0.s8 %v3447
        %v3449 = vlaneseq
        %v3450 = vshrl.u32 %v3449, 7
        %v3451 = vsub.s32 %v3448, %v3450
        %v3452 = vrot.slane %v3430, %v3451
        %v3454 = vunpack.c.l.s4 1966171168
        %v3455 = vunpack.c.0.s8 %v3454
        %v3456 = vlaneseq
        %v3457 = vshrl.u32 %v3456, 7
        %v3458 = vsub.s32 %v3455, %v3457
        %v3459 = vrot.slane %v3431, %v3458
        %v3460 = vcombine.low %v3438, %v3445
        %v3461 = vcombine.low %v3452, %v3459
        %v3463 = vunpack.c.l.s4 1966171168
        %v3464 = vunpack.c.0.s8 %v3463
        %v3465 = vlaneseq
        %v3466 = vshrl.u32 %v3465, 7
        %v3467 = vsub.s32 %v3464, %v3466
        %v3468 = vrot.slane %v3460, %v3467
        %v3470 = vunpack.c.l.s4 1966171168
        %v3471 = vunpack.c.0.s8 %v3470
        %v3472 = vlaneseq
        %v3473 = vshrl.u32 %v3472, 7
        %v3474 = vsub.s32 %v3471, %v3473
        %v3475 = vrot.slane %v3461, %v3474
        %v3476 = vcombine.low %v3468, %v3475
        %v3477 = vcombine.low %v3349, %v3340
        %v3478 = vcombine.low %v3372, %v3386
        %v3479 = vcombine.low %v3387, %v3388
        %v3480 = vcombine.low %v3379, %v3411
        %v3482 = vunpack.c.l.s4 1966171168
        %v3483 = vunpack.c.0.s8 %v3482
        %v3484 = vlaneseq
        %v3485 = vshrl.u32 %v3484, 7
        %v3486 = vsub.s32 %v3483, %v3485
        %v3487 = vrot.slane %v3477, %v3486
        %v3489 = vunpack.c.l.s4 1966171168
        %v3490 = vunpack.c.0.s8 %v3489
        %v3491 = vlaneseq
        %v3492 = vshrl.u32 %v3491, 7
        %v3493 = vsub.s32 %v3490, %v3492
        %v3494 = vrot.slane %v3478, %v3493
        %v3496 = vunpack.c.l.s4 1966171168
        %v3497 = vunpack.c.0.s8 %v3496
        %v3498 = vlaneseq
        %v3499 = vshrl.u32 %v3498, 7
        %v3500 = vsub.s32 %v3497, %v3499
        %v3501 = vrot.slane %v3479, %v3500
        %v3503 = vunpack.c.l.s4 1966171168
        %v3504 = vunpack.c.0.s8 %v3503
        %v3505 = vlaneseq
        %v3506 = vshrl.u32 %v3505, 7
        %v3507 = vsub.s32 %v3504, %v3506
        %v3508 = vrot.slane %v3480, %v3507
        %v3509 = vcombine.low %v3487, %v3494
        %v3510 = vcombine.low %v3501, %v3508
        %v3512 = vunpack.c.l.s4 1966171168
        %v3513 = vunpack.c.0.s8 %v3512
        %v3514 = vlaneseq
        %v3515 = vshrl.u32 %v3514, 7
        %v3516 = vsub.s32 %v3513, %v3515
        %v3517 = vrot.slane %v3509, %v3516
        %v3519 = vunpack.c.l.s4 1966171168
        %v3520 = vunpack.c.0.s8 %v3519
        %v3521 = vlaneseq
        %v3522 = vshrl.u32 %v3521, 7
        %v3523 = vsub.s32 %v3520, %v3522
        %v3524 = vrot.slane %v3510, %v3523
        %v3525 = vcombine.low %v3517, %v3524
        %v3526 = vcombine.low %v3425, %v3426
        %v3527 = vcombine.low %v3427, %v3418
        %v3529 = vunpack.c.l.s4 1966171168
        %v3530 = vunpack.c.0.s8 %v3529
        %v3531 = vlaneseq
        %v3532 = vshrl.u32 %v3531, 7
        %v3533 = vsub.s32 %v3530, %v3532
        %v3534 = vrot.slane %v3526, %v3533
        %v3536 = vunpack.c.l.s4 1966171168
        %v3537 = vunpack.c.0.s8 %v3536
        %v3538 = vlaneseq
        %v3539 = vshrl.u32 %v3538, 7
        %v3540 = vsub.s32 %v3537, %v3539
        %v3541 = vrot.slane %v3527, %v3540
        %v3542 = vcombine.low %v3534, %v3541
        %v3544 = vunpack.c.l.s4 1966171168
        %v3545 = vunpack.c.0.s8 %v3544
        %v3546 = vlaneseq
        %v3547 = vshrl.u32 %v3546, 7
        %v3548 = vsub.s32 %v3545, %v3547
        %v3549 = vrot.slane %v3542, %v3548
        %3550 = vrot.lane.b32.xlu0 %v3476, 112
        %v3551 = vpop.permute.xlu0 %3550
        %3552 = vrot.lane.b32.xlu0 %v3525, 112
        %v3553 = vpop.permute.xlu0 %3552
        %3554 = vrot.lane.b32.xlu0 %v3549, 112
        %v3555 = vpop.permute.xlu0 %3554
        %v3556 = vsel %vm693, %v3551, 0
        %v3558 = vsel %vm693, %v3553, 0
        %v3560 = vsel %vm693, %v3555, 0
        %3562 = vmatprep.subr.mxu0 0.0
        %3563 = vmatpush1.msra.mxu0 %v556
        %3564 = vmatprep.subr.mxu0 0.0
        %3565 = vmatpush1.msra.mxu0 %v557
        %3566 = vmatprep.subr.mxu0 0.0
        %3567 = vmatpush1.msra.mxu0 0.0
        %3568 = vmatprep.subr.mxu0 0.0
        %3569 = vmatpush1.msra.mxu0 0.0
        %3570 = vmatprep.subr.mxu0 0.0
        %3571 = vmatpush1.msra.mxu0 0.0
        %3572 = vmatprep.subr.mxu0 0.0
        %3573 = vmatpush1.msra.mxu0 0.0
        %3574 = vmatprep.subr.mxu0 0.0
        %3575 = vmatpush1.msra.mxu0 0.0
        %3576 = vmatprep.subr.mxu0 0.0
        %3577 = vmatpush1.msra.mxu0 0.0
        %3578 = vmatprep.subr.mxu0 0.0
        %3579 = vmatpush1.msra.mxu0 0.0
        %3580 = vmatprep.subr.mxu0 0.0
        %3581 = vmatpush1.msra.mxu0 0.0
        %3582 = vmatprep.subr.mxu0 0.0
        %3583 = vmatpush1.msra.mxu0 0.0
        %3584 = vmatprep.subr.mxu0 0.0
        %3585 = vmatpush1.msra.mxu0 0.0
        %3586 = vmatprep.subr.mxu0 0.0
        %3587 = vmatpush1.msra.mxu0 0.0
        %3588 = vmatprep.subr.mxu0 0.0
        %3589 = vmatpush1.msra.mxu0 0.0
        %3590 = vmatprep.subr.mxu0 0.0
        %3591 = vmatpush1.msra.mxu0 0.0
        %3592 = vmatprep.subr.mxu0 0.0
        %3593 = vmatpush1.msra.mxu0 0.0
        %3594 = vmatprep.subr.mxu0 0.0
        %3595 = vmatpush1.msra.mxu0 0.0
        %3596 = vmatprep.subr.mxu0 0.0
        %3597 = vmatpush1.msra.mxu0 0.0
        %3598 = vmatprep.subr.mxu0 0.0
        %3599 = vmatpush1.msra.mxu0 0.0
        %3600 = vmatprep.subr.mxu0 0.0
        %3601 = vmatpush1.msra.mxu0 0.0
        %3602 = vmatprep.subr.mxu0 0.0
        %3603 = vmatpush1.msra.mxu0 0.0
        %3604 = vmatprep.subr.mxu0 0.0
        %3605 = vmatpush1.msra.mxu0 0.0
        %3606 = vmatprep.subr.mxu0 0.0
        %3607 = vmatpush1.msra.mxu0 0.0
        %3608 = vmatprep.subr.mxu0 0.0
        %3609 = vmatpush1.msra.mxu0 0.0
        %3610 = vmatprep.subr.mxu0 0.0
        %3611 = vmatpush1.msra.mxu0 0.0
        %3612 = vmatprep.subr.mxu0 0.0
        %3613 = vmatpush1.msra.mxu0 0.0
        %3614 = vmatprep.subr.mxu0 0.0
        %3615 = vmatpush1.msra.mxu0 0.0
        %3616 = vmatprep.subr.mxu0 0.0
        %3617 = vmatpush1.msra.mxu0 0.0
        %3618 = vmatprep.subr.mxu0 0.0
        %3619 = vmatpush1.msra.mxu0 0.0
        %3620 = vmatprep.subr.mxu0 0.0
        %3621 = vmatpush1.msra.mxu0 0.0
        %3622 = vmatprep.subr.mxu0 0.0
        %3623 = vmatpush1.msra.mxu0 0.0
        %3624 = vmatprep.subr.mxu0 0.0
        %3625 = vmatpush1.msra.mxu0 0.0
        %3626 = vmatprep.mubr.f32.mxu0 0.0
        %3627 = vmatmul.mubr.f32.gmra.mrb[0].mxu0 %v3556
        %v3628 = vpop.f32.mrb[0].mxu0
        %v3629 = vadd.f32 %v563, %v3628
        %v3630 = vpop.f32.mrb[0].mxu0
        %3631 = vmatprep.mubr.f32.mxu0 0.0
        %3632 = vmatmul.mubr.f32.gmra.mrb[0].mxu0 %v3558
        %v3633 = vpop.f32.mrb[0].mxu0
        %v3634 = vadd.f32 %v563, %v3633
        %v3635 = vpop.f32.mrb[0].mxu0
        %3636 = vmatprep.mubr.f32.mxu0 0.0
        %3637 = vmatmul.mubr.f32.gmra.mrb[0].mxu0 %v3560
        %v3638 = vpop.f32.mrb[0].mxu0
        %v3639 = vadd.f32 %v563, %v3638
        %v3640 = vpop.f32.mrb[0].mxu0
        %3641 = vdwg.mxu0
        %v3642 = vmax.f32 %v3629, 0.0
        %v3643 = vmax.f32 %v3634, 0.0
        %v3644 = vmax.f32 %v3639, 0.0
        %v3648 = vcombine.high %v3642, %v3642
        %v3650 = vunpack.c.l.s4 1966171168
        %v3651 = vunpack.c.0.s8 %v3650
        %v3652 = vlaneseq
        %v3653 = vshrl.u32 %v3652, 7
        %v3654 = vsub.s32 %v3651, %v3653
        %v3655 = vrot.slane %v3642, %v3654
        %v3657 = vunpack.c.l.s4 1966171168
        %v3658 = vunpack.c.0.s8 %v3657
        %v3659 = vlaneseq
        %v3660 = vshrl.u32 %v3659, 7
        %v3661 = vsub.s32 %v3658, %v3660
        %v3662 = vrot.slane %v3648, %v3661
        %v3663 = vcombine.high %v3655, %v3655
        %v3664 = vcombine.high %v3662, %v3662
        %v3666 = vunpack.c.l.s4 1966171168
        %v3667 = vunpack.c.0.s8 %v3666
        %v3668 = vlaneseq
        %v3669 = vshrl.u32 %v3668, 7
        %v3670 = vsub.s32 %v3667, %v3669
        %v3671 = vrot.slane %v3655, %v3670
        %v3673 = vunpack.c.l.s4 1966171168
        %v3674 = vunpack.c.0.s8 %v3673
        %v3675 = vlaneseq
        %v3676 = vshrl.u32 %v3675, 7
        %v3677 = vsub.s32 %v3674, %v3676
        %v3678 = vrot.slane %v3662, %v3677
        %v3680 = vunpack.c.l.s4 1966171168
        %v3681 = vunpack.c.0.s8 %v3680
        %v3682 = vlaneseq
        %v3683 = vshrl.u32 %v3682, 7
        %v3684 = vsub.s32 %v3681, %v3683
        %v3685 = vrot.slane %v3663, %v3684
        %v3687 = vunpack.c.l.s4 1966171168
        %v3688 = vunpack.c.0.s8 %v3687
        %v3689 = vlaneseq
        %v3690 = vshrl.u32 %v3689, 7
        %v3691 = vsub.s32 %v3688, %v3690
        %v3692 = vrot.slane %v3664, %v3691
        %v3693 = vcombine.high %v3671, %v3671
        %v3694 = vcombine.high %v3678, %v3678
        %v3695 = vcombine.high %v3685, %v3685
        %v3696 = vcombine.high %v3692, %v3692
        %v3697 = vcombine.high %v3643, %v3643
        %v3699 = vunpack.c.l.s4 1966171168
        %v3700 = vunpack.c.0.s8 %v3699
        %v3701 = vlaneseq
        %v3702 = vshrl.u32 %v3701, 7
        %v3703 = vsub.s32 %v3700, %v3702
        %v3704 = vrot.slane %v3643, %v3703
        %v3706 = vunpack.c.l.s4 1966171168
        %v3707 = vunpack.c.0.s8 %v3706
        %v3708 = vlaneseq
        %v3709 = vshrl.u32 %v3708, 7
        %v3710 = vsub.s32 %v3707, %v3709
        %v3711 = vrot.slane %v3697, %v3710
        %v3712 = vcombine.high %v3704, %v3704
        %v3713 = vcombine.high %v3711, %v3711
        %v3715 = vunpack.c.l.s4 1966171168
        %v3716 = vunpack.c.0.s8 %v3715
        %v3717 = vlaneseq
        %v3718 = vshrl.u32 %v3717, 7
        %v3719 = vsub.s32 %v3716, %v3718
        %v3720 = vrot.slane %v3704, %v3719
        %v3722 = vunpack.c.l.s4 1966171168
        %v3723 = vunpack.c.0.s8 %v3722
        %v3724 = vlaneseq
        %v3725 = vshrl.u32 %v3724, 7
        %v3726 = vsub.s32 %v3723, %v3725
        %v3727 = vrot.slane %v3711, %v3726
        %v3729 = vunpack.c.l.s4 1966171168
        %v3730 = vunpack.c.0.s8 %v3729
        %v3731 = vlaneseq
        %v3732 = vshrl.u32 %v3731, 7
        %v3733 = vsub.s32 %v3730, %v3732
        %v3734 = vrot.slane %v3712, %v3733
        %v3736 = vunpack.c.l.s4 1966171168
        %v3737 = vunpack.c.0.s8 %v3736
        %v3738 = vlaneseq
        %v3739 = vshrl.u32 %v3738, 7
        %v3740 = vsub.s32 %v3737, %v3739
        %v3741 = vrot.slane %v3713, %v3740
        %v3742 = vcombine.high %v3720, %v3720
        %v3743 = vcombine.high %v3727, %v3727
        %v3744 = vcombine.high %v3734, %v3734
        %v3745 = vcombine.high %v3741, %v3741
        %v3747 = vunpack.c.l.s4 1966171168
        %v3748 = vunpack.c.0.s8 %v3747
        %v3749 = vlaneseq
        %v3750 = vshrl.u32 %v3749, 7
        %v3751 = vsub.s32 %v3748, %v3750
        %v3752 = vrot.slane %v3644, %v3751
        %v3753 = vcombine.high %v3752, %v3752
        %v3755 = vunpack.c.l.s4 1966171168
        %v3756 = vunpack.c.0.s8 %v3755
        %v3757 = vlaneseq
        %v3758 = vshrl.u32 %v3757, 7
        %v3759 = vsub.s32 %v3756, %v3758
        %v3760 = vrot.slane %v3752, %v3759
        %v3762 = vunpack.c.l.s4 1966171168
        %v3763 = vunpack.c.0.s8 %v3762
        %v3764 = vlaneseq
        %v3765 = vshrl.u32 %v3764, 7
        %v3766 = vsub.s32 %v3763, %v3765
        %v3767 = vrot.slane %v3753, %v3766
        %v3768 = vcombine.high %v3760, %v3760
        %v3769 = vcombine.high %v3767, %v3767
        %v3794 = vlaneseq
        %v3795 = vshrl.u32 %v3794, 7
        %v3796 = vsub.s32 0, %v3795
        %v3797 = vrot.slane %v388, %v3796
        %v3798 = vlaneseq
        %v3799 = vshrl.u32 %v3798, 7
        %v3800 = vsub.s32 1, %v3799
        %v3801 = vrot.slane %v388, %v3800
        %v3802 = vlaneseq
        %v3803 = vshrl.u32 %v3802, 7
        %v3804 = vsub.s32 2, %v3803
        %v3805 = vrot.slane %v388, %v3804
        %v3806 = vlaneseq
        %v3807 = vshrl.u32 %v3806, 7
        %v3808 = vsub.s32 3, %v3807
        %v3809 = vrot.slane %v388, %v3808
        %v3810 = vlaneseq
        %v3811 = vshrl.u32 %v3810, 7
        %v3812 = vsub.s32 4, %v3811
        %v3813 = vrot.slane %v388, %v3812
        %v3814 = vlaneseq
        %v3815 = vshrl.u32 %v3814, 7
        %v3816 = vsub.s32 0, %v3815
        %v3817 = vrot.slane %v389, %v3816
        %v3818 = vlaneseq
        %v3819 = vshrl.u32 %v3818, 7
        %v3820 = vsub.s32 1, %v3819
        %v3821 = vrot.slane %v389, %v3820
        %v3822 = vlaneseq
        %v3823 = vshrl.u32 %v3822, 7
        %v3824 = vsub.s32 2, %v3823
        %v3825 = vrot.slane %v389, %v3824
        %v3826 = vlaneseq
        %v3827 = vshrl.u32 %v3826, 7
        %v3828 = vsub.s32 3, %v3827
        %v3829 = vrot.slane %v389, %v3828
        %v3830 = vlaneseq
        %v3831 = vshrl.u32 %v3830, 7
        %v3832 = vsub.s32 4, %v3831
        %v3833 = vrot.slane %v389, %v3832
        %v3834 = vlaneseq
        %v3835 = vshrl.u32 %v3834, 7
        %v3836 = vsub.s32 0, %v3835
        %v3837 = vrot.slane %v390, %v3836
        %v3838 = vlaneseq
        %v3839 = vshrl.u32 %v3838, 7
        %v3840 = vsub.s32 1, %v3839
        %v3841 = vrot.slane %v390, %v3840
        %v3842 = vlaneseq
        %v3843 = vshrl.u32 %v3842, 7
        %v3844 = vsub.s32 2, %v3843
        %v3845 = vrot.slane %v390, %v3844
        %v3846 = vlaneseq
        %v3847 = vshrl.u32 %v3846, 7
        %v3848 = vsub.s32 3, %v3847
        %v3849 = vrot.slane %v390, %v3848
        %v3850 = vlaneseq
        %v3851 = vshrl.u32 %v3850, 7
        %v3852 = vsub.s32 4, %v3851
        %v3853 = vrot.slane %v390, %v3852
        %v3854 = vlaneseq
        %v3855 = vshrl.u32 %v3854, 7
        %v3856 = vsub.s32 0, %v3855
        %v3857 = vrot.slane %v391, %v3856
        %v3858 = vlaneseq
        %v3859 = vshrl.u32 %v3858, 7
        %v3860 = vsub.s32 1, %v3859
        %v3861 = vrot.slane %v391, %v3860
        %v3862 = vlaneseq
        %v3863 = vshrl.u32 %v3862, 7
        %v3864 = vsub.s32 2, %v3863
        %v3865 = vrot.slane %v391, %v3864
        %v3866 = vlaneseq
        %v3867 = vshrl.u32 %v3866, 7
        %v3868 = vsub.s32 3, %v3867
        %v3869 = vrot.slane %v391, %v3868
        %v3870 = vlaneseq
        %v3871 = vshrl.u32 %v3870, 7
        %v3872 = vsub.s32 4, %v3871
        %v3873 = vrot.slane %v391, %v3872
        %v3894 = vmul.f32 %v3671, %v3797
        %v3895 = vmul.f32 %v3685, %v3801
        %v3896 = vmul.f32 %v3693, %v3805
        %v3897 = vmul.f32 %v3695, %v3809
        %v3898 = vmul.f32 %v3678, %v3813
        %v3899 = vmul.f32 %v3692, %v3817
        %v3900 = vmul.f32 %v3694, %v3821
        %v3901 = vmul.f32 %v3696, %v3825
        %v3902 = vmul.f32 %v3720, %v3829
        %v3903 = vmul.f32 %v3734, %v3833
        %v3904 = vmul.f32 %v3742, %v3837
        %v3905 = vmul.f32 %v3744, %v3841
        %v3906 = vmul.f32 %v3727, %v3845
        %v3907 = vmul.f32 %v3741, %v3849
        %v3908 = vmul.f32 %v3743, %v3853
        %v3909 = vmul.f32 %v3745, %v3857
        %v3910 = vmul.f32 %v3760, %v3861
        %v3911 = vmul.f32 %v3767, %v3865
        %v3912 = vmul.f32 %v3768, %v3869
        %v3913 = vmul.f32 %v3769, %v3873
        %s3914 = scalar_lea.vmem %s3, 6
        %v3915 = vld [vmem:[%s3914] sm:$0x1]
        %v3917 = vlaneseq
        %v3918 = vshrl.u32 %v3917, 7
        %v3919 = vsub.s32 0, %v3918
        %v3920 = vrot.slane %v3915, %v3919
        %v3922 = vmul.f32 %v3264, %v3920
        %v3923 = vmul.f32 %v3265, %v3920
        %v3924 = vmul.f32 %v3266, %v3920
        %v3925 = vmul.f32 %v3267, %v3920
        %v3926 = vadd.f32 %v3193, %v3922
        %v3927 = vadd.f32 %v3194, %v3923
        %v3928 = vadd.f32 %v3195, %v3924
        %v3929 = vadd.f32 %v3196, %v3925
        %s3930 = scalar_lea.vmem %s4, 6
        %v3931 = vld [vmem:[%s3930] sm:$0x1]
        %v3933 = vlaneseq
        %v3934 = vshrl.u32 %v3933, 7
        %v3935 = vsub.s32 0, %v3934
        %v3936 = vrot.slane %v3931, %v3935
        %v3938 = vunpack.c.l.s4 1966171168
        %v3939 = vunpack.c.0.s8 %v3938
        %v3940 = vlaneseq
        %v3941 = vshrl.u32 %v3940, 7
        %v3942 = vsub.s32 %v3939, %v3941
        %v3943 = vrot.slane %v3936, %v3942
        %v3944 = vcombine.high %v3943, %v3943
        %v3946 = vunpack.c.l.s4 1966171168
        %v3947 = vunpack.c.0.s8 %v3946
        %v3948 = vlaneseq
        %v3949 = vshrl.u32 %v3948, 7
        %v3950 = vsub.s32 %v3947, %v3949
        %v3951 = vrot.slane %v3943, %v3950
        %v3953 = vunpack.c.l.s4 1966171168
        %v3954 = vunpack.c.0.s8 %v3953
        %v3955 = vlaneseq
        %v3956 = vshrl.u32 %v3955, 7
        %v3957 = vsub.s32 %v3954, %v3956
        %v3958 = vrot.slane %v3944, %v3957
        %v3959 = vcombine.high %v3951, %v3951
        %v3960 = vcombine.high %v3958, %v3958
        %v3965 = vmul.f32 %v3894, %v3951
        %v3966 = vmul.f32 %v3895, %v3958
        %v3967 = vmul.f32 %v3896, %v3959
        %v3968 = vmul.f32 %v3897, %v3960
        %v3969 = vmul.f32 %v3899, %v3951
        %v3970 = vmul.f32 %v3900, %v3958
        %v3971 = vmul.f32 %v3901, %v3959
        %v3972 = vmul.f32 %v3902, %v3960
        %v3973 = vmul.f32 %v3904, %v3951
        %v3974 = vmul.f32 %v3905, %v3958
        %v3975 = vmul.f32 %v3906, %v3959
        %v3976 = vmul.f32 %v3907, %v3960
        %v3977 = vmul.f32 %v3909, %v3951
        %v3978 = vmul.f32 %v3910, %v3958
        %v3979 = vmul.f32 %v3911, %v3959
        %v3980 = vmul.f32 %v3912, %v3960
        %v3981 = vadd.f32 %v3248, %v3965
        %v3982 = vadd.f32 %v3249, %v3966
        %v3983 = vadd.f32 %v3250, %v3967
        %v3984 = vadd.f32 %v3251, %v3968
        %v3985 = vadd.f32 %v3252, %v3969
        %v3986 = vadd.f32 %v3253, %v3970
        %v3987 = vadd.f32 %v3254, %v3971
        %v3988 = vadd.f32 %v3255, %v3972
        %v3989 = vadd.f32 %v3256, %v3973
        %v3990 = vadd.f32 %v3257, %v3974
        %v3991 = vadd.f32 %v3258, %v3975
        %v3992 = vadd.f32 %v3259, %v3976
        %v3993 = vadd.f32 %v3260, %v3977
        %v3994 = vadd.f32 %v3261, %v3978
        %v3995 = vadd.f32 %v3262, %v3979
        %v3996 = vadd.f32 %v3263, %v3980
        %s3997 = scalar_lea.vmem %s3, 8
        %v3998 = vld [vmem:[%s3997] sm:$0x1]
        %v4000 = vlaneseq
        %v4001 = vshrl.u32 %v4000, 7
        %v4002 = vsub.s32 0, %v4001
        %v4003 = vrot.slane %v3998, %v4002
        %v4005 = vmul.f32 %v3264, %v4003
        %v4006 = vmul.f32 %v3265, %v4003
        %v4007 = vmul.f32 %v3266, %v4003
        %v4008 = vmul.f32 %v3267, %v4003
        %v4013 = vrot.slane %v4005, 1
        %v4014 = vrot.slane %v4006, 1
        %v4015 = vrot.slane %v4007, 1
        %v4016 = vrot.slane %v4008, 1
        %v4021 = vadd.f32 %v3926, %v4013
        %v4022 = vadd.f32 %v3927, %v4014
        %v4023 = vadd.f32 %v3928, %v4015
        %v4024 = vadd.f32 %v3929, %v4016
        %s4025 = scalar_lea.vmem %s4, 8
        %v4026 = vld [vmem:[%s4025] sm:$0x1]
        %v4028 = vlaneseq
        %v4029 = vshrl.u32 %v4028, 7
        %v4030 = vsub.s32 0, %v4029
        %v4031 = vrot.slane %v4026, %v4030
        %v4033 = vunpack.c.l.s4 1966171168
        %v4034 = vunpack.c.0.s8 %v4033
        %v4035 = vlaneseq
        %v4036 = vshrl.u32 %v4035, 7
        %v4037 = vsub.s32 %v4034, %v4036
        %v4038 = vrot.slane %v4031, %v4037
        %v4039 = vcombine.high %v4038, %v4038
        %v4041 = vunpack.c.l.s4 1966171168
        %v4042 = vunpack.c.0.s8 %v4041
        %v4043 = vlaneseq
        %v4044 = vshrl.u32 %v4043, 7
        %v4045 = vsub.s32 %v4042, %v4044
        %v4046 = vrot.slane %v4038, %v4045
        %v4048 = vunpack.c.l.s4 1966171168
        %v4049 = vunpack.c.0.s8 %v4048
        %v4050 = vlaneseq
        %v4051 = vshrl.u32 %v4050, 7
        %v4052 = vsub.s32 %v4049, %v4051
        %v4053 = vrot.slane %v4039, %v4052
        %v4054 = vcombine.high %v4046, %v4046
        %v4055 = vcombine.high %v4053, %v4053
        %v4060 = vmul.f32 %v3895, %v4046
        %v4061 = vmul.f32 %v3896, %v4053
        %v4062 = vmul.f32 %v3897, %v4054
        %v4063 = vmul.f32 %v3898, %v4055
        %v4064 = vmul.f32 %v3900, %v4046
        %v4065 = vmul.f32 %v3901, %v4053
        %v4066 = vmul.f32 %v3902, %v4054
        %v4067 = vmul.f32 %v3903, %v4055
        %v4068 = vmul.f32 %v3905, %v4046
        %v4069 = vmul.f32 %v3906, %v4053
        %v4070 = vmul.f32 %v3907, %v4054
        %v4071 = vmul.f32 %v3908, %v4055
        %v4072 = vmul.f32 %v3910, %v4046
        %v4073 = vmul.f32 %v3911, %v4053
        %v4074 = vmul.f32 %v3912, %v4054
        %v4075 = vmul.f32 %v3913, %v4055
        %v4076 = vadd.f32 %v3981, %v4060
        %v4077 = vadd.f32 %v3982, %v4061
        %v4078 = vadd.f32 %v3983, %v4062
        %v4079 = vadd.f32 %v3984, %v4063
        %v4080 = vadd.f32 %v3985, %v4064
        %v4081 = vadd.f32 %v3986, %v4065
        %v4082 = vadd.f32 %v3987, %v4066
        %v4083 = vadd.f32 %v3988, %v4067
        %v4084 = vadd.f32 %v3989, %v4068
        %v4085 = vadd.f32 %v3990, %v4069
        %v4086 = vadd.f32 %v3991, %v4070
        %v4087 = vadd.f32 %v3992, %v4071
        %v4088 = vadd.f32 %v3993, %v4072
        %v4089 = vadd.f32 %v3994, %v4073
        %v4090 = vadd.f32 %v3995, %v4074
        %v4091 = vadd.f32 %v3996, %v4075
        %v4092 = vld [vmem:[%s335 + $0x8] sm:$0x1f]
        %v4093 = vld [vmem:[%s335 + $0x18] sm:$0x1f]
        %v4094 = vld [vmem:[%s335 + $0x28] sm:$0x1f]
        %v4095 = vld [vmem:[%s335 + $0x38] sm:$0x1f]
        %v4100 = vcombine.high %v4092, %v4092
        %v4102 = vunpack.c.l.s4 1966171168
        %v4103 = vunpack.c.0.s8 %v4102
        %v4104 = vlaneseq
        %v4105 = vshrl.u32 %v4104, 7
        %v4106 = vsub.s32 %v4103, %v4105
        %v4107 = vrot.slane %v4092, %v4106
        %v4109 = vunpack.c.l.s4 1966171168
        %v4110 = vunpack.c.0.s8 %v4109
        %v4111 = vlaneseq
        %v4112 = vshrl.u32 %v4111, 7
        %v4113 = vsub.s32 %v4110, %v4112
        %v4114 = vrot.slane %v4100, %v4113
        %v4115 = vcombine.high %v4107, %v4107
        %v4117 = vunpack.c.l.s4 1966171168
        %v4118 = vunpack.c.0.s8 %v4117
        %v4119 = vlaneseq
        %v4120 = vshrl.u32 %v4119, 7
        %v4121 = vsub.s32 %v4118, %v4120
        %v4122 = vrot.slane %v4107, %v4121
        %v4124 = vunpack.c.l.s4 1966171168
        %v4125 = vunpack.c.0.s8 %v4124
        %v4126 = vlaneseq
        %v4127 = vshrl.u32 %v4126, 7
        %v4128 = vsub.s32 %v4125, %v4127
        %v4129 = vrot.slane %v4114, %v4128
        %v4131 = vunpack.c.l.s4 1966171168
        %v4132 = vunpack.c.0.s8 %v4131
        %v4133 = vlaneseq
        %v4134 = vshrl.u32 %v4133, 7
        %v4135 = vsub.s32 %v4132, %v4134
        %v4136 = vrot.slane %v4115, %v4135
        %v4137 = vcombine.high %v4122, %v4122
        %v4138 = vcombine.high %v4136, %v4136
        %v4139 = vcombine.high %v4093, %v4093
        %v4141 = vunpack.c.l.s4 1966171168
        %v4142 = vunpack.c.0.s8 %v4141
        %v4143 = vlaneseq
        %v4144 = vshrl.u32 %v4143, 7
        %v4145 = vsub.s32 %v4142, %v4144
        %v4146 = vrot.slane %v4093, %v4145
        %v4148 = vunpack.c.l.s4 1966171168
        %v4149 = vunpack.c.0.s8 %v4148
        %v4150 = vlaneseq
        %v4151 = vshrl.u32 %v4150, 7
        %v4152 = vsub.s32 %v4149, %v4151
        %v4153 = vrot.slane %v4139, %v4152
        %v4154 = vcombine.high %v4146, %v4146
        %v4156 = vunpack.c.l.s4 1966171168
        %v4157 = vunpack.c.0.s8 %v4156
        %v4158 = vlaneseq
        %v4159 = vshrl.u32 %v4158, 7
        %v4160 = vsub.s32 %v4157, %v4159
        %v4161 = vrot.slane %v4146, %v4160
        %v4163 = vunpack.c.l.s4 1966171168
        %v4164 = vunpack.c.0.s8 %v4163
        %v4165 = vlaneseq
        %v4166 = vshrl.u32 %v4165, 7
        %v4167 = vsub.s32 %v4164, %v4166
        %v4168 = vrot.slane %v4153, %v4167
        %v4170 = vunpack.c.l.s4 1966171168
        %v4171 = vunpack.c.0.s8 %v4170
        %v4172 = vlaneseq
        %v4173 = vshrl.u32 %v4172, 7
        %v4174 = vsub.s32 %v4171, %v4173
        %v4175 = vrot.slane %v4154, %v4174
        %v4176 = vcombine.high %v4161, %v4161
        %v4177 = vcombine.high %v4175, %v4175
        %v4178 = vcombine.high %v4094, %v4094
        %v4180 = vunpack.c.l.s4 1966171168
        %v4181 = vunpack.c.0.s8 %v4180
        %v4182 = vlaneseq
        %v4183 = vshrl.u32 %v4182, 7
        %v4184 = vsub.s32 %v4181, %v4183
        %v4185 = vrot.slane %v4094, %v4184
        %v4187 = vunpack.c.l.s4 1966171168
        %v4188 = vunpack.c.0.s8 %v4187
        %v4189 = vlaneseq
        %v4190 = vshrl.u32 %v4189, 7
        %v4191 = vsub.s32 %v4188, %v4190
        %v4192 = vrot.slane %v4178, %v4191
        %v4193 = vcombine.high %v4185, %v4185
        %v4195 = vunpack.c.l.s4 1966171168
        %v4196 = vunpack.c.0.s8 %v4195
        %v4197 = vlaneseq
        %v4198 = vshrl.u32 %v4197, 7
        %v4199 = vsub.s32 %v4196, %v4198
        %v4200 = vrot.slane %v4185, %v4199
        %v4202 = vunpack.c.l.s4 1966171168
        %v4203 = vunpack.c.0.s8 %v4202
        %v4204 = vlaneseq
        %v4205 = vshrl.u32 %v4204, 7
        %v4206 = vsub.s32 %v4203, %v4205
        %v4207 = vrot.slane %v4192, %v4206
        %v4209 = vunpack.c.l.s4 1966171168
        %v4210 = vunpack.c.0.s8 %v4209
        %v4211 = vlaneseq
        %v4212 = vshrl.u32 %v4211, 7
        %v4213 = vsub.s32 %v4210, %v4212
        %v4214 = vrot.slane %v4193, %v4213
        %v4215 = vcombine.high %v4200, %v4200
        %v4216 = vcombine.high %v4214, %v4214
        %v4217 = vcombine.high %v4095, %v4095
        %v4219 = vunpack.c.l.s4 1966171168
        %v4220 = vunpack.c.0.s8 %v4219
        %v4221 = vlaneseq
        %v4222 = vshrl.u32 %v4221, 7
        %v4223 = vsub.s32 %v4220, %v4222
        %v4224 = vrot.slane %v4095, %v4223
        %v4226 = vunpack.c.l.s4 1966171168
        %v4227 = vunpack.c.0.s8 %v4226
        %v4228 = vlaneseq
        %v4229 = vshrl.u32 %v4228, 7
        %v4230 = vsub.s32 %v4227, %v4229
        %v4231 = vrot.slane %v4217, %v4230
        %v4232 = vcombine.high %v4224, %v4224
        %v4234 = vunpack.c.l.s4 1966171168
        %v4235 = vunpack.c.0.s8 %v4234
        %v4236 = vlaneseq
        %v4237 = vshrl.u32 %v4236, 7
        %v4238 = vsub.s32 %v4235, %v4237
        %v4239 = vrot.slane %v4224, %v4238
        %v4241 = vunpack.c.l.s4 1966171168
        %v4242 = vunpack.c.0.s8 %v4241
        %v4243 = vlaneseq
        %v4244 = vshrl.u32 %v4243, 7
        %v4245 = vsub.s32 %v4242, %v4244
        %v4246 = vrot.slane %v4231, %v4245
        %v4248 = vunpack.c.l.s4 1966171168
        %v4249 = vunpack.c.0.s8 %v4248
        %v4250 = vlaneseq
        %v4251 = vshrl.u32 %v4250, 7
        %v4252 = vsub.s32 %v4249, %v4251
        %v4253 = vrot.slane %v4232, %v4252
        %v4254 = vcombine.high %v4239, %v4239
        %v4255 = vcombine.high %v4253, %v4253
        %v4256 = vcombine.low %v4122, %v4136
        %v4257 = vcombine.low %v4137, %v4138
        %v4258 = vcombine.low %v4129, %v4161
        %v4259 = vcombine.low %v4175, %v4176
        %v4261 = vunpack.c.l.s4 1966171168
        %v4262 = vunpack.c.0.s8 %v4261
        %v4263 = vlaneseq
        %v4264 = vshrl.u32 %v4263, 7
        %v4265 = vsub.s32 %v4262, %v4264
        %v4266 = vrot.slane %v4256, %v4265
        %v4268 = vunpack.c.l.s4 1966171168
        %v4269 = vunpack.c.0.s8 %v4268
        %v4270 = vlaneseq
        %v4271 = vshrl.u32 %v4270, 7
        %v4272 = vsub.s32 %v4269, %v4271
        %v4273 = vrot.slane %v4257, %v4272
        %v4275 = vunpack.c.l.s4 1966171168
        %v4276 = vunpack.c.0.s8 %v4275
        %v4277 = vlaneseq
        %v4278 = vshrl.u32 %v4277, 7
        %v4279 = vsub.s32 %v4276, %v4278
        %v4280 = vrot.slane %v4258, %v4279
        %v4282 = vunpack.c.l.s4 1966171168
        %v4283 = vunpack.c.0.s8 %v4282
        %v4284 = vlaneseq
        %v4285 = vshrl.u32 %v4284, 7
        %v4286 = vsub.s32 %v4283, %v4285
        %v4287 = vrot.slane %v4259, %v4286
        %v4288 = vcombine.low %v4266, %v4273
        %v4289 = vcombine.low %v4280, %v4287
        %v4291 = vunpack.c.l.s4 1966171168
        %v4292 = vunpack.c.0.s8 %v4291
        %v4293 = vlaneseq
        %v4294 = vshrl.u32 %v4293, 7
        %v4295 = vsub.s32 %v4292, %v4294
        %v4296 = vrot.slane %v4288, %v4295
        %v4298 = vunpack.c.l.s4 1966171168
        %v4299 = vunpack.c.0.s8 %v4298
        %v4300 = vlaneseq
        %v4301 = vshrl.u32 %v4300, 7
        %v4302 = vsub.s32 %v4299, %v4301
        %v4303 = vrot.slane %v4289, %v4302
        %v4304 = vcombine.low %v4296, %v4303
        %v4305 = vcombine.low %v4177, %v4168
        %v4306 = vcombine.low %v4200, %v4214
        %v4307 = vcombine.low %v4215, %v4216
        %v4308 = vcombine.low %v4207, %v4239
        %v4310 = vunpack.c.l.s4 1966171168
        %v4311 = vunpack.c.0.s8 %v4310
        %v4312 = vlaneseq
        %v4313 = vshrl.u32 %v4312, 7
        %v4314 = vsub.s32 %v4311, %v4313
        %v4315 = vrot.slane %v4305, %v4314
        %v4317 = vunpack.c.l.s4 1966171168
        %v4318 = vunpack.c.0.s8 %v4317
        %v4319 = vlaneseq
        %v4320 = vshrl.u32 %v4319, 7
        %v4321 = vsub.s32 %v4318, %v4320
        %v4322 = vrot.slane %v4306, %v4321
        %v4324 = vunpack.c.l.s4 1966171168
        %v4325 = vunpack.c.0.s8 %v4324
        %v4326 = vlaneseq
        %v4327 = vshrl.u32 %v4326, 7
        %v4328 = vsub.s32 %v4325, %v4327
        %v4329 = vrot.slane %v4307, %v4328
        %v4331 = vunpack.c.l.s4 1966171168
        %v4332 = vunpack.c.0.s8 %v4331
        %v4333 = vlaneseq
        %v4334 = vshrl.u32 %v4333, 7
        %v4335 = vsub.s32 %v4332, %v4334
        %v4336 = vrot.slane %v4308, %v4335
        %v4337 = vcombine.low %v4315, %v4322
        %v4338 = vcombine.low %v4329, %v4336
        %v4340 = vunpack.c.l.s4 1966171168
        %v4341 = vunpack.c.0.s8 %v4340
        %v4342 = vlaneseq
        %v4343 = vshrl.u32 %v4342, 7
        %v4344 = vsub.s32 %v4341, %v4343
        %v4345 = vrot.slane %v4337, %v4344
        %v4347 = vunpack.c.l.s4 1966171168
        %v4348 = vunpack.c.0.s8 %v4347
        %v4349 = vlaneseq
        %v4350 = vshrl.u32 %v4349, 7
        %v4351 = vsub.s32 %v4348, %v4350
        %v4352 = vrot.slane %v4338, %v4351
        %v4353 = vcombine.low %v4345, %v4352
        %v4354 = vcombine.low %v4253, %v4254
        %v4355 = vcombine.low %v4255, %v4246
        %v4357 = vunpack.c.l.s4 1966171168
        %v4358 = vunpack.c.0.s8 %v4357
        %v4359 = vlaneseq
        %v4360 = vshrl.u32 %v4359, 7
        %v4361 = vsub.s32 %v4358, %v4360
        %v4362 = vrot.slane %v4354, %v4361
        %v4364 = vunpack.c.l.s4 1966171168
        %v4365 = vunpack.c.0.s8 %v4364
        %v4366 = vlaneseq
        %v4367 = vshrl.u32 %v4366, 7
        %v4368 = vsub.s32 %v4365, %v4367
        %v4369 = vrot.slane %v4355, %v4368
        %v4370 = vcombine.low %v4362, %v4369
        %v4372 = vunpack.c.l.s4 1966171168
        %v4373 = vunpack.c.0.s8 %v4372
        %v4374 = vlaneseq
        %v4375 = vshrl.u32 %v4374, 7
        %v4376 = vsub.s32 %v4373, %v4375
        %v4377 = vrot.slane %v4370, %v4376
        %4378 = vrot.lane.b32.xlu0 %v4304, 80
        %v4379 = vpop.permute.xlu0 %4378
        %4380 = vrot.lane.b32.xlu0 %v4353, 80
        %v4381 = vpop.permute.xlu0 %4380
        %4382 = vrot.lane.b32.xlu0 %v4377, 80
        %v4383 = vpop.permute.xlu0 %4382
        %v4384 = vsel %vm693, %v4379, 0
        %v4386 = vsel %vm693, %v4381, 0
        %v4388 = vsel %vm693, %v4383, 0
        %4390 = vmatprep.subr.mxu0 0.0
        %4391 = vmatpush1.msra.mxu0 %v556
        %4392 = vmatprep.subr.mxu0 0.0
        %4393 = vmatpush1.msra.mxu0 %v557
        %4394 = vmatprep.subr.mxu0 0.0
        %4395 = vmatpush1.msra.mxu0 0.0
        %4396 = vmatprep.subr.mxu0 0.0
        %4397 = vmatpush1.msra.mxu0 0.0
        %4398 = vmatprep.subr.mxu0 0.0
        %4399 = vmatpush1.msra.mxu0 0.0
        %4400 = vmatprep.subr.mxu0 0.0
        %4401 = vmatpush1.msra.mxu0 0.0
        %4402 = vmatprep.subr.mxu0 0.0
        %4403 = vmatpush1.msra.mxu0 0.0
        %4404 = vmatprep.subr.mxu0 0.0
        %4405 = vmatpush1.msra.mxu0 0.0
        %4406 = vmatprep.subr.mxu0 0.0
        %4407 = vmatpush1.msra.mxu0 0.0
        %4408 = vmatprep.subr.mxu0 0.0
        %4409 = vmatpush1.msra.mxu0 0.0
        %4410 = vmatprep.subr.mxu0 0.0
        %4411 = vmatpush1.msra.mxu0 0.0
        %4412 = vmatprep.subr.mxu0 0.0
        %4413 = vmatpush1.msra.mxu0 0.0
        %4414 = vmatprep.subr.mxu0 0.0
        %4415 = vmatpush1.msra.mxu0 0.0
        %4416 = vmatprep.subr.mxu0 0.0
        %4417 = vmatpush1.msra.mxu0 0.0
        %4418 = vmatprep.subr.mxu0 0.0
        %4419 = vmatpush1.msra.mxu0 0.0
        %4420 = vmatprep.subr.mxu0 0.0
        %4421 = vmatpush1.msra.mxu0 0.0
        %4422 = vmatprep.subr.mxu0 0.0
        %4423 = vmatpush1.msra.mxu0 0.0
        %4424 = vmatprep.subr.mxu0 0.0
        %4425 = vmatpush1.msra.mxu0 0.0
        %4426 = vmatprep.subr.mxu0 0.0
        %4427 = vmatpush1.msra.mxu0 0.0
        %4428 = vmatprep.subr.mxu0 0.0
        %4429 = vmatpush1.msra.mxu0 0.0
        %4430 = vmatprep.subr.mxu0 0.0
        %4431 = vmatpush1.msra.mxu0 0.0
        %4432 = vmatprep.subr.mxu0 0.0
        %4433 = vmatpush1.msra.mxu0 0.0
        %4434 = vmatprep.subr.mxu0 0.0
        %4435 = vmatpush1.msra.mxu0 0.0
        %4436 = vmatprep.subr.mxu0 0.0
        %4437 = vmatpush1.msra.mxu0 0.0
        %4438 = vmatprep.subr.mxu0 0.0
        %4439 = vmatpush1.msra.mxu0 0.0
        %4440 = vmatprep.subr.mxu0 0.0
        %4441 = vmatpush1.msra.mxu0 0.0
        %4442 = vmatprep.subr.mxu0 0.0
        %4443 = vmatpush1.msra.mxu0 0.0
        %4444 = vmatprep.subr.mxu0 0.0
        %4445 = vmatpush1.msra.mxu0 0.0
        %4446 = vmatprep.subr.mxu0 0.0
        %4447 = vmatpush1.msra.mxu0 0.0
        %4448 = vmatprep.subr.mxu0 0.0
        %4449 = vmatpush1.msra.mxu0 0.0
        %4450 = vmatprep.subr.mxu0 0.0
        %4451 = vmatpush1.msra.mxu0 0.0
        %4452 = vmatprep.subr.mxu0 0.0
        %4453 = vmatpush1.msra.mxu0 0.0
        %4454 = vmatprep.mubr.f32.mxu0 0.0
        %4455 = vmatmul.mubr.f32.gmra.mrb[0].mxu0 %v4384
        %v4456 = vpop.f32.mrb[0].mxu0
        %v4457 = vadd.f32 %v563, %v4456
        %v4458 = vpop.f32.mrb[0].mxu0
        %4459 = vmatprep.mubr.f32.mxu0 0.0
        %4460 = vmatmul.mubr.f32.gmra.mrb[0].mxu0 %v4386
        %v4461 = vpop.f32.mrb[0].mxu0
        %v4462 = vadd.f32 %v563, %v4461
        %v4463 = vpop.f32.mrb[0].mxu0
        %4464 = vmatprep.mubr.f32.mxu0 0.0
        %4465 = vmatmul.mubr.f32.gmra.mrb[0].mxu0 %v4388
        %v4466 = vpop.f32.mrb[0].mxu0
        %v4467 = vadd.f32 %v563, %v4466
        %v4468 = vpop.f32.mrb[0].mxu0
        %4469 = vdwg.mxu0
        %v4470 = vmax.f32 %v4457, 0.0
        %v4471 = vmax.f32 %v4462, 0.0
        %v4472 = vmax.f32 %v4467, 0.0
        %v4476 = vcombine.high %v4470, %v4470
        %v4478 = vunpack.c.l.s4 1966171168
        %v4479 = vunpack.c.0.s8 %v4478
        %v4480 = vlaneseq
        %v4481 = vshrl.u32 %v4480, 7
        %v4482 = vsub.s32 %v4479, %v4481
        %v4483 = vrot.slane %v4470, %v4482
        %v4485 = vunpack.c.l.s4 1966171168
        %v4486 = vunpack.c.0.s8 %v4485
        %v4487 = vlaneseq
        %v4488 = vshrl.u32 %v4487, 7
        %v4489 = vsub.s32 %v4486, %v4488
        %v4490 = vrot.slane %v4476, %v4489
        %v4491 = vcombine.high %v4483, %v4483
        %v4492 = vcombine.high %v4490, %v4490
        %v4494 = vunpack.c.l.s4 1966171168
        %v4495 = vunpack.c.0.s8 %v4494
        %v4496 = vlaneseq
        %v4497 = vshrl.u32 %v4496, 7
        %v4498 = vsub.s32 %v4495, %v4497
        %v4499 = vrot.slane %v4483, %v4498
        %v4501 = vunpack.c.l.s4 1966171168
        %v4502 = vunpack.c.0.s8 %v4501
        %v4503 = vlaneseq
        %v4504 = vshrl.u32 %v4503, 7
        %v4505 = vsub.s32 %v4502, %v4504
        %v4506 = vrot.slane %v4490, %v4505
        %v4508 = vunpack.c.l.s4 1966171168
        %v4509 = vunpack.c.0.s8 %v4508
        %v4510 = vlaneseq
        %v4511 = vshrl.u32 %v4510, 7
        %v4512 = vsub.s32 %v4509, %v4511
        %v4513 = vrot.slane %v4491, %v4512
        %v4515 = vunpack.c.l.s4 1966171168
        %v4516 = vunpack.c.0.s8 %v4515
        %v4517 = vlaneseq
        %v4518 = vshrl.u32 %v4517, 7
        %v4519 = vsub.s32 %v4516, %v4518
        %v4520 = vrot.slane %v4492, %v4519
        %v4521 = vcombine.high %v4499, %v4499
        %v4522 = vcombine.high %v4506, %v4506
        %v4523 = vcombine.high %v4513, %v4513
        %v4524 = vcombine.high %v4520, %v4520
        %v4525 = vcombine.high %v4471, %v4471
        %v4527 = vunpack.c.l.s4 1966171168
        %v4528 = vunpack.c.0.s8 %v4527
        %v4529 = vlaneseq
        %v4530 = vshrl.u32 %v4529, 7
        %v4531 = vsub.s32 %v4528, %v4530
        %v4532 = vrot.slane %v4471, %v4531
        %v4534 = vunpack.c.l.s4 1966171168
        %v4535 = vunpack.c.0.s8 %v4534
        %v4536 = vlaneseq
        %v4537 = vshrl.u32 %v4536, 7
        %v4538 = vsub.s32 %v4535, %v4537
        %v4539 = vrot.slane %v4525, %v4538
        %v4540 = vcombine.high %v4532, %v4532
        %v4541 = vcombine.high %v4539, %v4539
        %v4543 = vunpack.c.l.s4 1966171168
        %v4544 = vunpack.c.0.s8 %v4543
        %v4545 = vlaneseq
        %v4546 = vshrl.u32 %v4545, 7
        %v4547 = vsub.s32 %v4544, %v4546
        %v4548 = vrot.slane %v4532, %v4547
        %v4550 = vunpack.c.l.s4 1966171168
        %v4551 = vunpack.c.0.s8 %v4550
        %v4552 = vlaneseq
        %v4553 = vshrl.u32 %v4552, 7
        %v4554 = vsub.s32 %v4551, %v4553
        %v4555 = vrot.slane %v4539, %v4554
        %v4557 = vunpack.c.l.s4 1966171168
        %v4558 = vunpack.c.0.s8 %v4557
        %v4559 = vlaneseq
        %v4560 = vshrl.u32 %v4559, 7
        %v4561 = vsub.s32 %v4558, %v4560
        %v4562 = vrot.slane %v4540, %v4561
        %v4564 = vunpack.c.l.s4 1966171168
        %v4565 = vunpack.c.0.s8 %v4564
        %v4566 = vlaneseq
        %v4567 = vshrl.u32 %v4566, 7
        %v4568 = vsub.s32 %v4565, %v4567
        %v4569 = vrot.slane %v4541, %v4568
        %v4570 = vcombine.high %v4548, %v4548
        %v4571 = vcombine.high %v4562, %v4562
        %v4572 = vcombine.high %v4569, %v4569
        %v4574 = vunpack.c.l.s4 1966171168
        %v4575 = vunpack.c.0.s8 %v4574
        %v4576 = vlaneseq
        %v4577 = vshrl.u32 %v4576, 7
        %v4578 = vsub.s32 %v4575, %v4577
        %v4579 = vrot.slane %v4472, %v4578
        %v4580 = vcombine.high %v4579, %v4579
        %v4582 = vunpack.c.l.s4 1966171168
        %v4583 = vunpack.c.0.s8 %v4582
        %v4584 = vlaneseq
        %v4585 = vshrl.u32 %v4584, 7
        %v4586 = vsub.s32 %v4583, %v4585
        %v4587 = vrot.slane %v4579, %v4586
        %v4589 = vunpack.c.l.s4 1966171168
        %v4590 = vunpack.c.0.s8 %v4589
        %v4591 = vlaneseq
        %v4592 = vshrl.u32 %v4591, 7
        %v4593 = vsub.s32 %v4590, %v4592
        %v4594 = vrot.slane %v4580, %v4593
        %v4595 = vcombine.high %v4587, %v4587
        %v4612 = vmul.f32 %v4499, %v373
        %v4613 = vmul.f32 %v4513, %v373
        %v4614 = vmul.f32 %v4521, %v373
        %v4615 = vmul.f32 %v4523, %v373
        %v4616 = vmul.f32 %v4520, %v374
        %v4617 = vmul.f32 %v4522, %v374
        %v4618 = vmul.f32 %v4524, %v374
        %v4619 = vmul.f32 %v4548, %v374
        %v4620 = vmul.f32 %v4570, %v375
        %v4621 = vmul.f32 %v4571, %v375
        %v4622 = vmul.f32 %v4555, %v375
        %v4623 = vmul.f32 %v4569, %v375
        %v4624 = vmul.f32 %v4572, %v376
        %v4625 = vmul.f32 %v4587, %v376
        %v4626 = vmul.f32 %v4594, %v376
        %v4627 = vmul.f32 %v4595, %v376
        %s4628 = scalar_lea.vmem %s3, 7
        %v4629 = vld [vmem:[%s4628] sm:$0x1]
        %v4631 = vlaneseq
        %v4632 = vshrl.u32 %v4631, 7
        %v4633 = vsub.s32 0, %v4632
        %v4634 = vrot.slane %v4629, %v4633
        %4635 = vrot.lane.b32.xlu0 %v4634, 32
        %v4636 = vpop.permute.xlu0 %4635
        %v4638 = vmul.f32 %v4092, %v4636
        %v4639 = vmul.f32 %v4093, %v4636
        %v4640 = vmul.f32 %v4094, %v4636
        %v4641 = vmul.f32 %v4095, %v4636
        %4646 = vrot.lane.b32.xlu0 %v4638, 96
        %v4647 = vpop.permute.xlu0 %4646
        %4648 = vrot.lane.b32.xlu0 %v4639, 96
        %v4649 = vpop.permute.xlu0 %4648
        %4650 = vrot.lane.b32.xlu0 %v4640, 96
        %v4651 = vpop.permute.xlu0 %4650
        %4652 = vrot.lane.b32.xlu0 %v4641, 96
        %v4653 = vpop.permute.xlu0 %4652
        %v4658 = vadd.f32 %v4021, %v4647
        %v4659 = vadd.f32 %v4022, %v4649
        %v4660 = vadd.f32 %v4023, %v4651
        %v4661 = vadd.f32 %v4024, %v4653
        %s4662 = scalar_lea.vmem %s4, 7
        %v4663 = vld [vmem:[%s4662] sm:$0x1]
        %v4665 = vlaneseq
        %v4666 = vshrl.u32 %v4665, 7
        %v4667 = vsub.s32 0, %v4666
        %v4668 = vrot.slane %v4663, %v4667
        %v4670 = vunpack.c.l.s4 1966171168
        %v4671 = vunpack.c.0.s8 %v4670
        %v4672 = vlaneseq
        %v4673 = vshrl.u32 %v4672, 7
        %v4674 = vsub.s32 %v4671, %v4673
        %v4675 = vrot.slane %v4668, %v4674
        %v4676 = vcombine.high %v4675, %v4675
        %v4678 = vunpack.c.l.s4 1966171168
        %v4679 = vunpack.c.0.s8 %v4678
        %v4680 = vlaneseq
        %v4681 = vshrl.u32 %v4680, 7
        %v4682 = vsub.s32 %v4679, %v4681
        %v4683 = vrot.slane %v4675, %v4682
        %v4685 = vunpack.c.l.s4 1966171168
        %v4686 = vunpack.c.0.s8 %v4685
        %v4687 = vlaneseq
        %v4688 = vshrl.u32 %v4687, 7
        %v4689 = vsub.s32 %v4686, %v4688
        %v4690 = vrot.slane %v4676, %v4689
        %v4691 = vcombine.high %v4683, %v4683
        %v4692 = vcombine.high %v4690, %v4690
        %v4697 = vmul.f32 %v4612, %v4683
        %v4698 = vmul.f32 %v4613, %v4690
        %v4699 = vmul.f32 %v4614, %v4691
        %v4700 = vmul.f32 %v4615, %v4692
        %v4701 = vmul.f32 %v4616, %v4683
        %v4702 = vmul.f32 %v4617, %v4690
        %v4703 = vmul.f32 %v4618, %v4691
        %v4704 = vmul.f32 %v4619, %v4692
        %v4705 = vmul.f32 %v4620, %v4683
        %v4706 = vmul.f32 %v4621, %v4690
        %v4707 = vmul.f32 %v4622, %v4691
        %v4708 = vmul.f32 %v4623, %v4692
        %v4709 = vmul.f32 %v4624, %v4683
        %v4710 = vmul.f32 %v4625, %v4690
        %v4711 = vmul.f32 %v4626, %v4691
        %v4712 = vmul.f32 %v4627, %v4692
        %v4713 = vadd.f32 %v4076, %v4697
        %v4714 = vadd.f32 %v4077, %v4698
        %v4715 = vadd.f32 %v4078, %v4699
        %v4716 = vadd.f32 %v4079, %v4700
        %v4717 = vadd.f32 %v4080, %v4701
        %v4718 = vadd.f32 %v4081, %v4702
        %v4719 = vadd.f32 %v4082, %v4703
        %v4720 = vadd.f32 %v4083, %v4704
        %v4721 = vadd.f32 %v4084, %v4705
        %v4722 = vadd.f32 %v4085, %v4706
        %v4723 = vadd.f32 %v4086, %v4707
        %v4724 = vadd.f32 %v4087, %v4708
        %v4725 = vadd.f32 %v4088, %v4709
        %v4726 = vadd.f32 %v4089, %v4710
        %v4727 = vadd.f32 %v4090, %v4711
        %v4728 = vadd.f32 %v4091, %v4712
        %v4729 = vld [vmem:[%s5] sm:$0xff]
        %v4730 = vld [vmem:[%s5 + $0x8] sm:$0xff]
        %v4731 = vld [vmem:[%s6] sm:$0xff]
        %v4732 = vld [vmem:[%s6 + $0x8] sm:$0xff]
        %v4733 = vld [vmem:[%s6 + $0x10] sm:$0xff]
        %v4734 = vld [vmem:[%s6 + $0x18] sm:$0xff]
        %v4751 = vcombine.low %v4713, %v4714
        %v4752 = vcombine.low %v4715, %v4716
        %v4753 = vcombine.low %v4717, %v4718
        %v4754 = vcombine.low %v4719, %v4720
        %v4756 = vunpack.c.l.s4 1966171168
        %v4757 = vunpack.c.0.s8 %v4756
        %v4758 = vlaneseq
        %v4759 = vshrl.u32 %v4758, 7
        %v4760 = vsub.s32 %v4757, %v4759
        %v4761 = vrot.slane %v4751, %v4760
        %v4763 = vunpack.c.l.s4 1966171168
        %v4764 = vunpack.c.0.s8 %v4763
        %v4765 = vlaneseq
        %v4766 = vshrl.u32 %v4765, 7
        %v4767 = vsub.s32 %v4764, %v4766
        %v4768 = vrot.slane %v4752, %v4767
        %v4770 = vunpack.c.l.s4 1966171168
        %v4771 = vunpack.c.0.s8 %v4770
        %v4772 = vlaneseq
        %v4773 = vshrl.u32 %v4772, 7
        %v4774 = vsub.s32 %v4771, %v4773
        %v4775 = vrot.slane %v4753, %v4774
        %v4777 = vunpack.c.l.s4 1966171168
        %v4778 = vunpack.c.0.s8 %v4777
        %v4779 = vlaneseq
        %v4780 = vshrl.u32 %v4779, 7
        %v4781 = vsub.s32 %v4778, %v4780
        %v4782 = vrot.slane %v4754, %v4781
        %v4783 = vcombine.low %v4761, %v4768
        %v4784 = vcombine.low %v4775, %v4782
        %v4786 = vunpack.c.l.s4 1966171168
        %v4787 = vunpack.c.0.s8 %v4786
        %v4788 = vlaneseq
        %v4789 = vshrl.u32 %v4788, 7
        %v4790 = vsub.s32 %v4787, %v4789
        %v4791 = vrot.slane %v4783, %v4790
        %v4793 = vunpack.c.l.s4 1966171168
        %v4794 = vunpack.c.0.s8 %v4793
        %v4795 = vlaneseq
        %v4796 = vshrl.u32 %v4795, 7
        %v4797 = vsub.s32 %v4794, %v4796
        %v4798 = vrot.slane %v4784, %v4797
        %v4799 = vcombine.low %v4791, %v4798
        %v4800 = vcombine.low %v4721, %v4722
        %v4801 = vcombine.low %v4723, %v4724
        %v4802 = vcombine.low %v4725, %v4726
        %v4803 = vcombine.low %v4727, %v4728
        %v4805 = vunpack.c.l.s4 1966171168
        %v4806 = vunpack.c.0.s8 %v4805
        %v4807 = vlaneseq
        %v4808 = vshrl.u32 %v4807, 7
        %v4809 = vsub.s32 %v4806, %v4808
        %v4810 = vrot.slane %v4800, %v4809
        %v4812 = vunpack.c.l.s4 1966171168
        %v4813 = vunpack.c.0.s8 %v4812
        %v4814 = vlaneseq
        %v4815 = vshrl.u32 %v4814, 7
        %v4816 = vsub.s32 %v4813, %v4815
        %v4817 = vrot.slane %v4801, %v4816
        %v4819 = vunpack.c.l.s4 1966171168
        %v4820 = vunpack.c.0.s8 %v4819
        %v4821 = vlaneseq
        %v4822 = vshrl.u32 %v4821, 7
        %v4823 = vsub.s32 %v4820, %v4822
        %v4824 = vrot.slane %v4802, %v4823
        %v4826 = vunpack.c.l.s4 1966171168
        %v4827 = vunpack.c.0.s8 %v4826
        %v4828 = vlaneseq
        %v4829 = vshrl.u32 %v4828, 7
        %v4830 = vsub.s32 %v4827, %v4829
        %v4831 = vrot.slane %v4803, %v4830
        %v4832 = vcombine.low %v4810, %v4817
        %v4833 = vcombine.low %v4824, %v4831
        %v4835 = vunpack.c.l.s4 1966171168
        %v4836 = vunpack.c.0.s8 %v4835
        %v4837 = vlaneseq
        %v4838 = vshrl.u32 %v4837, 7
        %v4839 = vsub.s32 %v4836, %v4838
        %v4840 = vrot.slane %v4832, %v4839
        %v4842 = vunpack.c.l.s4 1966171168
        %v4843 = vunpack.c.0.s8 %v4842
        %v4844 = vlaneseq
        %v4845 = vshrl.u32 %v4844, 7
        %v4846 = vsub.s32 %v4843, %v4845
        %v4847 = vrot.slane %v4833, %v4846
        %v4848 = vcombine.low %v4840, %v4847
        %vm4849 = vcmask 261120
        %v4850 = vsel %vm4849, %v4799, 0
        %v4852 = vsel %vm4849, %v4848, 0
        %4854 = vmatprep.subr.mxu0 0.0
        %4855 = vmatpush1.msra.mxu0 %v4731
        %4856 = vmatprep.subr.mxu0 0.0
        %4857 = vmatpush1.msra.mxu0 %v4732
        %4858 = vmatprep.subr.mxu0 0.0
        %4859 = vmatpush1.msra.mxu0 %v4733
        %4860 = vmatprep.subr.mxu0 0.0
        %4861 = vmatpush1.msra.mxu0 %v4734
        %4862 = vmatprep.subr.mxu0 0.0
        %4863 = vmatpush1.msra.mxu0 0.0
        %4864 = vmatprep.subr.mxu0 0.0
        %4865 = vmatpush1.msra.mxu0 0.0
        %4866 = vmatprep.subr.mxu0 0.0
        %4867 = vmatpush1.msra.mxu0 0.0
        %4868 = vmatprep.subr.mxu0 0.0
        %4869 = vmatpush1.msra.mxu0 0.0
        %4870 = vmatprep.subr.mxu0 0.0
        %4871 = vmatpush1.msra.mxu0 0.0
        %4872 = vmatprep.subr.mxu0 0.0
        %4873 = vmatpush1.msra.mxu0 0.0
        %4874 = vmatprep.subr.mxu0 0.0
        %4875 = vmatpush1.msra.mxu0 0.0
        %4876 = vmatprep.subr.mxu0 0.0
        %4877 = vmatpush1.msra.mxu0 0.0
        %4878 = vmatprep.subr.mxu0 0.0
        %4879 = vmatpush1.msra.mxu0 0.0
        %4880 = vmatprep.subr.mxu0 0.0
        %4881 = vmatpush1.msra.mxu0 0.0
        %4882 = vmatprep.subr.mxu0 0.0
        %4883 = vmatpush1.msra.mxu0 0.0
        %4884 = vmatprep.subr.mxu0 0.0
        %4885 = vmatpush1.msra.mxu0 0.0
        %4886 = vmatprep.subr.mxu0 0.0
        %4887 = vmatpush1.msra.mxu0 0.0
        %4888 = vmatprep.subr.mxu0 0.0
        %4889 = vmatpush1.msra.mxu0 0.0
        %4890 = vmatprep.subr.mxu0 0.0
        %4891 = vmatpush1.msra.mxu0 0.0
        %4892 = vmatprep.subr.mxu0 0.0
        %4893 = vmatpush1.msra.mxu0 0.0
        %4894 = vmatprep.subr.mxu0 0.0
        %4895 = vmatpush1.msra.mxu0 0.0
        %4896 = vmatprep.subr.mxu0 0.0
        %4897 = vmatpush1.msra.mxu0 0.0
        %4898 = vmatprep.subr.mxu0 0.0
        %4899 = vmatpush1.msra.mxu0 0.0
        %4900 = vmatprep.subr.mxu0 0.0
        %4901 = vmatpush1.msra.mxu0 0.0
        %4902 = vmatprep.subr.mxu0 0.0
        %4903 = vmatpush1.msra.mxu0 0.0
        %4904 = vmatprep.subr.mxu0 0.0
        %4905 = vmatpush1.msra.mxu0 0.0
        %4906 = vmatprep.subr.mxu0 0.0
        %4907 = vmatpush1.msra.mxu0 0.0
        %4908 = vmatprep.subr.mxu0 0.0
        %4909 = vmatpush1.msra.mxu0 0.0
        %4910 = vmatprep.subr.mxu0 0.0
        %4911 = vmatpush1.msra.mxu0 0.0
        %4912 = vmatprep.subr.mxu0 0.0
        %4913 = vmatpush1.msra.mxu0 0.0
        %4914 = vmatprep.subr.mxu0 0.0
        %4915 = vmatpush1.msra.mxu0 0.0
        %4916 = vmatprep.subr.mxu0 0.0
        %4917 = vmatpush1.msra.mxu0 0.0
        %4918 = vmatprep.mubr.f32.mxu0 0.0
        %4919 = vmatmul.mubr.f32.gmra.mrb[0].mxu0 %v4850
        %v4920 = vpop.f32.mrb[0].mxu0
        %v4921 = vadd.f32 0.0, %v4920
        %v4922 = vpop.f32.mrb[0].mxu0
        %4923 = vmatprep.mubr.f32.mxu0 0.0
        %4924 = vmatmul.mubr.f32.gmra.mrb[0].mxu0 %v4852
        %v4925 = vpop.f32.mrb[0].mxu0
        %v4926 = vadd.f32 0.0, %v4925
        %v4927 = vpop.f32.mrb[0].mxu0
        %4928 = vdwg.mxu0
        %v4933 = vcombine.low %v4658, %v4659
        %v4934 = vcombine.low %v4660, %v4661
        %v4935 = vsel %vm693, %v4933, 0
        %v4937 = vsel %vm693, %v4934, 0
        %4939 = vmatprep.subr.mxu0 0.0
        %4940 = vmatpush1.msra.mxu0 %v4729
        %4941 = vmatprep.subr.mxu0 0.0
        %4942 = vmatpush1.msra.mxu0 %v4730
        %4943 = vmatprep.subr.mxu0 0.0
        %4944 = vmatpush1.msra.mxu0 0.0
        %4945 = vmatprep.subr.mxu0 0.0
        %4946 = vmatpush1.msra.mxu0 0.0
        %4947 = vmatprep.subr.mxu0 0.0
        %4948 = vmatpush1.msra.mxu0 0.0
        %4949 = vmatprep.subr.mxu0 0.0
        %4950 = vmatpush1.msra.mxu0 0.0
        %4951 = vmatprep.subr.mxu0 0.0
        %4952 = vmatpush1.msra.mxu0 0.0
        %4953 = vmatprep.subr.mxu0 0.0
        %4954 = vmatpush1.msra.mxu0 0.0
        %4955 = vmatprep.subr.mxu0 0.0
        %4956 = vmatpush1.msra.mxu0 0.0
        %4957 = vmatprep.subr.mxu0 0.0
        %4958 = vmatpush1.msra.mxu0 0.0
        %4959 = vmatprep.subr.mxu0 0.0
        %4960 = vmatpush1.msra.mxu0 0.0
        %4961 = vmatprep.subr.mxu0 0.0
        %4962 = vmatpush1.msra.mxu0 0.0
        %4963 = vmatprep.subr.mxu0 0.0
        %4964 = vmatpush1.msra.mxu0 0.0
        %4965 = vmatprep.subr.mxu0 0.0
        %4966 = vmatpush1.msra.mxu0 0.0
        %4967 = vmatprep.subr.mxu0 0.0
        %4968 = vmatpush1.msra.mxu0 0.0
        %4969 = vmatprep.subr.mxu0 0.0
        %4970 = vmatpush1.msra.mxu0 0.0
        %4971 = vmatprep.subr.mxu0 0.0
        %4972 = vmatpush1.msra.mxu0 0.0
        %4973 = vmatprep.subr.mxu0 0.0
        %4974 = vmatpush1.msra.mxu0 0.0
        %4975 = vmatprep.subr.mxu0 0.0
        %4976 = vmatpush1.msra.mxu0 0.0
        %4977 = vmatprep.subr.mxu0 0.0
        %4978 = vmatpush1.msra.mxu0 0.0
        %4979 = vmatprep.subr.mxu0 0.0
        %4980 = vmatpush1.msra.mxu0 0.0
        %4981 = vmatprep.subr.mxu0 0.0
        %4982 = vmatpush1.msra.mxu0 0.0
        %4983 = vmatprep.subr.mxu0 0.0
        %4984 = vmatpush1.msra.mxu0 0.0
        %4985 = vmatprep.subr.mxu0 0.0
        %4986 = vmatpush1.msra.mxu0 0.0
        %4987 = vmatprep.subr.mxu0 0.0
        %4988 = vmatpush1.msra.mxu0 0.0
        %4989 = vmatprep.subr.mxu0 0.0
        %4990 = vmatpush1.msra.mxu0 0.0
        %4991 = vmatprep.subr.mxu0 0.0
        %4992 = vmatpush1.msra.mxu0 0.0
        %4993 = vmatprep.subr.mxu0 0.0
        %4994 = vmatpush1.msra.mxu0 0.0
        %4995 = vmatprep.subr.mxu0 0.0
        %4996 = vmatpush1.msra.mxu0 0.0
        %4997 = vmatprep.subr.mxu0 0.0
        %4998 = vmatpush1.msra.mxu0 0.0
        %4999 = vmatprep.subr.mxu0 0.0
        %5000 = vmatpush1.msra.mxu0 0.0
        %5001 = vmatprep.subr.mxu0 0.0
        %5002 = vmatpush1.msra.mxu0 0.0
        %5003 = vmatprep.mubr.f32.mxu0 0.0
        %5004 = vmatmul.mubr.f32.gmra.mrb[0].mxu0 %v4935
        %v5005 = vpop.f32.mrb[0].mxu0
        %v5006 = vadd.f32 %v4921, %v5005
        %v5007 = vpop.f32.mrb[0].mxu0
        %5008 = vmatprep.mubr.f32.mxu0 0.0
        %5009 = vmatmul.mubr.f32.gmra.mrb[0].mxu0 %v4937
        %v5010 = vpop.f32.mrb[0].mxu0
        %v5011 = vadd.f32 %v4926, %v5010
        %v5012 = vpop.f32.mrb[0].mxu0
        %5013 = vdwg.mxu0
        %v5014 = vld [vmem:[%s7] sm:$0x1]
        %v5016 = vlaneseq
        %v5017 = vshrl.u32 %v5016, 7
        %v5018 = vsub.s32 0, %v5017
        %v5019 = vrot.slane %v5014, %v5018
        %v5021 = vadd.f32 %v5006, %v5019
        %v5022 = vadd.f32 %v5011, %v5019
        %v5023 = vmax.f32 %v5021, 0.0
        %v5024 = vmax.f32 %v5022, 0.0
        %v5027 = vcombine.high %v5023, %v5023
        %v5028 = vcombine.high %v5024, %v5024
        %vm5031 = vcmask 257024
        %5032 = vst.msk [vmem:[%s325] sm:$0xf] %vm5031, %v5023
        %5033 = vst.msk [vmem:[%s325 + $0x4] sm:$0xf] %vm5031, %v5027
        %5034 = vst.msk [vmem:[%s325 + $0x8] sm:$0xf] %vm5031, %v5024
        %5035 = vst.msk [vmem:[%s325 + $0xc] sm:$0xf] %vm5031, %v5028
        %s5036 = sand.u32 %s219, 1
        %s5037 = scalar_lea.sflag [#allocation3], %s5036
        %s5038 = sand.u32 %s219, 1
        %s5039 = smul.addr %s5038, 16
        %s5040 = scalar_lea.vmem [#allocation2], %s5039
        // Predicated region
        $region53: #{stem_forward.3} parent=51 // pred_check
          %p5041 = pneg %p229
        $region54: #{stem_forward.3} parent=51 // pred_check_branch
          %5043 = sbr.rel (%p5041) target = $region56
        $region55: #{stem_forward.3} parent=51 // pred_region
          %s5044 = smul.u32 4, %s27
          %s5046 = ssub.s32 256, 256
          %5047 = vsyncadd %s5037, %s5046
          %s5048 = smul.addr %s26, 4
          %s5049 = sadd.s32 %s5044, %s5048
          %s5050 = smul.addr %s5049, 64
          %s5051 = scalar_lea.hbm %s8, %s5050
          %s5052 = sshll.u32 %s5040, 4
          %s5053 = int_to_ptr.vmem [resolvable:$true] %s5052
          %5058 = dma.vmem_to_hbm [thread:$0]  %s5053, 256, %s5051, %s5037, 64, 64, 4
        $region56: #{stem_forward.3} parent=51 // pred_fallthru
          _
      $region52: #{stem_forward.3} parent=5 // pred_fallthru
        _
      %p5059 = scmp.le.s32.totalorder 2, %s17
      // Predicated region
      $region57: #{stem_forward.3} parent=5 // pred_check
        %p5060 = pneg %p5059
      $region58: #{stem_forward.3} parent=5 // pred_check_branch
        %5062 = sbr.rel (%p5060) target = $region60
      $region59: #{stem_forward.3} parent=5 // pred_region
        %s5063 = ssub.s32 %s17, 2
        // Predicated region
        $region61: #{stem_forward.3} parent=59 // pred_check
          %p5064 = pneg %p235
        $region62: #{stem_forward.3} parent=59 // pred_check_branch
          %5066 = sbr.rel (%p5064) target = $region64
        $region63: #{stem_forward.3} parent=59 // pred_region
          %s5067 = sand.u32 %s220, 1
          %s5068 = scalar_lea.sflag [#allocation3], %s5067
          %s5069 = sand.u32 %s220, 1
          %s5070 = smul.addr %s5069, 16
          %s5071 = scalar_lea.vmem [#allocation2], %s5070
          %5072 = dma.done %s5068, 256
        $region64: #{stem_forward.3} parent=59 // pred_fallthru
          _
      $region60: #{stem_forward.3} parent=5 // pred_fallthru
        _
    $region6: #{stem_forward.3} parent=1 // loop_footer
      %s21 = sadd.s32 1, %s17
    $region7: #{stem_forward.3} parent=1 // loop_footer_branch
      %16 = sbr.rel target = $region3
    $region8: #{stem_forward.3} parent=1 // loop_exit
      _
    %5073 = vsyncpa [#allocation3], 1
    %s5074 = scalar_lea.sflag [#allocation3], 1
    %5075 = vsyncpa %s5074, 1

</llo_original>
